<compile_context>
chip_gen: v6e
topology: v6e:2x2x1
jax: 0.10.0
libtpu: 0.0.40
codegen_flags: <defaults>
</compile_context>

<pallas_src>
import functools

import jax
import jax.numpy as jnp
from jax.experimental import pallas as pl
from jax.experimental.pallas import tpu as pltpu


def _round_up(x, m):
    return ((x + m - 1) // m) * m


# ------------------------- fused 3x3 conv kernel ------------------------------

def _conv_kernel(*args, taps, rows_out, cout, relu):
    """9-tap shift-and-matmul 3x3 conv on flattened (rows, Cin) phase planes.

    args = (phase_ref_0, ..., phase_ref_{P-1}, w_ref, b_ref, o_ref)
      phase_ref: (1, R, Cin) bf16   flattened zero-padded input plane(s)
      w_ref    : (9, Cin, Cout) bf16  (tap-major: t = kh*3 + kw)
      b_ref    : (1, Cout) f32
      o_ref    : (1, rows_out, Cout) bf16
    """
    n_ph = len(args) - 3
    phase_refs = args[:n_ph]
    w_ref, b_ref, o_ref = args[n_ph], args[n_ph + 1], args[n_ph + 2]

    acc = jnp.zeros((rows_out, cout), jnp.float32)
    for t, (ph, off) in enumerate(taps):
        xt = phase_refs[ph][0, pl.ds(off, rows_out), :]           # (rows_out, Cin)
        acc = acc + jnp.dot(xt, w_ref[t], preferred_element_type=jnp.float32)
    y = acc + b_ref[...]
    if relu:
        y = jnp.maximum(y, 0.0)
    o_ref[0] = y.astype(o_ref.dtype)


def conv3x3(x_nhwc, w9, b, stride):
    """3x3 conv, padding=1, stride in {1,2}, fused im2col + bias + ReLU.

    x_nhwc: (N, H, W, Cin) bf16; w9: (9, Cin, Cout) bf16; b: (1, Cout) f32.
    Wrapper-side glue is only a zero-pad (+ for stride 2 a parity split into 4
    planes) and a final reshape/column-drop; all MACs run on the MXU in Pallas.
    """
    nb, h, w, cin = x_nhwc.shape
    cout = w9.shape[-1]
    xp = jnp.pad(x_nhwc, ((0, 0), (1, 1), (1, 1), (0, 0)))

    if stride == 1:
        ho, wo = h, w
        wrow = w + 2
        planes = [xp.reshape(nb, (h + 2) * (w + 2), cin)]
        taps = [(0, kh * wrow + kw) for kh in range(3) for kw in range(3)]
    elif stride == 2:
        assert h % 2 == 0 and w % 2 == 0
        ho, wo = h // 2, w // 2
        wrow = wo + 1
        planes = [xp[:, a::2, c::2, :].reshape(nb, (ho + 1) * (wo + 1), cin)
                  for a in range(2) for c in range(2)]
        taps = [((kh % 2) * 2 + (kw % 2), (kh // 2) * wrow + (kw // 2))
                for kh in range(3) for kw in range(3)]
    else:
        raise ValueError("stride must be 1 or 2")

    # Output is computed on an (Ho, wrow) grid; the extra columns per row are
    # garbage (row wrap-around) and dropped below.  Pad the flattened planes so
    # every tap's slab read stays in bounds.
    rows_out = ho * wrow
    rows_need = rows_out + max(off for _, off in taps)
    r_target = _round_up(rows_need, 8)
    planes = [jnp.pad(p, ((0, 0), (0, max(0, r_target - p.shape[1])), (0, 0)))
              for p in planes]
    r = planes[0].shape[1]

    kernel = functools.partial(_conv_kernel, taps=taps, rows_out=rows_out,
                               cout=cout, relu=True)
    y = pl.pallas_call(
        kernel,
        out_shape=jax.ShapeDtypeStruct((nb, rows_out, cout), jnp.bfloat16),
        grid_spec=pltpu.PrefetchScalarGridSpec(
            num_scalar_prefetch=0,
            grid=(nb,),
            in_specs=(
                [pl.BlockSpec((1, r, cin), lambda n: (n, 0, 0)) for _ in planes]
                + [pl.BlockSpec((9, cin, cout), lambda n: (0, 0, 0)),
                   pl.BlockSpec((1, cout), lambda n: (0, 0))]),
            out_specs=pl.BlockSpec((1, rows_out, cout), lambda n: (n, 0, 0)),
        ),
        compiler_params=pltpu.CompilerParams(
            dimension_semantics=("parallel",),
            vmem_limit_bytes=32 * 1024 * 1024,
        ),
    )(*planes, w9, b)

    return y.reshape(nb, ho, wrow, cout)[:, :, :wo, :]


# ------------------ fused fc + policy head + critic head kernel ----------------

def _head_kernel(x_ref, fcw_ref, fcb_ref, phw_ref, phb_ref, chw_ref, chb_ref,
                 pow_ref, pob_ref, cow_ref, cob_ref, o_ref, acc_ref, *, n_k):
    """features = relu(x @ fc_w + fc_b)     (accumulated over the K grid axis)
       h_pol    = relu(features @ phw + phb);  policy = h_pol @ pow + pob
       h_crt    = relu(features @ chw + chb);  values = h_crt @ cow + cob
       out      = [policy_padded_to_128k | ext,int,0...(128)]   (lane-dense f32)
    """
    k = pl.program_id(1)

    @pl.when(k == 0)
    def _():
        acc_ref[...] = jnp.zeros_like(acc_ref)

    acc_ref[...] += jnp.dot(x_ref[...], fcw_ref[...],
                            preferred_element_type=jnp.float32)

    @pl.when(k == n_k - 1)
    def _():
        feat = jnp.maximum(acc_ref[...] + fcb_ref[...], 0.0)          # f32
        h_pol = jnp.maximum(
            jnp.dot(feat, phw_ref[...], preferred_element_type=jnp.float32)
            + phb_ref[...], 0.0)
        h_crt = jnp.maximum(
            jnp.dot(feat, chw_ref[...], preferred_element_type=jnp.float32)
            + chb_ref[...], 0.0)
        pol = jnp.dot(h_pol, pow_ref[...],
                      preferred_element_type=jnp.float32) + pob_ref[...]
        val = jnp.dot(h_crt, cow_ref[...],
                      preferred_element_type=jnp.float32) + cob_ref[...]
        o_ref[...] = jnp.concatenate([pol, val], axis=-1).astype(o_ref.dtype)


def fused_heads(x, p):
    """x: (M, features) bf16 -> (M, n_pol_pad + 128) f32 in one pallas_call."""
    m, k_dim = x.shape
    hidden = p["fc_w"].shape[1]
    n_pol_pad = p["pol_out_w"].shape[1]
    n_out = n_pol_pad + 128
    assert k_dim % 128 == 0, "features_count must be a multiple of 128"

    tm = m if m <= 256 else 256
    if k_dim <= 1024:
        tk = k_dim
    else:
        tk = max(t for t in (1024, 512, 256, 128) if k_dim % t == 0)
    nm = pl.cdiv(m, tm)
    nk = k_dim // tk

    return pl.pallas_call(
        functools.partial(_head_kernel, n_k=nk),
        out_shape=jax.ShapeDtypeStruct((m, n_out), jnp.float32),
        grid_spec=pltpu.PrefetchScalarGridSpec(
            num_scalar_prefetch=0,
            grid=(nm, nk),
            in_specs=[
                pl.BlockSpec((tm, tk), lambda i, k: (i, k)),          # x
                pl.BlockSpec((tk, hidden), lambda i, k: (k, 0)),      # fc_w
                pl.BlockSpec((1, hidden), lambda i, k: (0, 0)),       # fc_b
                pl.BlockSpec((hidden, hidden), lambda i, k: (0, 0)),  # pol hidden w
                pl.BlockSpec((1, hidden), lambda i, k: (0, 0)),       # pol hidden b
                pl.BlockSpec((hidden, hidden), lambda i, k: (0, 0)),  # crit hidden w
                pl.BlockSpec((1, hidden), lambda i, k: (0, 0)),       # crit hidden b
                pl.BlockSpec((hidden, n_pol_pad), lambda i, k: (0, 0)),  # pol out w
                pl.BlockSpec((1, n_pol_pad), lambda i, k: (0, 0)),       # pol out b
                pl.BlockSpec((hidden, 128), lambda i, k: (0, 0)),        # crit out w
                pl.BlockSpec((1, 128), lambda i, k: (0, 0)),             # crit out b
            ],
            out_specs=pl.BlockSpec((tm, n_out), lambda i, k: (i, 0)),
            scratch_shapes=[pltpu.VMEM((tm, hidden), jnp.float32)],
        ),
        compiler_params=pltpu.CompilerParams(
            dimension_semantics=("parallel", "arbitrary"),
            vmem_limit_bytes=32 * 1024 * 1024,
        ),
    )(x, p["fc_w"], p["fc_b"], p["pol_h_w"], p["pol_h_b"], p["crit_h_w"],
      p["crit_h_b"], p["pol_out_w"], p["pol_out_b"], p["crit_out_w"],
      p["crit_out_b"])


# ------------------------------ parameters -----------------------------------

def _orth(key, shape, gain):
    # matches torch.nn.init.orthogonal_(w, gain) statistically on (out, in_flat)
    return jax.nn.initializers.orthogonal(scale=gain, column_axis=-1)(
        key, shape, jnp.float32)


def _conv_w9(key, cout, cin, gain):
    """torch-style orthogonal (Cout, Cin*9) -> tap-major (9, Cin, Cout) bf16."""
    w_oihw = _orth(key, (cout, cin * 9), gain).reshape(cout, cin, 3, 3)
    return jnp.transpose(w_oihw, (2, 3, 1, 0)).reshape(9, cin, cout).astype(
        jnp.bfloat16)


def init_params(input_shape, outputs_count, key):
    c, h, w = input_shape
    assert h % 8 == 0 and w % 8 == 0
    hf, wf = h // 8, w // 8
    features = 128 * hf * wf
    hidden = 512
    g2 = 2.0 ** 0.5
    ks = jax.random.split(key, 10)
    p = {}

    # --- feature extractor convs (orthogonal gain sqrt(2), zero bias) ---
    p["c1_w"] = _conv_w9(ks[0], 32, c, g2);    p["c1_b"] = jnp.zeros((1, 32), jnp.float32)
    p["c2_w"] = _conv_w9(ks[1], 64, 32, g2);   p["c2_b"] = jnp.zeros((1, 64), jnp.float32)
    p["c3_w"] = _conv_w9(ks[2], 64, 64, g2);   p["c3_b"] = jnp.zeros((1, 64), jnp.float32)
    p["c4_w"] = _conv_w9(ks[3], 128, 64, g2);  p["c4_b"] = jnp.zeros((1, 128), jnp.float32)

    # --- fc: torch weight is (hidden, features) over NCHW-flatten order. Store
    # it transposed with rows permuted to NHWC-flatten (h, w, c) order so the
    # conv4 output flattens directly (no transpose in the hot path).
    fc_w = _orth(ks[4], (hidden, features), g2).T                 # (feat, hid), CHW rows
    fc_w = (fc_w.reshape(128, hf, wf, hidden)
            .transpose(1, 2, 0, 3)
            .reshape(features, hidden))
    p["fc_w"] = fc_w.astype(jnp.bfloat16)
    p["fc_b"] = jnp.zeros((1, hidden), jnp.float32)

    # --- policy head (f32 weights; computed in f32 inside the fused kernel) ---
    n_pol_pad = max(128, _round_up(outputs_count, 128))
    p["pol_h_w"] = _orth(ks[5], (hidden, hidden), 0.01).T
    p["pol_h_b"] = jnp.zeros((1, hidden), jnp.float32)
    pol_out = _orth(ks[6], (outputs_count, hidden), 0.01).T        # (512, outputs)
    p["pol_out_w"] = (jnp.zeros((hidden, n_pol_pad), jnp.float32)
                      .at[:, :outputs_count].set(pol_out))
    p["pol_out_b"] = jnp.zeros((1, n_pol_pad), jnp.float32)

    # --- critic head: col 0 = ext_value, col 1 = int_value, rest zero padding ---
    p["crit_h_w"] = _orth(ks[7], (hidden, hidden), 0.1).T
    p["crit_h_b"] = jnp.zeros((1, hidden), jnp.float32)
    ext_w = _orth(ks[8], (1, hidden), 0.01).T                      # (512, 1)
    int_w = _orth(ks[9], (1, hidden), 0.01).T                      # (512, 1)
    p["crit_out_w"] = (jnp.zeros((hidden, 128), jnp.float32)
                       .at[:, 0:1].set(ext_w).at[:, 1:2].set(int_w))
    p["crit_out_b"] = jnp.zeros((1, 128), jnp.float32)
    return p


# -------------------------------- forward ------------------------------------

def forward(params, state_nchw, *, outputs_count):
    # cast to bf16 BEFORE the layout transpose (halves the bytes moved)
    x = state_nchw.astype(jnp.bfloat16).transpose(0, 2, 3, 1)      # NCHW -> NHWC
    x = conv3x3(x, params["c1_w"], params["c1_b"], stride=2)
    x = conv3x3(x, params["c2_w"], params["c2_b"], stride=2)
    x = conv3x3(x, params["c3_w"], params["c3_b"], stride=2)
    x = conv3x3(x, params["c4_w"], params["c4_b"], stride=1)

    nb = x.shape[0]
    x = x.reshape(nb, -1)          # HWC flatten; fc_w rows were permuted to match

    out = fused_heads(x, params)   # (nb, n_pol_pad + 128) f32, lane-dense
    n_pol_pad = params["pol_out_w"].shape[1]
    policy = out[:, :outputs_count]
    ext_value = out[:, n_pol_pad:n_pol_pad + 1]
    int_value = out[:, n_pol_pad + 1:n_pol_pad + 2]
    return policy, ext_value, int_value


# --------------------------------- main ---------------------------------------

if __name__ == "__main__":
    input_shape = (4, 16, 16)    # (C, H, W); H, W multiples of 8
    outputs_count = 8
    batch = 2

    key = jax.random.PRNGKey(0)
    k_param, k_data = jax.random.split(key)
    params = init_params(input_shape, outputs_count, k_param)
    state = jax.random.normal(k_data, (batch,) + input_shape, dtype=jnp.float32)

    fwd = jax.jit(functools.partial(forward, outputs_count=outputs_count))
    policy, ext_value, int_value = fwd(params, state)
    jax.block_until_ready((policy, ext_value, int_value))

    assert policy.shape == (batch, outputs_count)
    assert ext_value.shape == (batch, 1)
    assert int_value.shape == (batch, 1)
    assert bool(jnp.all(jnp.isfinite(policy)))
    assert bool(jnp.all(jnp.isfinite(ext_value)))
    assert bool(jnp.all(jnp.isfinite(int_value)))
    print("KERNEL_OK")
</pallas_src>

<mosaic_0001>
module attributes {stable_mosaic.version = 11 : i64} {
  func.func @_conv_kernel(%arg0: i32, %arg1: memref<1x88x4xbf16, #tpu.memory_space<vmem>>, %arg2: memref<1x88x4xbf16, #tpu.memory_space<vmem>>, %arg3: memref<1x88x4xbf16, #tpu.memory_space<vmem>>, %arg4: memref<1x88x4xbf16, #tpu.memory_space<vmem>>, %arg5: memref<9x4x32xbf16, #tpu.memory_space<vmem>>, %arg6: memref<1x32xf32, #tpu.memory_space<vmem>>, %arg7: memref<1x72x32xbf16, #tpu.memory_space<vmem>>) attributes {dimension_semantics = [#tpu.dimension_semantics<parallel>], iteration_bounds = array<i64: 2>, scalar_prefetch = 0 : i64, scratch_operands = 0 : i64, tpu.core_type = #tpu.core_type<tc>, window_params = [{transform_indices = @transform_0, window_bounds = array<i64: 1, 88, 4>}, {transform_indices = @transform_1, window_bounds = array<i64: 1, 88, 4>}, {transform_indices = @transform_2, window_bounds = array<i64: 1, 88, 4>}, {transform_indices = @transform_3, window_bounds = array<i64: 1, 88, 4>}, {pipeline_mode = #tpu.pipeline_mode<synchronous>, transform_indices = @transform_4, window_bounds = array<i64: 9, 4, 32>}, {pipeline_mode = #tpu.pipeline_mode<synchronous>, transform_indices = @transform_5, window_bounds = array<i64: 1, 32>}, {transform_indices = @transform_6, window_bounds = array<i64: 1, 72, 32>}]} {
    %cst = arith.constant 0.000000e+00 : f32
    %0 = vector.broadcast %cst : f32 to vector<72x32xf32>
    %c0 = arith.constant 0 : index
    %c0_0 = arith.constant 0 : index
    %c0_1 = arith.constant 0 : index
    %1 = vector.load %arg1[%c0, %c0_0, %c0_1] : memref<1x88x4xbf16, #tpu.memory_space<vmem>>, vector<1x72x4xbf16>
    %2 = vector.shape_cast %1 : vector<1x72x4xbf16> to vector<72x4xbf16>
    %c0_2 = arith.constant 0 : index
    %c0_3 = arith.constant 0 : index
    %c0_4 = arith.constant 0 : index
    %3 = vector.load %arg5[%c0_2, %c0_3, %c0_4] : memref<9x4x32xbf16, #tpu.memory_space<vmem>>, vector<1x4x32xbf16>
    %4 = vector.shape_cast %3 : vector<1x4x32xbf16> to vector<4x32xbf16>
    %cst_5 = arith.constant dense<0.000000e+00> : vector<72x32xf32>
    %5 = tpu.matmul %2, %4, %cst_5 {dimension_numbers = #tpu.dot_dimension_numbers<[1], [0], [0], [1], [0, 0, 1, 1], [], []>} : vector<72x4xbf16>, vector<4x32xbf16>, vector<72x32xf32> -> vector<72x32xf32>
    %6 = arith.addf %0, %5 : vector<72x32xf32>
    %c0_6 = arith.constant 0 : index
    %c0_7 = arith.constant 0 : index
    %c0_8 = arith.constant 0 : index
    %7 = vector.load %arg2[%c0_6, %c0_7, %c0_8] : memref<1x88x4xbf16, #tpu.memory_space<vmem>>, vector<1x72x4xbf16>
    %8 = vector.shape_cast %7 : vector<1x72x4xbf16> to vector<72x4xbf16>
    %c1 = arith.constant 1 : index
    %c0_9 = arith.constant 0 : index
    %c0_10 = arith.constant 0 : index
    %9 = vector.load %arg5[%c1, %c0_9, %c0_10] : memref<9x4x32xbf16, #tpu.memory_space<vmem>>, vector<1x4x32xbf16>
    %10 = vector.shape_cast %9 : vector<1x4x32xbf16> to vector<4x32xbf16>
    %cst_11 = arith.constant dense<0.000000e+00> : vector<72x32xf32>
    %11 = tpu.matmul %8, %10, %cst_11 {dimension_numbers = #tpu.dot_dimension_numbers<[1], [0], [0], [1], [0, 0, 1, 1], [], []>} : vector<72x4xbf16>, vector<4x32xbf16>, vector<72x32xf32> -> vector<72x32xf32>
    %12 = arith.addf %6, %11 : vector<72x32xf32>
    %c0_12 = arith.constant 0 : index
    %c1_13 = arith.constant 1 : index
    %c0_14 = arith.constant 0 : index
    %13 = vector.load %arg1[%c0_12, %c1_13, %c0_14] : memref<1x88x4xbf16, #tpu.memory_space<vmem>>, vector<1x72x4xbf16>
    %14 = vector.shape_cast %13 : vector<1x72x4xbf16> to vector<72x4xbf16>
    %c2 = arith.constant 2 : index
    %c0_15 = arith.constant 0 : index
    %c0_16 = arith.constant 0 : index
    %15 = vector.load %arg5[%c2, %c0_15, %c0_16] : memref<9x4x32xbf16, #tpu.memory_space<vmem>>, vector<1x4x32xbf16>
    %16 = vector.shape_cast %15 : vector<1x4x32xbf16> to vector<4x32xbf16>
    %cst_17 = arith.constant dense<0.000000e+00> : vector<72x32xf32>
    %17 = tpu.matmul %14, %16, %cst_17 {dimension_numbers = #tpu.dot_dimension_numbers<[1], [0], [0], [1], [0, 0, 1, 1], [], []>} : vector<72x4xbf16>, vector<4x32xbf16>, vector<72x32xf32> -> vector<72x32xf32>
    %18 = arith.addf %12, %17 : vector<72x32xf32>
    %c0_18 = arith.constant 0 : index
    %c0_19 = arith.constant 0 : index
    %c0_20 = arith.constant 0 : index
    %19 = vector.load %arg3[%c0_18, %c0_19, %c0_20] : memref<1x88x4xbf16, #tpu.memory_space<vmem>>, vector<1x72x4xbf16>
    %20 = vector.shape_cast %19 : vector<1x72x4xbf16> to vector<72x4xbf16>
    %c3 = arith.constant 3 : index
    %c0_21 = arith.constant 0 : index
    %c0_22 = arith.constant 0 : index
    %21 = vector.load %arg5[%c3, %c0_21, %c0_22] : memref<9x4x32xbf16, #tpu.memory_space<vmem>>, vector<1x4x32xbf16>
    %22 = vector.shape_cast %21 : vector<1x4x32xbf16> to vector<4x32xbf16>
    %cst_23 = arith.constant dense<0.000000e+00> : vector<72x32xf32>
    %23 = tpu.matmul %20, %22, %cst_23 {dimension_numbers = #tpu.dot_dimension_numbers<[1], [0], [0], [1], [0, 0, 1, 1], [], []>} : vector<72x4xbf16>, vector<4x32xbf16>, vector<72x32xf32> -> vector<72x32xf32>
    %24 = arith.addf %18, %23 : vector<72x32xf32>
    %c0_24 = arith.constant 0 : index
    %c0_25 = arith.constant 0 : index
    %c0_26 = arith.constant 0 : index
    %25 = vector.load %arg4[%c0_24, %c0_25, %c0_26] : memref<1x88x4xbf16, #tpu.memory_space<vmem>>, vector<1x72x4xbf16>
    %26 = vector.shape_cast %25 : vector<1x72x4xbf16> to vector<72x4xbf16>
    %c4 = arith.constant 4 : index
    %c0_27 = arith.constant 0 : index
    %c0_28 = arith.constant 0 : index
    %27 = vector.load %arg5[%c4, %c0_27, %c0_28] : memref<9x4x32xbf16, #tpu.memory_space<vmem>>, vector<1x4x32xbf16>
    %28 = vector.shape_cast %27 : vector<1x4x32xbf16> to vector<4x32xbf16>
    %cst_29 = arith.constant dense<0.000000e+00> : vector<72x32xf32>
    %29 = tpu.matmul %26, %28, %cst_29 {dimension_numbers = #tpu.dot_dimension_numbers<[1], [0], [0], [1], [0, 0, 1, 1], [], []>} : vector<72x4xbf16>, vector<4x32xbf16>, vector<72x32xf32> -> vector<72x32xf32>
    %30 = arith.addf %24, %29 : vector<72x32xf32>
    %c0_30 = arith.constant 0 : index
    %c1_31 = arith.constant 1 : index
    %c0_32 = arith.constant 0 : index
    %31 = vector.load %arg3[%c0_30, %c1_31, %c0_32] : memref<1x88x4xbf16, #tpu.memory_space<vmem>>, vector<1x72x4xbf16>
    %32 = vector.shape_cast %31 : vector<1x72x4xbf16> to vector<72x4xbf16>
    %c5 = arith.constant 5 : index
    %c0_33 = arith.constant 0 : index
    %c0_34 = arith.constant 0 : index
    %33 = vector.load %arg5[%c5, %c0_33, %c0_34] : memref<9x4x32xbf16, #tpu.memory_space<vmem>>, vector<1x4x32xbf16>
    %34 = vector.shape_cast %33 : vector<1x4x32xbf16> to vector<4x32xbf16>
    %cst_35 = arith.constant dense<0.000000e+00> : vector<72x32xf32>
    %35 = tpu.matmul %32, %34, %cst_35 {dimension_numbers = #tpu.dot_dimension_numbers<[1], [0], [0], [1], [0, 0, 1, 1], [], []>} : vector<72x4xbf16>, vector<4x32xbf16>, vector<72x32xf32> -> vector<72x32xf32>
    %36 = arith.addf %30, %35 : vector<72x32xf32>
    %c0_36 = arith.constant 0 : index
    %c9 = arith.constant 9 : index
    %c0_37 = arith.constant 0 : index
    %37 = vector.load %arg1[%c0_36, %c9, %c0_37] : memref<1x88x4xbf16, #tpu.memory_space<vmem>>, vector<1x72x4xbf16>
    %38 = vector.shape_cast %37 : vector<1x72x4xbf16> to vector<72x4xbf16>
    %c6 = arith.constant 6 : index
    %c0_38 = arith.constant 0 : index
    %c0_39 = arith.constant 0 : index
    %39 = vector.load %arg5[%c6, %c0_38, %c0_39] : memref<9x4x32xbf16, #tpu.memory_space<vmem>>, vector<1x4x32xbf16>
    %40 = vector.shape_cast %39 : vector<1x4x32xbf16> to vector<4x32xbf16>
    %cst_40 = arith.constant dense<0.000000e+00> : vector<72x32xf32>
    %41 = tpu.matmul %38, %40, %cst_40 {dimension_numbers = #tpu.dot_dimension_numbers<[1], [0], [0], [1], [0, 0, 1, 1], [], []>} : vector<72x4xbf16>, vector<4x32xbf16>, vector<72x32xf32> -> vector<72x32xf32>
    %42 = arith.addf %36, %41 : vector<72x32xf32>
    %c0_41 = arith.constant 0 : index
    %c9_42 = arith.constant 9 : index
    %c0_43 = arith.constant 0 : index
    %43 = vector.load %arg2[%c0_41, %c9_42, %c0_43] : memref<1x88x4xbf16, #tpu.memory_space<vmem>>, vector<1x72x4xbf16>
    %44 = vector.shape_cast %43 : vector<1x72x4xbf16> to vector<72x4xbf16>
    %c7 = arith.constant 7 : index
    %c0_44 = arith.constant 0 : index
    %c0_45 = arith.constant 0 : index
    %45 = vector.load %arg5[%c7, %c0_44, %c0_45] : memref<9x4x32xbf16, #tpu.memory_space<vmem>>, vector<1x4x32xbf16>
    %46 = vector.shape_cast %45 : vector<1x4x32xbf16> to vector<4x32xbf16>
    %cst_46 = arith.constant dense<0.000000e+00> : vector<72x32xf32>
    %47 = tpu.matmul %44, %46, %cst_46 {dimension_numbers = #tpu.dot_dimension_numbers<[1], [0], [0], [1], [0, 0, 1, 1], [], []>} : vector<72x4xbf16>, vector<4x32xbf16>, vector<72x32xf32> -> vector<72x32xf32>
    %48 = arith.addf %42, %47 : vector<72x32xf32>
    %c0_47 = arith.constant 0 : index
    %c10 = arith.constant 10 : index
    %c0_48 = arith.constant 0 : index
    %49 = vector.load %arg1[%c0_47, %c10, %c0_48] : memref<1x88x4xbf16, #tpu.memory_space<vmem>>, vector<1x72x4xbf16>
    %50 = vector.shape_cast %49 : vector<1x72x4xbf16> to vector<72x4xbf16>
    %c8 = arith.constant 8 : index
    %c0_49 = arith.constant 0 : index
    %c0_50 = arith.constant 0 : index
    %51 = vector.load %arg5[%c8, %c0_49, %c0_50] : memref<9x4x32xbf16, #tpu.memory_space<vmem>>, vector<1x4x32xbf16>
    %52 = vector.shape_cast %51 : vector<1x4x32xbf16> to vector<4x32xbf16>
    %cst_51 = arith.constant dense<0.000000e+00> : vector<72x32xf32>
    %53 = tpu.matmul %50, %52, %cst_51 {dimension_numbers = #tpu.dot_dimension_numbers<[1], [0], [0], [1], [0, 0, 1, 1], [], []>} : vector<72x4xbf16>, vector<4x32xbf16>, vector<72x32xf32> -> vector<72x32xf32>
    %54 = arith.addf %48, %53 : vector<72x32xf32>
    %c0_52 = arith.constant 0 : index
    %c0_53 = arith.constant 0 : index
    %55 = vector.load %arg6[%c0_52, %c0_53] : memref<1x32xf32, #tpu.memory_space<vmem>>, vector<1x32xf32>
    %56 = vector.broadcast %55 : vector<1x32xf32> to vector<72x32xf32>
    %57 = arith.addf %54, %56 : vector<72x32xf32>
    %cst_54 = arith.constant 0.000000e+00 : f32
    %58 = vector.broadcast %cst_54 : f32 to vector<72x32xf32>
    %59 = arith.maximumf %57, %58 : vector<72x32xf32>
    %60 = arith.truncf %59 : vector<72x32xf32> to vector<72x32xbf16>
    %c0_55 = arith.constant 0 : index
    %c0_56 = arith.constant 0 : index
    %c0_57 = arith.constant 0 : index
    %61 = vector.load %arg7[%c0_55, %c0_56, %c0_57] : memref<1x72x32xbf16, #tpu.memory_space<vmem>>, vector<1x72x32xbf16>
    %62 = vector.shape_cast %61 : vector<1x72x32xbf16> to vector<72x32xbf16>
    %63 = vector.shape_cast %60 : vector<72x32xbf16> to vector<1x72x32xbf16>
    tpu.vector_store %arg7[%c0_55, %c0_56, %c0_57], %63 {strides = array<i32>} : memref<1x72x32xbf16, #tpu.memory_space<vmem>>, vector<1x72x32xbf16>,
    return
  }
  func.func @transform_0(%arg0: i32) -> (i32, i32, i32) {
    %c0_i32 = arith.constant 0 : i32
    %c0_i32_0 = arith.constant 0 : i32
    %c0_i32_1 = arith.constant 0 : i32
    return %arg0, %c0_i32, %c0_i32_0 : i32, i32, i32
  }
  func.func @transform_1(%arg0: i32) -> (i32, i32, i32) {
    %c0_i32 = arith.constant 0 : i32
    %c0_i32_0 = arith.constant 0 : i32
    %c0_i32_1 = arith.constant 0 : i32
    return %arg0, %c0_i32, %c0_i32_0 : i32, i32, i32
  }
  func.func @transform_2(%arg0: i32) -> (i32, i32, i32) {
    %c0_i32 = arith.constant 0 : i32
    %c0_i32_0 = arith.constant 0 : i32
    %c0_i32_1 = arith.constant 0 : i32
    return %arg0, %c0_i32, %c0_i32_0 : i32, i32, i32
  }
  func.func @transform_3(%arg0: i32) -> (i32, i32, i32) {
    %c0_i32 = arith.constant 0 : i32
    %c0_i32_0 = arith.constant 0 : i32
    %c0_i32_1 = arith.constant 0 : i32
    return %arg0, %c0_i32, %c0_i32_0 : i32, i32, i32
  }
  func.func @transform_4(%arg0: i32) -> (i32, i32, i32) {
    %c0_i32 = arith.constant 0 : i32
    %c0_i32_0 = arith.constant 0 : i32
    %c0_i32_1 = arith.constant 0 : i32
    %c0_i32_2 = arith.constant 0 : i32
    return %c0_i32, %c0_i32_0, %c0_i32_1 : i32, i32, i32
  }
  func.func @transform_5(%arg0: i32) -> (i32, i32) {
    %c0_i32 = arith.constant 0 : i32
    %c0_i32_0 = arith.constant 0 : i32
    %c0_i32_1 = arith.constant 0 : i32
    return %c0_i32, %c0_i32_0 : i32, i32
  }
  func.func @transform_6(%arg0: i32) -> (i32, i32, i32) {
    %c0_i32 = arith.constant 0 : i32
    %c0_i32_0 = arith.constant 0 : i32
    %c0_i32_1 = arith.constant 0 : i32
    return %arg0, %c0_i32, %c0_i32_0 : i32, i32, i32
  }
}

module attributes {stable_mosaic.version = 11 : i64} {
  func.func @_conv_kernel(%arg0: i32, %arg1: memref<1x32x32xbf16, #tpu.memory_space<vmem>>, %arg2: memref<1x32x32xbf16, #tpu.memory_space<vmem>>, %arg3: memref<1x32x32xbf16, #tpu.memory_space<vmem>>, %arg4: memref<1x32x32xbf16, #tpu.memory_space<vmem>>, %arg5: memref<9x32x64xbf16, #tpu.memory_space<vmem>>, %arg6: memref<1x64xf32, #tpu.memory_space<vmem>>, %arg7: memref<1x20x64xbf16, #tpu.memory_space<vmem>>) attributes {dimension_semantics = [#tpu.dimension_semantics<parallel>], iteration_bounds = array<i64: 2>, scalar_prefetch = 0 : i64, scratch_operands = 0 : i64, tpu.core_type = #tpu.core_type<tc>, window_params = [{transform_indices = @transform_0, window_bounds = array<i64: 1, 32, 32>}, {transform_indices = @transform_1, window_bounds = array<i64: 1, 32, 32>}, {transform_indices = @transform_2, window_bounds = array<i64: 1, 32, 32>}, {transform_indices = @transform_3, window_bounds = array<i64: 1, 32, 32>}, {pipeline_mode = #tpu.pipeline_mode<synchronous>, transform_indices = @transform_4, window_bounds = array<i64: 9, 32, 64>}, {pipeline_mode = #tpu.pipeline_mode<synchronous>, transform_indices = @transform_5, window_bounds = array<i64: 1, 64>}, {transform_indices = @transform_6, window_bounds = array<i64: 1, 20, 64>}]} {
    %cst = arith.constant 0.000000e+00 : f32
    %0 = vector.broadcast %cst : f32 to vector<20x64xf32>
    %c0 = arith.constant 0 : index
    %c0_0 = arith.constant 0 : index
    %c0_1 = arith.constant 0 : index
    %1 = vector.load %arg1[%c0, %c0_0, %c0_1] : memref<1x32x32xbf16, #tpu.memory_space<vmem>>, vector<1x20x32xbf16>
    %2 = vector.shape_cast %1 : vector<1x20x32xbf16> to vector<20x32xbf16>
    %c0_2 = arith.constant 0 : index
    %c0_3 = arith.constant 0 : index
    %c0_4 = arith.constant 0 : index
    %3 = vector.load %arg5[%c0_2, %c0_3, %c0_4] : memref<9x32x64xbf16, #tpu.memory_space<vmem>>, vector<1x32x64xbf16>
    %4 = vector.shape_cast %3 : vector<1x32x64xbf16> to vector<32x64xbf16>
    %cst_5 = arith.constant dense<0.000000e+00> : vector<20x64xf32>
    %5 = tpu.matmul %2, %4, %cst_5 {dimension_numbers = #tpu.dot_dimension_numbers<[1], [0], [0], [1], [0, 0, 1, 1], [], []>} : vector<20x32xbf16>, vector<32x64xbf16>, vector<20x64xf32> -> vector<20x64xf32>
    %6 = arith.addf %0, %5 : vector<20x64xf32>
    %c0_6 = arith.constant 0 : index
    %c0_7 = arith.constant 0 : index
    %c0_8 = arith.constant 0 : index
    %7 = vector.load %arg2[%c0_6, %c0_7, %c0_8] : memref<1x32x32xbf16, #tpu.memory_space<vmem>>, vector<1x20x32xbf16>
    %8 = vector.shape_cast %7 : vector<1x20x32xbf16> to vector<20x32xbf16>
    %c1 = arith.constant 1 : index
    %c0_9 = arith.constant 0 : index
    %c0_10 = arith.constant 0 : index
    %9 = vector.load %arg5[%c1, %c0_9, %c0_10] : memref<9x32x64xbf16, #tpu.memory_space<vmem>>, vector<1x32x64xbf16>
    %10 = vector.shape_cast %9 : vector<1x32x64xbf16> to vector<32x64xbf16>
    %cst_11 = arith.constant dense<0.000000e+00> : vector<20x64xf32>
    %11 = tpu.matmul %8, %10, %cst_11 {dimension_numbers = #tpu.dot_dimension_numbers<[1], [0], [0], [1], [0, 0, 1, 1], [], []>} : vector<20x32xbf16>, vector<32x64xbf16>, vector<20x64xf32> -> vector<20x64xf32>
    %12 = arith.addf %6, %11 : vector<20x64xf32>
    %c0_12 = arith.constant 0 : index
    %c1_13 = arith.constant 1 : index
    %c0_14 = arith.constant 0 : index
    %13 = vector.load %arg1[%c0_12, %c1_13, %c0_14] : memref<1x32x32xbf16, #tpu.memory_space<vmem>>, vector<1x20x32xbf16>
    %14 = vector.shape_cast %13 : vector<1x20x32xbf16> to vector<20x32xbf16>
    %c2 = arith.constant 2 : index
    %c0_15 = arith.constant 0 : index
    %c0_16 = arith.constant 0 : index
    %15 = vector.load %arg5[%c2, %c0_15, %c0_16] : memref<9x32x64xbf16, #tpu.memory_space<vmem>>, vector<1x32x64xbf16>
    %16 = vector.shape_cast %15 : vector<1x32x64xbf16> to vector<32x64xbf16>
    %cst_17 = arith.constant dense<0.000000e+00> : vector<20x64xf32>
    %17 = tpu.matmul %14, %16, %cst_17 {dimension_numbers = #tpu.dot_dimension_numbers<[1], [0], [0], [1], [0, 0, 1, 1], [], []>} : vector<20x32xbf16>, vector<32x64xbf16>, vector<20x64xf32> -> vector<20x64xf32>
    %18 = arith.addf %12, %17 : vector<20x64xf32>
    %c0_18 = arith.constant 0 : index
    %c0_19 = arith.constant 0 : index
    %c0_20 = arith.constant 0 : index
    %19 = vector.load %arg3[%c0_18, %c0_19, %c0_20] : memref<1x32x32xbf16, #tpu.memory_space<vmem>>, vector<1x20x32xbf16>
    %20 = vector.shape_cast %19 : vector<1x20x32xbf16> to vector<20x32xbf16>
    %c3 = arith.constant 3 : index
    %c0_21 = arith.constant 0 : index
    %c0_22 = arith.constant 0 : index
    %21 = vector.load %arg5[%c3, %c0_21, %c0_22] : memref<9x32x64xbf16, #tpu.memory_space<vmem>>, vector<1x32x64xbf16>
    %22 = vector.shape_cast %21 : vector<1x32x64xbf16> to vector<32x64xbf16>
    %cst_23 = arith.constant dense<0.000000e+00> : vector<20x64xf32>
    %23 = tpu.matmul %20, %22, %cst_23 {dimension_numbers = #tpu.dot_dimension_numbers<[1], [0], [0], [1], [0, 0, 1, 1], [], []>} : vector<20x32xbf16>, vector<32x64xbf16>, vector<20x64xf32> -> vector<20x64xf32>
    %24 = arith.addf %18, %23 : vector<20x64xf32>
    %c0_24 = arith.constant 0 : index
    %c0_25 = arith.constant 0 : index
    %c0_26 = arith.constant 0 : index
    %25 = vector.load %arg4[%c0_24, %c0_25, %c0_26] : memref<1x32x32xbf16, #tpu.memory_space<vmem>>, vector<1x20x32xbf16>
    %26 = vector.shape_cast %25 : vector<1x20x32xbf16> to vector<20x32xbf16>
    %c4 = arith.constant 4 : index
    %c0_27 = arith.constant 0 : index
    %c0_28 = arith.constant 0 : index
    %27 = vector.load %arg5[%c4, %c0_27, %c0_28] : memref<9x32x64xbf16, #tpu.memory_space<vmem>>, vector<1x32x64xbf16>
    %28 = vector.shape_cast %27 : vector<1x32x64xbf16> to vector<32x64xbf16>
    %cst_29 = arith.constant dense<0.000000e+00> : vector<20x64xf32>
    %29 = tpu.matmul %26, %28, %cst_29 {dimension_numbers = #tpu.dot_dimension_numbers<[1], [0], [0], [1], [0, 0, 1, 1], [], []>} : vector<20x32xbf16>, vector<32x64xbf16>, vector<20x64xf32> -> vector<20x64xf32>
    %30 = arith.addf %24, %29 : vector<20x64xf32>
    %c0_30 = arith.constant 0 : index
    %c1_31 = arith.constant 1 : index
    %c0_32 = arith.constant 0 : index
    %31 = vector.load %arg3[%c0_30, %c1_31, %c0_32] : memref<1x32x32xbf16, #tpu.memory_space<vmem>>, vector<1x20x32xbf16>
    %32 = vector.shape_cast %31 : vector<1x20x32xbf16> to vector<20x32xbf16>
    %c5 = arith.constant 5 : index
    %c0_33 = arith.constant 0 : index
    %c0_34 = arith.constant 0 : index
    %33 = vector.load %arg5[%c5, %c0_33, %c0_34] : memref<9x32x64xbf16, #tpu.memory_space<vmem>>, vector<1x32x64xbf16>
    %34 = vector.shape_cast %33 : vector<1x32x64xbf16> to vector<32x64xbf16>
    %cst_35 = arith.constant dense<0.000000e+00> : vector<20x64xf32>
    %35 = tpu.matmul %32, %34, %cst_35 {dimension_numbers = #tpu.dot_dimension_numbers<[1], [0], [0], [1], [0, 0, 1, 1], [], []>} : vector<20x32xbf16>, vector<32x64xbf16>, vector<20x64xf32> -> vector<20x64xf32>
    %36 = arith.addf %30, %35 : vector<20x64xf32>
    %c0_36 = arith.constant 0 : index
    %c5_37 = arith.constant 5 : index
    %c0_38 = arith.constant 0 : index
    %37 = vector.load %arg1[%c0_36, %c5_37, %c0_38] : memref<1x32x32xbf16, #tpu.memory_space<vmem>>, vector<1x20x32xbf16>
    %38 = vector.shape_cast %37 : vector<1x20x32xbf16> to vector<20x32xbf16>
    %c6 = arith.constant 6 : index
    %c0_39 = arith.constant 0 : index
    %c0_40 = arith.constant 0 : index
    %39 = vector.load %arg5[%c6, %c0_39, %c0_40] : memref<9x32x64xbf16, #tpu.memory_space<vmem>>, vector<1x32x64xbf16>
    %40 = vector.shape_cast %39 : vector<1x32x64xbf16> to vector<32x64xbf16>
    %cst_41 = arith.constant dense<0.000000e+00> : vector<20x64xf32>
    %41 = tpu.matmul %38, %40, %cst_41 {dimension_numbers = #tpu.dot_dimension_numbers<[1], [0], [0], [1], [0, 0, 1, 1], [], []>} : vector<20x32xbf16>, vector<32x64xbf16>, vector<20x64xf32> -> vector<20x64xf32>
    %42 = arith.addf %36, %41 : vector<20x64xf32>
    %c0_42 = arith.constant 0 : index
    %c5_43 = arith.constant 5 : index
    %c0_44 = arith.constant 0 : index
    %43 = vector.load %arg2[%c0_42, %c5_43, %c0_44] : memref<1x32x32xbf16, #tpu.memory_space<vmem>>, vector<1x20x32xbf16>
    %44 = vector.shape_cast %43 : vector<1x20x32xbf16> to vector<20x32xbf16>
    %c7 = arith.constant 7 : index
    %c0_45 = arith.constant 0 : index
    %c0_46 = arith.constant 0 : index
    %45 = vector.load %arg5[%c7, %c0_45, %c0_46] : memref<9x32x64xbf16, #tpu.memory_space<vmem>>, vector<1x32x64xbf16>
    %46 = vector.shape_cast %45 : vector<1x32x64xbf16> to vector<32x64xbf16>
    %cst_47 = arith.constant dense<0.000000e+00> : vector<20x64xf32>
    %47 = tpu.matmul %44, %46, %cst_47 {dimension_numbers = #tpu.dot_dimension_numbers<[1], [0], [0], [1], [0, 0, 1, 1], [], []>} : vector<20x32xbf16>, vector<32x64xbf16>, vector<20x64xf32> -> vector<20x64xf32>
    %48 = arith.addf %42, %47 : vector<20x64xf32>
    %c0_48 = arith.constant 0 : index
    %c6_49 = arith.constant 6 : index
    %c0_50 = arith.constant 0 : index
    %49 = vector.load %arg1[%c0_48, %c6_49, %c0_50] : memref<1x32x32xbf16, #tpu.memory_space<vmem>>, vector<1x20x32xbf16>
    %50 = vector.shape_cast %49 : vector<1x20x32xbf16> to vector<20x32xbf16>
    %c8 = arith.constant 8 : index
    %c0_51 = arith.constant 0 : index
    %c0_52 = arith.constant 0 : index
    %51 = vector.load %arg5[%c8, %c0_51, %c0_52] : memref<9x32x64xbf16, #tpu.memory_space<vmem>>, vector<1x32x64xbf16>
    %52 = vector.shape_cast %51 : vector<1x32x64xbf16> to vector<32x64xbf16>
    %cst_53 = arith.constant dense<0.000000e+00> : vector<20x64xf32>
    %53 = tpu.matmul %50, %52, %cst_53 {dimension_numbers = #tpu.dot_dimension_numbers<[1], [0], [0], [1], [0, 0, 1, 1], [], []>} : vector<20x32xbf16>, vector<32x64xbf16>, vector<20x64xf32> -> vector<20x64xf32>
    %54 = arith.addf %48, %53 : vector<20x64xf32>
    %c0_54 = arith.constant 0 : index
    %c0_55 = arith.constant 0 : index
    %55 = vector.load %arg6[%c0_54, %c0_55] : memref<1x64xf32, #tpu.memory_space<vmem>>, vector<1x64xf32>
    %56 = vector.broadcast %55 : vector<1x64xf32> to vector<20x64xf32>
    %57 = arith.addf %54, %56 : vector<20x64xf32>
    %cst_56 = arith.constant 0.000000e+00 : f32
    %58 = vector.broadcast %cst_56 : f32 to vector<20x64xf32>
    %59 = arith.maximumf %57, %58 : vector<20x64xf32>
    %60 = arith.truncf %59 : vector<20x64xf32> to vector<20x64xbf16>
    %c0_57 = arith.constant 0 : index
    %c0_58 = arith.constant 0 : index
    %c0_59 = arith.constant 0 : index
    %61 = vector.load %arg7[%c0_57, %c0_58, %c0_59] : memref<1x20x64xbf16, #tpu.memory_space<vmem>>, vector<1x20x64xbf16>
    %62 = vector.shape_cast %61 : vector<1x20x64xbf16> to vector<20x64xbf16>
    %63 = vector.shape_cast %60 : vector<20x64xbf16> to vector<1x20x64xbf16>
    tpu.vector_store %arg7[%c0_57, %c0_58, %c0_59], %63 {strides = array<i32>} : memref<1x20x64xbf16, #tpu.memory_space<vmem>>, vector<1x20x64xbf16>,
    return
  }
  func.func @transform_0(%arg0: i32) -> (i32, i32, i32) {
    %c0_i32 = arith.constant 0 : i32
    %c0_i32_0 = arith.constant 0 : i32
    %c0_i32_1 = arith.constant 0 : i32
    return %arg0, %c0_i32, %c0_i32_0 : i32, i32, i32
  }
  func.func @transform_1(%arg0: i32) -> (i32, i32, i32) {
    %c0_i32 = arith.constant 0 : i32
    %c0_i32_0 = arith.constant 0 : i32
    %c0_i32_1 = arith.constant 0 : i32
    return %arg0, %c0_i32, %c0_i32_0 : i32, i32, i32
  }
  func.func @transform_2(%arg0: i32) -> (i32, i32, i32) {
    %c0_i32 = arith.constant 0 : i32
    %c0_i32_0 = arith.constant 0 : i32
    %c0_i32_1 = arith.constant 0 : i32
    return %arg0, %c0_i32, %c0_i32_0 : i32, i32, i32
  }
  func.func @transform_3(%arg0: i32) -> (i32, i32, i32) {
    %c0_i32 = arith.constant 0 : i32
    %c0_i32_0 = arith.constant 0 : i32
    %c0_i32_1 = arith.constant 0 : i32
    return %arg0, %c0_i32, %c0_i32_0 : i32, i32, i32
  }
  func.func @transform_4(%arg0: i32) -> (i32, i32, i32) {
    %c0_i32 = arith.constant 0 : i32
    %c0_i32_0 = arith.constant 0 : i32
    %c0_i32_1 = arith.constant 0 : i32
    %c0_i32_2 = arith.constant 0 : i32
    return %c0_i32, %c0_i32_0, %c0_i32_1 : i32, i32, i32
  }
  func.func @transform_5(%arg0: i32) -> (i32, i32) {
    %c0_i32 = arith.constant 0 : i32
    %c0_i32_0 = arith.constant 0 : i32
    %c0_i32_1 = arith.constant 0 : i32
    return %c0_i32, %c0_i32_0 : i32, i32
  }
  func.func @transform_6(%arg0: i32) -> (i32, i32, i32) {
    %c0_i32 = arith.constant 0 : i32
    %c0_i32_0 = arith.constant 0 : i32
    %c0_i32_1 = arith.constant 0 : i32
    return %arg0, %c0_i32, %c0_i32_0 : i32, i32, i32
  }
}

module attributes {stable_mosaic.version = 11 : i64} {
  func.func @_conv_kernel(%arg0: i32, %arg1: memref<1x16x64xbf16, #tpu.memory_space<vmem>>, %arg2: memref<1x16x64xbf16, #tpu.memory_space<vmem>>, %arg3: memref<1x16x64xbf16, #tpu.memory_space<vmem>>, %arg4: memref<1x16x64xbf16, #tpu.memory_space<vmem>>, %arg5: memref<9x64x64xbf16, #tpu.memory_space<vmem>>, %arg6: memref<1x64xf32, #tpu.memory_space<vmem>>, %arg7: memref<1x6x64xbf16, #tpu.memory_space<vmem>>) attributes {dimension_semantics = [#tpu.dimension_semantics<parallel>], iteration_bounds = array<i64: 2>, scalar_prefetch = 0 : i64, scratch_operands = 0 : i64, tpu.core_type = #tpu.core_type<tc>, window_params = [{transform_indices = @transform_0, window_bounds = array<i64: 1, 16, 64>}, {transform_indices = @transform_1, window_bounds = array<i64: 1, 16, 64>}, {transform_indices = @transform_2, window_bounds = array<i64: 1, 16, 64>}, {transform_indices = @transform_3, window_bounds = array<i64: 1, 16, 64>}, {pipeline_mode = #tpu.pipeline_mode<synchronous>, transform_indices = @transform_4, window_bounds = array<i64: 9, 64, 64>}, {pipeline_mode = #tpu.pipeline_mode<synchronous>, transform_indices = @transform_5, window_bounds = array<i64: 1, 64>}, {transform_indices = @transform_6, window_bounds = array<i64: 1, 6, 64>}]} {
    %cst = arith.constant 0.000000e+00 : f32
    %0 = vector.broadcast %cst : f32 to vector<6x64xf32>
    %c0 = arith.constant 0 : index
    %c0_0 = arith.constant 0 : index
    %c0_1 = arith.constant 0 : index
    %1 = vector.load %arg1[%c0, %c0_0, %c0_1] : memref<1x16x64xbf16, #tpu.memory_space<vmem>>, vector<1x6x64xbf16>
    %2 = vector.shape_cast %1 : vector<1x6x64xbf16> to vector<6x64xbf16>
    %c0_2 = arith.constant 0 : index
    %c0_3 = arith.constant 0 : index
    %c0_4 = arith.constant 0 : index
    %3 = vector.load %arg5[%c0_2, %c0_3, %c0_4] : memref<9x64x64xbf16, #tpu.memory_space<vmem>>, vector<1x64x64xbf16>
    %4 = vector.shape_cast %3 : vector<1x64x64xbf16> to vector<64x64xbf16>
    %cst_5 = arith.constant dense<0.000000e+00> : vector<6x64xf32>
    %5 = tpu.matmul %2, %4, %cst_5 {dimension_numbers = #tpu.dot_dimension_numbers<[1], [0], [0], [1], [0, 0, 1, 1], [], []>} : vector<6x64xbf16>, vector<64x64xbf16>, vector<6x64xf32> -> vector<6x64xf32>
    %6 = arith.addf %0, %5 : vector<6x64xf32>
    %c0_6 = arith.constant 0 : index
    %c0_7 = arith.constant 0 : index
    %c0_8 = arith.constant 0 : index
    %7 = vector.load %arg2[%c0_6, %c0_7, %c0_8] : memref<1x16x64xbf16, #tpu.memory_space<vmem>>, vector<1x6x64xbf16>
    %8 = vector.shape_cast %7 : vector<1x6x64xbf16> to vector<6x64xbf16>
    %c1 = arith.constant 1 : index
    %c0_9 = arith.constant 0 : index
    %c0_10 = arith.constant 0 : index
    %9 = vector.load %arg5[%c1, %c0_9, %c0_10] : memref<9x64x64xbf16, #tpu.memory_space<vmem>>, vector<1x64x64xbf16>
    %10 = vector.shape_cast %9 : vector<1x64x64xbf16> to vector<64x64xbf16>
    %cst_11 = arith.constant dense<0.000000e+00> : vector<6x64xf32>
    %11 = tpu.matmul %8, %10, %cst_11 {dimension_numbers = #tpu.dot_dimension_numbers<[1], [0], [0], [1], [0, 0, 1, 1], [], []>} : vector<6x64xbf16>, vector<64x64xbf16>, vector<6x64xf32> -> vector<6x64xf32>
    %12 = arith.addf %6, %11 : vector<6x64xf32>
    %c0_12 = arith.constant 0 : index
    %c1_13 = arith.constant 1 : index
    %c0_14 = arith.constant 0 : index
    %13 = vector.load %arg1[%c0_12, %c1_13, %c0_14] : memref<1x16x64xbf16, #tpu.memory_space<vmem>>, vector<1x6x64xbf16>
    %14 = vector.shape_cast %13 : vector<1x6x64xbf16> to vector<6x64xbf16>
    %c2 = arith.constant 2 : index
    %c0_15 = arith.constant 0 : index
    %c0_16 = arith.constant 0 : index
    %15 = vector.load %arg5[%c2, %c0_15, %c0_16] : memref<9x64x64xbf16, #tpu.memory_space<vmem>>, vector<1x64x64xbf16>
    %16 = vector.shape_cast %15 : vector<1x64x64xbf16> to vector<64x64xbf16>
    %cst_17 = arith.constant dense<0.000000e+00> : vector<6x64xf32>
    %17 = tpu.matmul %14, %16, %cst_17 {dimension_numbers = #tpu.dot_dimension_numbers<[1], [0], [0], [1], [0, 0, 1, 1], [], []>} : vector<6x64xbf16>, vector<64x64xbf16>, vector<6x64xf32> -> vector<6x64xf32>
    %18 = arith.addf %12, %17 : vector<6x64xf32>
    %c0_18 = arith.constant 0 : index
    %c0_19 = arith.constant 0 : index
    %c0_20 = arith.constant 0 : index
    %19 = vector.load %arg3[%c0_18, %c0_19, %c0_20] : memref<1x16x64xbf16, #tpu.memory_space<vmem>>, vector<1x6x64xbf16>
    %20 = vector.shape_cast %19 : vector<1x6x64xbf16> to vector<6x64xbf16>
    %c3 = arith.constant 3 : index
    %c0_21 = arith.constant 0 : index
    %c0_22 = arith.constant 0 : index
    %21 = vector.load %arg5[%c3, %c0_21, %c0_22] : memref<9x64x64xbf16, #tpu.memory_space<vmem>>, vector<1x64x64xbf16>
    %22 = vector.shape_cast %21 : vector<1x64x64xbf16> to vector<64x64xbf16>
    %cst_23 = arith.constant dense<0.000000e+00> : vector<6x64xf32>
    %23 = tpu.matmul %20, %22, %cst_23 {dimension_numbers = #tpu.dot_dimension_numbers<[1], [0], [0], [1], [0, 0, 1, 1], [], []>} : vector<6x64xbf16>, vector<64x64xbf16>, vector<6x64xf32> -> vector<6x64xf32>
    %24 = arith.addf %18, %23 : vector<6x64xf32>
    %c0_24 = arith.constant 0 : index
    %c0_25 = arith.constant 0 : index
    %c0_26 = arith.constant 0 : index
    %25 = vector.load %arg4[%c0_24, %c0_25, %c0_26] : memref<1x16x64xbf16, #tpu.memory_space<vmem>>, vector<1x6x64xbf16>
    %26 = vector.shape_cast %25 : vector<1x6x64xbf16> to vector<6x64xbf16>
    %c4 = arith.constant 4 : index
    %c0_27 = arith.constant 0 : index
    %c0_28 = arith.constant 0 : index
    %27 = vector.load %arg5[%c4, %c0_27, %c0_28] : memref<9x64x64xbf16, #tpu.memory_space<vmem>>, vector<1x64x64xbf16>
    %28 = vector.shape_cast %27 : vector<1x64x64xbf16> to vector<64x64xbf16>
    %cst_29 = arith.constant dense<0.000000e+00> : vector<6x64xf32>
    %29 = tpu.matmul %26, %28, %cst_29 {dimension_numbers = #tpu.dot_dimension_numbers<[1], [0], [0], [1], [0, 0, 1, 1], [], []>} : vector<6x64xbf16>, vector<64x64xbf16>, vector<6x64xf32> -> vector<6x64xf32>
    %30 = arith.addf %24, %29 : vector<6x64xf32>
    %c0_30 = arith.constant 0 : index
    %c1_31 = arith.constant 1 : index
    %c0_32 = arith.constant 0 : index
    %31 = vector.load %arg3[%c0_30, %c1_31, %c0_32] : memref<1x16x64xbf16, #tpu.memory_space<vmem>>, vector<1x6x64xbf16>
    %32 = vector.shape_cast %31 : vector<1x6x64xbf16> to vector<6x64xbf16>
    %c5 = arith.constant 5 : index
    %c0_33 = arith.constant 0 : index
    %c0_34 = arith.constant 0 : index
    %33 = vector.load %arg5[%c5, %c0_33, %c0_34] : memref<9x64x64xbf16, #tpu.memory_space<vmem>>, vector<1x64x64xbf16>
    %34 = vector.shape_cast %33 : vector<1x64x64xbf16> to vector<64x64xbf16>
    %cst_35 = arith.constant dense<0.000000e+00> : vector<6x64xf32>
    %35 = tpu.matmul %32, %34, %cst_35 {dimension_numbers = #tpu.dot_dimension_numbers<[1], [0], [0], [1], [0, 0, 1, 1], [], []>} : vector<6x64xbf16>, vector<64x64xbf16>, vector<6x64xf32> -> vector<6x64xf32>
    %36 = arith.addf %30, %35 : vector<6x64xf32>
    %c0_36 = arith.constant 0 : index
    %c3_37 = arith.constant 3 : index
    %c0_38 = arith.constant 0 : index
    %37 = vector.load %arg1[%c0_36, %c3_37, %c0_38] : memref<1x16x64xbf16, #tpu.memory_space<vmem>>, vector<1x6x64xbf16>
    %38 = vector.shape_cast %37 : vector<1x6x64xbf16> to vector<6x64xbf16>
    %c6 = arith.constant 6 : index
    %c0_39 = arith.constant 0 : index
    %c0_40 = arith.constant 0 : index
    %39 = vector.load %arg5[%c6, %c0_39, %c0_40] : memref<9x64x64xbf16, #tpu.memory_space<vmem>>, vector<1x64x64xbf16>
    %40 = vector.shape_cast %39 : vector<1x64x64xbf16> to vector<64x64xbf16>
    %cst_41 = arith.constant dense<0.000000e+00> : vector<6x64xf32>
    %41 = tpu.matmul %38, %40, %cst_41 {dimension_numbers = #tpu.dot_dimension_numbers<[1], [0], [0], [1], [0, 0, 1, 1], [], []>} : vector<6x64xbf16>, vector<64x64xbf16>, vector<6x64xf32> -> vector<6x64xf32>
    %42 = arith.addf %36, %41 : vector<6x64xf32>
    %c0_42 = arith.constant 0 : index
    %c3_43 = arith.constant 3 : index
    %c0_44 = arith.constant 0 : index
    %43 = vector.load %arg2[%c0_42, %c3_43, %c0_44] : memref<1x16x64xbf16, #tpu.memory_space<vmem>>, vector<1x6x64xbf16>
    %44 = vector.shape_cast %43 : vector<1x6x64xbf16> to vector<6x64xbf16>
    %c7 = arith.constant 7 : index
    %c0_45 = arith.constant 0 : index
    %c0_46 = arith.constant 0 : index
    %45 = vector.load %arg5[%c7, %c0_45, %c0_46] : memref<9x64x64xbf16, #tpu.memory_space<vmem>>, vector<1x64x64xbf16>
    %46 = vector.shape_cast %45 : vector<1x64x64xbf16> to vector<64x64xbf16>
    %cst_47 = arith.constant dense<0.000000e+00> : vector<6x64xf32>
    %47 = tpu.matmul %44, %46, %cst_47 {dimension_numbers = #tpu.dot_dimension_numbers<[1], [0], [0], [1], [0, 0, 1, 1], [], []>} : vector<6x64xbf16>, vector<64x64xbf16>, vector<6x64xf32> -> vector<6x64xf32>
    %48 = arith.addf %42, %47 : vector<6x64xf32>
    %c0_48 = arith.constant 0 : index
    %c4_49 = arith.constant 4 : index
    %c0_50 = arith.constant 0 : index
    %49 = vector.load %arg1[%c0_48, %c4_49, %c0_50] : memref<1x16x64xbf16, #tpu.memory_space<vmem>>, vector<1x6x64xbf16>
    %50 = vector.shape_cast %49 : vector<1x6x64xbf16> to vector<6x64xbf16>
    %c8 = arith.constant 8 : index
    %c0_51 = arith.constant 0 : index
    %c0_52 = arith.constant 0 : index
    %51 = vector.load %arg5[%c8, %c0_51, %c0_52] : memref<9x64x64xbf16, #tpu.memory_space<vmem>>, vector<1x64x64xbf16>
    %52 = vector.shape_cast %51 : vector<1x64x64xbf16> to vector<64x64xbf16>
    %cst_53 = arith.constant dense<0.000000e+00> : vector<6x64xf32>
    %53 = tpu.matmul %50, %52, %cst_53 {dimension_numbers = #tpu.dot_dimension_numbers<[1], [0], [0], [1], [0, 0, 1, 1], [], []>} : vector<6x64xbf16>, vector<64x64xbf16>, vector<6x64xf32> -> vector<6x64xf32>
    %54 = arith.addf %48, %53 : vector<6x64xf32>
    %c0_54 = arith.constant 0 : index
    %c0_55 = arith.constant 0 : index
    %55 = vector.load %arg6[%c0_54, %c0_55] : memref<1x64xf32, #tpu.memory_space<vmem>>, vector<1x64xf32>
    %56 = vector.broadcast %55 : vector<1x64xf32> to vector<6x64xf32>
    %57 = arith.addf %54, %56 : vector<6x64xf32>
    %cst_56 = arith.constant 0.000000e+00 : f32
    %58 = vector.broadcast %cst_56 : f32 to vector<6x64xf32>
    %59 = arith.maximumf %57, %58 : vector<6x64xf32>
    %60 = arith.truncf %59 : vector<6x64xf32> to vector<6x64xbf16>
    %c0_57 = arith.constant 0 : index
    %c0_58 = arith.constant 0 : index
    %c0_59 = arith.constant 0 : index
    %61 = vector.load %arg7[%c0_57, %c0_58, %c0_59] : memref<1x6x64xbf16, #tpu.memory_space<vmem>>, vector<1x6x64xbf16>
    %62 = vector.shape_cast %61 : vector<1x6x64xbf16> to vector<6x64xbf16>
    %63 = vector.shape_cast %60 : vector<6x64xbf16> to vector<1x6x64xbf16>
    tpu.vector_store %arg7[%c0_57, %c0_58, %c0_59], %63 {strides = array<i32>} : memref<1x6x64xbf16, #tpu.memory_space<vmem>>, vector<1x6x64xbf16>,
    return
  }
  func.func @transform_0(%arg0: i32) -> (i32, i32, i32) {
    %c0_i32 = arith.constant 0 : i32
    %c0_i32_0 = arith.constant 0 : i32
    %c0_i32_1 = arith.constant 0 : i32
    return %arg0, %c0_i32, %c0_i32_0 : i32, i32, i32
  }
  func.func @transform_1(%arg0: i32) -> (i32, i32, i32) {
    %c0_i32 = arith.constant 0 : i32
    %c0_i32_0 = arith.constant 0 : i32
    %c0_i32_1 = arith.constant 0 : i32
    return %arg0, %c0_i32, %c0_i32_0 : i32, i32, i32
  }
  func.func @transform_2(%arg0: i32) -> (i32, i32, i32) {
    %c0_i32 = arith.constant 0 : i32
    %c0_i32_0 = arith.constant 0 : i32
    %c0_i32_1 = arith.constant 0 : i32
    return %arg0, %c0_i32, %c0_i32_0 : i32, i32, i32
  }
  func.func @transform_3(%arg0: i32) -> (i32, i32, i32) {
    %c0_i32 = arith.constant 0 : i32
    %c0_i32_0 = arith.constant 0 : i32
    %c0_i32_1 = arith.constant 0 : i32
    return %arg0, %c0_i32, %c0_i32_0 : i32, i32, i32
  }
  func.func @transform_4(%arg0: i32) -> (i32, i32, i32) {
    %c0_i32 = arith.constant 0 : i32
    %c0_i32_0 = arith.constant 0 : i32
    %c0_i32_1 = arith.constant 0 : i32
    %c0_i32_2 = arith.constant 0 : i32
    return %c0_i32, %c0_i32_0, %c0_i32_1 : i32, i32, i32
  }
  func.func @transform_5(%arg0: i32) -> (i32, i32) {
    %c0_i32 = arith.constant 0 : i32
    %c0_i32_0 = arith.constant 0 : i32
    %c0_i32_1 = arith.constant 0 : i32
    return %c0_i32, %c0_i32_0 : i32, i32
  }
  func.func @transform_6(%arg0: i32) -> (i32, i32, i32) {
    %c0_i32 = arith.constant 0 : i32
    %c0_i32_0 = arith.constant 0 : i32
    %c0_i32_1 = arith.constant 0 : i32
    return %arg0, %c0_i32, %c0_i32_0 : i32, i32, i32
  }
}

module attributes {stable_mosaic.version = 11 : i64} {
  func.func @_conv_kernel(%arg0: i32, %arg1: memref<1x24x64xbf16, #tpu.memory_space<vmem>>, %arg2: memref<9x64x128xbf16, #tpu.memory_space<vmem>>, %arg3: memref<1x128xf32, #tpu.memory_space<vmem>>, %arg4: memref<1x8x128xbf16, #tpu.memory_space<vmem>>) attributes {dimension_semantics = [#tpu.dimension_semantics<parallel>], iteration_bounds = array<i64: 2>, scalar_prefetch = 0 : i64, scratch_operands = 0 : i64, tpu.core_type = #tpu.core_type<tc>, window_params = [{transform_indices = @transform_0, window_bounds = array<i64: 1, 24, 64>}, {pipeline_mode = #tpu.pipeline_mode<synchronous>, transform_indices = @transform_1, window_bounds = array<i64: 9, 64, 128>}, {pipeline_mode = #tpu.pipeline_mode<synchronous>, transform_indices = @transform_2, window_bounds = array<i64: 1, 128>}, {transform_indices = @transform_3, window_bounds = array<i64: 1, 8, 128>}]} {
    %cst = arith.constant 0.000000e+00 : f32
    %0 = vector.broadcast %cst : f32 to vector<8x128xf32>
    %c0 = arith.constant 0 : index
    %c0_0 = arith.constant 0 : index
    %c0_1 = arith.constant 0 : index
    %1 = vector.load %arg1[%c0, %c0_0, %c0_1] : memref<1x24x64xbf16, #tpu.memory_space<vmem>>, vector<1x8x64xbf16>
    %2 = vector.shape_cast %1 : vector<1x8x64xbf16> to vector<8x64xbf16>
    %c0_2 = arith.constant 0 : index
    %c0_3 = arith.constant 0 : index
    %c0_4 = arith.constant 0 : index
    %3 = vector.load %arg2[%c0_2, %c0_3, %c0_4] : memref<9x64x128xbf16, #tpu.memory_space<vmem>>, vector<1x64x128xbf16>
    %4 = vector.shape_cast %3 : vector<1x64x128xbf16> to vector<64x128xbf16>
    %cst_5 = arith.constant dense<0.000000e+00> : vector<8x128xf32>
    %5 = tpu.matmul %2, %4, %cst_5 {dimension_numbers = #tpu.dot_dimension_numbers<[1], [0], [0], [1], [0, 0, 1, 1], [], []>} : vector<8x64xbf16>, vector<64x128xbf16>, vector<8x128xf32> -> vector<8x128xf32>
    %6 = arith.addf %0, %5 : vector<8x128xf32>
    %c0_6 = arith.constant 0 : index
    %c1 = arith.constant 1 : index
    %c0_7 = arith.constant 0 : index
    %7 = vector.load %arg1[%c0_6, %c1, %c0_7] : memref<1x24x64xbf16, #tpu.memory_space<vmem>>, vector<1x8x64xbf16>
    %8 = vector.shape_cast %7 : vector<1x8x64xbf16> to vector<8x64xbf16>
    %c1_8 = arith.constant 1 : index
    %c0_9 = arith.constant 0 : index
    %c0_10 = arith.constant 0 : index
    %9 = vector.load %arg2[%c1_8, %c0_9, %c0_10] : memref<9x64x128xbf16, #tpu.memory_space<vmem>>, vector<1x64x128xbf16>
    %10 = vector.shape_cast %9 : vector<1x64x128xbf16> to vector<64x128xbf16>
    %cst_11 = arith.constant dense<0.000000e+00> : vector<8x128xf32>
    %11 = tpu.matmul %8, %10, %cst_11 {dimension_numbers = #tpu.dot_dimension_numbers<[1], [0], [0], [1], [0, 0, 1, 1], [], []>} : vector<8x64xbf16>, vector<64x128xbf16>, vector<8x128xf32> -> vector<8x128xf32>
    %12 = arith.addf %6, %11 : vector<8x128xf32>
    %c0_12 = arith.constant 0 : index
    %c2 = arith.constant 2 : index
    %c0_13 = arith.constant 0 : index
    %13 = vector.load %arg1[%c0_12, %c2, %c0_13] : memref<1x24x64xbf16, #tpu.memory_space<vmem>>, vector<1x8x64xbf16>
    %14 = vector.shape_cast %13 : vector<1x8x64xbf16> to vector<8x64xbf16>
    %c2_14 = arith.constant 2 : index
    %c0_15 = arith.constant 0 : index
    %c0_16 = arith.constant 0 : index
    %15 = vector.load %arg2[%c2_14, %c0_15, %c0_16] : memref<9x64x128xbf16, #tpu.memory_space<vmem>>, vector<1x64x128xbf16>
    %16 = vector.shape_cast %15 : vector<1x64x128xbf16> to vector<64x128xbf16>
    %cst_17 = arith.constant dense<0.000000e+00> : vector<8x128xf32>
    %17 = tpu.matmul %14, %16, %cst_17 {dimension_numbers = #tpu.dot_dimension_numbers<[1], [0], [0], [1], [0, 0, 1, 1], [], []>} : vector<8x64xbf16>, vector<64x128xbf16>, vector<8x128xf32> -> vector<8x128xf32>
    %18 = arith.addf %12, %17 : vector<8x128xf32>
    %c0_18 = arith.constant 0 : index
    %c4 = arith.constant 4 : index
    %c0_19 = arith.constant 0 : index
    %19 = vector.load %arg1[%c0_18, %c4, %c0_19] : memref<1x24x64xbf16, #tpu.memory_space<vmem>>, vector<1x8x64xbf16>
    %20 = vector.shape_cast %19 : vector<1x8x64xbf16> to vector<8x64xbf16>
    %c3 = arith.constant 3 : index
    %c0_20 = arith.constant 0 : index
    %c0_21 = arith.constant 0 : index
    %21 = vector.load %arg2[%c3, %c0_20, %c0_21] : memref<9x64x128xbf16, #tpu.memory_space<vmem>>, vector<1x64x128xbf16>
    %22 = vector.shape_cast %21 : vector<1x64x128xbf16> to vector<64x128xbf16>
    %cst_22 = arith.constant dense<0.000000e+00> : vector<8x128xf32>
    %23 = tpu.matmul %20, %22, %cst_22 {dimension_numbers = #tpu.dot_dimension_numbers<[1], [0], [0], [1], [0, 0, 1, 1], [], []>} : vector<8x64xbf16>, vector<64x128xbf16>, vector<8x128xf32> -> vector<8x128xf32>
    %24 = arith.addf %18, %23 : vector<8x128xf32>
    %c0_23 = arith.constant 0 : index
    %c5 = arith.constant 5 : index
    %c0_24 = arith.constant 0 : index
    %25 = vector.load %arg1[%c0_23, %c5, %c0_24] : memref<1x24x64xbf16, #tpu.memory_space<vmem>>, vector<1x8x64xbf16>
    %26 = vector.shape_cast %25 : vector<1x8x64xbf16> to vector<8x64xbf16>
    %c4_25 = arith.constant 4 : index
    %c0_26 = arith.constant 0 : index
    %c0_27 = arith.constant 0 : index
    %27 = vector.load %arg2[%c4_25, %c0_26, %c0_27] : memref<9x64x128xbf16, #tpu.memory_space<vmem>>, vector<1x64x128xbf16>
    %28 = vector.shape_cast %27 : vector<1x64x128xbf16> to vector<64x128xbf16>
    %cst_28 = arith.constant dense<0.000000e+00> : vector<8x128xf32>
    %29 = tpu.matmul %26, %28, %cst_28 {dimension_numbers = #tpu.dot_dimension_numbers<[1], [0], [0], [1], [0, 0, 1, 1], [], []>} : vector<8x64xbf16>, vector<64x128xbf16>, vector<8x128xf32> -> vector<8x128xf32>
    %30 = arith.addf %24, %29 : vector<8x128xf32>
    %c0_29 = arith.constant 0 : index
    %c6 = arith.constant 6 : index
    %c0_30 = arith.constant 0 : index
    %31 = vector.load %arg1[%c0_29, %c6, %c0_30] : memref<1x24x64xbf16, #tpu.memory_space<vmem>>, vector<1x8x64xbf16>
    %32 = vector.shape_cast %31 : vector<1x8x64xbf16> to vector<8x64xbf16>
    %c5_31 = arith.constant 5 : index
    %c0_32 = arith.constant 0 : index
    %c0_33 = arith.constant 0 : index
    %33 = vector.load %arg2[%c5_31, %c0_32, %c0_33] : memref<9x64x128xbf16, #tpu.memory_space<vmem>>, vector<1x64x128xbf16>
    %34 = vector.shape_cast %33 : vector<1x64x128xbf16> to vector<64x128xbf16>
    %cst_34 = arith.constant dense<0.000000e+00> : vector<8x128xf32>
    %35 = tpu.matmul %32, %34, %cst_34 {dimension_numbers = #tpu.dot_dimension_numbers<[1], [0], [0], [1], [0, 0, 1, 1], [], []>} : vector<8x64xbf16>, vector<64x128xbf16>, vector<8x128xf32> -> vector<8x128xf32>
    %36 = arith.addf %30, %35 : vector<8x128xf32>
    %c0_35 = arith.constant 0 : index
    %c8 = arith.constant 8 : index
    %c0_36 = arith.constant 0 : index
    %37 = vector.load %arg1[%c0_35, %c8, %c0_36] : memref<1x24x64xbf16, #tpu.memory_space<vmem>>, vector<1x8x64xbf16>
    %38 = vector.shape_cast %37 : vector<1x8x64xbf16> to vector<8x64xbf16>
    %c6_37 = arith.constant 6 : index
    %c0_38 = arith.constant 0 : index
    %c0_39 = arith.constant 0 : index
    %39 = vector.load %arg2[%c6_37, %c0_38, %c0_39] : memref<9x64x128xbf16, #tpu.memory_space<vmem>>, vector<1x64x128xbf16>
    %40 = vector.shape_cast %39 : vector<1x64x128xbf16> to vector<64x128xbf16>
    %cst_40 = arith.constant dense<0.000000e+00> : vector<8x128xf32>
    %41 = tpu.matmul %38, %40, %cst_40 {dimension_numbers = #tpu.dot_dimension_numbers<[1], [0], [0], [1], [0, 0, 1, 1], [], []>} : vector<8x64xbf16>, vector<64x128xbf16>, vector<8x128xf32> -> vector<8x128xf32>
    %42 = arith.addf %36, %41 : vector<8x128xf32>
    %c0_41 = arith.constant 0 : index
    %c9 = arith.constant 9 : index
    %c0_42 = arith.constant 0 : index
    %43 = vector.load %arg1[%c0_41, %c9, %c0_42] : memref<1x24x64xbf16, #tpu.memory_space<vmem>>, vector<1x8x64xbf16>
    %44 = vector.shape_cast %43 : vector<1x8x64xbf16> to vector<8x64xbf16>
    %c7 = arith.constant 7 : index
    %c0_43 = arith.constant 0 : index
    %c0_44 = arith.constant 0 : index
    %45 = vector.load %arg2[%c7, %c0_43, %c0_44] : memref<9x64x128xbf16, #tpu.memory_space<vmem>>, vector<1x64x128xbf16>
    %46 = vector.shape_cast %45 : vector<1x64x128xbf16> to vector<64x128xbf16>
    %cst_45 = arith.constant dense<0.000000e+00> : vector<8x128xf32>
    %47 = tpu.matmul %44, %46, %cst_45 {dimension_numbers = #tpu.dot_dimension_numbers<[1], [0], [0], [1], [0, 0, 1, 1], [], []>} : vector<8x64xbf16>, vector<64x128xbf16>, vector<8x128xf32> -> vector<8x128xf32>
    %48 = arith.addf %42, %47 : vector<8x128xf32>
    %c0_46 = arith.constant 0 : index
    %c10 = arith.constant 10 : index
    %c0_47 = arith.constant 0 : index
    %49 = vector.load %arg1[%c0_46, %c10, %c0_47] : memref<1x24x64xbf16, #tpu.memory_space<vmem>>, vector<1x8x64xbf16>
    %50 = vector.shape_cast %49 : vector<1x8x64xbf16> to vector<8x64xbf16>
    %c8_48 = arith.constant 8 : index
    %c0_49 = arith.constant 0 : index
    %c0_50 = arith.constant 0 : index
    %51 = vector.load %arg2[%c8_48, %c0_49, %c0_50] : memref<9x64x128xbf16, #tpu.memory_space<vmem>>, vector<1x64x128xbf16>
    %52 = vector.shape_cast %51 : vector<1x64x128xbf16> to vector<64x128xbf16>
    %cst_51 = arith.constant dense<0.000000e+00> : vector<8x128xf32>
    %53 = tpu.matmul %50, %52, %cst_51 {dimension_numbers = #tpu.dot_dimension_numbers<[1], [0], [0], [1], [0, 0, 1, 1], [], []>} : vector<8x64xbf16>, vector<64x128xbf16>, vector<8x128xf32> -> vector<8x128xf32>
    %54 = arith.addf %48, %53 : vector<8x128xf32>
    %c0_52 = arith.constant 0 : index
    %c0_53 = arith.constant 0 : index
    %55 = vector.load %arg3[%c0_52, %c0_53] : memref<1x128xf32, #tpu.memory_space<vmem>>, vector<1x128xf32>
    %56 = vector.broadcast %55 : vector<1x128xf32> to vector<8x128xf32>
    %57 = arith.addf %54, %56 : vector<8x128xf32>
    %cst_54 = arith.constant 0.000000e+00 : f32
    %58 = vector.broadcast %cst_54 : f32 to vector<8x128xf32>
    %59 = arith.maximumf %57, %58 : vector<8x128xf32>
    %60 = arith.truncf %59 : vector<8x128xf32> to vector<8x128xbf16>
    %c0_55 = arith.constant 0 : index
    %c0_56 = arith.constant 0 : index
    %c0_57 = arith.constant 0 : index
    %61 = vector.load %arg4[%c0_55, %c0_56, %c0_57] : memref<1x8x128xbf16, #tpu.memory_space<vmem>>, vector<1x8x128xbf16>
    %62 = vector.shape_cast %61 : vector<1x8x128xbf16> to vector<8x128xbf16>
    %63 = vector.shape_cast %60 : vector<8x128xbf16> to vector<1x8x128xbf16>
    tpu.vector_store %arg4[%c0_55, %c0_56, %c0_57], %63 {strides = array<i32>} : memref<1x8x128xbf16, #tpu.memory_space<vmem>>, vector<1x8x128xbf16>,
    return
  }
  func.func @transform_0(%arg0: i32) -> (i32, i32, i32) {
    %c0_i32 = arith.constant 0 : i32
    %c0_i32_0 = arith.constant 0 : i32
    %c0_i32_1 = arith.constant 0 : i32
    return %arg0, %c0_i32, %c0_i32_0 : i32, i32, i32
  }
  func.func @transform_1(%arg0: i32) -> (i32, i32, i32) {
    %c0_i32 = arith.constant 0 : i32
    %c0_i32_0 = arith.constant 0 : i32
    %c0_i32_1 = arith.constant 0 : i32
    %c0_i32_2 = arith.constant 0 : i32
    return %c0_i32, %c0_i32_0, %c0_i32_1 : i32, i32, i32
  }
  func.func @transform_2(%arg0: i32) -> (i32, i32) {
    %c0_i32 = arith.constant 0 : i32
    %c0_i32_0 = arith.constant 0 : i32
    %c0_i32_1 = arith.constant 0 : i32
    return %c0_i32, %c0_i32_0 : i32, i32
  }
  func.func @transform_3(%arg0: i32) -> (i32, i32, i32) {
    %c0_i32 = arith.constant 0 : i32
    %c0_i32_0 = arith.constant 0 : i32
    %c0_i32_1 = arith.constant 0 : i32
    return %arg0, %c0_i32, %c0_i32_0 : i32, i32, i32
  }
}

module attributes {stable_mosaic.version = 11 : i64} {
  func.func @_head_kernel(%arg0: i32, %arg1: i32, %arg2: memref<2x512xbf16, #tpu.memory_space<vmem>>, %arg3: memref<512x512xbf16, #tpu.memory_space<vmem>>, %arg4: memref<1x512xf32, #tpu.memory_space<vmem>>, %arg5: memref<512x512xf32, #tpu.memory_space<vmem>>, %arg6: memref<1x512xf32, #tpu.memory_space<vmem>>, %arg7: memref<512x512xf32, #tpu.memory_space<vmem>>, %arg8: memref<1x512xf32, #tpu.memory_space<vmem>>, %arg9: memref<512x128xf32, #tpu.memory_space<vmem>>, %arg10: memref<1x128xf32, #tpu.memory_space<vmem>>, %arg11: memref<512x128xf32, #tpu.memory_space<vmem>>, %arg12: memref<1x128xf32, #tpu.memory_space<vmem>>, %arg13: memref<2x256xf32, #tpu.memory_space<vmem>>, %arg14: memref<2x512xf32, #tpu.memory_space<vmem>>) attributes {dimension_semantics = [#tpu.dimension_semantics<parallel>, #tpu.dimension_semantics<arbitrary>], iteration_bounds = array<i64: 1, 1>, scalar_prefetch = 0 : i64, scratch_operands = 1 : i64, tpu.core_type = #tpu.core_type<tc>, window_params = [{transform_indices = @transform_0, window_bounds = array<i64: 2, 512>}, {transform_indices = @transform_1, window_bounds = array<i64: 512, 512>}, {pipeline_mode = #tpu.pipeline_mode<synchronous>, transform_indices = @transform_2, window_bounds = array<i64: 1, 512>}, {pipeline_mode = #tpu.pipeline_mode<synchronous>, transform_indices = @transform_3, window_bounds = array<i64: 512, 512>}, {pipeline_mode = #tpu.pipeline_mode<synchronous>, transform_indices = @transform_4, window_bounds = array<i64: 1, 512>}, {pipeline_mode = #tpu.pipeline_mode<synchronous>, transform_indices = @transform_5, window_bounds = array<i64: 512, 512>}, {pipeline_mode = #tpu.pipeline_mode<synchronous>, transform_indices = @transform_6, window_bounds = array<i64: 1, 512>}, {pipeline_mode = #tpu.pipeline_mode<synchronous>, transform_indices = @transform_7, window_bounds = array<i64: 512, 128>}, {pipeline_mode = #tpu.pipeline_mode<synchronous>, transform_indices = @transform_8, window_bounds = array<i64: 1, 128>}, {pipeline_mode = #tpu.pipeline_mode<synchronous>, transform_indices = @transform_9, window_bounds = array<i64: 512, 128>}, {pipeline_mode = #tpu.pipeline_mode<synchronous>, transform_indices = @transform_10, window_bounds = array<i64: 1, 128>}, {transform_indices = @transform_11, window_bounds = array<i64: 2, 256>}]} {
    %c0_i32 = arith.constant 0 : i32
    %0 = arith.cmpi eq, %arg1, %c0_i32 : i32
    %1 = arith.extui %0 : i1 to i32
    %c0_i32_0 = arith.constant 0 : i32
    %2 = arith.cmpi ne, %1, %c0_i32_0 : i32
    scf.if %2 {
      %cst_10 = arith.constant 0.000000e+00 : f32
      %12 = vector.broadcast %cst_10 : f32 to vector<2x512xf32>
      %c0_11 = arith.constant 0 : index
      %c0_12 = arith.constant 0 : index
      %13 = vector.load %arg14[%c0_11, %c0_12] : memref<2x512xf32, #tpu.memory_space<vmem>>, vector<2x512xf32>
      tpu.vector_store %arg14[%c0_11, %c0_12], %12 {strides = array<i32>} : memref<2x512xf32, #tpu.memory_space<vmem>>, vector<2x512xf32>,
    } else {
    }
    %c0 = arith.constant 0 : index
    %c0_1 = arith.constant 0 : index
    %3 = vector.load %arg14[%c0, %c0_1] : memref<2x512xf32, #tpu.memory_space<vmem>>, vector<2x512xf32>
    %c0_2 = arith.constant 0 : index
    %c0_3 = arith.constant 0 : index
    %4 = vector.load %arg2[%c0_2, %c0_3] : memref<2x512xbf16, #tpu.memory_space<vmem>>, vector<2x512xbf16>
    %c0_4 = arith.constant 0 : index
    %c0_5 = arith.constant 0 : index
    %5 = vector.load %arg3[%c0_4, %c0_5] : memref<512x512xbf16, #tpu.memory_space<vmem>>, vector<512x512xbf16>
    %cst = arith.constant dense<0.000000e+00> : vector<2x512xf32>
    %6 = tpu.matmul %4, %5, %cst {dimension_numbers = #tpu.dot_dimension_numbers<[1], [0], [0], [1], [0, 0, 1, 1], [], []>} : vector<2x512xbf16>, vector<512x512xbf16>, vector<2x512xf32> -> vector<2x512xf32>
    %7 = arith.addf %3, %6 : vector<2x512xf32>
    %c0_6 = arith.constant 0 : index
    %c0_7 = arith.constant 0 : index
    %8 = vector.load %arg14[%c0_6, %c0_7] : memref<2x512xf32, #tpu.memory_space<vmem>>, vector<2x512xf32>
    tpu.vector_store %arg14[%c0_6, %c0_7], %7 {strides = array<i32>} : memref<2x512xf32, #tpu.memory_space<vmem>>, vector<2x512xf32>,
    %c0_i32_8 = arith.constant 0 : i32
    %9 = arith.cmpi eq, %arg1, %c0_i32_8 : i32
    %10 = arith.extui %9 : i1 to i32
    %c0_i32_9 = arith.constant 0 : i32
    %11 = arith.cmpi ne, %10, %c0_i32_9 : i32
    scf.if %11 {
      %c0_10 = arith.constant 0 : index
      %c0_11 = arith.constant 0 : index
      %12 = vector.load %arg14[%c0_10, %c0_11] : memref<2x512xf32, #tpu.memory_space<vmem>>, vector<2x512xf32>
      %c0_12 = arith.constant 0 : index
      %c0_13 = arith.constant 0 : index
      %13 = vector.load %arg4[%c0_12, %c0_13] : memref<1x512xf32, #tpu.memory_space<vmem>>, vector<1x512xf32>
      %14 = vector.broadcast %13 : vector<1x512xf32> to vector<2x512xf32>
      %15 = arith.addf %12, %14 : vector<2x512xf32>
      %cst_14 = arith.constant 0.000000e+00 : f32
      %16 = vector.broadcast %cst_14 : f32 to vector<2x512xf32>
      %17 = arith.maximumf %15, %16 : vector<2x512xf32>
      %c0_15 = arith.constant 0 : index
      %c0_16 = arith.constant 0 : index
      %18 = vector.load %arg5[%c0_15, %c0_16] : memref<512x512xf32, #tpu.memory_space<vmem>>, vector<512x512xf32>
      %cst_17 = arith.constant dense<0.000000e+00> : vector<2x512xf32>
      %19 = tpu.matmul %17, %18, %cst_17 {dimension_numbers = #tpu.dot_dimension_numbers<[1], [0], [0], [1], [0, 0, 1, 1], [], []>} : vector<2x512xf32>, vector<512x512xf32>, vector<2x512xf32> -> vector<2x512xf32>
      %c0_18 = arith.constant 0 : index
      %c0_19 = arith.constant 0 : index
      %20 = vector.load %arg6[%c0_18, %c0_19] : memref<1x512xf32, #tpu.memory_space<vmem>>, vector<1x512xf32>
      %21 = vector.broadcast %20 : vector<1x512xf32> to vector<2x512xf32>
      %22 = arith.addf %19, %21 : vector<2x512xf32>
      %cst_20 = arith.constant 0.000000e+00 : f32
      %23 = vector.broadcast %cst_20 : f32 to vector<2x512xf32>
      %24 = arith.maximumf %22, %23 : vector<2x512xf32>
      %c0_21 = arith.constant 0 : index
      %c0_22 = arith.constant 0 : index
      %25 = vector.load %arg7[%c0_21, %c0_22] : memref<512x512xf32, #tpu.memory_space<vmem>>, vector<512x512xf32>
      %cst_23 = arith.constant dense<0.000000e+00> : vector<2x512xf32>
      %26 = tpu.matmul %17, %25, %cst_23 {dimension_numbers = #tpu.dot_dimension_numbers<[1], [0], [0], [1], [0, 0, 1, 1], [], []>} : vector<2x512xf32>, vector<512x512xf32>, vector<2x512xf32> -> vector<2x512xf32>
      %c0_24 = arith.constant 0 : index
      %c0_25 = arith.constant 0 : index
      %27 = vector.load %arg8[%c0_24, %c0_25] : memref<1x512xf32, #tpu.memory_space<vmem>>, vector<1x512xf32>
      %28 = vector.broadcast %27 : vector<1x512xf32> to vector<2x512xf32>
      %29 = arith.addf %26, %28 : vector<2x512xf32>
      %cst_26 = arith.constant 0.000000e+00 : f32
      %30 = vector.broadcast %cst_26 : f32 to vector<2x512xf32>
      %31 = arith.maximumf %29, %30 : vector<2x512xf32>
      %c0_27 = arith.constant 0 : index
      %c0_28 = arith.constant 0 : index
      %32 = vector.load %arg9[%c0_27, %c0_28] : memref<512x128xf32, #tpu.memory_space<vmem>>, vector<512x128xf32>
      %cst_29 = arith.constant dense<0.000000e+00> : vector<2x128xf32>
      %33 = tpu.matmul %24, %32, %cst_29 {dimension_numbers = #tpu.dot_dimension_numbers<[1], [0], [0], [1], [0, 0, 1, 1], [], []>} : vector<2x512xf32>, vector<512x128xf32>, vector<2x128xf32> -> vector<2x128xf32>
      %c0_30 = arith.constant 0 : index
      %c0_31 = arith.constant 0 : index
      %34 = vector.load %arg10[%c0_30, %c0_31] : memref<1x128xf32, #tpu.memory_space<vmem>>, vector<1x128xf32>
      %35 = vector.broadcast %34 : vector<1x128xf32> to vector<2x128xf32>
      %36 = arith.addf %33, %35 : vector<2x128xf32>
      %c0_32 = arith.constant 0 : index
      %c0_33 = arith.constant 0 : index
      %37 = vector.load %arg11[%c0_32, %c0_33] : memref<512x128xf32, #tpu.memory_space<vmem>>, vector<512x128xf32>
      %cst_34 = arith.constant dense<0.000000e+00> : vector<2x128xf32>
      %38 = tpu.matmul %31, %37, %cst_34 {dimension_numbers = #tpu.dot_dimension_numbers<[1], [0], [0], [1], [0, 0, 1, 1], [], []>} : vector<2x512xf32>, vector<512x128xf32>, vector<2x128xf32> -> vector<2x128xf32>
      %c0_35 = arith.constant 0 : index
      %c0_36 = arith.constant 0 : index
      %39 = vector.load %arg12[%c0_35, %c0_36] : memref<1x128xf32, #tpu.memory_space<vmem>>, vector<1x128xf32>
      %40 = vector.broadcast %39 : vector<1x128xf32> to vector<2x128xf32>
      %41 = arith.addf %38, %40 : vector<2x128xf32>
      %42 = tpu.concatenate %36, %41 in 1 : vector<2x128xf32>, vector<2x128xf32> -> vector<2x256xf32>
      %c0_37 = arith.constant 0 : index
      %c0_38 = arith.constant 0 : index
      %43 = vector.load %arg13[%c0_37, %c0_38] : memref<2x256xf32, #tpu.memory_space<vmem>>, vector<2x256xf32>
      tpu.vector_store %arg13[%c0_37, %c0_38], %42 {strides = array<i32>} : memref<2x256xf32, #tpu.memory_space<vmem>>, vector<2x256xf32>,
    } else {
    }
    return
  }
  func.func @transform_0(%arg0: i32, %arg1: i32) -> (i32, i32) {
    %c0_i32 = arith.constant 0 : i32
    return %arg0, %arg1 : i32, i32
  }
  func.func @transform_1(%arg0: i32, %arg1: i32) -> (i32, i32) {
    %c0_i32 = arith.constant 0 : i32
    %c0_i32_0 = arith.constant 0 : i32
    return %arg1, %c0_i32 : i32, i32
  }
  func.func @transform_2(%arg0: i32, %arg1: i32) -> (i32, i32) {
    %c0_i32 = arith.constant 0 : i32
    %c0_i32_0 = arith.constant 0 : i32
    %c0_i32_1 = arith.constant 0 : i32
    return %c0_i32, %c0_i32_0 : i32, i32
  }
  func.func @transform_3(%arg0: i32, %arg1: i32) -> (i32, i32) {
    %c0_i32 = arith.constant 0 : i32
    %c0_i32_0 = arith.constant 0 : i32
    %c0_i32_1 = arith.constant 0 : i32
    return %c0_i32, %c0_i32_0 : i32, i32
  }
  func.func @transform_4(%arg0: i32, %arg1: i32) -> (i32, i32) {
    %c0_i32 = arith.constant 0 : i32
    %c0_i32_0 = arith.constant 0 : i32
    %c0_i32_1 = arith.constant 0 : i32
    return %c0_i32, %c0_i32_0 : i32, i32
  }
  func.func @transform_5(%arg0: i32, %arg1: i32) -> (i32, i32) {
    %c0_i32 = arith.constant 0 : i32
    %c0_i32_0 = arith.constant 0 : i32
    %c0_i32_1 = arith.constant 0 : i32
    return %c0_i32, %c0_i32_0 : i32, i32
  }
  func.func @transform_6(%arg0: i32, %arg1: i32) -> (i32, i32) {
    %c0_i32 = arith.constant 0 : i32
    %c0_i32_0 = arith.constant 0 : i32
    %c0_i32_1 = arith.constant 0 : i32
    return %c0_i32, %c0_i32_0 : i32, i32
  }
  func.func @transform_7(%arg0: i32, %arg1: i32) -> (i32, i32) {
    %c0_i32 = arith.constant 0 : i32
    %c0_i32_0 = arith.constant 0 : i32
    %c0_i32_1 = arith.constant 0 : i32
    return %c0_i32, %c0_i32_0 : i32, i32
  }
  func.func @transform_8(%arg0: i32, %arg1: i32) -> (i32, i32) {
    %c0_i32 = arith.constant 0 : i32
    %c0_i32_0 = arith.constant 0 : i32
    %c0_i32_1 = arith.constant 0 : i32
    return %c0_i32, %c0_i32_0 : i32, i32
  }
  func.func @transform_9(%arg0: i32, %arg1: i32) -> (i32, i32) {
    %c0_i32 = arith.constant 0 : i32
    %c0_i32_0 = arith.constant 0 : i32
    %c0_i32_1 = arith.constant 0 : i32
    return %c0_i32, %c0_i32_0 : i32, i32
  }
  func.func @transform_10(%arg0: i32, %arg1: i32) -> (i32, i32) {
    %c0_i32 = arith.constant 0 : i32
    %c0_i32_0 = arith.constant 0 : i32
    %c0_i32_1 = arith.constant 0 : i32
    return %c0_i32, %c0_i32_0 : i32, i32
  }
  func.func @transform_11(%arg0: i32, %arg1: i32) -> (i32, i32) {
    %c0_i32 = arith.constant 0 : i32
    %c0_i32_0 = arith.constant 0 : i32
    return %arg0, %c0_i32 : i32, i32
  }
}

</mosaic_0001>

<llo_original>
// kernel: forward.6
$region0: #{forward.6}
  #allocation0 [shape = 'u32[]', space=smem, size = 0x4, offset = 0x4, fixed_abs, tag = 'smem constant byte address 0x4 - core index']
  #allocation1 [shape = 'u32[144,128]{1,0:T(1,128)}', space=vmem, size = 0x12000, scoped, tag = 'internal scratch']
  %s0 = inlined_call_operand.vmem [shape: bf16[2,32,32], index: 0, kind: input, shape index: {}]
  %s1 = inlined_call_operand.vmem [shape: bf16[2,32,32], index: 1, kind: input, shape index: {}]
  %s2 = inlined_call_operand.vmem [shape: bf16[2,32,32], index: 2, kind: input, shape index: {}]
  %s3 = inlined_call_operand.vmem [shape: bf16[2,32,32], index: 3, kind: input, shape index: {}]
  %s4 = inlined_call_operand.vmem [shape: bf16[9,32,64], index: 4, kind: input, shape index: {}]
  %s5 = inlined_call_operand.vmem [shape: f32[1,64], index: 5, kind: input, shape index: {}]
  %s6 = inlined_call_operand.vmem [shape: bf16[2,20,64], index: 6, kind: output, shape index: {}]
  %s7 = sld [smem:[#allocation0]]
  $region57: #{forward.6} parent=0
    _
  %s9 = ssub.s32 1, %s7
  %s10 = scalar_select 0, %s9, %s7
  loop: start=0, step=1, limit=4
  $region2: #{forward.6} parent=0 // loop_pre_header
    _
  $region3: #{forward.6} parent=0 // loop_header
    %s12 = sphi 0, %s16
    %p13 = scmp.ge.s32.totalorder %s12, 4
    %s22 = sphi 0, %s24
    %s25 = sphi 0, %s22
    %s26 = sphi 0, %s25
    %s42 = sphi 0, %s26
    %s48 = sphi 0, %s50
    %s51 = sphi 0, %s48
    %s52 = sphi 0, %s51
    %s68 = sphi 0, %s52
    %s74 = sphi 0, %s76
    %s77 = sphi 0, %s74
    %s78 = sphi 0, %s77
    %s94 = sphi 0, %s78
    %s100 = sphi 0, %s102
    %s103 = sphi 0, %s100
    %s104 = sphi 0, %s103
    %s120 = sphi 0, %s104
    %s124 = sphi 0, %s124
    %s126 = sphi 0, %s124
    %s127 = sphi 0, %s126
    %s141 = sphi 0, %s127
    %s145 = sphi 0, %s145
    %s147 = sphi 0, %s145
    %s148 = sphi 0, %s147
    %s162 = sphi 0, %s148
    %s168 = sphi 0, %s170
    %s171 = sphi 0, %s168
    %s172 = sphi 0, %s171
    %s188 = sphi 0, %s172
  $region4: #{forward.6} parent=0 // loop_header_branch
    %15 = sbr.rel (%p13) target = $region8
  $region5: #{forward.6} parent=0 // loop_body
    %s17 = ssub.s32 %s12, 1
    %s18 = ssub.s32 %s12, 2
    %s19 = sadd.s32 %s12, 1
    %s20 = ssub.s32 %s12, %s19
    %p21 = scmp.eq.s32.totalorder %s20, 0
    %s23 = sadd.s32 %s22, 1
    %s24 = scalar_select %p21, %s22, %s23
    %p27 = pneg %p21
    %p28 = scmp.eq.s32.totalorder %s12, 1
    %p29 = por %p27, %p28
    %p30 = scmp.ne.s32.totalorder %s22, %s25
    %p31 = scmp.eq.s32.totalorder %s12, 0
    %p32 = por %p30, %p31
    %p33 = scmp.ne.s32.totalorder %s22, %s25
    %p34 = scmp.eq.s32.totalorder %s17, 1
    %p35 = por %p33, %p34
    %p36 = scmp.ne.s32.totalorder %s25, %s26
    %p37 = scmp.eq.s32.totalorder %s17, 0
    %p38 = por %p36, %p37
    %p39 = scmp.ne.s32.totalorder %s25, %s26
    %p40 = scmp.eq.s32.totalorder %s18, 1
    %p41 = por %p39, %p40
    %p43 = scmp.ne.s32.totalorder %s26, %s42
    %p44 = scmp.eq.s32.totalorder %s18, 0
    %p45 = por %p43, %p44
    %s46 = ssub.s32 %s12, %s19
    %p47 = scmp.eq.s32.totalorder %s46, 0
    %s49 = sadd.s32 %s48, 1
    %s50 = scalar_select %p47, %s48, %s49
    %p53 = pneg %p47
    %p54 = scmp.eq.s32.totalorder %s12, 1
    %p55 = por %p53, %p54
    %p56 = scmp.ne.s32.totalorder %s48, %s51
    %p57 = scmp.eq.s32.totalorder %s12, 0
    %p58 = por %p56, %p57
    %p59 = scmp.ne.s32.totalorder %s48, %s51
    %p60 = scmp.eq.s32.totalorder %s17, 1
    %p61 = por %p59, %p60
    %p62 = scmp.ne.s32.totalorder %s51, %s52
    %p63 = scmp.eq.s32.totalorder %s17, 0
    %p64 = por %p62, %p63
    %p65 = scmp.ne.s32.totalorder %s51, %s52
    %p66 = scmp.eq.s32.totalorder %s18, 1
    %p67 = por %p65, %p66
    %p69 = scmp.ne.s32.totalorder %s52, %s68
    %p70 = scmp.eq.s32.totalorder %s18, 0
    %p71 = por %p69, %p70
    %s72 = ssub.s32 %s12, %s19
    %p73 = scmp.eq.s32.totalorder %s72, 0
    %s75 = sadd.s32 %s74, 1
    %s76 = scalar_select %p73, %s74, %s75
    %p79 = pneg %p73
    %p80 = scmp.eq.s32.totalorder %s12, 1
    %p81 = por %p79, %p80
    %p82 = scmp.ne.s32.totalorder %s74, %s77
    %p83 = scmp.eq.s32.totalorder %s12, 0
    %p84 = por %p82, %p83
    %p85 = scmp.ne.s32.totalorder %s74, %s77
    %p86 = scmp.eq.s32.totalorder %s17, 1
    %p87 = por %p85, %p86
    %p88 = scmp.ne.s32.totalorder %s77, %s78
    %p89 = scmp.eq.s32.totalorder %s17, 0
    %p90 = por %p88, %p89
    %p91 = scmp.ne.s32.totalorder %s77, %s78
    %p92 = scmp.eq.s32.totalorder %s18, 1
    %p93 = por %p91, %p92
    %p95 = scmp.ne.s32.totalorder %s78, %s94
    %p96 = scmp.eq.s32.totalorder %s18, 0
    %p97 = por %p95, %p96
    %s98 = ssub.s32 %s12, %s19
    %p99 = scmp.eq.s32.totalorder %s98, 0
    %s101 = sadd.s32 %s100, 1
    %s102 = scalar_select %p99, %s100, %s101
    %p105 = pneg %p99
    %p106 = scmp.eq.s32.totalorder %s12, 1
    %p107 = por %p105, %p106
    %p108 = scmp.ne.s32.totalorder %s100, %s103
    %p109 = scmp.eq.s32.totalorder %s12, 0
    %p110 = por %p108, %p109
    %p111 = scmp.ne.s32.totalorder %s100, %s103
    %p112 = scmp.eq.s32.totalorder %s17, 1
    %p113 = por %p111, %p112
    %p114 = scmp.ne.s32.totalorder %s103, %s104
    %p115 = scmp.eq.s32.totalorder %s17, 0
    %p116 = por %p114, %p115
    %p117 = scmp.ne.s32.totalorder %s103, %s104
    %p118 = scmp.eq.s32.totalorder %s18, 1
    %p119 = por %p117, %p118
    %p121 = scmp.ne.s32.totalorder %s104, %s120
    %p122 = scmp.eq.s32.totalorder %s18, 0
    %p123 = por %p121, %p122
    %s125 = sadd.s32 %s124, 1
    %p128 = scmp.eq.s32.totalorder %s12, 1
    %p129 = scmp.ne.s32.totalorder %s124, %s126
    %p130 = scmp.eq.s32.totalorder %s12, 0
    %p131 = por %p129, %p130
    %p132 = scmp.ne.s32.totalorder %s124, %s126
    %p133 = scmp.eq.s32.totalorder %s17, 1
    %p134 = por %p132, %p133
    %p135 = scmp.ne.s32.totalorder %s126, %s127
    %p136 = scmp.eq.s32.totalorder %s17, 0
    %p137 = por %p135, %p136
    %p138 = scmp.ne.s32.totalorder %s126, %s127
    %p139 = scmp.eq.s32.totalorder %s18, 1
    %p140 = por %p138, %p139
    %p142 = scmp.ne.s32.totalorder %s127, %s141
    %p143 = scmp.eq.s32.totalorder %s18, 0
    %p144 = por %p142, %p143
    %s146 = sadd.s32 %s145, 1
    %p149 = scmp.eq.s32.totalorder %s12, 1
    %p150 = scmp.ne.s32.totalorder %s145, %s147
    %p151 = scmp.eq.s32.totalorder %s12, 0
    %p152 = por %p150, %p151
    %p153 = scmp.ne.s32.totalorder %s145, %s147
    %p154 = scmp.eq.s32.totalorder %s17, 1
    %p155 = por %p153, %p154
    %p156 = scmp.ne.s32.totalorder %s147, %s148
    %p157 = scmp.eq.s32.totalorder %s17, 0
    %p158 = por %p156, %p157
    %p159 = scmp.ne.s32.totalorder %s147, %s148
    %p160 = scmp.eq.s32.totalorder %s18, 1
    %p161 = por %p159, %p160
    %p163 = scmp.ne.s32.totalorder %s148, %s162
    %p164 = scmp.eq.s32.totalorder %s18, 0
    %p165 = por %p163, %p164
    %s166 = ssub.s32 %s12, %s19
    %p167 = scmp.eq.s32.totalorder %s166, 0
    %s169 = sadd.s32 %s168, 1
    %s170 = scalar_select %p167, %s168, %s169
    %p173 = pneg %p167
    %p174 = scmp.eq.s32.totalorder %s12, 1
    %p175 = por %p173, %p174
    %p176 = scmp.ne.s32.totalorder %s168, %s171
    %p177 = scmp.eq.s32.totalorder %s12, 0
    %p178 = por %p176, %p177
    %p179 = scmp.ne.s32.totalorder %s168, %s171
    %p180 = scmp.eq.s32.totalorder %s17, 1
    %p181 = por %p179, %p180
    %p182 = scmp.ne.s32.totalorder %s171, %s172
    %p183 = scmp.eq.s32.totalorder %s17, 0
    %p184 = por %p182, %p183
    %p185 = scmp.ne.s32.totalorder %s171, %s172
    %p186 = scmp.eq.s32.totalorder %s18, 1
    %p187 = por %p185, %p186
    %p189 = scmp.ne.s32.totalorder %s172, %s188
    %p190 = scmp.eq.s32.totalorder %s18, 0
    %p191 = por %p189, %p190
    %p192 = scmp.le.s32.totalorder 1, %s12
    %p193 = scmp.lt.s32.totalorder %s12, 3
    %p194 = pnand %p192, %p193
    %p195 = pneg %p194
    // Predicated region
    $region9: #{forward.6} parent=5 // pred_check
      _
    $region10: #{forward.6} parent=5 // pred_check_branch
      %197 = sbr.rel (%p194) target = $region12
    $region11: #{forward.6} parent=5 // pred_region
      %s198 = ssub.s32 %s12, 1
      // Predicated region
      $region13: #{forward.6} parent=11 // pred_check
        %p199 = pneg %p137
      $region14: #{forward.6} parent=11 // pred_check_branch
        %201 = sbr.rel (%p199) target = $region16
      $region15: #{forward.6} parent=11 // pred_region
        _
      $region16: #{forward.6} parent=11 // pred_fallthru
        _
      // Predicated region
      $region17: #{forward.6} parent=11 // pred_check
        %p202 = pneg %p158
      $region18: #{forward.6} parent=11 // pred_check_branch
        %204 = sbr.rel (%p202) target = $region20
      $region19: #{forward.6} parent=11 // pred_region
        _
      $region20: #{forward.6} parent=11 // pred_fallthru
        _
    $region12: #{forward.6} parent=5 // pred_fallthru
      _
    %p205 = scmp.lt.s32.totalorder %s12, 2
    // Predicated region
    $region21: #{forward.6} parent=5 // pred_check
      %p206 = pneg %p205
    $region22: #{forward.6} parent=5 // pred_check_branch
      %208 = sbr.rel (%p206) target = $region24
    $region23: #{forward.6} parent=5 // pred_region
      // Predicated region
      $region25: #{forward.6} parent=23 // pred_check
        %p209 = pneg %p32
      $region26: #{forward.6} parent=23 // pred_check_branch
        %211 = sbr.rel (%p209) target = $region28
      $region27: #{forward.6} parent=23 // pred_region
        %p212 = scmp.lt.s32.totalorder %s12, 1
        %s213 = scalar_select %p212, %s12, 1
        %s214 = smul.addr %s213, 4
        %s215 = smul.addr %s214, 4
        %s216 = scalar_lea.vmem %s0, %s215
      $region28: #{forward.6} parent=23 // pred_fallthru
        _
      // Predicated region
      $region29: #{forward.6} parent=23 // pred_check
        %p217 = pneg %p58
      $region30: #{forward.6} parent=23 // pred_check_branch
        %219 = sbr.rel (%p217) target = $region32
      $region31: #{forward.6} parent=23 // pred_region
        %p220 = scmp.lt.s32.totalorder %s12, 1
        %s221 = scalar_select %p220, %s12, 1
        %s222 = smul.addr %s221, 4
        %s223 = smul.addr %s222, 4
        %s224 = scalar_lea.vmem %s1, %s223
      $region32: #{forward.6} parent=23 // pred_fallthru
        _
      // Predicated region
      $region33: #{forward.6} parent=23 // pred_check
        %p225 = pneg %p84
      $region34: #{forward.6} parent=23 // pred_check_branch
        %227 = sbr.rel (%p225) target = $region36
      $region35: #{forward.6} parent=23 // pred_region
        %p228 = scmp.lt.s32.totalorder %s12, 1
        %s229 = scalar_select %p228, %s12, 1
        %s230 = smul.addr %s229, 4
        %s231 = smul.addr %s230, 4
        %s232 = scalar_lea.vmem %s2, %s231
      $region36: #{forward.6} parent=23 // pred_fallthru
        _
      // Predicated region
      $region37: #{forward.6} parent=23 // pred_check
        %p233 = pneg %p110
      $region38: #{forward.6} parent=23 // pred_check_branch
        %235 = sbr.rel (%p233) target = $region40
      $region39: #{forward.6} parent=23 // pred_region
        %p236 = scmp.lt.s32.totalorder %s12, 1
        %s237 = scalar_select %p236, %s12, 1
        %s238 = smul.addr %s237, 4
        %s239 = smul.addr %s238, 4
        %s240 = scalar_lea.vmem %s3, %s239
      $region40: #{forward.6} parent=23 // pred_fallthru
        _
    $region24: #{forward.6} parent=5 // pred_fallthru
      _
    %p241 = scmp.le.s32.totalorder 1, %s12
    %p242 = scmp.lt.s32.totalorder %s12, 3
    %p243 = pnand %p241, %p242
    %p244 = pneg %p243
    // Predicated region
    $region41: #{forward.6} parent=5 // pred_check
      _
    $region42: #{forward.6} parent=5 // pred_check_branch
      %246 = sbr.rel (%p243) target = $region44
    $region43: #{forward.6} parent=5 // pred_region
      %s247 = ssub.s32 %s12, 1
      %p248 = scmp.lt.s32.totalorder %s17, 1
      %s249 = scalar_select %p248, %s17, 1
      %s250 = smul.addr %s249, 4
      %s251 = smul.addr %s250, 4
      %s252 = scalar_lea.vmem %s0, %s251
      %p253 = pneg %p38
      %p254 = pneg %p35
      %p255 = scmp.lt.s32.totalorder %s17, 1
      %s256 = scalar_select %p255, %s17, 1
      %s257 = smul.addr %s256, 4
      %s258 = smul.addr %s257, 4
      %s259 = scalar_lea.vmem %s1, %s258
      %p260 = pneg %p64
      %p261 = pneg %p61
      %p262 = scmp.lt.s32.totalorder %s17, 1
      %s263 = scalar_select %p262, %s17, 1
      %s264 = smul.addr %s263, 4
      %s265 = smul.addr %s264, 4
      %s266 = scalar_lea.vmem %s2, %s265
      %p267 = pneg %p90
      %p268 = pneg %p87
      %p269 = scmp.lt.s32.totalorder %s17, 1
      %s270 = scalar_select %p269, %s17, 1
      %s271 = smul.addr %s270, 4
      %s272 = smul.addr %s271, 4
      %s273 = scalar_lea.vmem %s3, %s272
      %p274 = pneg %p116
      %p275 = pneg %p113
      %p276 = pneg %p137
      %p277 = pneg %p134
      %p278 = pneg %p158
      %p279 = pneg %p155
      %p280 = pneg %p184
      %p281 = pneg %p181
      %p282 = scmp.lt.s32.totalorder %s17, 1
      %s283 = scalar_select %p282, %s17, 1
      %s284 = smul.addr %s283, 3
      %s285 = smul.addr %s284, 4
      %s286 = scalar_lea.vmem %s6, %s285
      %p287 = scmp.lt.s32.totalorder %s17, 1
      %s288 = scalar_select %p287, %s17, 1
      %s289 = smul.addr %s288, 4
      %s290 = smul.addr %s289, 4
      %s291 = scalar_lea.vmem %s0, %s290
      %p292 = scmp.lt.s32.totalorder %s17, 1
      %s293 = scalar_select %p292, %s17, 1
      %s294 = smul.addr %s293, 4
      %s295 = smul.addr %s294, 4
      %s296 = scalar_lea.vmem %s1, %s295
      %p297 = scmp.lt.s32.totalorder %s17, 1
      %s298 = scalar_select %p297, %s17, 1
      %s299 = smul.addr %s298, 4
      %s300 = smul.addr %s299, 4
      %s301 = scalar_lea.vmem %s2, %s300
      %p302 = scmp.lt.s32.totalorder %s17, 1
      %s303 = scalar_select %p302, %s17, 1
      %s304 = smul.addr %s303, 4
      %s305 = smul.addr %s304, 4
      %s306 = scalar_lea.vmem %s3, %s305
      %p307 = scmp.lt.s32.totalorder %s17, 1
      %s308 = scalar_select %p307, %s17, 1
      %s309 = smul.addr %s308, 3
      %s310 = smul.addr %s309, 4
      %s311 = scalar_lea.vmem %s6, %s310
      %v313 = vld [vmem:[%s291] sm:$0xf]
      %v314 = vld [vmem:[%s291 + $0x4] sm:$0xf]
      %v315 = vld [vmem:[%s291 + $0x8] sm:$0x3]
      %v316 = vld [vmem:[%s4] sm:$0xf]
      %v317 = vld [vmem:[%s4 + $0x4] sm:$0xf]
      %v318 = vld [vmem:[%s4 + $0x8] sm:$0xf]
      %v319 = vld [vmem:[%s4 + $0xc] sm:$0xf]
      %v320 = vld [vmem:[%s296] sm:$0xf]
      %v321 = vld [vmem:[%s296 + $0x4] sm:$0xf]
      %v322 = vld [vmem:[%s296 + $0x8] sm:$0x3]
      %s323 = scalar_lea.vmem %s4, 16
      %v324 = vld [vmem:[%s323] sm:$0xf]
      %v325 = vld [vmem:[%s323 + $0x4] sm:$0xf]
      %v326 = vld [vmem:[%s323 + $0x8] sm:$0xf]
      %v327 = vld [vmem:[%s323 + $0xc] sm:$0xf]
      %v331 = vunpack.c.l.b16 %v320
      %v332 = vunpack.c.l.b16 %v321
      %v333 = vunpack.c.l.b16 %v322
      %v334 = vpack.c.b16 %v332, %v331
      %v335 = vpack.c.b16 %v333, %v333
      %v340 = vunpack.c.l.b16 %v324
      %v341 = vunpack.c.l.b16 %v325
      %v342 = vunpack.c.l.b16 %v326
      %v343 = vunpack.c.l.b16 %v327
      %v344 = vpack.c.b16 %v341, %v340
      %v345 = vpack.c.b16 %v343, %v342
      %vm348 = vcmask 261120
      %v350 = vsel %vm348, %v334, 0
      %v353 = vsel %vm348, %v335, 0
      %355 = vmatprep.subr.bf16.mxu0 0
      %356 = vmatpush1.bf16.msra.mxu0 0
      %357 = vmatprep.subr.bf16.mxu0 0
      %358 = vmatpush1.bf16.msra.mxu0 0
      %359 = vmatprep.subr.bf16.mxu0 0
      %360 = vmatpush1.bf16.msra.mxu0 0
      %361 = vmatprep.subr.bf16.mxu0 0
      %362 = vmatpush1.bf16.msra.mxu0 0
      %363 = vmatprep.subr.bf16.mxu0 0
      %364 = vmatpush1.bf16.msra.mxu0 0
      %365 = vmatprep.subr.bf16.mxu0 0
      %366 = vmatpush1.bf16.msra.mxu0 0
      %367 = vmatprep.subr.bf16.mxu0 0
      %368 = vmatpush1.bf16.msra.mxu0 %v345
      %369 = vmatprep.subr.bf16.mxu0 0
      %370 = vmatpush1.bf16.msra.mxu0 %v344
      %371 = vmatprep.subr.bf16.mxu0 0
      %372 = vmatpush2.bf16.msra.mxu0 0
      %373 = vmatprep.subr.bf16.mxu0 0
      %374 = vmatpush2.bf16.msra.mxu0 0
      %375 = vmatprep.subr.bf16.mxu0 0
      %376 = vmatpush2.bf16.msra.mxu0 0
      %377 = vmatprep.subr.bf16.mxu0 0
      %378 = vmatpush2.bf16.msra.mxu0 0
      %379 = vmatprep.subr.bf16.mxu0 0
      %380 = vmatpush2.bf16.msra.mxu0 0
      %381 = vmatprep.subr.bf16.mxu0 0
      %382 = vmatpush2.bf16.msra.mxu0 0
      %383 = vmatprep.subr.bf16.mxu0 0
      %384 = vmatpush2.bf16.msra.mxu0 0
      %385 = vmatprep.subr.bf16.mxu0 0
      %386 = vmatpush2.bf16.msra.mxu0 0
      %387 = vmatprep.mubr.bf16.mxu0 0
      %388 = vmatmul.mubr.bf16.gmra.mxu0 %v350
      %v389 = vpop.f32.mrf.mxu0
      %v390 = vadd.f32 0.0, %v389
      %v391 = vpop.f32.mrf.mxu0
      %v392 = vpop.f32.mrf.mxu0
      %v393 = vadd.f32 0.0, %v392
      %v394 = vpop.f32.mrf.mxu0
      %395 = vmatprep.mubr.bf16.mxu0 0
      %396 = vmatmul.mubr.bf16.gmra.mxu0 %v353
      %v397 = vpop.f32.mrf.mxu0
      %v398 = vadd.f32 0.0, %v397
      %v399 = vpop.f32.mrf.mxu0
      %v400 = vpop.f32.mrf.mxu0
      %v401 = vpop.f32.mrf.mxu0
      %402 = vdwg.mxu0
      %v406 = vunpack.c.l.b16 %v313
      %v407 = vunpack.c.l.b16 %v314
      %v408 = vunpack.c.l.b16 %v315
      %v409 = vpack.c.b16 %v407, %v406
      %v410 = vpack.c.b16 %v408, %v408
      %v415 = vunpack.c.l.b16 %v316
      %v416 = vunpack.c.l.b16 %v317
      %v417 = vunpack.c.l.b16 %v318
      %v418 = vunpack.c.l.b16 %v319
      %v419 = vpack.c.b16 %v416, %v415
      %v420 = vpack.c.b16 %v418, %v417
      %v424 = vsel %vm348, %v409, 0
      %v427 = vsel %vm348, %v410, 0
      %429 = vmatprep.subr.bf16.mxu0 0
      %430 = vmatpush1.bf16.msra.mxu0 0
      %431 = vmatprep.subr.bf16.mxu0 0
      %432 = vmatpush1.bf16.msra.mxu0 0
      %433 = vmatprep.subr.bf16.mxu0 0
      %434 = vmatpush1.bf16.msra.mxu0 0
      %435 = vmatprep.subr.bf16.mxu0 0
      %436 = vmatpush1.bf16.msra.mxu0 0
      %437 = vmatprep.subr.bf16.mxu0 0
      %438 = vmatpush1.bf16.msra.mxu0 0
      %439 = vmatprep.subr.bf16.mxu0 0
      %440 = vmatpush1.bf16.msra.mxu0 0
      %441 = vmatprep.subr.bf16.mxu0 0
      %442 = vmatpush1.bf16.msra.mxu0 %v420
      %443 = vmatprep.subr.bf16.mxu0 0
      %444 = vmatpush1.bf16.msra.mxu0 %v419
      %445 = vmatprep.subr.bf16.mxu0 0
      %446 = vmatpush2.bf16.msra.mxu0 0
      %447 = vmatprep.subr.bf16.mxu0 0
      %448 = vmatpush2.bf16.msra.mxu0 0
      %449 = vmatprep.subr.bf16.mxu0 0
      %450 = vmatpush2.bf16.msra.mxu0 0
      %451 = vmatprep.subr.bf16.mxu0 0
      %452 = vmatpush2.bf16.msra.mxu0 0
      %453 = vmatprep.subr.bf16.mxu0 0
      %454 = vmatpush2.bf16.msra.mxu0 0
      %455 = vmatprep.subr.bf16.mxu0 0
      %456 = vmatpush2.bf16.msra.mxu0 0
      %457 = vmatprep.subr.bf16.mxu0 0
      %458 = vmatpush2.bf16.msra.mxu0 0
      %459 = vmatprep.subr.bf16.mxu0 0
      %460 = vmatpush2.bf16.msra.mxu0 0
      %461 = vmatprep.mubr.bf16.mxu0 0
      %462 = vmatmul.mubr.bf16.gmra.mxu0 %v424
      %v463 = vpop.f32.mrf.mxu0
      %v464 = vadd.f32 %v390, %v463
      %v465 = vpop.f32.mrf.mxu0
      %v466 = vpop.f32.mrf.mxu0
      %v467 = vadd.f32 %v393, %v466
      %v468 = vpop.f32.mrf.mxu0
      %469 = vmatprep.mubr.bf16.mxu0 0
      %470 = vmatmul.mubr.bf16.gmra.mxu0 %v427
      %v471 = vpop.f32.mrf.mxu0
      %v472 = vadd.f32 %v398, %v471
      %v473 = vpop.f32.mrf.mxu0
      %v474 = vpop.f32.mrf.mxu0
      %v475 = vpop.f32.mrf.mxu0
      %476 = vdwg.mxu0
      %v477 = vld [vmem:[%s291 + $0x8] sm:$0x7]
      %s478 = scalar_lea.vmem %s4, 32
      %v479 = vld [vmem:[%s478] sm:$0xf]
      %v480 = vld [vmem:[%s478 + $0x4] sm:$0xf]
      %v481 = vld [vmem:[%s478 + $0x8] sm:$0xf]
      %v482 = vld [vmem:[%s478 + $0xc] sm:$0xf]
      %v484 = vunpack.c.l.b16 %v477
      %v485 = vpack.c.b16 %v484, %v484
      %vm486 = vsmask.f32 7424
      %v487 = vshrl.u32 %v409, 16
      %v489 = vshll.u32 %v409, 16
      %v491 = vrot.slane %v489, 1
      %v492 = vor.u32 %v487, %v491
      %v494 = vshll.u32 %v485, 16
      %v496 = vrot.slane %v494, 1
      %v497 = vsel %vm486, %v492, %v496
      %v498 = vshrl.u32 %v485, 16
      %v500 = vor.u32 %v498, %v496
      %v505 = vunpack.c.l.b16 %v479
      %v506 = vunpack.c.l.b16 %v480
      %v507 = vunpack.c.l.b16 %v481
      %v508 = vunpack.c.l.b16 %v482
      %v509 = vpack.c.b16 %v506, %v505
      %v510 = vpack.c.b16 %v508, %v507
      %v514 = vsel %vm348, %v497, 0
      %v517 = vsel %vm348, %v500, 0
      %519 = vmatprep.subr.bf16.mxu0 0
      %520 = vmatpush1.bf16.msra.mxu0 0
      %521 = vmatprep.subr.bf16.mxu0 0
      %522 = vmatpush1.bf16.msra.mxu0 0
      %523 = vmatprep.subr.bf16.mxu0 0
      %524 = vmatpush1.bf16.msra.mxu0 0
      %525 = vmatprep.subr.bf16.mxu0 0
      %526 = vmatpush1.bf16.msra.mxu0 0
      %527 = vmatprep.subr.bf16.mxu0 0
      %528 = vmatpush1.bf16.msra.mxu0 0
      %529 = vmatprep.subr.bf16.mxu0 0
      %530 = vmatpush1.bf16.msra.mxu0 0
      %531 = vmatprep.subr.bf16.mxu0 0
      %532 = vmatpush1.bf16.msra.mxu0 %v510
      %533 = vmatprep.subr.bf16.mxu0 0
      %534 = vmatpush1.bf16.msra.mxu0 %v509
      %535 = vmatprep.subr.bf16.mxu0 0
      %536 = vmatpush2.bf16.msra.mxu0 0
      %537 = vmatprep.subr.bf16.mxu0 0
      %538 = vmatpush2.bf16.msra.mxu0 0
      %539 = vmatprep.subr.bf16.mxu0 0
      %540 = vmatpush2.bf16.msra.mxu0 0
      %541 = vmatprep.subr.bf16.mxu0 0
      %542 = vmatpush2.bf16.msra.mxu0 0
      %543 = vmatprep.subr.bf16.mxu0 0
      %544 = vmatpush2.bf16.msra.mxu0 0
      %545 = vmatprep.subr.bf16.mxu0 0
      %546 = vmatpush2.bf16.msra.mxu0 0
      %547 = vmatprep.subr.bf16.mxu0 0
      %548 = vmatpush2.bf16.msra.mxu0 0
      %549 = vmatprep.subr.bf16.mxu0 0
      %550 = vmatpush2.bf16.msra.mxu0 0
      %551 = vmatprep.mubr.bf16.mxu0 0
      %552 = vmatmul.mubr.bf16.gmra.mxu0 %v514
      %v553 = vpop.f32.mrf.mxu0
      %v554 = vadd.f32 0.0, %v553
      %v555 = vpop.f32.mrf.mxu0
      %v556 = vpop.f32.mrf.mxu0
      %v557 = vadd.f32 0.0, %v556
      %v558 = vpop.f32.mrf.mxu0
      %559 = vmatprep.mubr.bf16.mxu0 0
      %560 = vmatmul.mubr.bf16.gmra.mxu0 %v517
      %v561 = vpop.f32.mrf.mxu0
      %v562 = vadd.f32 0.0, %v561
      %v563 = vpop.f32.mrf.mxu0
      %v564 = vpop.f32.mrf.mxu0
      %v565 = vpop.f32.mrf.mxu0
      %566 = vdwg.mxu0
      %v567 = vadd.f32 %v464, %v554
      %v568 = vadd.f32 %v467, %v557
      %v569 = vadd.f32 %v472, %v562
      %v570 = vld [vmem:[%s301] sm:$0xf]
      %v571 = vld [vmem:[%s301 + $0x4] sm:$0xf]
      %v572 = vld [vmem:[%s301 + $0x8] sm:$0x3]
      %s573 = scalar_lea.vmem %s4, 48
      %v574 = vld [vmem:[%s573] sm:$0xf]
      %v575 = vld [vmem:[%s573 + $0x4] sm:$0xf]
      %v576 = vld [vmem:[%s573 + $0x8] sm:$0xf]
      %v577 = vld [vmem:[%s573 + $0xc] sm:$0xf]
      %v581 = vunpack.c.l.b16 %v570
      %v582 = vunpack.c.l.b16 %v571
      %v583 = vunpack.c.l.b16 %v572
      %v584 = vpack.c.b16 %v582, %v581
      %v585 = vpack.c.b16 %v583, %v583
      %v590 = vunpack.c.l.b16 %v574
      %v591 = vunpack.c.l.b16 %v575
      %v592 = vunpack.c.l.b16 %v576
      %v593 = vunpack.c.l.b16 %v577
      %v594 = vpack.c.b16 %v591, %v590
      %v595 = vpack.c.b16 %v593, %v592
      %v599 = vsel %vm348, %v584, 0
      %v602 = vsel %vm348, %v585, 0
      %604 = vmatprep.subr.bf16.mxu0 0
      %605 = vmatpush1.bf16.msra.mxu0 0
      %606 = vmatprep.subr.bf16.mxu0 0
      %607 = vmatpush1.bf16.msra.mxu0 0
      %608 = vmatprep.subr.bf16.mxu0 0
      %609 = vmatpush1.bf16.msra.mxu0 0
      %610 = vmatprep.subr.bf16.mxu0 0
      %611 = vmatpush1.bf16.msra.mxu0 0
      %612 = vmatprep.subr.bf16.mxu0 0
      %613 = vmatpush1.bf16.msra.mxu0 0
      %614 = vmatprep.subr.bf16.mxu0 0
      %615 = vmatpush1.bf16.msra.mxu0 0
      %616 = vmatprep.subr.bf16.mxu0 0
      %617 = vmatpush1.bf16.msra.mxu0 %v595
      %618 = vmatprep.subr.bf16.mxu0 0
      %619 = vmatpush1.bf16.msra.mxu0 %v594
      %620 = vmatprep.subr.bf16.mxu0 0
      %621 = vmatpush2.bf16.msra.mxu0 0
      %622 = vmatprep.subr.bf16.mxu0 0
      %623 = vmatpush2.bf16.msra.mxu0 0
      %624 = vmatprep.subr.bf16.mxu0 0
      %625 = vmatpush2.bf16.msra.mxu0 0
      %626 = vmatprep.subr.bf16.mxu0 0
      %627 = vmatpush2.bf16.msra.mxu0 0
      %628 = vmatprep.subr.bf16.mxu0 0
      %629 = vmatpush2.bf16.msra.mxu0 0
      %630 = vmatprep.subr.bf16.mxu0 0
      %631 = vmatpush2.bf16.msra.mxu0 0
      %632 = vmatprep.subr.bf16.mxu0 0
      %633 = vmatpush2.bf16.msra.mxu0 0
      %634 = vmatprep.subr.bf16.mxu0 0
      %635 = vmatpush2.bf16.msra.mxu0 0
      %636 = vmatprep.mubr.bf16.mxu0 0
      %637 = vmatmul.mubr.bf16.gmra.mxu0 %v599
      %v638 = vpop.f32.mrf.mxu0
      %v639 = vadd.f32 0.0, %v638
      %v640 = vpop.f32.mrf.mxu0
      %v641 = vpop.f32.mrf.mxu0
      %v642 = vadd.f32 0.0, %v641
      %v643 = vpop.f32.mrf.mxu0
      %644 = vmatprep.mubr.bf16.mxu0 0
      %645 = vmatmul.mubr.bf16.gmra.mxu0 %v602
      %v646 = vpop.f32.mrf.mxu0
      %v647 = vadd.f32 0.0, %v646
      %v648 = vpop.f32.mrf.mxu0
      %v649 = vpop.f32.mrf.mxu0
      %v650 = vpop.f32.mrf.mxu0
      %651 = vdwg.mxu0
      %v652 = vadd.f32 %v567, %v639
      %v653 = vadd.f32 %v568, %v642
      %v654 = vadd.f32 %v569, %v647
      %v655 = vld [vmem:[%s306] sm:$0xf]
      %v656 = vld [vmem:[%s306 + $0x4] sm:$0xf]
      %v657 = vld [vmem:[%s306 + $0x8] sm:$0x3]
      %s658 = scalar_lea.vmem %s4, 64
      %v659 = vld [vmem:[%s658] sm:$0xf]
      %v660 = vld [vmem:[%s658 + $0x4] sm:$0xf]
      %v661 = vld [vmem:[%s658 + $0x8] sm:$0xf]
      %v662 = vld [vmem:[%s658 + $0xc] sm:$0xf]
      %v666 = vunpack.c.l.b16 %v655
      %v667 = vunpack.c.l.b16 %v656
      %v668 = vunpack.c.l.b16 %v657
      %v669 = vpack.c.b16 %v667, %v666
      %v670 = vpack.c.b16 %v668, %v668
      %v675 = vunpack.c.l.b16 %v659
      %v676 = vunpack.c.l.b16 %v660
      %v677 = vunpack.c.l.b16 %v661
      %v678 = vunpack.c.l.b16 %v662
      %v679 = vpack.c.b16 %v676, %v675
      %v680 = vpack.c.b16 %v678, %v677
      %v684 = vsel %vm348, %v669, 0
      %v687 = vsel %vm348, %v670, 0
      %689 = vmatprep.subr.bf16.mxu0 0
      %690 = vmatpush1.bf16.msra.mxu0 0
      %691 = vmatprep.subr.bf16.mxu0 0
      %692 = vmatpush1.bf16.msra.mxu0 0
      %693 = vmatprep.subr.bf16.mxu0 0
      %694 = vmatpush1.bf16.msra.mxu0 0
      %695 = vmatprep.subr.bf16.mxu0 0
      %696 = vmatpush1.bf16.msra.mxu0 0
      %697 = vmatprep.subr.bf16.mxu0 0
      %698 = vmatpush1.bf16.msra.mxu0 0
      %699 = vmatprep.subr.bf16.mxu0 0
      %700 = vmatpush1.bf16.msra.mxu0 0
      %701 = vmatprep.subr.bf16.mxu0 0
      %702 = vmatpush1.bf16.msra.mxu0 %v680
      %703 = vmatprep.subr.bf16.mxu0 0
      %704 = vmatpush1.bf16.msra.mxu0 %v679
      %705 = vmatprep.subr.bf16.mxu0 0
      %706 = vmatpush2.bf16.msra.mxu0 0
      %707 = vmatprep.subr.bf16.mxu0 0
      %708 = vmatpush2.bf16.msra.mxu0 0
      %709 = vmatprep.subr.bf16.mxu0 0
      %710 = vmatpush2.bf16.msra.mxu0 0
      %711 = vmatprep.subr.bf16.mxu0 0
      %712 = vmatpush2.bf16.msra.mxu0 0
      %713 = vmatprep.subr.bf16.mxu0 0
      %714 = vmatpush2.bf16.msra.mxu0 0
      %715 = vmatprep.subr.bf16.mxu0 0
      %716 = vmatpush2.bf16.msra.mxu0 0
      %717 = vmatprep.subr.bf16.mxu0 0
      %718 = vmatpush2.bf16.msra.mxu0 0
      %719 = vmatprep.subr.bf16.mxu0 0
      %720 = vmatpush2.bf16.msra.mxu0 0
      %721 = vmatprep.mubr.bf16.mxu0 0
      %722 = vmatmul.mubr.bf16.gmra.mxu0 %v684
      %v723 = vpop.f32.mrf.mxu0
      %v724 = vadd.f32 0.0, %v723
      %v725 = vpop.f32.mrf.mxu0
      %v726 = vpop.f32.mrf.mxu0
      %v727 = vadd.f32 0.0, %v726
      %v728 = vpop.f32.mrf.mxu0
      %729 = vmatprep.mubr.bf16.mxu0 0
      %730 = vmatmul.mubr.bf16.gmra.mxu0 %v687
      %v731 = vpop.f32.mrf.mxu0
      %v732 = vadd.f32 0.0, %v731
      %v733 = vpop.f32.mrf.mxu0
      %v734 = vpop.f32.mrf.mxu0
      %v735 = vpop.f32.mrf.mxu0
      %736 = vdwg.mxu0
      %v737 = vadd.f32 %v652, %v724
      %v738 = vadd.f32 %v653, %v727
      %v739 = vadd.f32 %v654, %v732
      %v740 = vld [vmem:[%s301 + $0x8] sm:$0x7]
      %s741 = scalar_lea.vmem %s4, 80
      %v742 = vld [vmem:[%s741] sm:$0xf]
      %v743 = vld [vmem:[%s741 + $0x4] sm:$0xf]
      %v744 = vld [vmem:[%s741 + $0x8] sm:$0xf]
      %v745 = vld [vmem:[%s741 + $0xc] sm:$0xf]
      %v747 = vunpack.c.l.b16 %v740
      %v748 = vpack.c.b16 %v747, %v747
      %v749 = vshrl.u32 %v584, 16
      %v751 = vshll.u32 %v584, 16
      %v753 = vrot.slane %v751, 1
      %v754 = vor.u32 %v749, %v753
      %v756 = vshll.u32 %v748, 16
      %v758 = vrot.slane %v756, 1
      %v759 = vsel %vm486, %v754, %v758
      %v760 = vshrl.u32 %v748, 16
      %v762 = vor.u32 %v760, %v758
      %v767 = vunpack.c.l.b16 %v742
      %v768 = vunpack.c.l.b16 %v743
      %v769 = vunpack.c.l.b16 %v744
      %v770 = vunpack.c.l.b16 %v745
      %v771 = vpack.c.b16 %v768, %v767
      %v772 = vpack.c.b16 %v770, %v769
      %v776 = vsel %vm348, %v759, 0
      %v779 = vsel %vm348, %v762, 0
      %781 = vmatprep.subr.bf16.mxu0 0
      %782 = vmatpush1.bf16.msra.mxu0 0
      %783 = vmatprep.subr.bf16.mxu0 0
      %784 = vmatpush1.bf16.msra.mxu0 0
      %785 = vmatprep.subr.bf16.mxu0 0
      %786 = vmatpush1.bf16.msra.mxu0 0
      %787 = vmatprep.subr.bf16.mxu0 0
      %788 = vmatpush1.bf16.msra.mxu0 0
      %789 = vmatprep.subr.bf16.mxu0 0
      %790 = vmatpush1.bf16.msra.mxu0 0
      %791 = vmatprep.subr.bf16.mxu0 0
      %792 = vmatpush1.bf16.msra.mxu0 0
      %793 = vmatprep.subr.bf16.mxu0 0
      %794 = vmatpush1.bf16.msra.mxu0 %v772
      %795 = vmatprep.subr.bf16.mxu0 0
      %796 = vmatpush1.bf16.msra.mxu0 %v771
      %797 = vmatprep.subr.bf16.mxu0 0
      %798 = vmatpush2.bf16.msra.mxu0 0
      %799 = vmatprep.subr.bf16.mxu0 0
      %800 = vmatpush2.bf16.msra.mxu0 0
      %801 = vmatprep.subr.bf16.mxu0 0
      %802 = vmatpush2.bf16.msra.mxu0 0
      %803 = vmatprep.subr.bf16.mxu0 0
      %804 = vmatpush2.bf16.msra.mxu0 0
      %805 = vmatprep.subr.bf16.mxu0 0
      %806 = vmatpush2.bf16.msra.mxu0 0
      %807 = vmatprep.subr.bf16.mxu0 0
      %808 = vmatpush2.bf16.msra.mxu0 0
      %809 = vmatprep.subr.bf16.mxu0 0
      %810 = vmatpush2.bf16.msra.mxu0 0
      %811 = vmatprep.subr.bf16.mxu0 0
      %812 = vmatpush2.bf16.msra.mxu0 0
      %813 = vmatprep.mubr.bf16.mxu0 0
      %814 = vmatmul.mubr.bf16.gmra.mxu0 %v776
      %v815 = vpop.f32.mrf.mxu0
      %v816 = vadd.f32 0.0, %v815
      %v817 = vpop.f32.mrf.mxu0
      %v818 = vpop.f32.mrf.mxu0
      %v819 = vadd.f32 0.0, %v818
      %v820 = vpop.f32.mrf.mxu0
      %821 = vmatprep.mubr.bf16.mxu0 0
      %822 = vmatmul.mubr.bf16.gmra.mxu0 %v779
      %v823 = vpop.f32.mrf.mxu0
      %v824 = vadd.f32 0.0, %v823
      %v825 = vpop.f32.mrf.mxu0
      %v826 = vpop.f32.mrf.mxu0
      %v827 = vpop.f32.mrf.mxu0
      %828 = vdwg.mxu0
      %v829 = vadd.f32 %v737, %v816
      %v830 = vadd.f32 %v738, %v819
      %v831 = vadd.f32 %v739, %v824
      %v832 = vld [vmem:[%s291] sm:$0xc]
      %v833 = vld [vmem:[%s291 + $0x4] sm:$0xf]
      %v834 = vld [vmem:[%s291 + $0x8] sm:$0xf]
      %v835 = vld [vmem:[%s291 + $0xc] sm:$0x1]
      %s836 = scalar_lea.vmem %s4, 96
      %v837 = vld [vmem:[%s836] sm:$0xf]
      %v838 = vld [vmem:[%s836 + $0x4] sm:$0xf]
      %v839 = vld [vmem:[%s836 + $0x8] sm:$0xf]
      %v840 = vld [vmem:[%s836 + $0xc] sm:$0xf]
      %v845 = vunpack.c.l.b16 %v832
      %v846 = vunpack.c.l.b16 %v833
      %v847 = vunpack.c.l.b16 %v834
      %v848 = vunpack.c.l.b16 %v835
      %v849 = vpack.c.b16 %v846, %v845
      %v850 = vpack.c.b16 %v848, %v847
      %vm851 = vsmask.f32 5376
      %v853 = vshrl.u32 %v849, 16
      %v855 = vrot.slane %v853, 2
      %v856 = vshll.u32 %v849, 16
      %v858 = vrot.slane %v856, 3
      %v859 = vor.u32 %v855, %v858
      %v861 = vshrl.u32 %v850, 16
      %v863 = vrot.slane %v861, 2
      %v864 = vshll.u32 %v850, 16
      %v866 = vrot.slane %v864, 3
      %v867 = vor.u32 %v863, %v866
      %v868 = vsel %vm851, %v859, %v867
      %v873 = vunpack.c.l.b16 %v837
      %v874 = vunpack.c.l.b16 %v838
      %v875 = vunpack.c.l.b16 %v839
      %v876 = vunpack.c.l.b16 %v840
      %v877 = vpack.c.b16 %v874, %v873
      %v878 = vpack.c.b16 %v876, %v875
      %v882 = vsel %vm348, %v868, 0
      %v885 = vsel %vm348, %v867, 0
      %887 = vmatprep.subr.bf16.mxu0 0
      %888 = vmatpush1.bf16.msra.mxu0 0
      %889 = vmatprep.subr.bf16.mxu0 0
      %890 = vmatpush1.bf16.msra.mxu0 0
      %891 = vmatprep.subr.bf16.mxu0 0
      %892 = vmatpush1.bf16.msra.mxu0 0
      %893 = vmatprep.subr.bf16.mxu0 0
      %894 = vmatpush1.bf16.msra.mxu0 0
      %895 = vmatprep.subr.bf16.mxu0 0
      %896 = vmatpush1.bf16.msra.mxu0 0
      %897 = vmatprep.subr.bf16.mxu0 0
      %898 = vmatpush1.bf16.msra.mxu0 0
      %899 = vmatprep.subr.bf16.mxu0 0
      %900 = vmatpush1.bf16.msra.mxu0 %v878
      %901 = vmatprep.subr.bf16.mxu0 0
      %902 = vmatpush1.bf16.msra.mxu0 %v877
      %903 = vmatprep.subr.bf16.mxu0 0
      %904 = vmatpush2.bf16.msra.mxu0 0
      %905 = vmatprep.subr.bf16.mxu0 0
      %906 = vmatpush2.bf16.msra.mxu0 0
      %907 = vmatprep.subr.bf16.mxu0 0
      %908 = vmatpush2.bf16.msra.mxu0 0
      %909 = vmatprep.subr.bf16.mxu0 0
      %910 = vmatpush2.bf16.msra.mxu0 0
      %911 = vmatprep.subr.bf16.mxu0 0
      %912 = vmatpush2.bf16.msra.mxu0 0
      %913 = vmatprep.subr.bf16.mxu0 0
      %914 = vmatpush2.bf16.msra.mxu0 0
      %915 = vmatprep.subr.bf16.mxu0 0
      %916 = vmatpush2.bf16.msra.mxu0 0
      %917 = vmatprep.subr.bf16.mxu0 0
      %918 = vmatpush2.bf16.msra.mxu0 0
      %919 = vmatprep.mubr.bf16.mxu0 0
      %920 = vmatmul.mubr.bf16.gmra.mxu0 %v882
      %v921 = vpop.f32.mrf.mxu0
      %v922 = vadd.f32 0.0, %v921
      %v923 = vpop.f32.mrf.mxu0
      %v924 = vpop.f32.mrf.mxu0
      %v925 = vadd.f32 0.0, %v924
      %v926 = vpop.f32.mrf.mxu0
      %927 = vmatprep.mubr.bf16.mxu0 0
      %928 = vmatmul.mubr.bf16.gmra.mxu0 %v885
      %v929 = vpop.f32.mrf.mxu0
      %v930 = vadd.f32 0.0, %v929
      %v931 = vpop.f32.mrf.mxu0
      %v932 = vpop.f32.mrf.mxu0
      %v933 = vpop.f32.mrf.mxu0
      %934 = vdwg.mxu0
      %v935 = vadd.f32 %v829, %v922
      %v936 = vadd.f32 %v830, %v925
      %v937 = vadd.f32 %v831, %v930
      %v938 = vld [vmem:[%s296] sm:$0xc]
      %v939 = vld [vmem:[%s296 + $0x4] sm:$0xf]
      %v940 = vld [vmem:[%s296 + $0x8] sm:$0xf]
      %v941 = vld [vmem:[%s296 + $0xc] sm:$0x1]
      %s942 = scalar_lea.vmem %s4, 112
      %v943 = vld [vmem:[%s942] sm:$0xf]
      %v944 = vld [vmem:[%s942 + $0x4] sm:$0xf]
      %v945 = vld [vmem:[%s942 + $0x8] sm:$0xf]
      %v946 = vld [vmem:[%s942 + $0xc] sm:$0xf]
      %v951 = vunpack.c.l.b16 %v938
      %v952 = vunpack.c.l.b16 %v939
      %v953 = vunpack.c.l.b16 %v940
      %v954 = vunpack.c.l.b16 %v941
      %v955 = vpack.c.b16 %v952, %v951
      %v956 = vpack.c.b16 %v954, %v953
      %v958 = vshrl.u32 %v955, 16
      %v960 = vrot.slane %v958, 2
      %v961 = vshll.u32 %v955, 16
      %v963 = vrot.slane %v961, 3
      %v964 = vor.u32 %v960, %v963
      %v966 = vshrl.u32 %v956, 16
      %v968 = vrot.slane %v966, 2
      %v969 = vshll.u32 %v956, 16
      %v971 = vrot.slane %v969, 3
      %v972 = vor.u32 %v968, %v971
      %v973 = vsel %vm851, %v964, %v972
      %v978 = vunpack.c.l.b16 %v943
      %v979 = vunpack.c.l.b16 %v944
      %v980 = vunpack.c.l.b16 %v945
      %v981 = vunpack.c.l.b16 %v946
      %v982 = vpack.c.b16 %v979, %v978
      %v983 = vpack.c.b16 %v981, %v980
      %v987 = vsel %vm348, %v973, 0
      %v990 = vsel %vm348, %v972, 0
      %992 = vmatprep.subr.bf16.mxu0 0
      %993 = vmatpush1.bf16.msra.mxu0 0
      %994 = vmatprep.subr.bf16.mxu0 0
      %995 = vmatpush1.bf16.msra.mxu0 0
      %996 = vmatprep.subr.bf16.mxu0 0
      %997 = vmatpush1.bf16.msra.mxu0 0
      %998 = vmatprep.subr.bf16.mxu0 0
      %999 = vmatpush1.bf16.msra.mxu0 0
      %1000 = vmatprep.subr.bf16.mxu0 0
      %1001 = vmatpush1.bf16.msra.mxu0 0
      %1002 = vmatprep.subr.bf16.mxu0 0
      %1003 = vmatpush1.bf16.msra.mxu0 0
      %1004 = vmatprep.subr.bf16.mxu0 0
      %1005 = vmatpush1.bf16.msra.mxu0 %v983
      %1006 = vmatprep.subr.bf16.mxu0 0
      %1007 = vmatpush1.bf16.msra.mxu0 %v982
      %1008 = vmatprep.subr.bf16.mxu0 0
      %1009 = vmatpush2.bf16.msra.mxu0 0
      %1010 = vmatprep.subr.bf16.mxu0 0
      %1011 = vmatpush2.bf16.msra.mxu0 0
      %1012 = vmatprep.subr.bf16.mxu0 0
      %1013 = vmatpush2.bf16.msra.mxu0 0
      %1014 = vmatprep.subr.bf16.mxu0 0
      %1015 = vmatpush2.bf16.msra.mxu0 0
      %1016 = vmatprep.subr.bf16.mxu0 0
      %1017 = vmatpush2.bf16.msra.mxu0 0
      %1018 = vmatprep.subr.bf16.mxu0 0
      %1019 = vmatpush2.bf16.msra.mxu0 0
      %1020 = vmatprep.subr.bf16.mxu0 0
      %1021 = vmatpush2.bf16.msra.mxu0 0
      %1022 = vmatprep.subr.bf16.mxu0 0
      %1023 = vmatpush2.bf16.msra.mxu0 0
      %1024 = vmatprep.mubr.bf16.mxu0 0
      %1025 = vmatmul.mubr.bf16.gmra.mxu0 %v987
      %v1026 = vpop.f32.mrf.mxu0
      %v1027 = vadd.f32 0.0, %v1026
      %v1028 = vpop.f32.mrf.mxu0
      %v1029 = vpop.f32.mrf.mxu0
      %v1030 = vadd.f32 0.0, %v1029
      %v1031 = vpop.f32.mrf.mxu0
      %1032 = vmatprep.mubr.bf16.mxu0 0
      %1033 = vmatmul.mubr.bf16.gmra.mxu0 %v990
      %v1034 = vpop.f32.mrf.mxu0
      %v1035 = vadd.f32 0.0, %v1034
      %v1036 = vpop.f32.mrf.mxu0
      %v1037 = vpop.f32.mrf.mxu0
      %v1038 = vpop.f32.mrf.mxu0
      %1039 = vdwg.mxu0
      %v1040 = vadd.f32 %v935, %v1027
      %v1041 = vadd.f32 %v936, %v1030
      %v1042 = vadd.f32 %v937, %v1035
      %v1043 = vld [vmem:[%s291] sm:$0x8]
      %s1044 = scalar_lea.vmem %s4, 128
      %v1045 = vld [vmem:[%s1044] sm:$0xf]
      %v1046 = vld [vmem:[%s1044 + $0x4] sm:$0xf]
      %v1047 = vld [vmem:[%s1044 + $0x8] sm:$0xf]
      %v1048 = vld [vmem:[%s1044 + $0xc] sm:$0xf]
      %v1050 = vunpack.c.l.b16 %v1043
      %v1051 = vpack.c.b16 %v846, %v1050
      %vm1052 = vcmask 1044480
      %v1053 = vrot.slane %v1051, 3
      %v1054 = vrot.slane %v850, 3
      %v1055 = vsel %vm1052, %v1053, %v1054
      %v1060 = vunpack.c.l.b16 %v1045
      %v1061 = vunpack.c.l.b16 %v1046
      %v1062 = vunpack.c.l.b16 %v1047
      %v1063 = vunpack.c.l.b16 %v1048
      %v1064 = vpack.c.b16 %v1061, %v1060
      %v1065 = vpack.c.b16 %v1063, %v1062
      %v1069 = vsel %vm348, %v1055, 0
      %v1072 = vsel %vm348, %v1054, 0
      %1074 = vmatprep.subr.bf16.mxu0 0
      %1075 = vmatpush1.bf16.msra.mxu0 0
      %1076 = vmatprep.subr.bf16.mxu0 0
      %1077 = vmatpush1.bf16.msra.mxu0 0
      %1078 = vmatprep.subr.bf16.mxu0 0
      %1079 = vmatpush1.bf16.msra.mxu0 0
      %1080 = vmatprep.subr.bf16.mxu0 0
      %1081 = vmatpush1.bf16.msra.mxu0 0
      %1082 = vmatprep.subr.bf16.mxu0 0
      %1083 = vmatpush1.bf16.msra.mxu0 0
      %1084 = vmatprep.subr.bf16.mxu0 0
      %1085 = vmatpush1.bf16.msra.mxu0 0
      %1086 = vmatprep.subr.bf16.mxu0 0
      %1087 = vmatpush1.bf16.msra.mxu0 %v1065
      %1088 = vmatprep.subr.bf16.mxu0 0
      %1089 = vmatpush1.bf16.msra.mxu0 %v1064
      %1090 = vmatprep.subr.bf16.mxu0 0
      %1091 = vmatpush2.bf16.msra.mxu0 0
      %1092 = vmatprep.subr.bf16.mxu0 0
      %1093 = vmatpush2.bf16.msra.mxu0 0
      %1094 = vmatprep.subr.bf16.mxu0 0
      %1095 = vmatpush2.bf16.msra.mxu0 0
      %1096 = vmatprep.subr.bf16.mxu0 0
      %1097 = vmatpush2.bf16.msra.mxu0 0
      %1098 = vmatprep.subr.bf16.mxu0 0
      %1099 = vmatpush2.bf16.msra.mxu0 0
      %1100 = vmatprep.subr.bf16.mxu0 0
      %1101 = vmatpush2.bf16.msra.mxu0 0
      %1102 = vmatprep.subr.bf16.mxu0 0
      %1103 = vmatpush2.bf16.msra.mxu0 0
      %1104 = vmatprep.subr.bf16.mxu0 0
      %1105 = vmatpush2.bf16.msra.mxu0 0
      %1106 = vmatprep.mubr.bf16.mxu0 0
      %1107 = vmatmul.mubr.bf16.gmra.mxu0 %v1069
      %v1108 = vpop.f32.mrf.mxu0
      %v1109 = vadd.f32 0.0, %v1108
      %v1110 = vpop.f32.mrf.mxu0
      %v1111 = vpop.f32.mrf.mxu0
      %v1112 = vadd.f32 0.0, %v1111
      %v1113 = vpop.f32.mrf.mxu0
      %1114 = vmatprep.mubr.bf16.mxu0 0
      %1115 = vmatmul.mubr.bf16.gmra.mxu0 %v1072
      %v1116 = vpop.f32.mrf.mxu0
      %v1117 = vadd.f32 0.0, %v1116
      %v1118 = vpop.f32.mrf.mxu0
      %v1119 = vpop.f32.mrf.mxu0
      %v1120 = vpop.f32.mrf.mxu0
      %1121 = vdwg.mxu0
      %v1122 = vadd.f32 %v1040, %v1109
      %v1123 = vadd.f32 %v1041, %v1112
      %v1124 = vadd.f32 %v1042, %v1117
      %v1125 = vld [vmem:[%s5] sm:$0x1]
      %v1127 = vlaneseq
      %v1128 = vshrl.u32 %v1127, 7
      %v1129 = vsub.s32 0, %v1128
      %v1130 = vrot.slane %v1125, %v1129
      %v1132 = vadd.f32 %v1122, %v1130
      %v1133 = vadd.f32 %v1123, %v1130
      %v1134 = vadd.f32 %v1124, %v1130
      %v1135 = vmax.f32 %v1132, 0.0
      %v1136 = vmax.f32 %v1133, 0.0
      %v1137 = vmax.f32 %v1134, 0.0
      %v1138 = vpack.c.bf16 %v1136, %v1135
      %v1139 = vpack.c.bf16 %v1137, %v1137
      %v1142 = vunpack.c.l.b16 %v1138
      %v1143 = vunpack.c.h.b16 %v1138
      %v1144 = vunpack.c.l.b16 %v1139
      %v1145 = vpack.c.b16 %v1142, %v1142
      %v1146 = vpack.c.b16 %v1143, %v1143
      %v1147 = vpack.c.b16 %v1144, %v1144
      %vm1151 = vcmask 519168
      %1152 = vst.msk [vmem:[%s311] sm:$0xf] %vm1151, %v1145
      %1153 = vst.msk [vmem:[%s311 + $0x4] sm:$0xf] %vm1151, %v1146
      %vm1154 = vcmask 517120
      %1155 = vst.msk [vmem:[%s311 + $0x8] sm:$0x3] %vm1154, %v1147
      %p1156 = scmp.lt.s32.totalorder %s17, 1
      %s1157 = scalar_select %p1156, %s17, 1
      %s1158 = smul.addr %s1157, 3
      %s1159 = smul.addr %s1158, 4
      %s1160 = scalar_lea.vmem %s6, %s1159
      // Predicated region
      $region45: #{forward.6} parent=43 // pred_check
        %p1161 = pneg %p181
      $region46: #{forward.6} parent=43 // pred_check_branch
        %1163 = sbr.rel (%p1161) target = $region48
      $region47: #{forward.6} parent=43 // pred_region
        _
      $region48: #{forward.6} parent=43 // pred_fallthru
        _
    $region44: #{forward.6} parent=5 // pred_fallthru
      _
    %p1164 = scmp.le.s32.totalorder 2, %s12
    // Predicated region
    $region49: #{forward.6} parent=5 // pred_check
      %p1165 = pneg %p1164
    $region50: #{forward.6} parent=5 // pred_check_branch
      %1167 = sbr.rel (%p1165) target = $region52
    $region51: #{forward.6} parent=5 // pred_region
      %s1168 = ssub.s32 %s12, 2
      // Predicated region
      $region53: #{forward.6} parent=51 // pred_check
        %p1169 = pneg %p187
      $region54: #{forward.6} parent=51 // pred_check_branch
        %1171 = sbr.rel (%p1169) target = $region56
      $region55: #{forward.6} parent=51 // pred_region
        %p1172 = scmp.lt.s32.totalorder %s18, 1
        %s1173 = scalar_select %p1172, %s18, 1
        %s1174 = smul.addr %s1173, 3
        %s1175 = smul.addr %s1174, 4
        %s1176 = scalar_lea.vmem %s6, %s1175
      $region56: #{forward.6} parent=51 // pred_fallthru
        _
    $region52: #{forward.6} parent=5 // pred_fallthru
      _
  $region6: #{forward.6} parent=0 // loop_footer
    %s16 = sadd.s32 1, %s12
  $region7: #{forward.6} parent=0 // loop_footer_branch
    %11 = sbr.rel target = $region3
  $region8: #{forward.6} parent=0 // loop_exit
    _

// kernel: forward.7
$region0: #{forward.7}
  #allocation0 [shape = 'u32[]', space=smem, size = 0x4, offset = 0x4, fixed_abs, tag = 'smem constant byte address 0x4 - core index']
  #allocation1 [shape = 'u32[144,128]{1,0:T(1,128)}', space=vmem, size = 0x12000, scoped, tag = 'internal scratch']
  %s0 = inlined_call_operand.vmem [shape: bf16[2,16,64], index: 0, kind: input, shape index: {}]
  %s1 = inlined_call_operand.vmem [shape: bf16[2,16,64], index: 1, kind: input, shape index: {}]
  %s2 = inlined_call_operand.vmem [shape: bf16[2,16,64], index: 2, kind: input, shape index: {}]
  %s3 = inlined_call_operand.vmem [shape: bf16[2,16,64], index: 3, kind: input, shape index: {}]
  %s4 = inlined_call_operand.hbm [shape: bf16[9,64,64], index: 4, kind: input, shape index: {}]
  %s5 = inlined_call_operand.vmem [shape: f32[1,64], index: 5, kind: input, shape index: {}]
  %s6 = inlined_call_operand.vmem [shape: bf16[2,6,64], index: 6, kind: output, shape index: {}]
  %s7 = sld [smem:[#allocation0]]
  $region61: #{forward.7} parent=0
    _
  %s9 = ssub.s32 1, %s7
  %s10 = scalar_select 0, %s9, %s7
  $region1: #{forward.7} parent=0
    #allocation2 [shape = 'u8[147456]{0}', space=vmem, size = 0x24000, scoped, tag = 'input window, operand 4, single buffered']
    #allocation3 [shape = 's32[2]{0}', space=sflag, size = 0x8, scoped, tag = 'scoped memory for forward.7']
    %11 = vsyncpa [#allocation3], 0
    loop: start=0, step=1, limit=4
    $region2: #{forward.7} parent=1 // loop_pre_header
      _
    $region3: #{forward.7} parent=1 // loop_header
      %s13 = sphi 0, %s17
      %p14 = scmp.ge.s32.totalorder %s13, 4
      %s23 = sphi 0, %s25
      %s26 = sphi 0, %s23
      %s27 = sphi 0, %s26
      %s43 = sphi 0, %s27
      %s49 = sphi 0, %s51
      %s52 = sphi 0, %s49
      %s53 = sphi 0, %s52
      %s69 = sphi 0, %s53
      %s75 = sphi 0, %s77
      %s78 = sphi 0, %s75
      %s79 = sphi 0, %s78
      %s95 = sphi 0, %s79
      %s101 = sphi 0, %s103
      %s104 = sphi 0, %s101
      %s105 = sphi 0, %s104
      %s121 = sphi 0, %s105
      %s125 = sphi 0, %s125
      %s127 = sphi 0, %s125
      %s128 = sphi 0, %s127
      %s142 = sphi 0, %s128
      %s146 = sphi 0, %s146
      %s148 = sphi 0, %s146
      %s149 = sphi 0, %s148
      %s163 = sphi 0, %s149
      %s169 = sphi 0, %s171
      %s172 = sphi 0, %s169
      %s173 = sphi 0, %s172
      %s189 = sphi 0, %s173
    $region4: #{forward.7} parent=1 // loop_header_branch
      %16 = sbr.rel (%p14) target = $region8
    $region5: #{forward.7} parent=1 // loop_body
      %s18 = ssub.s32 %s13, 1
      %s19 = ssub.s32 %s13, 2
      %s20 = sadd.s32 %s13, 1
      %s21 = ssub.s32 %s13, %s20
      %p22 = scmp.eq.s32.totalorder %s21, 0
      %s24 = sadd.s32 %s23, 1
      %s25 = scalar_select %p22, %s23, %s24
      %p28 = pneg %p22
      %p29 = scmp.eq.s32.totalorder %s13, 1
      %p30 = por %p28, %p29
      %p31 = scmp.ne.s32.totalorder %s23, %s26
      %p32 = scmp.eq.s32.totalorder %s13, 0
      %p33 = por %p31, %p32
      %p34 = scmp.ne.s32.totalorder %s23, %s26
      %p35 = scmp.eq.s32.totalorder %s18, 1
      %p36 = por %p34, %p35
      %p37 = scmp.ne.s32.totalorder %s26, %s27
      %p38 = scmp.eq.s32.totalorder %s18, 0
      %p39 = por %p37, %p38
      %p40 = scmp.ne.s32.totalorder %s26, %s27
      %p41 = scmp.eq.s32.totalorder %s19, 1
      %p42 = por %p40, %p41
      %p44 = scmp.ne.s32.totalorder %s27, %s43
      %p45 = scmp.eq.s32.totalorder %s19, 0
      %p46 = por %p44, %p45
      %s47 = ssub.s32 %s13, %s20
      %p48 = scmp.eq.s32.totalorder %s47, 0
      %s50 = sadd.s32 %s49, 1
      %s51 = scalar_select %p48, %s49, %s50
      %p54 = pneg %p48
      %p55 = scmp.eq.s32.totalorder %s13, 1
      %p56 = por %p54, %p55
      %p57 = scmp.ne.s32.totalorder %s49, %s52
      %p58 = scmp.eq.s32.totalorder %s13, 0
      %p59 = por %p57, %p58
      %p60 = scmp.ne.s32.totalorder %s49, %s52
      %p61 = scmp.eq.s32.totalorder %s18, 1
      %p62 = por %p60, %p61
      %p63 = scmp.ne.s32.totalorder %s52, %s53
      %p64 = scmp.eq.s32.totalorder %s18, 0
      %p65 = por %p63, %p64
      %p66 = scmp.ne.s32.totalorder %s52, %s53
      %p67 = scmp.eq.s32.totalorder %s19, 1
      %p68 = por %p66, %p67
      %p70 = scmp.ne.s32.totalorder %s53, %s69
      %p71 = scmp.eq.s32.totalorder %s19, 0
      %p72 = por %p70, %p71
      %s73 = ssub.s32 %s13, %s20
      %p74 = scmp.eq.s32.totalorder %s73, 0
      %s76 = sadd.s32 %s75, 1
      %s77 = scalar_select %p74, %s75, %s76
      %p80 = pneg %p74
      %p81 = scmp.eq.s32.totalorder %s13, 1
      %p82 = por %p80, %p81
      %p83 = scmp.ne.s32.totalorder %s75, %s78
      %p84 = scmp.eq.s32.totalorder %s13, 0
      %p85 = por %p83, %p84
      %p86 = scmp.ne.s32.totalorder %s75, %s78
      %p87 = scmp.eq.s32.totalorder %s18, 1
      %p88 = por %p86, %p87
      %p89 = scmp.ne.s32.totalorder %s78, %s79
      %p90 = scmp.eq.s32.totalorder %s18, 0
      %p91 = por %p89, %p90
      %p92 = scmp.ne.s32.totalorder %s78, %s79
      %p93 = scmp.eq.s32.totalorder %s19, 1
      %p94 = por %p92, %p93
      %p96 = scmp.ne.s32.totalorder %s79, %s95
      %p97 = scmp.eq.s32.totalorder %s19, 0
      %p98 = por %p96, %p97
      %s99 = ssub.s32 %s13, %s20
      %p100 = scmp.eq.s32.totalorder %s99, 0
      %s102 = sadd.s32 %s101, 1
      %s103 = scalar_select %p100, %s101, %s102
      %p106 = pneg %p100
      %p107 = scmp.eq.s32.totalorder %s13, 1
      %p108 = por %p106, %p107
      %p109 = scmp.ne.s32.totalorder %s101, %s104
      %p110 = scmp.eq.s32.totalorder %s13, 0
      %p111 = por %p109, %p110
      %p112 = scmp.ne.s32.totalorder %s101, %s104
      %p113 = scmp.eq.s32.totalorder %s18, 1
      %p114 = por %p112, %p113
      %p115 = scmp.ne.s32.totalorder %s104, %s105
      %p116 = scmp.eq.s32.totalorder %s18, 0
      %p117 = por %p115, %p116
      %p118 = scmp.ne.s32.totalorder %s104, %s105
      %p119 = scmp.eq.s32.totalorder %s19, 1
      %p120 = por %p118, %p119
      %p122 = scmp.ne.s32.totalorder %s105, %s121
      %p123 = scmp.eq.s32.totalorder %s19, 0
      %p124 = por %p122, %p123
      %s126 = sadd.s32 %s125, 1
      %p129 = scmp.eq.s32.totalorder %s13, 1
      %p130 = scmp.ne.s32.totalorder %s125, %s127
      %p131 = scmp.eq.s32.totalorder %s13, 0
      %p132 = por %p130, %p131
      %p133 = scmp.ne.s32.totalorder %s125, %s127
      %p134 = scmp.eq.s32.totalorder %s18, 1
      %p135 = por %p133, %p134
      %p136 = scmp.ne.s32.totalorder %s127, %s128
      %p137 = scmp.eq.s32.totalorder %s18, 0
      %p138 = por %p136, %p137
      %p139 = scmp.ne.s32.totalorder %s127, %s128
      %p140 = scmp.eq.s32.totalorder %s19, 1
      %p141 = por %p139, %p140
      %p143 = scmp.ne.s32.totalorder %s128, %s142
      %p144 = scmp.eq.s32.totalorder %s19, 0
      %p145 = por %p143, %p144
      %s147 = sadd.s32 %s146, 1
      %p150 = scmp.eq.s32.totalorder %s13, 1
      %p151 = scmp.ne.s32.totalorder %s146, %s148
      %p152 = scmp.eq.s32.totalorder %s13, 0
      %p153 = por %p151, %p152
      %p154 = scmp.ne.s32.totalorder %s146, %s148
      %p155 = scmp.eq.s32.totalorder %s18, 1
      %p156 = por %p154, %p155
      %p157 = scmp.ne.s32.totalorder %s148, %s149
      %p158 = scmp.eq.s32.totalorder %s18, 0
      %p159 = por %p157, %p158
      %p160 = scmp.ne.s32.totalorder %s148, %s149
      %p161 = scmp.eq.s32.totalorder %s19, 1
      %p162 = por %p160, %p161
      %p164 = scmp.ne.s32.totalorder %s149, %s163
      %p165 = scmp.eq.s32.totalorder %s19, 0
      %p166 = por %p164, %p165
      %s167 = ssub.s32 %s13, %s20
      %p168 = scmp.eq.s32.totalorder %s167, 0
      %s170 = sadd.s32 %s169, 1
      %s171 = scalar_select %p168, %s169, %s170
      %p174 = pneg %p168
      %p175 = scmp.eq.s32.totalorder %s13, 1
      %p176 = por %p174, %p175
      %p177 = scmp.ne.s32.totalorder %s169, %s172
      %p178 = scmp.eq.s32.totalorder %s13, 0
      %p179 = por %p177, %p178
      %p180 = scmp.ne.s32.totalorder %s169, %s172
      %p181 = scmp.eq.s32.totalorder %s18, 1
      %p182 = por %p180, %p181
      %p183 = scmp.ne.s32.totalorder %s172, %s173
      %p184 = scmp.eq.s32.totalorder %s18, 0
      %p185 = por %p183, %p184
      %p186 = scmp.ne.s32.totalorder %s172, %s173
      %p187 = scmp.eq.s32.totalorder %s19, 1
      %p188 = por %p186, %p187
      %p190 = scmp.ne.s32.totalorder %s173, %s189
      %p191 = scmp.eq.s32.totalorder %s19, 0
      %p192 = por %p190, %p191
      %p193 = scmp.le.s32.totalorder 1, %s13
      %p194 = scmp.lt.s32.totalorder %s13, 3
      %p195 = pnand %p193, %p194
      %p196 = pneg %p195
      // Predicated region
      $region9: #{forward.7} parent=5 // pred_check
        _
      $region10: #{forward.7} parent=5 // pred_check_branch
        %198 = sbr.rel (%p195) target = $region12
      $region11: #{forward.7} parent=5 // pred_region
        %s199 = ssub.s32 %s13, 1
        // Predicated region
        $region13: #{forward.7} parent=11 // pred_check
          %p200 = pneg %p138
        $region14: #{forward.7} parent=11 // pred_check_branch
          %202 = sbr.rel (%p200) target = $region16
        $region15: #{forward.7} parent=11 // pred_region
          %s204 = ssub.s32 4608, 4608
          %205 = vsyncadd [#allocation3], %s204
          %s206 = sshll.u32 [#allocation2], 4
          %s207 = int_to_ptr.vmem [resolvable:$true] %s206
          %212 = dma.hbm_to_vmem [thread:$0]  %s4, 4608, %s207, [#allocation3], 64, 64, 4
        $region16: #{forward.7} parent=11 // pred_fallthru
          _
        // Predicated region
        $region17: #{forward.7} parent=11 // pred_check
          %p213 = pneg %p159
        $region18: #{forward.7} parent=11 // pred_check_branch
          %215 = sbr.rel (%p213) target = $region20
        $region19: #{forward.7} parent=11 // pred_region
          _
        $region20: #{forward.7} parent=11 // pred_fallthru
          _
      $region12: #{forward.7} parent=5 // pred_fallthru
        _
      %p216 = scmp.lt.s32.totalorder %s13, 2
      // Predicated region
      $region21: #{forward.7} parent=5 // pred_check
        %p217 = pneg %p216
      $region22: #{forward.7} parent=5 // pred_check_branch
        %219 = sbr.rel (%p217) target = $region24
      $region23: #{forward.7} parent=5 // pred_region
        // Predicated region
        $region25: #{forward.7} parent=23 // pred_check
          %p220 = pneg %p33
        $region26: #{forward.7} parent=23 // pred_check_branch
          %222 = sbr.rel (%p220) target = $region28
        $region27: #{forward.7} parent=23 // pred_region
          %p223 = scmp.lt.s32.totalorder %s13, 1
          %s224 = scalar_select %p223, %s13, 1
          %s225 = smul.addr %s224, 2
          %s226 = smul.addr %s225, 4
          %s227 = scalar_lea.vmem %s0, %s226
        $region28: #{forward.7} parent=23 // pred_fallthru
          _
        // Predicated region
        $region29: #{forward.7} parent=23 // pred_check
          %p228 = pneg %p59
        $region30: #{forward.7} parent=23 // pred_check_branch
          %230 = sbr.rel (%p228) target = $region32
        $region31: #{forward.7} parent=23 // pred_region
          %p231 = scmp.lt.s32.totalorder %s13, 1
          %s232 = scalar_select %p231, %s13, 1
          %s233 = smul.addr %s232, 2
          %s234 = smul.addr %s233, 4
          %s235 = scalar_lea.vmem %s1, %s234
        $region32: #{forward.7} parent=23 // pred_fallthru
          _
        // Predicated region
        $region33: #{forward.7} parent=23 // pred_check
          %p236 = pneg %p85
        $region34: #{forward.7} parent=23 // pred_check_branch
          %238 = sbr.rel (%p236) target = $region36
        $region35: #{forward.7} parent=23 // pred_region
          %p239 = scmp.lt.s32.totalorder %s13, 1
          %s240 = scalar_select %p239, %s13, 1
          %s241 = smul.addr %s240, 2
          %s242 = smul.addr %s241, 4
          %s243 = scalar_lea.vmem %s2, %s242
        $region36: #{forward.7} parent=23 // pred_fallthru
          _
        // Predicated region
        $region37: #{forward.7} parent=23 // pred_check
          %p244 = pneg %p111
        $region38: #{forward.7} parent=23 // pred_check_branch
          %246 = sbr.rel (%p244) target = $region40
        $region39: #{forward.7} parent=23 // pred_region
          %p247 = scmp.lt.s32.totalorder %s13, 1
          %s248 = scalar_select %p247, %s13, 1
          %s249 = smul.addr %s248, 2
          %s250 = smul.addr %s249, 4
          %s251 = scalar_lea.vmem %s3, %s250
        $region40: #{forward.7} parent=23 // pred_fallthru
          _
      $region24: #{forward.7} parent=5 // pred_fallthru
        _
      %p252 = scmp.le.s32.totalorder 1, %s13
      %p253 = scmp.lt.s32.totalorder %s13, 3
      %p254 = pnand %p252, %p253
      %p255 = pneg %p254
      // Predicated region
      $region41: #{forward.7} parent=5 // pred_check
        _
      $region42: #{forward.7} parent=5 // pred_check_branch
        %257 = sbr.rel (%p254) target = $region44
      $region43: #{forward.7} parent=5 // pred_region
        %s258 = ssub.s32 %s13, 1
        // Predicated region
        $region45: #{forward.7} parent=43 // pred_check
          %p259 = pneg %p138
        $region46: #{forward.7} parent=43 // pred_check_branch
          %261 = sbr.rel (%p259) target = $region48
        $region47: #{forward.7} parent=43 // pred_region
          %262 = dma.done [#allocation3], 4608
        $region48: #{forward.7} parent=43 // pred_fallthru
          _
        %p263 = scmp.lt.s32.totalorder %s18, 1
        %s264 = scalar_select %p263, %s18, 1
        %s265 = smul.addr %s264, 2
        %s266 = smul.addr %s265, 4
        %s267 = scalar_lea.vmem %s0, %s266
        %p268 = pneg %p39
        %p269 = pneg %p36
        %p270 = scmp.lt.s32.totalorder %s18, 1
        %s271 = scalar_select %p270, %s18, 1
        %s272 = smul.addr %s271, 2
        %s273 = smul.addr %s272, 4
        %s274 = scalar_lea.vmem %s1, %s273
        %p275 = pneg %p65
        %p276 = pneg %p62
        %p277 = scmp.lt.s32.totalorder %s18, 1
        %s278 = scalar_select %p277, %s18, 1
        %s279 = smul.addr %s278, 2
        %s280 = smul.addr %s279, 4
        %s281 = scalar_lea.vmem %s2, %s280
        %p282 = pneg %p91
        %p283 = pneg %p88
        %p284 = scmp.lt.s32.totalorder %s18, 1
        %s285 = scalar_select %p284, %s18, 1
        %s286 = smul.addr %s285, 2
        %s287 = smul.addr %s286, 4
        %s288 = scalar_lea.vmem %s3, %s287
        %p289 = pneg %p117
        %p290 = pneg %p114
        %p291 = pneg %p138
        %p292 = pneg %p135
        %p293 = pneg %p159
        %p294 = pneg %p156
        %p295 = pneg %p185
        %p296 = pneg %p182
        %p297 = scmp.lt.s32.totalorder %s18, 1
        %s298 = scalar_select %p297, %s18, 1
        %s299 = smul.addr %s298, 4
        %s300 = scalar_lea.vmem %s6, %s299
        %p301 = scmp.lt.s32.totalorder %s18, 1
        %s302 = scalar_select %p301, %s18, 1
        %s303 = smul.addr %s302, 2
        %s304 = smul.addr %s303, 4
        %s305 = scalar_lea.vmem %s0, %s304
        %p306 = scmp.lt.s32.totalorder %s18, 1
        %s307 = scalar_select %p306, %s18, 1
        %s308 = smul.addr %s307, 2
        %s309 = smul.addr %s308, 4
        %s310 = scalar_lea.vmem %s1, %s309
        %p311 = scmp.lt.s32.totalorder %s18, 1
        %s312 = scalar_select %p311, %s18, 1
        %s313 = smul.addr %s312, 2
        %s314 = smul.addr %s313, 4
        %s315 = scalar_lea.vmem %s2, %s314
        %p316 = scmp.lt.s32.totalorder %s18, 1
        %s317 = scalar_select %p316, %s18, 1
        %s318 = smul.addr %s317, 2
        %s319 = smul.addr %s318, 4
        %s320 = scalar_lea.vmem %s3, %s319
        %p321 = scmp.lt.s32.totalorder %s18, 1
        %s322 = scalar_select %p321, %s18, 1
        %s323 = smul.addr %s322, 4
        %s324 = scalar_lea.vmem %s6, %s323
        %v326 = vld [vmem:[%s305] sm:$0x7]
        %v327 = vld [vmem:[#allocation2] sm:$0xf]
        %v328 = vld [vmem:[#allocation2 + $0x4] sm:$0xf]
        %v329 = vld [vmem:[#allocation2 + $0x8] sm:$0xf]
        %v330 = vld [vmem:[#allocation2 + $0xc] sm:$0xf]
        %v331 = vld [vmem:[#allocation2 + $0x10] sm:$0xf]
        %v332 = vld [vmem:[#allocation2 + $0x14] sm:$0xf]
        %v333 = vld [vmem:[#allocation2 + $0x18] sm:$0xf]
        %v334 = vld [vmem:[#allocation2 + $0x1c] sm:$0xf]
        %v335 = vld [vmem:[%s310] sm:$0x7]
        %s336 = scalar_lea.vmem [#allocation2], 32
        %v337 = vld [vmem:[%s336] sm:$0xf]
        %v338 = vld [vmem:[%s336 + $0x4] sm:$0xf]
        %v339 = vld [vmem:[%s336 + $0x8] sm:$0xf]
        %v340 = vld [vmem:[%s336 + $0xc] sm:$0xf]
        %v341 = vld [vmem:[%s336 + $0x10] sm:$0xf]
        %v342 = vld [vmem:[%s336 + $0x14] sm:$0xf]
        %v343 = vld [vmem:[%s336 + $0x18] sm:$0xf]
        %v344 = vld [vmem:[%s336 + $0x1c] sm:$0xf]
        %v353 = vunpack.c.l.b16 %v337
        %v354 = vunpack.c.l.b16 %v338
        %v355 = vunpack.c.l.b16 %v339
        %v356 = vunpack.c.l.b16 %v340
        %v357 = vunpack.c.l.b16 %v341
        %v358 = vunpack.c.l.b16 %v342
        %v359 = vunpack.c.l.b16 %v343
        %v360 = vunpack.c.l.b16 %v344
        %v361 = vpack.c.b16 %v354, %v353
        %v362 = vpack.c.b16 %v356, %v355
        %v363 = vpack.c.b16 %v358, %v357
        %v364 = vpack.c.b16 %v360, %v359
        %vm369 = vcmask 523264
        %v371 = vsel %vm369, %v335, 0
        %373 = vmatprep.subr.bf16.mxu0 0
        %374 = vmatpush1.bf16.msra.mxu0 0
        %375 = vmatprep.subr.bf16.mxu0 0
        %376 = vmatpush1.bf16.msra.mxu0 0
        %377 = vmatprep.subr.bf16.mxu0 0
        %378 = vmatpush1.bf16.msra.mxu0 0
        %379 = vmatprep.subr.bf16.mxu0 0
        %380 = vmatpush1.bf16.msra.mxu0 0
        %381 = vmatprep.subr.bf16.mxu0 0
        %382 = vmatpush1.bf16.msra.mxu0 %v364
        %383 = vmatprep.subr.bf16.mxu0 0
        %384 = vmatpush1.bf16.msra.mxu0 %v363
        %385 = vmatprep.subr.bf16.mxu0 0
        %386 = vmatpush1.bf16.msra.mxu0 %v362
        %387 = vmatprep.subr.bf16.mxu0 0
        %388 = vmatpush1.bf16.msra.mxu0 %v361
        %389 = vmatprep.subr.bf16.mxu0 0
        %390 = vmatpush2.bf16.msra.mxu0 0
        %391 = vmatprep.subr.bf16.mxu0 0
        %392 = vmatpush2.bf16.msra.mxu0 0
        %393 = vmatprep.subr.bf16.mxu0 0
        %394 = vmatpush2.bf16.msra.mxu0 0
        %395 = vmatprep.subr.bf16.mxu0 0
        %396 = vmatpush2.bf16.msra.mxu0 0
        %397 = vmatprep.subr.bf16.mxu0 0
        %398 = vmatpush2.bf16.msra.mxu0 0
        %399 = vmatprep.subr.bf16.mxu0 0
        %400 = vmatpush2.bf16.msra.mxu0 0
        %401 = vmatprep.subr.bf16.mxu0 0
        %402 = vmatpush2.bf16.msra.mxu0 0
        %403 = vmatprep.subr.bf16.mxu0 0
        %404 = vmatpush2.bf16.msra.mxu0 0
        %405 = vmatprep.mubr.bf16.mxu0 0
        %406 = vmatmul.mubr.bf16.gmra.mxu0 %v371
        %v407 = vpop.f32.mrf.mxu0
        %v408 = vadd.f32 0.0, %v407
        %v409 = vpop.f32.mrf.mxu0
        %v410 = vpop.f32.mrf.mxu0
        %v411 = vpop.f32.mrf.mxu0
        %412 = vdwg.mxu0
        %v421 = vunpack.c.l.b16 %v327
        %v422 = vunpack.c.l.b16 %v328
        %v423 = vunpack.c.l.b16 %v329
        %v424 = vunpack.c.l.b16 %v330
        %v425 = vunpack.c.l.b16 %v331
        %v426 = vunpack.c.l.b16 %v332
        %v427 = vunpack.c.l.b16 %v333
        %v428 = vunpack.c.l.b16 %v334
        %v429 = vpack.c.b16 %v422, %v421
        %v430 = vpack.c.b16 %v424, %v423
        %v431 = vpack.c.b16 %v426, %v425
        %v432 = vpack.c.b16 %v428, %v427
        %v438 = vsel %vm369, %v326, 0
        %440 = vmatprep.subr.bf16.mxu0 0
        %441 = vmatpush1.bf16.msra.mxu0 0
        %442 = vmatprep.subr.bf16.mxu0 0
        %443 = vmatpush1.bf16.msra.mxu0 0
        %444 = vmatprep.subr.bf16.mxu0 0
        %445 = vmatpush1.bf16.msra.mxu0 0
        %446 = vmatprep.subr.bf16.mxu0 0
        %447 = vmatpush1.bf16.msra.mxu0 0
        %448 = vmatprep.subr.bf16.mxu0 0
        %449 = vmatpush1.bf16.msra.mxu0 %v432
        %450 = vmatprep.subr.bf16.mxu0 0
        %451 = vmatpush1.bf16.msra.mxu0 %v431
        %452 = vmatprep.subr.bf16.mxu0 0
        %453 = vmatpush1.bf16.msra.mxu0 %v430
        %454 = vmatprep.subr.bf16.mxu0 0
        %455 = vmatpush1.bf16.msra.mxu0 %v429
        %456 = vmatprep.subr.bf16.mxu0 0
        %457 = vmatpush2.bf16.msra.mxu0 0
        %458 = vmatprep.subr.bf16.mxu0 0
        %459 = vmatpush2.bf16.msra.mxu0 0
        %460 = vmatprep.subr.bf16.mxu0 0
        %461 = vmatpush2.bf16.msra.mxu0 0
        %462 = vmatprep.subr.bf16.mxu0 0
        %463 = vmatpush2.bf16.msra.mxu0 0
        %464 = vmatprep.subr.bf16.mxu0 0
        %465 = vmatpush2.bf16.msra.mxu0 0
        %466 = vmatprep.subr.bf16.mxu0 0
        %467 = vmatpush2.bf16.msra.mxu0 0
        %468 = vmatprep.subr.bf16.mxu0 0
        %469 = vmatpush2.bf16.msra.mxu0 0
        %470 = vmatprep.subr.bf16.mxu0 0
        %471 = vmatpush2.bf16.msra.mxu0 0
        %472 = vmatprep.mubr.bf16.mxu0 0
        %473 = vmatmul.mubr.bf16.gmra.mxu0 %v438
        %v474 = vpop.f32.mrf.mxu0
        %v475 = vadd.f32 %v408, %v474
        %v476 = vpop.f32.mrf.mxu0
        %v477 = vpop.f32.mrf.mxu0
        %v478 = vpop.f32.mrf.mxu0
        %479 = vdwg.mxu0
        %v480 = vld [vmem:[%s305] sm:$0xf]
        %s481 = scalar_lea.vmem [#allocation2], 64
        %v482 = vld [vmem:[%s481] sm:$0xf]
        %v483 = vld [vmem:[%s481 + $0x4] sm:$0xf]
        %v484 = vld [vmem:[%s481 + $0x8] sm:$0xf]
        %v485 = vld [vmem:[%s481 + $0xc] sm:$0xf]
        %v486 = vld [vmem:[%s481 + $0x10] sm:$0xf]
        %v487 = vld [vmem:[%s481 + $0x14] sm:$0xf]
        %v488 = vld [vmem:[%s481 + $0x18] sm:$0xf]
        %v489 = vld [vmem:[%s481 + $0x1c] sm:$0xf]
        %v491 = vunpack.c.l.b16 %v480
        %v492 = vpack.c.b16 %v491, %v491
        %v494 = vshrl.u32 %v492, 16
        %v496 = vshll.u32 %v492, 16
        %v498 = vrot.slane %v496, 1
        %v499 = vor.u32 %v494, %v498
        %v508 = vunpack.c.l.b16 %v482
        %v509 = vunpack.c.l.b16 %v483
        %v510 = vunpack.c.l.b16 %v484
        %v511 = vunpack.c.l.b16 %v485
        %v512 = vunpack.c.l.b16 %v486
        %v513 = vunpack.c.l.b16 %v487
        %v514 = vunpack.c.l.b16 %v488
        %v515 = vunpack.c.l.b16 %v489
        %v516 = vpack.c.b16 %v509, %v508
        %v517 = vpack.c.b16 %v511, %v510
        %v518 = vpack.c.b16 %v513, %v512
        %v519 = vpack.c.b16 %v515, %v514
        %v525 = vsel %vm369, %v499, 0
        %527 = vmatprep.subr.bf16.mxu0 0
        %528 = vmatpush1.bf16.msra.mxu0 0
        %529 = vmatprep.subr.bf16.mxu0 0
        %530 = vmatpush1.bf16.msra.mxu0 0
        %531 = vmatprep.subr.bf16.mxu0 0
        %532 = vmatpush1.bf16.msra.mxu0 0
        %533 = vmatprep.subr.bf16.mxu0 0
        %534 = vmatpush1.bf16.msra.mxu0 0
        %535 = vmatprep.subr.bf16.mxu0 0
        %536 = vmatpush1.bf16.msra.mxu0 %v519
        %537 = vmatprep.subr.bf16.mxu0 0
        %538 = vmatpush1.bf16.msra.mxu0 %v518
        %539 = vmatprep.subr.bf16.mxu0 0
        %540 = vmatpush1.bf16.msra.mxu0 %v517
        %541 = vmatprep.subr.bf16.mxu0 0
        %542 = vmatpush1.bf16.msra.mxu0 %v516
        %543 = vmatprep.subr.bf16.mxu0 0
        %544 = vmatpush2.bf16.msra.mxu0 0
        %545 = vmatprep.subr.bf16.mxu0 0
        %546 = vmatpush2.bf16.msra.mxu0 0
        %547 = vmatprep.subr.bf16.mxu0 0
        %548 = vmatpush2.bf16.msra.mxu0 0
        %549 = vmatprep.subr.bf16.mxu0 0
        %550 = vmatpush2.bf16.msra.mxu0 0
        %551 = vmatprep.subr.bf16.mxu0 0
        %552 = vmatpush2.bf16.msra.mxu0 0
        %553 = vmatprep.subr.bf16.mxu0 0
        %554 = vmatpush2.bf16.msra.mxu0 0
        %555 = vmatprep.subr.bf16.mxu0 0
        %556 = vmatpush2.bf16.msra.mxu0 0
        %557 = vmatprep.subr.bf16.mxu0 0
        %558 = vmatpush2.bf16.msra.mxu0 0
        %559 = vmatprep.mubr.bf16.mxu0 0
        %560 = vmatmul.mubr.bf16.gmra.mxu0 %v525
        %v561 = vpop.f32.mrf.mxu0
        %v562 = vadd.f32 0.0, %v561
        %v563 = vpop.f32.mrf.mxu0
        %v564 = vpop.f32.mrf.mxu0
        %v565 = vpop.f32.mrf.mxu0
        %566 = vdwg.mxu0
        %v567 = vadd.f32 %v475, %v562
        %v568 = vld [vmem:[%s315] sm:$0x7]
        %s569 = scalar_lea.vmem [#allocation2], 96
        %v570 = vld [vmem:[%s569] sm:$0xf]
        %v571 = vld [vmem:[%s569 + $0x4] sm:$0xf]
        %v572 = vld [vmem:[%s569 + $0x8] sm:$0xf]
        %v573 = vld [vmem:[%s569 + $0xc] sm:$0xf]
        %v574 = vld [vmem:[%s569 + $0x10] sm:$0xf]
        %v575 = vld [vmem:[%s569 + $0x14] sm:$0xf]
        %v576 = vld [vmem:[%s569 + $0x18] sm:$0xf]
        %v577 = vld [vmem:[%s569 + $0x1c] sm:$0xf]
        %v586 = vunpack.c.l.b16 %v570
        %v587 = vunpack.c.l.b16 %v571
        %v588 = vunpack.c.l.b16 %v572
        %v589 = vunpack.c.l.b16 %v573
        %v590 = vunpack.c.l.b16 %v574
        %v591 = vunpack.c.l.b16 %v575
        %v592 = vunpack.c.l.b16 %v576
        %v593 = vunpack.c.l.b16 %v577
        %v594 = vpack.c.b16 %v587, %v586
        %v595 = vpack.c.b16 %v589, %v588
        %v596 = vpack.c.b16 %v591, %v590
        %v597 = vpack.c.b16 %v593, %v592
        %v603 = vsel %vm369, %v568, 0
        %605 = vmatprep.subr.bf16.mxu0 0
        %606 = vmatpush1.bf16.msra.mxu0 0
        %607 = vmatprep.subr.bf16.mxu0 0
        %608 = vmatpush1.bf16.msra.mxu0 0
        %609 = vmatprep.subr.bf16.mxu0 0
        %610 = vmatpush1.bf16.msra.mxu0 0
        %611 = vmatprep.subr.bf16.mxu0 0
        %612 = vmatpush1.bf16.msra.mxu0 0
        %613 = vmatprep.subr.bf16.mxu0 0
        %614 = vmatpush1.bf16.msra.mxu0 %v597
        %615 = vmatprep.subr.bf16.mxu0 0
        %616 = vmatpush1.bf16.msra.mxu0 %v596
        %617 = vmatprep.subr.bf16.mxu0 0
        %618 = vmatpush1.bf16.msra.mxu0 %v595
        %619 = vmatprep.subr.bf16.mxu0 0
        %620 = vmatpush1.bf16.msra.mxu0 %v594
        %621 = vmatprep.subr.bf16.mxu0 0
        %622 = vmatpush2.bf16.msra.mxu0 0
        %623 = vmatprep.subr.bf16.mxu0 0
        %624 = vmatpush2.bf16.msra.mxu0 0
        %625 = vmatprep.subr.bf16.mxu0 0
        %626 = vmatpush2.bf16.msra.mxu0 0
        %627 = vmatprep.subr.bf16.mxu0 0
        %628 = vmatpush2.bf16.msra.mxu0 0
        %629 = vmatprep.subr.bf16.mxu0 0
        %630 = vmatpush2.bf16.msra.mxu0 0
        %631 = vmatprep.subr.bf16.mxu0 0
        %632 = vmatpush2.bf16.msra.mxu0 0
        %633 = vmatprep.subr.bf16.mxu0 0
        %634 = vmatpush2.bf16.msra.mxu0 0
        %635 = vmatprep.subr.bf16.mxu0 0
        %636 = vmatpush2.bf16.msra.mxu0 0
        %637 = vmatprep.mubr.bf16.mxu0 0
        %638 = vmatmul.mubr.bf16.gmra.mxu0 %v603
        %v639 = vpop.f32.mrf.mxu0
        %v640 = vadd.f32 0.0, %v639
        %v641 = vpop.f32.mrf.mxu0
        %v642 = vpop.f32.mrf.mxu0
        %v643 = vpop.f32.mrf.mxu0
        %644 = vdwg.mxu0
        %v645 = vadd.f32 %v567, %v640
        %v646 = vld [vmem:[%s320] sm:$0x7]
        %s647 = scalar_lea.vmem [#allocation2], 128
        %v648 = vld [vmem:[%s647] sm:$0xf]
        %v649 = vld [vmem:[%s647 + $0x4] sm:$0xf]
        %v650 = vld [vmem:[%s647 + $0x8] sm:$0xf]
        %v651 = vld [vmem:[%s647 + $0xc] sm:$0xf]
        %v652 = vld [vmem:[%s647 + $0x10] sm:$0xf]
        %v653 = vld [vmem:[%s647 + $0x14] sm:$0xf]
        %v654 = vld [vmem:[%s647 + $0x18] sm:$0xf]
        %v655 = vld [vmem:[%s647 + $0x1c] sm:$0xf]
        %v664 = vunpack.c.l.b16 %v648
        %v665 = vunpack.c.l.b16 %v649
        %v666 = vunpack.c.l.b16 %v650
        %v667 = vunpack.c.l.b16 %v651
        %v668 = vunpack.c.l.b16 %v652
        %v669 = vunpack.c.l.b16 %v653
        %v670 = vunpack.c.l.b16 %v654
        %v671 = vunpack.c.l.b16 %v655
        %v672 = vpack.c.b16 %v665, %v664
        %v673 = vpack.c.b16 %v667, %v666
        %v674 = vpack.c.b16 %v669, %v668
        %v675 = vpack.c.b16 %v671, %v670
        %v681 = vsel %vm369, %v646, 0
        %683 = vmatprep.subr.bf16.mxu0 0
        %684 = vmatpush1.bf16.msra.mxu0 0
        %685 = vmatprep.subr.bf16.mxu0 0
        %686 = vmatpush1.bf16.msra.mxu0 0
        %687 = vmatprep.subr.bf16.mxu0 0
        %688 = vmatpush1.bf16.msra.mxu0 0
        %689 = vmatprep.subr.bf16.mxu0 0
        %690 = vmatpush1.bf16.msra.mxu0 0
        %691 = vmatprep.subr.bf16.mxu0 0
        %692 = vmatpush1.bf16.msra.mxu0 %v675
        %693 = vmatprep.subr.bf16.mxu0 0
        %694 = vmatpush1.bf16.msra.mxu0 %v674
        %695 = vmatprep.subr.bf16.mxu0 0
        %696 = vmatpush1.bf16.msra.mxu0 %v673
        %697 = vmatprep.subr.bf16.mxu0 0
        %698 = vmatpush1.bf16.msra.mxu0 %v672
        %699 = vmatprep.subr.bf16.mxu0 0
        %700 = vmatpush2.bf16.msra.mxu0 0
        %701 = vmatprep.subr.bf16.mxu0 0
        %702 = vmatpush2.bf16.msra.mxu0 0
        %703 = vmatprep.subr.bf16.mxu0 0
        %704 = vmatpush2.bf16.msra.mxu0 0
        %705 = vmatprep.subr.bf16.mxu0 0
        %706 = vmatpush2.bf16.msra.mxu0 0
        %707 = vmatprep.subr.bf16.mxu0 0
        %708 = vmatpush2.bf16.msra.mxu0 0
        %709 = vmatprep.subr.bf16.mxu0 0
        %710 = vmatpush2.bf16.msra.mxu0 0
        %711 = vmatprep.subr.bf16.mxu0 0
        %712 = vmatpush2.bf16.msra.mxu0 0
        %713 = vmatprep.subr.bf16.mxu0 0
        %714 = vmatpush2.bf16.msra.mxu0 0
        %715 = vmatprep.mubr.bf16.mxu0 0
        %716 = vmatmul.mubr.bf16.gmra.mxu0 %v681
        %v717 = vpop.f32.mrf.mxu0
        %v718 = vadd.f32 0.0, %v717
        %v719 = vpop.f32.mrf.mxu0
        %v720 = vpop.f32.mrf.mxu0
        %v721 = vpop.f32.mrf.mxu0
        %722 = vdwg.mxu0
        %v723 = vadd.f32 %v645, %v718
        %v724 = vld [vmem:[%s315] sm:$0xf]
        %s725 = scalar_lea.vmem [#allocation2], 160
        %v726 = vld [vmem:[%s725] sm:$0xf]
        %v727 = vld [vmem:[%s725 + $0x4] sm:$0xf]
        %v728 = vld [vmem:[%s725 + $0x8] sm:$0xf]
        %v729 = vld [vmem:[%s725 + $0xc] sm:$0xf]
        %v730 = vld [vmem:[%s725 + $0x10] sm:$0xf]
        %v731 = vld [vmem:[%s725 + $0x14] sm:$0xf]
        %v732 = vld [vmem:[%s725 + $0x18] sm:$0xf]
        %v733 = vld [vmem:[%s725 + $0x1c] sm:$0xf]
        %v735 = vunpack.c.l.b16 %v724
        %v736 = vpack.c.b16 %v735, %v735
        %v738 = vshrl.u32 %v736, 16
        %v740 = vshll.u32 %v736, 16
        %v742 = vrot.slane %v740, 1
        %v743 = vor.u32 %v738, %v742
        %v752 = vunpack.c.l.b16 %v726
        %v753 = vunpack.c.l.b16 %v727
        %v754 = vunpack.c.l.b16 %v728
        %v755 = vunpack.c.l.b16 %v729
        %v756 = vunpack.c.l.b16 %v730
        %v757 = vunpack.c.l.b16 %v731
        %v758 = vunpack.c.l.b16 %v732
        %v759 = vunpack.c.l.b16 %v733
        %v760 = vpack.c.b16 %v753, %v752
        %v761 = vpack.c.b16 %v755, %v754
        %v762 = vpack.c.b16 %v757, %v756
        %v763 = vpack.c.b16 %v759, %v758
        %v769 = vsel %vm369, %v743, 0
        %771 = vmatprep.subr.bf16.mxu0 0
        %772 = vmatpush1.bf16.msra.mxu0 0
        %773 = vmatprep.subr.bf16.mxu0 0
        %774 = vmatpush1.bf16.msra.mxu0 0
        %775 = vmatprep.subr.bf16.mxu0 0
        %776 = vmatpush1.bf16.msra.mxu0 0
        %777 = vmatprep.subr.bf16.mxu0 0
        %778 = vmatpush1.bf16.msra.mxu0 0
        %779 = vmatprep.subr.bf16.mxu0 0
        %780 = vmatpush1.bf16.msra.mxu0 %v763
        %781 = vmatprep.subr.bf16.mxu0 0
        %782 = vmatpush1.bf16.msra.mxu0 %v762
        %783 = vmatprep.subr.bf16.mxu0 0
        %784 = vmatpush1.bf16.msra.mxu0 %v761
        %785 = vmatprep.subr.bf16.mxu0 0
        %786 = vmatpush1.bf16.msra.mxu0 %v760
        %787 = vmatprep.subr.bf16.mxu0 0
        %788 = vmatpush2.bf16.msra.mxu0 0
        %789 = vmatprep.subr.bf16.mxu0 0
        %790 = vmatpush2.bf16.msra.mxu0 0
        %791 = vmatprep.subr.bf16.mxu0 0
        %792 = vmatpush2.bf16.msra.mxu0 0
        %793 = vmatprep.subr.bf16.mxu0 0
        %794 = vmatpush2.bf16.msra.mxu0 0
        %795 = vmatprep.subr.bf16.mxu0 0
        %796 = vmatpush2.bf16.msra.mxu0 0
        %797 = vmatprep.subr.bf16.mxu0 0
        %798 = vmatpush2.bf16.msra.mxu0 0
        %799 = vmatprep.subr.bf16.mxu0 0
        %800 = vmatpush2.bf16.msra.mxu0 0
        %801 = vmatprep.subr.bf16.mxu0 0
        %802 = vmatpush2.bf16.msra.mxu0 0
        %803 = vmatprep.mubr.bf16.mxu0 0
        %804 = vmatmul.mubr.bf16.gmra.mxu0 %v769
        %v805 = vpop.f32.mrf.mxu0
        %v806 = vadd.f32 0.0, %v805
        %v807 = vpop.f32.mrf.mxu0
        %v808 = vpop.f32.mrf.mxu0
        %v809 = vpop.f32.mrf.mxu0
        %810 = vdwg.mxu0
        %v811 = vadd.f32 %v723, %v806
        %v812 = vld [vmem:[%s305] sm:$0xe]
        %v813 = vld [vmem:[%s305 + $0x4] sm:$0x1]
        %s814 = scalar_lea.vmem [#allocation2], 192
        %v815 = vld [vmem:[%s814] sm:$0xf]
        %v816 = vld [vmem:[%s814 + $0x4] sm:$0xf]
        %v817 = vld [vmem:[%s814 + $0x8] sm:$0xf]
        %v818 = vld [vmem:[%s814 + $0xc] sm:$0xf]
        %v819 = vld [vmem:[%s814 + $0x10] sm:$0xf]
        %v820 = vld [vmem:[%s814 + $0x14] sm:$0xf]
        %v821 = vld [vmem:[%s814 + $0x18] sm:$0xf]
        %v822 = vld [vmem:[%s814 + $0x1c] sm:$0xf]
        %v825 = vunpack.c.l.b16 %v812
        %v826 = vunpack.c.l.b16 %v813
        %v827 = vpack.c.b16 %v826, %v825
        %v829 = vshrl.u32 %v827, 16
        %v831 = vrot.slane %v829, 1
        %v832 = vshll.u32 %v827, 16
        %v834 = vrot.slane %v832, 2
        %v835 = vor.u32 %v831, %v834
        %v844 = vunpack.c.l.b16 %v815
        %v845 = vunpack.c.l.b16 %v816
        %v846 = vunpack.c.l.b16 %v817
        %v847 = vunpack.c.l.b16 %v818
        %v848 = vunpack.c.l.b16 %v819
        %v849 = vunpack.c.l.b16 %v820
        %v850 = vunpack.c.l.b16 %v821
        %v851 = vunpack.c.l.b16 %v822
        %v852 = vpack.c.b16 %v845, %v844
        %v853 = vpack.c.b16 %v847, %v846
        %v854 = vpack.c.b16 %v849, %v848
        %v855 = vpack.c.b16 %v851, %v850
        %v861 = vsel %vm369, %v835, 0
        %863 = vmatprep.subr.bf16.mxu0 0
        %864 = vmatpush1.bf16.msra.mxu0 0
        %865 = vmatprep.subr.bf16.mxu0 0
        %866 = vmatpush1.bf16.msra.mxu0 0
        %867 = vmatprep.subr.bf16.mxu0 0
        %868 = vmatpush1.bf16.msra.mxu0 0
        %869 = vmatprep.subr.bf16.mxu0 0
        %870 = vmatpush1.bf16.msra.mxu0 0
        %871 = vmatprep.subr.bf16.mxu0 0
        %872 = vmatpush1.bf16.msra.mxu0 %v855
        %873 = vmatprep.subr.bf16.mxu0 0
        %874 = vmatpush1.bf16.msra.mxu0 %v854
        %875 = vmatprep.subr.bf16.mxu0 0
        %876 = vmatpush1.bf16.msra.mxu0 %v853
        %877 = vmatprep.subr.bf16.mxu0 0
        %878 = vmatpush1.bf16.msra.mxu0 %v852
        %879 = vmatprep.subr.bf16.mxu0 0
        %880 = vmatpush2.bf16.msra.mxu0 0
        %881 = vmatprep.subr.bf16.mxu0 0
        %882 = vmatpush2.bf16.msra.mxu0 0
        %883 = vmatprep.subr.bf16.mxu0 0
        %884 = vmatpush2.bf16.msra.mxu0 0
        %885 = vmatprep.subr.bf16.mxu0 0
        %886 = vmatpush2.bf16.msra.mxu0 0
        %887 = vmatprep.subr.bf16.mxu0 0
        %888 = vmatpush2.bf16.msra.mxu0 0
        %889 = vmatprep.subr.bf16.mxu0 0
        %890 = vmatpush2.bf16.msra.mxu0 0
        %891 = vmatprep.subr.bf16.mxu0 0
        %892 = vmatpush2.bf16.msra.mxu0 0
        %893 = vmatprep.subr.bf16.mxu0 0
        %894 = vmatpush2.bf16.msra.mxu0 0
        %895 = vmatprep.mubr.bf16.mxu0 0
        %896 = vmatmul.mubr.bf16.gmra.mxu0 %v861
        %v897 = vpop.f32.mrf.mxu0
        %v898 = vadd.f32 0.0, %v897
        %v899 = vpop.f32.mrf.mxu0
        %v900 = vpop.f32.mrf.mxu0
        %v901 = vpop.f32.mrf.mxu0
        %902 = vdwg.mxu0
        %v903 = vadd.f32 %v811, %v898
        %v904 = vld [vmem:[%s310] sm:$0xe]
        %v905 = vld [vmem:[%s310 + $0x4] sm:$0x1]
        %s906 = scalar_lea.vmem [#allocation2], 224
        %v907 = vld [vmem:[%s906] sm:$0xf]
        %v908 = vld [vmem:[%s906 + $0x4] sm:$0xf]
        %v909 = vld [vmem:[%s906 + $0x8] sm:$0xf]
        %v910 = vld [vmem:[%s906 + $0xc] sm:$0xf]
        %v911 = vld [vmem:[%s906 + $0x10] sm:$0xf]
        %v912 = vld [vmem:[%s906 + $0x14] sm:$0xf]
        %v913 = vld [vmem:[%s906 + $0x18] sm:$0xf]
        %v914 = vld [vmem:[%s906 + $0x1c] sm:$0xf]
        %v917 = vunpack.c.l.b16 %v904
        %v918 = vunpack.c.l.b16 %v905
        %v919 = vpack.c.b16 %v918, %v917
        %v921 = vshrl.u32 %v919, 16
        %v923 = vrot.slane %v921, 1
        %v924 = vshll.u32 %v919, 16
        %v926 = vrot.slane %v924, 2
        %v927 = vor.u32 %v923, %v926
        %v936 = vunpack.c.l.b16 %v907
        %v937 = vunpack.c.l.b16 %v908
        %v938 = vunpack.c.l.b16 %v909
        %v939 = vunpack.c.l.b16 %v910
        %v940 = vunpack.c.l.b16 %v911
        %v941 = vunpack.c.l.b16 %v912
        %v942 = vunpack.c.l.b16 %v913
        %v943 = vunpack.c.l.b16 %v914
        %v944 = vpack.c.b16 %v937, %v936
        %v945 = vpack.c.b16 %v939, %v938
        %v946 = vpack.c.b16 %v941, %v940
        %v947 = vpack.c.b16 %v943, %v942
        %v953 = vsel %vm369, %v927, 0
        %955 = vmatprep.subr.bf16.mxu0 0
        %956 = vmatpush1.bf16.msra.mxu0 0
        %957 = vmatprep.subr.bf16.mxu0 0
        %958 = vmatpush1.bf16.msra.mxu0 0
        %959 = vmatprep.subr.bf16.mxu0 0
        %960 = vmatpush1.bf16.msra.mxu0 0
        %961 = vmatprep.subr.bf16.mxu0 0
        %962 = vmatpush1.bf16.msra.mxu0 0
        %963 = vmatprep.subr.bf16.mxu0 0
        %964 = vmatpush1.bf16.msra.mxu0 %v947
        %965 = vmatprep.subr.bf16.mxu0 0
        %966 = vmatpush1.bf16.msra.mxu0 %v946
        %967 = vmatprep.subr.bf16.mxu0 0
        %968 = vmatpush1.bf16.msra.mxu0 %v945
        %969 = vmatprep.subr.bf16.mxu0 0
        %970 = vmatpush1.bf16.msra.mxu0 %v944
        %971 = vmatprep.subr.bf16.mxu0 0
        %972 = vmatpush2.bf16.msra.mxu0 0
        %973 = vmatprep.subr.bf16.mxu0 0
        %974 = vmatpush2.bf16.msra.mxu0 0
        %975 = vmatprep.subr.bf16.mxu0 0
        %976 = vmatpush2.bf16.msra.mxu0 0
        %977 = vmatprep.subr.bf16.mxu0 0
        %978 = vmatpush2.bf16.msra.mxu0 0
        %979 = vmatprep.subr.bf16.mxu0 0
        %980 = vmatpush2.bf16.msra.mxu0 0
        %981 = vmatprep.subr.bf16.mxu0 0
        %982 = vmatpush2.bf16.msra.mxu0 0
        %983 = vmatprep.subr.bf16.mxu0 0
        %984 = vmatpush2.bf16.msra.mxu0 0
        %985 = vmatprep.subr.bf16.mxu0 0
        %986 = vmatpush2.bf16.msra.mxu0 0
        %987 = vmatprep.mubr.bf16.mxu0 0
        %988 = vmatmul.mubr.bf16.gmra.mxu0 %v953
        %v989 = vpop.f32.mrf.mxu0
        %v990 = vadd.f32 0.0, %v989
        %v991 = vpop.f32.mrf.mxu0
        %v992 = vpop.f32.mrf.mxu0
        %v993 = vpop.f32.mrf.mxu0
        %994 = vdwg.mxu0
        %v995 = vadd.f32 %v903, %v990
        %v996 = vld [vmem:[%s305] sm:$0xc]
        %s997 = scalar_lea.vmem [#allocation2], 256
        %v998 = vld [vmem:[%s997] sm:$0xf]
        %v999 = vld [vmem:[%s997 + $0x4] sm:$0xf]
        %v1000 = vld [vmem:[%s997 + $0x8] sm:$0xf]
        %v1001 = vld [vmem:[%s997 + $0xc] sm:$0xf]
        %v1002 = vld [vmem:[%s997 + $0x10] sm:$0xf]
        %v1003 = vld [vmem:[%s997 + $0x14] sm:$0xf]
        %v1004 = vld [vmem:[%s997 + $0x18] sm:$0xf]
        %v1005 = vld [vmem:[%s997 + $0x1c] sm:$0xf]
        %v1007 = vunpack.c.l.b16 %v996
        %v1008 = vpack.c.b16 %v826, %v1007
        %v1009 = vrot.slane %v1008, 2
        %v1018 = vunpack.c.l.b16 %v998
        %v1019 = vunpack.c.l.b16 %v999
        %v1020 = vunpack.c.l.b16 %v1000
        %v1021 = vunpack.c.l.b16 %v1001
        %v1022 = vunpack.c.l.b16 %v1002
        %v1023 = vunpack.c.l.b16 %v1003
        %v1024 = vunpack.c.l.b16 %v1004
        %v1025 = vunpack.c.l.b16 %v1005
        %v1026 = vpack.c.b16 %v1019, %v1018
        %v1027 = vpack.c.b16 %v1021, %v1020
        %v1028 = vpack.c.b16 %v1023, %v1022
        %v1029 = vpack.c.b16 %v1025, %v1024
        %v1035 = vsel %vm369, %v1009, 0
        %1037 = vmatprep.subr.bf16.mxu0 0
        %1038 = vmatpush1.bf16.msra.mxu0 0
        %1039 = vmatprep.subr.bf16.mxu0 0
        %1040 = vmatpush1.bf16.msra.mxu0 0
        %1041 = vmatprep.subr.bf16.mxu0 0
        %1042 = vmatpush1.bf16.msra.mxu0 0
        %1043 = vmatprep.subr.bf16.mxu0 0
        %1044 = vmatpush1.bf16.msra.mxu0 0
        %1045 = vmatprep.subr.bf16.mxu0 0
        %1046 = vmatpush1.bf16.msra.mxu0 %v1029
        %1047 = vmatprep.subr.bf16.mxu0 0
        %1048 = vmatpush1.bf16.msra.mxu0 %v1028
        %1049 = vmatprep.subr.bf16.mxu0 0
        %1050 = vmatpush1.bf16.msra.mxu0 %v1027
        %1051 = vmatprep.subr.bf16.mxu0 0
        %1052 = vmatpush1.bf16.msra.mxu0 %v1026
        %1053 = vmatprep.subr.bf16.mxu0 0
        %1054 = vmatpush2.bf16.msra.mxu0 0
        %1055 = vmatprep.subr.bf16.mxu0 0
        %1056 = vmatpush2.bf16.msra.mxu0 0
        %1057 = vmatprep.subr.bf16.mxu0 0
        %1058 = vmatpush2.bf16.msra.mxu0 0
        %1059 = vmatprep.subr.bf16.mxu0 0
        %1060 = vmatpush2.bf16.msra.mxu0 0
        %1061 = vmatprep.subr.bf16.mxu0 0
        %1062 = vmatpush2.bf16.msra.mxu0 0
        %1063 = vmatprep.subr.bf16.mxu0 0
        %1064 = vmatpush2.bf16.msra.mxu0 0
        %1065 = vmatprep.subr.bf16.mxu0 0
        %1066 = vmatpush2.bf16.msra.mxu0 0
        %1067 = vmatprep.subr.bf16.mxu0 0
        %1068 = vmatpush2.bf16.msra.mxu0 0
        %1069 = vmatprep.mubr.bf16.mxu0 0
        %1070 = vmatmul.mubr.bf16.gmra.mxu0 %v1035
        %v1071 = vpop.f32.mrf.mxu0
        %v1072 = vadd.f32 0.0, %v1071
        %v1073 = vpop.f32.mrf.mxu0
        %v1074 = vpop.f32.mrf.mxu0
        %v1075 = vpop.f32.mrf.mxu0
        %1076 = vdwg.mxu0
        %v1077 = vadd.f32 %v995, %v1072
        %v1078 = vld [vmem:[%s5] sm:$0x1]
        %v1080 = vlaneseq
        %v1081 = vshrl.u32 %v1080, 7
        %v1082 = vsub.s32 0, %v1081
        %v1083 = vrot.slane %v1078, %v1082
        %v1085 = vadd.f32 %v1077, %v1083
        %v1086 = vmax.f32 %v1085, 0.0
        %v1087 = vpack.c.bf16 %v1086, %v1086
        %vm1088 = vcmask 518144
        %1089 = vst.msk [vmem:[%s324] sm:$0x7] %vm1088, %v1087
        %p1090 = scmp.lt.s32.totalorder %s18, 1
        %s1091 = scalar_select %p1090, %s18, 1
        %s1092 = smul.addr %s1091, 4
        %s1093 = scalar_lea.vmem %s6, %s1092
        // Predicated region
        $region49: #{forward.7} parent=43 // pred_check
          %p1094 = pneg %p182
        $region50: #{forward.7} parent=43 // pred_check_branch
          %1096 = sbr.rel (%p1094) target = $region52
        $region51: #{forward.7} parent=43 // pred_region
          _
        $region52: #{forward.7} parent=43 // pred_fallthru
          _
      $region44: #{forward.7} parent=5 // pred_fallthru
        _
      %p1097 = scmp.le.s32.totalorder 2, %s13
      // Predicated region
      $region53: #{forward.7} parent=5 // pred_check
        %p1098 = pneg %p1097
      $region54: #{forward.7} parent=5 // pred_check_branch
        %1100 = sbr.rel (%p1098) target = $region56
      $region55: #{forward.7} parent=5 // pred_region
        %s1101 = ssub.s32 %s13, 2
        // Predicated region
        $region57: #{forward.7} parent=55 // pred_check
          %p1102 = pneg %p188
        $region58: #{forward.7} parent=55 // pred_check_branch
          %1104 = sbr.rel (%p1102) target = $region60
        $region59: #{forward.7} parent=55 // pred_region
          %p1105 = scmp.lt.s32.totalorder %s19, 1
          %s1106 = scalar_select %p1105, %s19, 1
          %s1107 = smul.addr %s1106, 4
          %s1108 = scalar_lea.vmem %s6, %s1107
        $region60: #{forward.7} parent=55 // pred_fallthru
          _
      $region56: #{forward.7} parent=5 // pred_fallthru
        _
    $region6: #{forward.7} parent=1 // loop_footer
      %s17 = sadd.s32 1, %s13
    $region7: #{forward.7} parent=1 // loop_footer_branch
      %12 = sbr.rel target = $region3
    $region8: #{forward.7} parent=1 // loop_exit
      _
    %1109 = vsyncpa [#allocation3], 1
    %s1110 = scalar_lea.sflag [#allocation3], 1
    %1111 = vsyncpa %s1110, 1

// kernel: forward.5
$region0: #{forward.5}
  #allocation0 [shape = 'u32[]', space=smem, size = 0x4, offset = 0x4, fixed_abs, tag = 'smem constant byte address 0x4 - core index']
  #allocation1 [shape = 'u32[144,128]{1,0:T(1,128)}', space=vmem, size = 0x12000, scoped, tag = 'internal scratch']
  %s0 = inlined_call_operand.vmem [shape: bf16[2,88,4], index: 0, kind: input, shape index: {}]
  %s1 = inlined_call_operand.vmem [shape: bf16[2,88,4], index: 1, kind: input, shape index: {}]
  %s2 = inlined_call_operand.vmem [shape: bf16[2,88,4], index: 2, kind: input, shape index: {}]
  %s3 = inlined_call_operand.vmem [shape: bf16[2,88,4], index: 3, kind: input, shape index: {}]
  %s4 = inlined_call_operand.vmem [shape: bf16[9,4,32], index: 4, kind: input, shape index: {}]
  %s5 = inlined_call_operand.vmem [shape: f32[1,32], index: 5, kind: input, shape index: {}]
  %s6 = inlined_call_operand.vmem [shape: bf16[2,72,32], index: 6, kind: output, shape index: {}]
  %s7 = sld [smem:[#allocation0]]
  $region57: #{forward.5} parent=0
    _
  %s9 = ssub.s32 1, %s7
  %s10 = scalar_select 0, %s9, %s7
  loop: start=0, step=1, limit=4
  $region2: #{forward.5} parent=0 // loop_pre_header
    _
  $region3: #{forward.5} parent=0 // loop_header
    %s12 = sphi 0, %s16
    %p13 = scmp.ge.s32.totalorder %s12, 4
    %s22 = sphi 0, %s24
    %s25 = sphi 0, %s22
    %s26 = sphi 0, %s25
    %s42 = sphi 0, %s26
    %s48 = sphi 0, %s50
    %s51 = sphi 0, %s48
    %s52 = sphi 0, %s51
    %s68 = sphi 0, %s52
    %s74 = sphi 0, %s76
    %s77 = sphi 0, %s74
    %s78 = sphi 0, %s77
    %s94 = sphi 0, %s78
    %s100 = sphi 0, %s102
    %s103 = sphi 0, %s100
    %s104 = sphi 0, %s103
    %s120 = sphi 0, %s104
    %s124 = sphi 0, %s124
    %s126 = sphi 0, %s124
    %s127 = sphi 0, %s126
    %s141 = sphi 0, %s127
    %s145 = sphi 0, %s145
    %s147 = sphi 0, %s145
    %s148 = sphi 0, %s147
    %s162 = sphi 0, %s148
    %s168 = sphi 0, %s170
    %s171 = sphi 0, %s168
    %s172 = sphi 0, %s171
    %s188 = sphi 0, %s172
  $region4: #{forward.5} parent=0 // loop_header_branch
    %15 = sbr.rel (%p13) target = $region8
  $region5: #{forward.5} parent=0 // loop_body
    %s17 = ssub.s32 %s12, 1
    %s18 = ssub.s32 %s12, 2
    %s19 = sadd.s32 %s12, 1
    %s20 = ssub.s32 %s12, %s19
    %p21 = scmp.eq.s32.totalorder %s20, 0
    %s23 = sadd.s32 %s22, 1
    %s24 = scalar_select %p21, %s22, %s23
    %p27 = pneg %p21
    %p28 = scmp.eq.s32.totalorder %s12, 1
    %p29 = por %p27, %p28
    %p30 = scmp.ne.s32.totalorder %s22, %s25
    %p31 = scmp.eq.s32.totalorder %s12, 0
    %p32 = por %p30, %p31
    %p33 = scmp.ne.s32.totalorder %s22, %s25
    %p34 = scmp.eq.s32.totalorder %s17, 1
    %p35 = por %p33, %p34
    %p36 = scmp.ne.s32.totalorder %s25, %s26
    %p37 = scmp.eq.s32.totalorder %s17, 0
    %p38 = por %p36, %p37
    %p39 = scmp.ne.s32.totalorder %s25, %s26
    %p40 = scmp.eq.s32.totalorder %s18, 1
    %p41 = por %p39, %p40
    %p43 = scmp.ne.s32.totalorder %s26, %s42
    %p44 = scmp.eq.s32.totalorder %s18, 0
    %p45 = por %p43, %p44
    %s46 = ssub.s32 %s12, %s19
    %p47 = scmp.eq.s32.totalorder %s46, 0
    %s49 = sadd.s32 %s48, 1
    %s50 = scalar_select %p47, %s48, %s49
    %p53 = pneg %p47
    %p54 = scmp.eq.s32.totalorder %s12, 1
    %p55 = por %p53, %p54
    %p56 = scmp.ne.s32.totalorder %s48, %s51
    %p57 = scmp.eq.s32.totalorder %s12, 0
    %p58 = por %p56, %p57
    %p59 = scmp.ne.s32.totalorder %s48, %s51
    %p60 = scmp.eq.s32.totalorder %s17, 1
    %p61 = por %p59, %p60
    %p62 = scmp.ne.s32.totalorder %s51, %s52
    %p63 = scmp.eq.s32.totalorder %s17, 0
    %p64 = por %p62, %p63
    %p65 = scmp.ne.s32.totalorder %s51, %s52
    %p66 = scmp.eq.s32.totalorder %s18, 1
    %p67 = por %p65, %p66
    %p69 = scmp.ne.s32.totalorder %s52, %s68
    %p70 = scmp.eq.s32.totalorder %s18, 0
    %p71 = por %p69, %p70
    %s72 = ssub.s32 %s12, %s19
    %p73 = scmp.eq.s32.totalorder %s72, 0
    %s75 = sadd.s32 %s74, 1
    %s76 = scalar_select %p73, %s74, %s75
    %p79 = pneg %p73
    %p80 = scmp.eq.s32.totalorder %s12, 1
    %p81 = por %p79, %p80
    %p82 = scmp.ne.s32.totalorder %s74, %s77
    %p83 = scmp.eq.s32.totalorder %s12, 0
    %p84 = por %p82, %p83
    %p85 = scmp.ne.s32.totalorder %s74, %s77
    %p86 = scmp.eq.s32.totalorder %s17, 1
    %p87 = por %p85, %p86
    %p88 = scmp.ne.s32.totalorder %s77, %s78
    %p89 = scmp.eq.s32.totalorder %s17, 0
    %p90 = por %p88, %p89
    %p91 = scmp.ne.s32.totalorder %s77, %s78
    %p92 = scmp.eq.s32.totalorder %s18, 1
    %p93 = por %p91, %p92
    %p95 = scmp.ne.s32.totalorder %s78, %s94
    %p96 = scmp.eq.s32.totalorder %s18, 0
    %p97 = por %p95, %p96
    %s98 = ssub.s32 %s12, %s19
    %p99 = scmp.eq.s32.totalorder %s98, 0
    %s101 = sadd.s32 %s100, 1
    %s102 = scalar_select %p99, %s100, %s101
    %p105 = pneg %p99
    %p106 = scmp.eq.s32.totalorder %s12, 1
    %p107 = por %p105, %p106
    %p108 = scmp.ne.s32.totalorder %s100, %s103
    %p109 = scmp.eq.s32.totalorder %s12, 0
    %p110 = por %p108, %p109
    %p111 = scmp.ne.s32.totalorder %s100, %s103
    %p112 = scmp.eq.s32.totalorder %s17, 1
    %p113 = por %p111, %p112
    %p114 = scmp.ne.s32.totalorder %s103, %s104
    %p115 = scmp.eq.s32.totalorder %s17, 0
    %p116 = por %p114, %p115
    %p117 = scmp.ne.s32.totalorder %s103, %s104
    %p118 = scmp.eq.s32.totalorder %s18, 1
    %p119 = por %p117, %p118
    %p121 = scmp.ne.s32.totalorder %s104, %s120
    %p122 = scmp.eq.s32.totalorder %s18, 0
    %p123 = por %p121, %p122
    %s125 = sadd.s32 %s124, 1
    %p128 = scmp.eq.s32.totalorder %s12, 1
    %p129 = scmp.ne.s32.totalorder %s124, %s126
    %p130 = scmp.eq.s32.totalorder %s12, 0
    %p131 = por %p129, %p130
    %p132 = scmp.ne.s32.totalorder %s124, %s126
    %p133 = scmp.eq.s32.totalorder %s17, 1
    %p134 = por %p132, %p133
    %p135 = scmp.ne.s32.totalorder %s126, %s127
    %p136 = scmp.eq.s32.totalorder %s17, 0
    %p137 = por %p135, %p136
    %p138 = scmp.ne.s32.totalorder %s126, %s127
    %p139 = scmp.eq.s32.totalorder %s18, 1
    %p140 = por %p138, %p139
    %p142 = scmp.ne.s32.totalorder %s127, %s141
    %p143 = scmp.eq.s32.totalorder %s18, 0
    %p144 = por %p142, %p143
    %s146 = sadd.s32 %s145, 1
    %p149 = scmp.eq.s32.totalorder %s12, 1
    %p150 = scmp.ne.s32.totalorder %s145, %s147
    %p151 = scmp.eq.s32.totalorder %s12, 0
    %p152 = por %p150, %p151
    %p153 = scmp.ne.s32.totalorder %s145, %s147
    %p154 = scmp.eq.s32.totalorder %s17, 1
    %p155 = por %p153, %p154
    %p156 = scmp.ne.s32.totalorder %s147, %s148
    %p157 = scmp.eq.s32.totalorder %s17, 0
    %p158 = por %p156, %p157
    %p159 = scmp.ne.s32.totalorder %s147, %s148
    %p160 = scmp.eq.s32.totalorder %s18, 1
    %p161 = por %p159, %p160
    %p163 = scmp.ne.s32.totalorder %s148, %s162
    %p164 = scmp.eq.s32.totalorder %s18, 0
    %p165 = por %p163, %p164
    %s166 = ssub.s32 %s12, %s19
    %p167 = scmp.eq.s32.totalorder %s166, 0
    %s169 = sadd.s32 %s168, 1
    %s170 = scalar_select %p167, %s168, %s169
    %p173 = pneg %p167
    %p174 = scmp.eq.s32.totalorder %s12, 1
    %p175 = por %p173, %p174
    %p176 = scmp.ne.s32.totalorder %s168, %s171
    %p177 = scmp.eq.s32.totalorder %s12, 0
    %p178 = por %p176, %p177
    %p179 = scmp.ne.s32.totalorder %s168, %s171
    %p180 = scmp.eq.s32.totalorder %s17, 1
    %p181 = por %p179, %p180
    %p182 = scmp.ne.s32.totalorder %s171, %s172
    %p183 = scmp.eq.s32.totalorder %s17, 0
    %p184 = por %p182, %p183
    %p185 = scmp.ne.s32.totalorder %s171, %s172
    %p186 = scmp.eq.s32.totalorder %s18, 1
    %p187 = por %p185, %p186
    %p189 = scmp.ne.s32.totalorder %s172, %s188
    %p190 = scmp.eq.s32.totalorder %s18, 0
    %p191 = por %p189, %p190
    %p192 = scmp.le.s32.totalorder 1, %s12
    %p193 = scmp.lt.s32.totalorder %s12, 3
    %p194 = pnand %p192, %p193
    %p195 = pneg %p194
    // Predicated region
    $region9: #{forward.5} parent=5 // pred_check
      _
    $region10: #{forward.5} parent=5 // pred_check_branch
      %197 = sbr.rel (%p194) target = $region12
    $region11: #{forward.5} parent=5 // pred_region
      %s198 = ssub.s32 %s12, 1
      // Predicated region
      $region13: #{forward.5} parent=11 // pred_check
        %p199 = pneg %p137
      $region14: #{forward.5} parent=11 // pred_check_branch
        %201 = sbr.rel (%p199) target = $region16
      $region15: #{forward.5} parent=11 // pred_region
        _
      $region16: #{forward.5} parent=11 // pred_fallthru
        _
      // Predicated region
      $region17: #{forward.5} parent=11 // pred_check
        %p202 = pneg %p158
      $region18: #{forward.5} parent=11 // pred_check_branch
        %204 = sbr.rel (%p202) target = $region20
      $region19: #{forward.5} parent=11 // pred_region
        _
      $region20: #{forward.5} parent=11 // pred_fallthru
        _
    $region12: #{forward.5} parent=5 // pred_fallthru
      _
    %p205 = scmp.lt.s32.totalorder %s12, 2
    // Predicated region
    $region21: #{forward.5} parent=5 // pred_check
      %p206 = pneg %p205
    $region22: #{forward.5} parent=5 // pred_check_branch
      %208 = sbr.rel (%p206) target = $region24
    $region23: #{forward.5} parent=5 // pred_region
      // Predicated region
      $region25: #{forward.5} parent=23 // pred_check
        %p209 = pneg %p32
      $region26: #{forward.5} parent=23 // pred_check_branch
        %211 = sbr.rel (%p209) target = $region28
      $region27: #{forward.5} parent=23 // pred_region
        %p212 = scmp.lt.s32.totalorder %s12, 1
        %s213 = scalar_select %p212, %s12, 1
        %s214 = smul.addr %s213, 11
        %s215 = smul.addr %s214, 4
        %s216 = scalar_lea.vmem %s0, %s215
      $region28: #{forward.5} parent=23 // pred_fallthru
        _
      // Predicated region
      $region29: #{forward.5} parent=23 // pred_check
        %p217 = pneg %p58
      $region30: #{forward.5} parent=23 // pred_check_branch
        %219 = sbr.rel (%p217) target = $region32
      $region31: #{forward.5} parent=23 // pred_region
        %p220 = scmp.lt.s32.totalorder %s12, 1
        %s221 = scalar_select %p220, %s12, 1
        %s222 = smul.addr %s221, 11
        %s223 = smul.addr %s222, 4
        %s224 = scalar_lea.vmem %s1, %s223
      $region32: #{forward.5} parent=23 // pred_fallthru
        _
      // Predicated region
      $region33: #{forward.5} parent=23 // pred_check
        %p225 = pneg %p84
      $region34: #{forward.5} parent=23 // pred_check_branch
        %227 = sbr.rel (%p225) target = $region36
      $region35: #{forward.5} parent=23 // pred_region
        %p228 = scmp.lt.s32.totalorder %s12, 1
        %s229 = scalar_select %p228, %s12, 1
        %s230 = smul.addr %s229, 11
        %s231 = smul.addr %s230, 4
        %s232 = scalar_lea.vmem %s2, %s231
      $region36: #{forward.5} parent=23 // pred_fallthru
        _
      // Predicated region
      $region37: #{forward.5} parent=23 // pred_check
        %p233 = pneg %p110
      $region38: #{forward.5} parent=23 // pred_check_branch
        %235 = sbr.rel (%p233) target = $region40
      $region39: #{forward.5} parent=23 // pred_region
        %p236 = scmp.lt.s32.totalorder %s12, 1
        %s237 = scalar_select %p236, %s12, 1
        %s238 = smul.addr %s237, 11
        %s239 = smul.addr %s238, 4
        %s240 = scalar_lea.vmem %s3, %s239
      $region40: #{forward.5} parent=23 // pred_fallthru
        _
    $region24: #{forward.5} parent=5 // pred_fallthru
      _
    %p241 = scmp.le.s32.totalorder 1, %s12
    %p242 = scmp.lt.s32.totalorder %s12, 3
    %p243 = pnand %p241, %p242
    %p244 = pneg %p243
    // Predicated region
    $region41: #{forward.5} parent=5 // pred_check
      _
    $region42: #{forward.5} parent=5 // pred_check_branch
      %246 = sbr.rel (%p243) target = $region44
    $region43: #{forward.5} parent=5 // pred_region
      %s247 = ssub.s32 %s12, 1
      %p248 = scmp.lt.s32.totalorder %s17, 1
      %s249 = scalar_select %p248, %s17, 1
      %s250 = smul.addr %s249, 11
      %s251 = smul.addr %s250, 4
      %s252 = scalar_lea.vmem %s0, %s251
      %p253 = pneg %p38
      %p254 = pneg %p35
      %p255 = scmp.lt.s32.totalorder %s17, 1
      %s256 = scalar_select %p255, %s17, 1
      %s257 = smul.addr %s256, 11
      %s258 = smul.addr %s257, 4
      %s259 = scalar_lea.vmem %s1, %s258
      %p260 = pneg %p64
      %p261 = pneg %p61
      %p262 = scmp.lt.s32.totalorder %s17, 1
      %s263 = scalar_select %p262, %s17, 1
      %s264 = smul.addr %s263, 11
      %s265 = smul.addr %s264, 4
      %s266 = scalar_lea.vmem %s2, %s265
      %p267 = pneg %p90
      %p268 = pneg %p87
      %p269 = scmp.lt.s32.totalorder %s17, 1
      %s270 = scalar_select %p269, %s17, 1
      %s271 = smul.addr %s270, 11
      %s272 = smul.addr %s271, 4
      %s273 = scalar_lea.vmem %s3, %s272
      %p274 = pneg %p116
      %p275 = pneg %p113
      %p276 = pneg %p137
      %p277 = pneg %p134
      %p278 = pneg %p158
      %p279 = pneg %p155
      %p280 = pneg %p184
      %p281 = pneg %p181
      %p282 = scmp.lt.s32.totalorder %s17, 1
      %s283 = scalar_select %p282, %s17, 1
      %s284 = smul.addr %s283, 9
      %s285 = smul.addr %s284, 4
      %s286 = scalar_lea.vmem %s6, %s285
      %p287 = scmp.lt.s32.totalorder %s17, 1
      %s288 = scalar_select %p287, %s17, 1
      %s289 = smul.addr %s288, 11
      %s290 = smul.addr %s289, 4
      %s291 = scalar_lea.vmem %s0, %s290
      %p292 = scmp.lt.s32.totalorder %s17, 1
      %s293 = scalar_select %p292, %s17, 1
      %s294 = smul.addr %s293, 11
      %s295 = smul.addr %s294, 4
      %s296 = scalar_lea.vmem %s1, %s295
      %p297 = scmp.lt.s32.totalorder %s17, 1
      %s298 = scalar_select %p297, %s17, 1
      %s299 = smul.addr %s298, 11
      %s300 = smul.addr %s299, 4
      %s301 = scalar_lea.vmem %s2, %s300
      %p302 = scmp.lt.s32.totalorder %s17, 1
      %s303 = scalar_select %p302, %s17, 1
      %s304 = smul.addr %s303, 11
      %s305 = smul.addr %s304, 4
      %s306 = scalar_lea.vmem %s3, %s305
      %p307 = scmp.lt.s32.totalorder %s17, 1
      %s308 = scalar_select %p307, %s17, 1
      %s309 = smul.addr %s308, 9
      %s310 = smul.addr %s309, 4
      %s311 = scalar_lea.vmem %s6, %s310
      %v313 = vld [vmem:[%s291] sm:$0xf]
      %v314 = vld [vmem:[%s291 + $0x4] sm:$0xf]
      %v315 = vld [vmem:[%s291 + $0x8] sm:$0xf]
      %v316 = vld [vmem:[%s291 + $0xc] sm:$0xf]
      %v317 = vld [vmem:[%s291 + $0x10] sm:$0xf]
      %v318 = vld [vmem:[%s291 + $0x14] sm:$0xf]
      %v319 = vld [vmem:[%s291 + $0x18] sm:$0xf]
      %v320 = vld [vmem:[%s291 + $0x1c] sm:$0xf]
      %v321 = vld [vmem:[%s291 + $0x20] sm:$0xf]
      %v322 = vld [vmem:[%s4] sm:$0x3]
      %v323 = vld [vmem:[%s296] sm:$0xf]
      %v324 = vld [vmem:[%s296 + $0x4] sm:$0xf]
      %v325 = vld [vmem:[%s296 + $0x8] sm:$0xf]
      %v326 = vld [vmem:[%s296 + $0xc] sm:$0xf]
      %v327 = vld [vmem:[%s296 + $0x10] sm:$0xf]
      %v328 = vld [vmem:[%s296 + $0x14] sm:$0xf]
      %v329 = vld [vmem:[%s296 + $0x18] sm:$0xf]
      %v330 = vld [vmem:[%s296 + $0x1c] sm:$0xf]
      %v331 = vld [vmem:[%s296 + $0x20] sm:$0xf]
      %s332 = scalar_lea.vmem %s4, 2
      %v333 = vld [vmem:[%s332] sm:$0x3]
      %v343 = vunpack.c.l.b16 %v323
      %v344 = vunpack.c.l.b16 %v324
      %v345 = vunpack.c.l.b16 %v325
      %v346 = vunpack.c.l.b16 %v326
      %v347 = vunpack.c.l.b16 %v327
      %v348 = vunpack.c.l.b16 %v328
      %v349 = vunpack.c.l.b16 %v329
      %v350 = vunpack.c.l.b16 %v330
      %v351 = vunpack.c.l.b16 %v331
      %v352 = vpack.c.b16 %v344, %v343
      %v353 = vpack.c.b16 %v346, %v345
      %v354 = vpack.c.b16 %v348, %v347
      %v355 = vpack.c.b16 %v350, %v349
      %v356 = vpack.c.b16 %v351, %v351
      %vm357 = vcmask 31744
      %v359 = vsel %vm357, %v352, 0
      %v362 = vsel %vm357, %v353, 0
      %v365 = vsel %vm357, %v354, 0
      %v368 = vsel %vm357, %v355, 0
      %v371 = vsel %vm357, %v356, 0
      %vm373 = vcmask 1041408
      %v375 = vsel %vm373, %v333, 0
      %377 = vmatprep.subr.bf16.mxu0 0
      %378 = vmatpush1.bf16.msra.mxu0 0
      %379 = vmatprep.subr.bf16.mxu0 0
      %380 = vmatpush1.bf16.msra.mxu0 0
      %381 = vmatprep.subr.bf16.mxu0 0
      %382 = vmatpush1.bf16.msra.mxu0 0
      %383 = vmatprep.subr.bf16.mxu0 0
      %384 = vmatpush1.bf16.msra.mxu0 0
      %385 = vmatprep.subr.bf16.mxu0 0
      %386 = vmatpush1.bf16.msra.mxu0 0
      %387 = vmatprep.subr.bf16.mxu0 0
      %388 = vmatpush1.bf16.msra.mxu0 0
      %389 = vmatprep.subr.bf16.mxu0 0
      %390 = vmatpush1.bf16.msra.mxu0 0
      %391 = vmatprep.subr.bf16.mxu0 0
      %392 = vmatpush1.bf16.msra.mxu0 %v375
      %393 = vmatprep.subr.bf16.mxu0 0
      %394 = vmatpush2.bf16.msra.mxu0 0
      %395 = vmatprep.subr.bf16.mxu0 0
      %396 = vmatpush2.bf16.msra.mxu0 0
      %397 = vmatprep.subr.bf16.mxu0 0
      %398 = vmatpush2.bf16.msra.mxu0 0
      %399 = vmatprep.subr.bf16.mxu0 0
      %400 = vmatpush2.bf16.msra.mxu0 0
      %401 = vmatprep.subr.bf16.mxu0 0
      %402 = vmatpush2.bf16.msra.mxu0 0
      %403 = vmatprep.subr.bf16.mxu0 0
      %404 = vmatpush2.bf16.msra.mxu0 0
      %405 = vmatprep.subr.bf16.mxu0 0
      %406 = vmatpush2.bf16.msra.mxu0 0
      %407 = vmatprep.subr.bf16.mxu0 0
      %408 = vmatpush2.bf16.msra.mxu0 0
      %409 = vmatprep.mubr.bf16.mxu0 0
      %410 = vmatmul.mubr.bf16.gmra.mxu0 %v359
      %v411 = vpop.f32.mrf.mxu0
      %v412 = vadd.f32 0.0, %v411
      %v413 = vpop.f32.mrf.mxu0
      %v414 = vpop.f32.mrf.mxu0
      %v415 = vadd.f32 0.0, %v414
      %v416 = vpop.f32.mrf.mxu0
      %417 = vmatprep.mubr.bf16.mxu0 0
      %418 = vmatmul.mubr.bf16.gmra.mxu0 %v362
      %v419 = vpop.f32.mrf.mxu0
      %v420 = vadd.f32 0.0, %v419
      %v421 = vpop.f32.mrf.mxu0
      %v422 = vpop.f32.mrf.mxu0
      %v423 = vadd.f32 0.0, %v422
      %v424 = vpop.f32.mrf.mxu0
      %425 = vmatprep.mubr.bf16.mxu0 0
      %426 = vmatmul.mubr.bf16.gmra.mxu0 %v365
      %v427 = vpop.f32.mrf.mxu0
      %v428 = vadd.f32 0.0, %v427
      %v429 = vpop.f32.mrf.mxu0
      %v430 = vpop.f32.mrf.mxu0
      %v431 = vadd.f32 0.0, %v430
      %v432 = vpop.f32.mrf.mxu0
      %433 = vmatprep.mubr.bf16.mxu0 0
      %434 = vmatmul.mubr.bf16.gmra.mxu0 %v368
      %v435 = vpop.f32.mrf.mxu0
      %v436 = vadd.f32 0.0, %v435
      %v437 = vpop.f32.mrf.mxu0
      %v438 = vpop.f32.mrf.mxu0
      %v439 = vadd.f32 0.0, %v438
      %v440 = vpop.f32.mrf.mxu0
      %441 = vmatprep.mubr.bf16.mxu0 0
      %442 = vmatmul.mubr.bf16.gmra.mxu0 %v371
      %v443 = vpop.f32.mrf.mxu0
      %v444 = vadd.f32 0.0, %v443
      %v445 = vpop.f32.mrf.mxu0
      %v446 = vpop.f32.mrf.mxu0
      %v447 = vpop.f32.mrf.mxu0
      %448 = vdwg.mxu0
      %v458 = vunpack.c.l.b16 %v313
      %v459 = vunpack.c.l.b16 %v314
      %v460 = vunpack.c.l.b16 %v315
      %v461 = vunpack.c.l.b16 %v316
      %v462 = vunpack.c.l.b16 %v317
      %v463 = vunpack.c.l.b16 %v318
      %v464 = vunpack.c.l.b16 %v319
      %v465 = vunpack.c.l.b16 %v320
      %v466 = vunpack.c.l.b16 %v321
      %v467 = vpack.c.b16 %v459, %v458
      %v468 = vpack.c.b16 %v461, %v460
      %v469 = vpack.c.b16 %v463, %v462
      %v470 = vpack.c.b16 %v465, %v464
      %v471 = vpack.c.b16 %v466, %v466
      %v473 = vsel %vm357, %v467, 0
      %v476 = vsel %vm357, %v468, 0
      %v479 = vsel %vm357, %v469, 0
      %v482 = vsel %vm357, %v470, 0
      %v485 = vsel %vm357, %v471, 0
      %v488 = vsel %vm373, %v322, 0
      %490 = vmatprep.subr.bf16.mxu0 0
      %491 = vmatpush1.bf16.msra.mxu0 0
      %492 = vmatprep.subr.bf16.mxu0 0
      %493 = vmatpush1.bf16.msra.mxu0 0
      %494 = vmatprep.subr.bf16.mxu0 0
      %495 = vmatpush1.bf16.msra.mxu0 0
      %496 = vmatprep.subr.bf16.mxu0 0
      %497 = vmatpush1.bf16.msra.mxu0 0
      %498 = vmatprep.subr.bf16.mxu0 0
      %499 = vmatpush1.bf16.msra.mxu0 0
      %500 = vmatprep.subr.bf16.mxu0 0
      %501 = vmatpush1.bf16.msra.mxu0 0
      %502 = vmatprep.subr.bf16.mxu0 0
      %503 = vmatpush1.bf16.msra.mxu0 0
      %504 = vmatprep.subr.bf16.mxu0 0
      %505 = vmatpush1.bf16.msra.mxu0 %v488
      %506 = vmatprep.subr.bf16.mxu0 0
      %507 = vmatpush2.bf16.msra.mxu0 0
      %508 = vmatprep.subr.bf16.mxu0 0
      %509 = vmatpush2.bf16.msra.mxu0 0
      %510 = vmatprep.subr.bf16.mxu0 0
      %511 = vmatpush2.bf16.msra.mxu0 0
      %512 = vmatprep.subr.bf16.mxu0 0
      %513 = vmatpush2.bf16.msra.mxu0 0
      %514 = vmatprep.subr.bf16.mxu0 0
      %515 = vmatpush2.bf16.msra.mxu0 0
      %516 = vmatprep.subr.bf16.mxu0 0
      %517 = vmatpush2.bf16.msra.mxu0 0
      %518 = vmatprep.subr.bf16.mxu0 0
      %519 = vmatpush2.bf16.msra.mxu0 0
      %520 = vmatprep.subr.bf16.mxu0 0
      %521 = vmatpush2.bf16.msra.mxu0 0
      %522 = vmatprep.mubr.bf16.mxu0 0
      %523 = vmatmul.mubr.bf16.gmra.mxu0 %v473
      %v524 = vpop.f32.mrf.mxu0
      %v525 = vadd.f32 %v412, %v524
      %v526 = vpop.f32.mrf.mxu0
      %v527 = vpop.f32.mrf.mxu0
      %v528 = vadd.f32 %v415, %v527
      %v529 = vpop.f32.mrf.mxu0
      %530 = vmatprep.mubr.bf16.mxu0 0
      %531 = vmatmul.mubr.bf16.gmra.mxu0 %v476
      %v532 = vpop.f32.mrf.mxu0
      %v533 = vadd.f32 %v420, %v532
      %v534 = vpop.f32.mrf.mxu0
      %v535 = vpop.f32.mrf.mxu0
      %v536 = vadd.f32 %v423, %v535
      %v537 = vpop.f32.mrf.mxu0
      %538 = vmatprep.mubr.bf16.mxu0 0
      %539 = vmatmul.mubr.bf16.gmra.mxu0 %v479
      %v540 = vpop.f32.mrf.mxu0
      %v541 = vadd.f32 %v428, %v540
      %v542 = vpop.f32.mrf.mxu0
      %v543 = vpop.f32.mrf.mxu0
      %v544 = vadd.f32 %v431, %v543
      %v545 = vpop.f32.mrf.mxu0
      %546 = vmatprep.mubr.bf16.mxu0 0
      %547 = vmatmul.mubr.bf16.gmra.mxu0 %v482
      %v548 = vpop.f32.mrf.mxu0
      %v549 = vadd.f32 %v436, %v548
      %v550 = vpop.f32.mrf.mxu0
      %v551 = vpop.f32.mrf.mxu0
      %v552 = vadd.f32 %v439, %v551
      %v553 = vpop.f32.mrf.mxu0
      %554 = vmatprep.mubr.bf16.mxu0 0
      %555 = vmatmul.mubr.bf16.gmra.mxu0 %v485
      %v556 = vpop.f32.mrf.mxu0
      %v557 = vadd.f32 %v444, %v556
      %v558 = vpop.f32.mrf.mxu0
      %v559 = vpop.f32.mrf.mxu0
      %v560 = vpop.f32.mrf.mxu0
      %561 = vdwg.mxu0
      %v562 = vld [vmem:[%s291] sm:$0xf]
      %v563 = vld [vmem:[%s291 + $0x4] sm:$0xf]
      %v564 = vld [vmem:[%s291 + $0x8] sm:$0xf]
      %v565 = vld [vmem:[%s291 + $0xc] sm:$0xf]
      %v566 = vld [vmem:[%s291 + $0x10] sm:$0xf]
      %v567 = vld [vmem:[%s291 + $0x14] sm:$0xf]
      %v568 = vld [vmem:[%s291 + $0x18] sm:$0xf]
      %v569 = vld [vmem:[%s291 + $0x1c] sm:$0xf]
      %v570 = vld [vmem:[%s291 + $0x20] sm:$0xf]
      %v571 = vld [vmem:[%s291 + $0x24] sm:$0x1]
      %s572 = scalar_lea.vmem %s4, 4
      %v573 = vld [vmem:[%s572] sm:$0x3]
      %v584 = vunpack.c.l.b16 %v562
      %v585 = vunpack.c.l.b16 %v563
      %v586 = vunpack.c.l.b16 %v564
      %v587 = vunpack.c.l.b16 %v565
      %v588 = vunpack.c.l.b16 %v566
      %v589 = vunpack.c.l.b16 %v567
      %v590 = vunpack.c.l.b16 %v568
      %v591 = vunpack.c.l.b16 %v569
      %v592 = vunpack.c.l.b16 %v570
      %v593 = vunpack.c.l.b16 %v571
      %v594 = vpack.c.b16 %v585, %v584
      %v595 = vpack.c.b16 %v587, %v586
      %v596 = vpack.c.b16 %v589, %v588
      %v597 = vpack.c.b16 %v591, %v590
      %v598 = vpack.c.b16 %v593, %v592
      %vm599 = vsmask.f32 7424
      %v601 = vshrl.u32 %v594, 16
      %v603 = vshll.u32 %v594, 16
      %v605 = vrot.slane %v603, 1
      %v606 = vor.u32 %v601, %v605
      %v608 = vshll.u32 %v595, 16
      %v610 = vrot.slane %v608, 1
      %v611 = vsel %vm599, %v606, %v610
      %v612 = vshrl.u32 %v595, 16
      %v614 = vor.u32 %v612, %v610
      %v616 = vshll.u32 %v596, 16
      %v618 = vrot.slane %v616, 1
      %v619 = vsel %vm599, %v614, %v618
      %v620 = vshrl.u32 %v596, 16
      %v622 = vor.u32 %v620, %v618
      %v624 = vshll.u32 %v597, 16
      %v626 = vrot.slane %v624, 1
      %v627 = vsel %vm599, %v622, %v626
      %v628 = vshrl.u32 %v597, 16
      %v630 = vor.u32 %v628, %v626
      %v632 = vshll.u32 %v598, 16
      %v634 = vrot.slane %v632, 1
      %v635 = vsel %vm599, %v630, %v634
      %v636 = vshrl.u32 %v598, 16
      %v638 = vor.u32 %v636, %v634
      %v640 = vsel %vm357, %v611, 0
      %v643 = vsel %vm357, %v619, 0
      %v646 = vsel %vm357, %v627, 0
      %v649 = vsel %vm357, %v635, 0
      %v652 = vsel %vm357, %v638, 0
      %v655 = vsel %vm373, %v573, 0
      %657 = vmatprep.subr.bf16.mxu0 0
      %658 = vmatpush1.bf16.msra.mxu0 0
      %659 = vmatprep.subr.bf16.mxu0 0
      %660 = vmatpush1.bf16.msra.mxu0 0
      %661 = vmatprep.subr.bf16.mxu0 0
      %662 = vmatpush1.bf16.msra.mxu0 0
      %663 = vmatprep.subr.bf16.mxu0 0
      %664 = vmatpush1.bf16.msra.mxu0 0
      %665 = vmatprep.subr.bf16.mxu0 0
      %666 = vmatpush1.bf16.msra.mxu0 0
      %667 = vmatprep.subr.bf16.mxu0 0
      %668 = vmatpush1.bf16.msra.mxu0 0
      %669 = vmatprep.subr.bf16.mxu0 0
      %670 = vmatpush1.bf16.msra.mxu0 0
      %671 = vmatprep.subr.bf16.mxu0 0
      %672 = vmatpush1.bf16.msra.mxu0 %v655
      %673 = vmatprep.subr.bf16.mxu0 0
      %674 = vmatpush2.bf16.msra.mxu0 0
      %675 = vmatprep.subr.bf16.mxu0 0
      %676 = vmatpush2.bf16.msra.mxu0 0
      %677 = vmatprep.subr.bf16.mxu0 0
      %678 = vmatpush2.bf16.msra.mxu0 0
      %679 = vmatprep.subr.bf16.mxu0 0
      %680 = vmatpush2.bf16.msra.mxu0 0
      %681 = vmatprep.subr.bf16.mxu0 0
      %682 = vmatpush2.bf16.msra.mxu0 0
      %683 = vmatprep.subr.bf16.mxu0 0
      %684 = vmatpush2.bf16.msra.mxu0 0
      %685 = vmatprep.subr.bf16.mxu0 0
      %686 = vmatpush2.bf16.msra.mxu0 0
      %687 = vmatprep.subr.bf16.mxu0 0
      %688 = vmatpush2.bf16.msra.mxu0 0
      %689 = vmatprep.mubr.bf16.mxu0 0
      %690 = vmatmul.mubr.bf16.gmra.mxu0 %v640
      %v691 = vpop.f32.mrf.mxu0
      %v692 = vadd.f32 0.0, %v691
      %v693 = vpop.f32.mrf.mxu0
      %v694 = vpop.f32.mrf.mxu0
      %v695 = vadd.f32 0.0, %v694
      %v696 = vpop.f32.mrf.mxu0
      %697 = vmatprep.mubr.bf16.mxu0 0
      %698 = vmatmul.mubr.bf16.gmra.mxu0 %v643
      %v699 = vpop.f32.mrf.mxu0
      %v700 = vadd.f32 0.0, %v699
      %v701 = vpop.f32.mrf.mxu0
      %v702 = vpop.f32.mrf.mxu0
      %v703 = vadd.f32 0.0, %v702
      %v704 = vpop.f32.mrf.mxu0
      %705 = vmatprep.mubr.bf16.mxu0 0
      %706 = vmatmul.mubr.bf16.gmra.mxu0 %v646
      %v707 = vpop.f32.mrf.mxu0
      %v708 = vadd.f32 0.0, %v707
      %v709 = vpop.f32.mrf.mxu0
      %v710 = vpop.f32.mrf.mxu0
      %v711 = vadd.f32 0.0, %v710
      %v712 = vpop.f32.mrf.mxu0
      %713 = vmatprep.mubr.bf16.mxu0 0
      %714 = vmatmul.mubr.bf16.gmra.mxu0 %v649
      %v715 = vpop.f32.mrf.mxu0
      %v716 = vadd.f32 0.0, %v715
      %v717 = vpop.f32.mrf.mxu0
      %v718 = vpop.f32.mrf.mxu0
      %v719 = vadd.f32 0.0, %v718
      %v720 = vpop.f32.mrf.mxu0
      %721 = vmatprep.mubr.bf16.mxu0 0
      %722 = vmatmul.mubr.bf16.gmra.mxu0 %v652
      %v723 = vpop.f32.mrf.mxu0
      %v724 = vadd.f32 0.0, %v723
      %v725 = vpop.f32.mrf.mxu0
      %v726 = vpop.f32.mrf.mxu0
      %v727 = vpop.f32.mrf.mxu0
      %728 = vdwg.mxu0
      %v729 = vadd.f32 %v525, %v692
      %v730 = vadd.f32 %v528, %v695
      %v731 = vadd.f32 %v533, %v700
      %v732 = vadd.f32 %v536, %v703
      %v733 = vadd.f32 %v541, %v708
      %v734 = vadd.f32 %v544, %v711
      %v735 = vadd.f32 %v549, %v716
      %v736 = vadd.f32 %v552, %v719
      %v737 = vadd.f32 %v557, %v724
      %v738 = vld [vmem:[%s301] sm:$0xf]
      %v739 = vld [vmem:[%s301 + $0x4] sm:$0xf]
      %v740 = vld [vmem:[%s301 + $0x8] sm:$0xf]
      %v741 = vld [vmem:[%s301 + $0xc] sm:$0xf]
      %v742 = vld [vmem:[%s301 + $0x10] sm:$0xf]
      %v743 = vld [vmem:[%s301 + $0x14] sm:$0xf]
      %v744 = vld [vmem:[%s301 + $0x18] sm:$0xf]
      %v745 = vld [vmem:[%s301 + $0x1c] sm:$0xf]
      %v746 = vld [vmem:[%s301 + $0x20] sm:$0xf]
      %s747 = scalar_lea.vmem %s4, 6
      %v748 = vld [vmem:[%s747] sm:$0x3]
      %v758 = vunpack.c.l.b16 %v738
      %v759 = vunpack.c.l.b16 %v739
      %v760 = vunpack.c.l.b16 %v740
      %v761 = vunpack.c.l.b16 %v741
      %v762 = vunpack.c.l.b16 %v742
      %v763 = vunpack.c.l.b16 %v743
      %v764 = vunpack.c.l.b16 %v744
      %v765 = vunpack.c.l.b16 %v745
      %v766 = vunpack.c.l.b16 %v746
      %v767 = vpack.c.b16 %v759, %v758
      %v768 = vpack.c.b16 %v761, %v760
      %v769 = vpack.c.b16 %v763, %v762
      %v770 = vpack.c.b16 %v765, %v764
      %v771 = vpack.c.b16 %v766, %v766
      %v773 = vsel %vm357, %v767, 0
      %v776 = vsel %vm357, %v768, 0
      %v779 = vsel %vm357, %v769, 0
      %v782 = vsel %vm357, %v770, 0
      %v785 = vsel %vm357, %v771, 0
      %v788 = vsel %vm373, %v748, 0
      %790 = vmatprep.subr.bf16.mxu0 0
      %791 = vmatpush1.bf16.msra.mxu0 0
      %792 = vmatprep.subr.bf16.mxu0 0
      %793 = vmatpush1.bf16.msra.mxu0 0
      %794 = vmatprep.subr.bf16.mxu0 0
      %795 = vmatpush1.bf16.msra.mxu0 0
      %796 = vmatprep.subr.bf16.mxu0 0
      %797 = vmatpush1.bf16.msra.mxu0 0
      %798 = vmatprep.subr.bf16.mxu0 0
      %799 = vmatpush1.bf16.msra.mxu0 0
      %800 = vmatprep.subr.bf16.mxu0 0
      %801 = vmatpush1.bf16.msra.mxu0 0
      %802 = vmatprep.subr.bf16.mxu0 0
      %803 = vmatpush1.bf16.msra.mxu0 0
      %804 = vmatprep.subr.bf16.mxu0 0
      %805 = vmatpush1.bf16.msra.mxu0 %v788
      %806 = vmatprep.subr.bf16.mxu0 0
      %807 = vmatpush2.bf16.msra.mxu0 0
      %808 = vmatprep.subr.bf16.mxu0 0
      %809 = vmatpush2.bf16.msra.mxu0 0
      %810 = vmatprep.subr.bf16.mxu0 0
      %811 = vmatpush2.bf16.msra.mxu0 0
      %812 = vmatprep.subr.bf16.mxu0 0
      %813 = vmatpush2.bf16.msra.mxu0 0
      %814 = vmatprep.subr.bf16.mxu0 0
      %815 = vmatpush2.bf16.msra.mxu0 0
      %816 = vmatprep.subr.bf16.mxu0 0
      %817 = vmatpush2.bf16.msra.mxu0 0
      %818 = vmatprep.subr.bf16.mxu0 0
      %819 = vmatpush2.bf16.msra.mxu0 0
      %820 = vmatprep.subr.bf16.mxu0 0
      %821 = vmatpush2.bf16.msra.mxu0 0
      %822 = vmatprep.mubr.bf16.mxu0 0
      %823 = vmatmul.mubr.bf16.gmra.mxu0 %v773
      %v824 = vpop.f32.mrf.mxu0
      %v825 = vadd.f32 0.0, %v824
      %v826 = vpop.f32.mrf.mxu0
      %v827 = vpop.f32.mrf.mxu0
      %v828 = vadd.f32 0.0, %v827
      %v829 = vpop.f32.mrf.mxu0
      %830 = vmatprep.mubr.bf16.mxu0 0
      %831 = vmatmul.mubr.bf16.gmra.mxu0 %v776
      %v832 = vpop.f32.mrf.mxu0
      %v833 = vadd.f32 0.0, %v832
      %v834 = vpop.f32.mrf.mxu0
      %v835 = vpop.f32.mrf.mxu0
      %v836 = vadd.f32 0.0, %v835
      %v837 = vpop.f32.mrf.mxu0
      %838 = vmatprep.mubr.bf16.mxu0 0
      %839 = vmatmul.mubr.bf16.gmra.mxu0 %v779
      %v840 = vpop.f32.mrf.mxu0
      %v841 = vadd.f32 0.0, %v840
      %v842 = vpop.f32.mrf.mxu0
      %v843 = vpop.f32.mrf.mxu0
      %v844 = vadd.f32 0.0, %v843
      %v845 = vpop.f32.mrf.mxu0
      %846 = vmatprep.mubr.bf16.mxu0 0
      %847 = vmatmul.mubr.bf16.gmra.mxu0 %v782
      %v848 = vpop.f32.mrf.mxu0
      %v849 = vadd.f32 0.0, %v848
      %v850 = vpop.f32.mrf.mxu0
      %v851 = vpop.f32.mrf.mxu0
      %v852 = vadd.f32 0.0, %v851
      %v853 = vpop.f32.mrf.mxu0
      %854 = vmatprep.mubr.bf16.mxu0 0
      %855 = vmatmul.mubr.bf16.gmra.mxu0 %v785
      %v856 = vpop.f32.mrf.mxu0
      %v857 = vadd.f32 0.0, %v856
      %v858 = vpop.f32.mrf.mxu0
      %v859 = vpop.f32.mrf.mxu0
      %v860 = vpop.f32.mrf.mxu0
      %861 = vdwg.mxu0
      %v862 = vadd.f32 %v729, %v825
      %v863 = vadd.f32 %v730, %v828
      %v864 = vadd.f32 %v731, %v833
      %v865 = vadd.f32 %v732, %v836
      %v866 = vadd.f32 %v733, %v841
      %v867 = vadd.f32 %v734, %v844
      %v868 = vadd.f32 %v735, %v849
      %v869 = vadd.f32 %v736, %v852
      %v870 = vadd.f32 %v737, %v857
      %v871 = vld [vmem:[%s306] sm:$0xf]
      %v872 = vld [vmem:[%s306 + $0x4] sm:$0xf]
      %v873 = vld [vmem:[%s306 + $0x8] sm:$0xf]
      %v874 = vld [vmem:[%s306 + $0xc] sm:$0xf]
      %v875 = vld [vmem:[%s306 + $0x10] sm:$0xf]
      %v876 = vld [vmem:[%s306 + $0x14] sm:$0xf]
      %v877 = vld [vmem:[%s306 + $0x18] sm:$0xf]
      %v878 = vld [vmem:[%s306 + $0x1c] sm:$0xf]
      %v879 = vld [vmem:[%s306 + $0x20] sm:$0xf]
      %s880 = scalar_lea.vmem %s4, 8
      %v881 = vld [vmem:[%s880] sm:$0x3]
      %v891 = vunpack.c.l.b16 %v871
      %v892 = vunpack.c.l.b16 %v872
      %v893 = vunpack.c.l.b16 %v873
      %v894 = vunpack.c.l.b16 %v874
      %v895 = vunpack.c.l.b16 %v875
      %v896 = vunpack.c.l.b16 %v876
      %v897 = vunpack.c.l.b16 %v877
      %v898 = vunpack.c.l.b16 %v878
      %v899 = vunpack.c.l.b16 %v879
      %v900 = vpack.c.b16 %v892, %v891
      %v901 = vpack.c.b16 %v894, %v893
      %v902 = vpack.c.b16 %v896, %v895
      %v903 = vpack.c.b16 %v898, %v897
      %v904 = vpack.c.b16 %v899, %v899
      %v906 = vsel %vm357, %v900, 0
      %v909 = vsel %vm357, %v901, 0
      %v912 = vsel %vm357, %v902, 0
      %v915 = vsel %vm357, %v903, 0
      %v918 = vsel %vm357, %v904, 0
      %v921 = vsel %vm373, %v881, 0
      %923 = vmatprep.subr.bf16.mxu0 0
      %924 = vmatpush1.bf16.msra.mxu0 0
      %925 = vmatprep.subr.bf16.mxu0 0
      %926 = vmatpush1.bf16.msra.mxu0 0
      %927 = vmatprep.subr.bf16.mxu0 0
      %928 = vmatpush1.bf16.msra.mxu0 0
      %929 = vmatprep.subr.bf16.mxu0 0
      %930 = vmatpush1.bf16.msra.mxu0 0
      %931 = vmatprep.subr.bf16.mxu0 0
      %932 = vmatpush1.bf16.msra.mxu0 0
      %933 = vmatprep.subr.bf16.mxu0 0
      %934 = vmatpush1.bf16.msra.mxu0 0
      %935 = vmatprep.subr.bf16.mxu0 0
      %936 = vmatpush1.bf16.msra.mxu0 0
      %937 = vmatprep.subr.bf16.mxu0 0
      %938 = vmatpush1.bf16.msra.mxu0 %v921
      %939 = vmatprep.subr.bf16.mxu0 0
      %940 = vmatpush2.bf16.msra.mxu0 0
      %941 = vmatprep.subr.bf16.mxu0 0
      %942 = vmatpush2.bf16.msra.mxu0 0
      %943 = vmatprep.subr.bf16.mxu0 0
      %944 = vmatpush2.bf16.msra.mxu0 0
      %945 = vmatprep.subr.bf16.mxu0 0
      %946 = vmatpush2.bf16.msra.mxu0 0
      %947 = vmatprep.subr.bf16.mxu0 0
      %948 = vmatpush2.bf16.msra.mxu0 0
      %949 = vmatprep.subr.bf16.mxu0 0
      %950 = vmatpush2.bf16.msra.mxu0 0
      %951 = vmatprep.subr.bf16.mxu0 0
      %952 = vmatpush2.bf16.msra.mxu0 0
      %953 = vmatprep.subr.bf16.mxu0 0
      %954 = vmatpush2.bf16.msra.mxu0 0
      %955 = vmatprep.mubr.bf16.mxu0 0
      %956 = vmatmul.mubr.bf16.gmra.mxu0 %v906
      %v957 = vpop.f32.mrf.mxu0
      %v958 = vadd.f32 0.0, %v957
      %v959 = vpop.f32.mrf.mxu0
      %v960 = vpop.f32.mrf.mxu0
      %v961 = vadd.f32 0.0, %v960
      %v962 = vpop.f32.mrf.mxu0
      %963 = vmatprep.mubr.bf16.mxu0 0
      %964 = vmatmul.mubr.bf16.gmra.mxu0 %v909
      %v965 = vpop.f32.mrf.mxu0
      %v966 = vadd.f32 0.0, %v965
      %v967 = vpop.f32.mrf.mxu0
      %v968 = vpop.f32.mrf.mxu0
      %v969 = vadd.f32 0.0, %v968
      %v970 = vpop.f32.mrf.mxu0
      %971 = vmatprep.mubr.bf16.mxu0 0
      %972 = vmatmul.mubr.bf16.gmra.mxu0 %v912
      %v973 = vpop.f32.mrf.mxu0
      %v974 = vadd.f32 0.0, %v973
      %v975 = vpop.f32.mrf.mxu0
      %v976 = vpop.f32.mrf.mxu0
      %v977 = vadd.f32 0.0, %v976
      %v978 = vpop.f32.mrf.mxu0
      %979 = vmatprep.mubr.bf16.mxu0 0
      %980 = vmatmul.mubr.bf16.gmra.mxu0 %v915
      %v981 = vpop.f32.mrf.mxu0
      %v982 = vadd.f32 0.0, %v981
      %v983 = vpop.f32.mrf.mxu0
      %v984 = vpop.f32.mrf.mxu0
      %v985 = vadd.f32 0.0, %v984
      %v986 = vpop.f32.mrf.mxu0
      %987 = vmatprep.mubr.bf16.mxu0 0
      %988 = vmatmul.mubr.bf16.gmra.mxu0 %v918
      %v989 = vpop.f32.mrf.mxu0
      %v990 = vadd.f32 0.0, %v989
      %v991 = vpop.f32.mrf.mxu0
      %v992 = vpop.f32.mrf.mxu0
      %v993 = vpop.f32.mrf.mxu0
      %994 = vdwg.mxu0
      %v995 = vadd.f32 %v862, %v958
      %v996 = vadd.f32 %v863, %v961
      %v997 = vadd.f32 %v864, %v966
      %v998 = vadd.f32 %v865, %v969
      %v999 = vadd.f32 %v866, %v974
      %v1000 = vadd.f32 %v867, %v977
      %v1001 = vadd.f32 %v868, %v982
      %v1002 = vadd.f32 %v869, %v985
      %v1003 = vadd.f32 %v870, %v990
      %v1004 = vld [vmem:[%s301] sm:$0xf]
      %v1005 = vld [vmem:[%s301 + $0x4] sm:$0xf]
      %v1006 = vld [vmem:[%s301 + $0x8] sm:$0xf]
      %v1007 = vld [vmem:[%s301 + $0xc] sm:$0xf]
      %v1008 = vld [vmem:[%s301 + $0x10] sm:$0xf]
      %v1009 = vld [vmem:[%s301 + $0x14] sm:$0xf]
      %v1010 = vld [vmem:[%s301 + $0x18] sm:$0xf]
      %v1011 = vld [vmem:[%s301 + $0x1c] sm:$0xf]
      %v1012 = vld [vmem:[%s301 + $0x20] sm:$0xf]
      %v1013 = vld [vmem:[%s301 + $0x24] sm:$0x1]
      %s1014 = scalar_lea.vmem %s4, 10
      %v1015 = vld [vmem:[%s1014] sm:$0x3]
      %v1026 = vunpack.c.l.b16 %v1004
      %v1027 = vunpack.c.l.b16 %v1005
      %v1028 = vunpack.c.l.b16 %v1006
      %v1029 = vunpack.c.l.b16 %v1007
      %v1030 = vunpack.c.l.b16 %v1008
      %v1031 = vunpack.c.l.b16 %v1009
      %v1032 = vunpack.c.l.b16 %v1010
      %v1033 = vunpack.c.l.b16 %v1011
      %v1034 = vunpack.c.l.b16 %v1012
      %v1035 = vunpack.c.l.b16 %v1013
      %v1036 = vpack.c.b16 %v1027, %v1026
      %v1037 = vpack.c.b16 %v1029, %v1028
      %v1038 = vpack.c.b16 %v1031, %v1030
      %v1039 = vpack.c.b16 %v1033, %v1032
      %v1040 = vpack.c.b16 %v1035, %v1034
      %v1042 = vshrl.u32 %v1036, 16
      %v1044 = vshll.u32 %v1036, 16
      %v1046 = vrot.slane %v1044, 1
      %v1047 = vor.u32 %v1042, %v1046
      %v1049 = vshll.u32 %v1037, 16
      %v1051 = vrot.slane %v1049, 1
      %v1052 = vsel %vm599, %v1047, %v1051
      %v1053 = vshrl.u32 %v1037, 16
      %v1055 = vor.u32 %v1053, %v1051
      %v1057 = vshll.u32 %v1038, 16
      %v1059 = vrot.slane %v1057, 1
      %v1060 = vsel %vm599, %v1055, %v1059
      %v1061 = vshrl.u32 %v1038, 16
      %v1063 = vor.u32 %v1061, %v1059
      %v1065 = vshll.u32 %v1039, 16
      %v1067 = vrot.slane %v1065, 1
      %v1068 = vsel %vm599, %v1063, %v1067
      %v1069 = vshrl.u32 %v1039, 16
      %v1071 = vor.u32 %v1069, %v1067
      %v1073 = vshll.u32 %v1040, 16
      %v1075 = vrot.slane %v1073, 1
      %v1076 = vsel %vm599, %v1071, %v1075
      %v1077 = vshrl.u32 %v1040, 16
      %v1079 = vor.u32 %v1077, %v1075
      %v1081 = vsel %vm357, %v1052, 0
      %v1084 = vsel %vm357, %v1060, 0
      %v1087 = vsel %vm357, %v1068, 0
      %v1090 = vsel %vm357, %v1076, 0
      %v1093 = vsel %vm357, %v1079, 0
      %v1096 = vsel %vm373, %v1015, 0
      %1098 = vmatprep.subr.bf16.mxu0 0
      %1099 = vmatpush1.bf16.msra.mxu0 0
      %1100 = vmatprep.subr.bf16.mxu0 0
      %1101 = vmatpush1.bf16.msra.mxu0 0
      %1102 = vmatprep.subr.bf16.mxu0 0
      %1103 = vmatpush1.bf16.msra.mxu0 0
      %1104 = vmatprep.subr.bf16.mxu0 0
      %1105 = vmatpush1.bf16.msra.mxu0 0
      %1106 = vmatprep.subr.bf16.mxu0 0
      %1107 = vmatpush1.bf16.msra.mxu0 0
      %1108 = vmatprep.subr.bf16.mxu0 0
      %1109 = vmatpush1.bf16.msra.mxu0 0
      %1110 = vmatprep.subr.bf16.mxu0 0
      %1111 = vmatpush1.bf16.msra.mxu0 0
      %1112 = vmatprep.subr.bf16.mxu0 0
      %1113 = vmatpush1.bf16.msra.mxu0 %v1096
      %1114 = vmatprep.subr.bf16.mxu0 0
      %1115 = vmatpush2.bf16.msra.mxu0 0
      %1116 = vmatprep.subr.bf16.mxu0 0
      %1117 = vmatpush2.bf16.msra.mxu0 0
      %1118 = vmatprep.subr.bf16.mxu0 0
      %1119 = vmatpush2.bf16.msra.mxu0 0
      %1120 = vmatprep.subr.bf16.mxu0 0
      %1121 = vmatpush2.bf16.msra.mxu0 0
      %1122 = vmatprep.subr.bf16.mxu0 0
      %1123 = vmatpush2.bf16.msra.mxu0 0
      %1124 = vmatprep.subr.bf16.mxu0 0
      %1125 = vmatpush2.bf16.msra.mxu0 0
      %1126 = vmatprep.subr.bf16.mxu0 0
      %1127 = vmatpush2.bf16.msra.mxu0 0
      %1128 = vmatprep.subr.bf16.mxu0 0
      %1129 = vmatpush2.bf16.msra.mxu0 0
      %1130 = vmatprep.mubr.bf16.mxu0 0
      %1131 = vmatmul.mubr.bf16.gmra.mxu0 %v1081
      %v1132 = vpop.f32.mrf.mxu0
      %v1133 = vadd.f32 0.0, %v1132
      %v1134 = vpop.f32.mrf.mxu0
      %v1135 = vpop.f32.mrf.mxu0
      %v1136 = vadd.f32 0.0, %v1135
      %v1137 = vpop.f32.mrf.mxu0
      %1138 = vmatprep.mubr.bf16.mxu0 0
      %1139 = vmatmul.mubr.bf16.gmra.mxu0 %v1084
      %v1140 = vpop.f32.mrf.mxu0
      %v1141 = vadd.f32 0.0, %v1140
      %v1142 = vpop.f32.mrf.mxu0
      %v1143 = vpop.f32.mrf.mxu0
      %v1144 = vadd.f32 0.0, %v1143
      %v1145 = vpop.f32.mrf.mxu0
      %1146 = vmatprep.mubr.bf16.mxu0 0
      %1147 = vmatmul.mubr.bf16.gmra.mxu0 %v1087
      %v1148 = vpop.f32.mrf.mxu0
      %v1149 = vadd.f32 0.0, %v1148
      %v1150 = vpop.f32.mrf.mxu0
      %v1151 = vpop.f32.mrf.mxu0
      %v1152 = vadd.f32 0.0, %v1151
      %v1153 = vpop.f32.mrf.mxu0
      %1154 = vmatprep.mubr.bf16.mxu0 0
      %1155 = vmatmul.mubr.bf16.gmra.mxu0 %v1090
      %v1156 = vpop.f32.mrf.mxu0
      %v1157 = vadd.f32 0.0, %v1156
      %v1158 = vpop.f32.mrf.mxu0
      %v1159 = vpop.f32.mrf.mxu0
      %v1160 = vadd.f32 0.0, %v1159
      %v1161 = vpop.f32.mrf.mxu0
      %1162 = vmatprep.mubr.bf16.mxu0 0
      %1163 = vmatmul.mubr.bf16.gmra.mxu0 %v1093
      %v1164 = vpop.f32.mrf.mxu0
      %v1165 = vadd.f32 0.0, %v1164
      %v1166 = vpop.f32.mrf.mxu0
      %v1167 = vpop.f32.mrf.mxu0
      %v1168 = vpop.f32.mrf.mxu0
      %1169 = vdwg.mxu0
      %v1170 = vadd.f32 %v995, %v1133
      %v1171 = vadd.f32 %v996, %v1136
      %v1172 = vadd.f32 %v997, %v1141
      %v1173 = vadd.f32 %v998, %v1144
      %v1174 = vadd.f32 %v999, %v1149
      %v1175 = vadd.f32 %v1000, %v1152
      %v1176 = vadd.f32 %v1001, %v1157
      %v1177 = vadd.f32 %v1002, %v1160
      %v1178 = vadd.f32 %v1003, %v1165
      %v1179 = vld [vmem:[%s291 + $0x4] sm:$0xf]
      %v1180 = vld [vmem:[%s291 + $0x8] sm:$0xf]
      %v1181 = vld [vmem:[%s291 + $0xc] sm:$0xf]
      %v1182 = vld [vmem:[%s291 + $0x10] sm:$0xf]
      %v1183 = vld [vmem:[%s291 + $0x14] sm:$0xf]
      %v1184 = vld [vmem:[%s291 + $0x18] sm:$0xf]
      %v1185 = vld [vmem:[%s291 + $0x1c] sm:$0xf]
      %v1186 = vld [vmem:[%s291 + $0x20] sm:$0xf]
      %v1187 = vld [vmem:[%s291 + $0x24] sm:$0xf]
      %v1188 = vld [vmem:[%s291 + $0x28] sm:$0x1]
      %s1189 = scalar_lea.vmem %s4, 12
      %v1190 = vld [vmem:[%s1189] sm:$0x3]
      %v1201 = vunpack.c.l.b16 %v1179
      %v1202 = vunpack.c.l.b16 %v1180
      %v1203 = vunpack.c.l.b16 %v1181
      %v1204 = vunpack.c.l.b16 %v1182
      %v1205 = vunpack.c.l.b16 %v1183
      %v1206 = vunpack.c.l.b16 %v1184
      %v1207 = vunpack.c.l.b16 %v1185
      %v1208 = vunpack.c.l.b16 %v1186
      %v1209 = vunpack.c.l.b16 %v1187
      %v1210 = vunpack.c.l.b16 %v1188
      %v1211 = vpack.c.b16 %v1202, %v1201
      %v1212 = vpack.c.b16 %v1204, %v1203
      %v1213 = vpack.c.b16 %v1206, %v1205
      %v1214 = vpack.c.b16 %v1208, %v1207
      %v1215 = vpack.c.b16 %v1210, %v1209
      %v1217 = vshrl.u32 %v1211, 16
      %v1219 = vshll.u32 %v1211, 16
      %v1221 = vrot.slane %v1219, 1
      %v1222 = vor.u32 %v1217, %v1221
      %v1224 = vshll.u32 %v1212, 16
      %v1226 = vrot.slane %v1224, 1
      %v1227 = vsel %vm599, %v1222, %v1226
      %v1228 = vshrl.u32 %v1212, 16
      %v1230 = vor.u32 %v1228, %v1226
      %v1232 = vshll.u32 %v1213, 16
      %v1234 = vrot.slane %v1232, 1
      %v1235 = vsel %vm599, %v1230, %v1234
      %v1236 = vshrl.u32 %v1213, 16
      %v1238 = vor.u32 %v1236, %v1234
      %v1240 = vshll.u32 %v1214, 16
      %v1242 = vrot.slane %v1240, 1
      %v1243 = vsel %vm599, %v1238, %v1242
      %v1244 = vshrl.u32 %v1214, 16
      %v1246 = vor.u32 %v1244, %v1242
      %v1248 = vshll.u32 %v1215, 16
      %v1250 = vrot.slane %v1248, 1
      %v1251 = vsel %vm599, %v1246, %v1250
      %v1252 = vshrl.u32 %v1215, 16
      %v1254 = vor.u32 %v1252, %v1250
      %v1256 = vsel %vm357, %v1227, 0
      %v1259 = vsel %vm357, %v1235, 0
      %v1262 = vsel %vm357, %v1243, 0
      %v1265 = vsel %vm357, %v1251, 0
      %v1268 = vsel %vm357, %v1254, 0
      %v1271 = vsel %vm373, %v1190, 0
      %1273 = vmatprep.subr.bf16.mxu0 0
      %1274 = vmatpush1.bf16.msra.mxu0 0
      %1275 = vmatprep.subr.bf16.mxu0 0
      %1276 = vmatpush1.bf16.msra.mxu0 0
      %1277 = vmatprep.subr.bf16.mxu0 0
      %1278 = vmatpush1.bf16.msra.mxu0 0
      %1279 = vmatprep.subr.bf16.mxu0 0
      %1280 = vmatpush1.bf16.msra.mxu0 0
      %1281 = vmatprep.subr.bf16.mxu0 0
      %1282 = vmatpush1.bf16.msra.mxu0 0
      %1283 = vmatprep.subr.bf16.mxu0 0
      %1284 = vmatpush1.bf16.msra.mxu0 0
      %1285 = vmatprep.subr.bf16.mxu0 0
      %1286 = vmatpush1.bf16.msra.mxu0 0
      %1287 = vmatprep.subr.bf16.mxu0 0
      %1288 = vmatpush1.bf16.msra.mxu0 %v1271
      %1289 = vmatprep.subr.bf16.mxu0 0
      %1290 = vmatpush2.bf16.msra.mxu0 0
      %1291 = vmatprep.subr.bf16.mxu0 0
      %1292 = vmatpush2.bf16.msra.mxu0 0
      %1293 = vmatprep.subr.bf16.mxu0 0
      %1294 = vmatpush2.bf16.msra.mxu0 0
      %1295 = vmatprep.subr.bf16.mxu0 0
      %1296 = vmatpush2.bf16.msra.mxu0 0
      %1297 = vmatprep.subr.bf16.mxu0 0
      %1298 = vmatpush2.bf16.msra.mxu0 0
      %1299 = vmatprep.subr.bf16.mxu0 0
      %1300 = vmatpush2.bf16.msra.mxu0 0
      %1301 = vmatprep.subr.bf16.mxu0 0
      %1302 = vmatpush2.bf16.msra.mxu0 0
      %1303 = vmatprep.subr.bf16.mxu0 0
      %1304 = vmatpush2.bf16.msra.mxu0 0
      %1305 = vmatprep.mubr.bf16.mxu0 0
      %1306 = vmatmul.mubr.bf16.gmra.mxu0 %v1256
      %v1307 = vpop.f32.mrf.mxu0
      %v1308 = vadd.f32 0.0, %v1307
      %v1309 = vpop.f32.mrf.mxu0
      %v1310 = vpop.f32.mrf.mxu0
      %v1311 = vadd.f32 0.0, %v1310
      %v1312 = vpop.f32.mrf.mxu0
      %1313 = vmatprep.mubr.bf16.mxu0 0
      %1314 = vmatmul.mubr.bf16.gmra.mxu0 %v1259
      %v1315 = vpop.f32.mrf.mxu0
      %v1316 = vadd.f32 0.0, %v1315
      %v1317 = vpop.f32.mrf.mxu0
      %v1318 = vpop.f32.mrf.mxu0
      %v1319 = vadd.f32 0.0, %v1318
      %v1320 = vpop.f32.mrf.mxu0
      %1321 = vmatprep.mubr.bf16.mxu0 0
      %1322 = vmatmul.mubr.bf16.gmra.mxu0 %v1262
      %v1323 = vpop.f32.mrf.mxu0
      %v1324 = vadd.f32 0.0, %v1323
      %v1325 = vpop.f32.mrf.mxu0
      %v1326 = vpop.f32.mrf.mxu0
      %v1327 = vadd.f32 0.0, %v1326
      %v1328 = vpop.f32.mrf.mxu0
      %1329 = vmatprep.mubr.bf16.mxu0 0
      %1330 = vmatmul.mubr.bf16.gmra.mxu0 %v1265
      %v1331 = vpop.f32.mrf.mxu0
      %v1332 = vadd.f32 0.0, %v1331
      %v1333 = vpop.f32.mrf.mxu0
      %v1334 = vpop.f32.mrf.mxu0
      %v1335 = vadd.f32 0.0, %v1334
      %v1336 = vpop.f32.mrf.mxu0
      %1337 = vmatprep.mubr.bf16.mxu0 0
      %1338 = vmatmul.mubr.bf16.gmra.mxu0 %v1268
      %v1339 = vpop.f32.mrf.mxu0
      %v1340 = vadd.f32 0.0, %v1339
      %v1341 = vpop.f32.mrf.mxu0
      %v1342 = vpop.f32.mrf.mxu0
      %v1343 = vpop.f32.mrf.mxu0
      %1344 = vdwg.mxu0
      %v1345 = vadd.f32 %v1170, %v1308
      %v1346 = vadd.f32 %v1171, %v1311
      %v1347 = vadd.f32 %v1172, %v1316
      %v1348 = vadd.f32 %v1173, %v1319
      %v1349 = vadd.f32 %v1174, %v1324
      %v1350 = vadd.f32 %v1175, %v1327
      %v1351 = vadd.f32 %v1176, %v1332
      %v1352 = vadd.f32 %v1177, %v1335
      %v1353 = vadd.f32 %v1178, %v1340
      %v1354 = vld [vmem:[%s296 + $0x4] sm:$0xf]
      %v1355 = vld [vmem:[%s296 + $0x8] sm:$0xf]
      %v1356 = vld [vmem:[%s296 + $0xc] sm:$0xf]
      %v1357 = vld [vmem:[%s296 + $0x10] sm:$0xf]
      %v1358 = vld [vmem:[%s296 + $0x14] sm:$0xf]
      %v1359 = vld [vmem:[%s296 + $0x18] sm:$0xf]
      %v1360 = vld [vmem:[%s296 + $0x1c] sm:$0xf]
      %v1361 = vld [vmem:[%s296 + $0x20] sm:$0xf]
      %v1362 = vld [vmem:[%s296 + $0x24] sm:$0xf]
      %v1363 = vld [vmem:[%s296 + $0x28] sm:$0x1]
      %s1364 = scalar_lea.vmem %s4, 14
      %v1365 = vld [vmem:[%s1364] sm:$0x3]
      %v1376 = vunpack.c.l.b16 %v1354
      %v1377 = vunpack.c.l.b16 %v1355
      %v1378 = vunpack.c.l.b16 %v1356
      %v1379 = vunpack.c.l.b16 %v1357
      %v1380 = vunpack.c.l.b16 %v1358
      %v1381 = vunpack.c.l.b16 %v1359
      %v1382 = vunpack.c.l.b16 %v1360
      %v1383 = vunpack.c.l.b16 %v1361
      %v1384 = vunpack.c.l.b16 %v1362
      %v1385 = vunpack.c.l.b16 %v1363
      %v1386 = vpack.c.b16 %v1377, %v1376
      %v1387 = vpack.c.b16 %v1379, %v1378
      %v1388 = vpack.c.b16 %v1381, %v1380
      %v1389 = vpack.c.b16 %v1383, %v1382
      %v1390 = vpack.c.b16 %v1385, %v1384
      %v1392 = vshrl.u32 %v1386, 16
      %v1394 = vshll.u32 %v1386, 16
      %v1396 = vrot.slane %v1394, 1
      %v1397 = vor.u32 %v1392, %v1396
      %v1399 = vshll.u32 %v1387, 16
      %v1401 = vrot.slane %v1399, 1
      %v1402 = vsel %vm599, %v1397, %v1401
      %v1403 = vshrl.u32 %v1387, 16
      %v1405 = vor.u32 %v1403, %v1401
      %v1407 = vshll.u32 %v1388, 16
      %v1409 = vrot.slane %v1407, 1
      %v1410 = vsel %vm599, %v1405, %v1409
      %v1411 = vshrl.u32 %v1388, 16
      %v1413 = vor.u32 %v1411, %v1409
      %v1415 = vshll.u32 %v1389, 16
      %v1417 = vrot.slane %v1415, 1
      %v1418 = vsel %vm599, %v1413, %v1417
      %v1419 = vshrl.u32 %v1389, 16
      %v1421 = vor.u32 %v1419, %v1417
      %v1423 = vshll.u32 %v1390, 16
      %v1425 = vrot.slane %v1423, 1
      %v1426 = vsel %vm599, %v1421, %v1425
      %v1427 = vshrl.u32 %v1390, 16
      %v1429 = vor.u32 %v1427, %v1425
      %v1431 = vsel %vm357, %v1402, 0
      %v1434 = vsel %vm357, %v1410, 0
      %v1437 = vsel %vm357, %v1418, 0
      %v1440 = vsel %vm357, %v1426, 0
      %v1443 = vsel %vm357, %v1429, 0
      %v1446 = vsel %vm373, %v1365, 0
      %1448 = vmatprep.subr.bf16.mxu0 0
      %1449 = vmatpush1.bf16.msra.mxu0 0
      %1450 = vmatprep.subr.bf16.mxu0 0
      %1451 = vmatpush1.bf16.msra.mxu0 0
      %1452 = vmatprep.subr.bf16.mxu0 0
      %1453 = vmatpush1.bf16.msra.mxu0 0
      %1454 = vmatprep.subr.bf16.mxu0 0
      %1455 = vmatpush1.bf16.msra.mxu0 0
      %1456 = vmatprep.subr.bf16.mxu0 0
      %1457 = vmatpush1.bf16.msra.mxu0 0
      %1458 = vmatprep.subr.bf16.mxu0 0
      %1459 = vmatpush1.bf16.msra.mxu0 0
      %1460 = vmatprep.subr.bf16.mxu0 0
      %1461 = vmatpush1.bf16.msra.mxu0 0
      %1462 = vmatprep.subr.bf16.mxu0 0
      %1463 = vmatpush1.bf16.msra.mxu0 %v1446
      %1464 = vmatprep.subr.bf16.mxu0 0
      %1465 = vmatpush2.bf16.msra.mxu0 0
      %1466 = vmatprep.subr.bf16.mxu0 0
      %1467 = vmatpush2.bf16.msra.mxu0 0
      %1468 = vmatprep.subr.bf16.mxu0 0
      %1469 = vmatpush2.bf16.msra.mxu0 0
      %1470 = vmatprep.subr.bf16.mxu0 0
      %1471 = vmatpush2.bf16.msra.mxu0 0
      %1472 = vmatprep.subr.bf16.mxu0 0
      %1473 = vmatpush2.bf16.msra.mxu0 0
      %1474 = vmatprep.subr.bf16.mxu0 0
      %1475 = vmatpush2.bf16.msra.mxu0 0
      %1476 = vmatprep.subr.bf16.mxu0 0
      %1477 = vmatpush2.bf16.msra.mxu0 0
      %1478 = vmatprep.subr.bf16.mxu0 0
      %1479 = vmatpush2.bf16.msra.mxu0 0
      %1480 = vmatprep.mubr.bf16.mxu0 0
      %1481 = vmatmul.mubr.bf16.gmra.mxu0 %v1431
      %v1482 = vpop.f32.mrf.mxu0
      %v1483 = vadd.f32 0.0, %v1482
      %v1484 = vpop.f32.mrf.mxu0
      %v1485 = vpop.f32.mrf.mxu0
      %v1486 = vadd.f32 0.0, %v1485
      %v1487 = vpop.f32.mrf.mxu0
      %1488 = vmatprep.mubr.bf16.mxu0 0
      %1489 = vmatmul.mubr.bf16.gmra.mxu0 %v1434
      %v1490 = vpop.f32.mrf.mxu0
      %v1491 = vadd.f32 0.0, %v1490
      %v1492 = vpop.f32.mrf.mxu0
      %v1493 = vpop.f32.mrf.mxu0
      %v1494 = vadd.f32 0.0, %v1493
      %v1495 = vpop.f32.mrf.mxu0
      %1496 = vmatprep.mubr.bf16.mxu0 0
      %1497 = vmatmul.mubr.bf16.gmra.mxu0 %v1437
      %v1498 = vpop.f32.mrf.mxu0
      %v1499 = vadd.f32 0.0, %v1498
      %v1500 = vpop.f32.mrf.mxu0
      %v1501 = vpop.f32.mrf.mxu0
      %v1502 = vadd.f32 0.0, %v1501
      %v1503 = vpop.f32.mrf.mxu0
      %1504 = vmatprep.mubr.bf16.mxu0 0
      %1505 = vmatmul.mubr.bf16.gmra.mxu0 %v1440
      %v1506 = vpop.f32.mrf.mxu0
      %v1507 = vadd.f32 0.0, %v1506
      %v1508 = vpop.f32.mrf.mxu0
      %v1509 = vpop.f32.mrf.mxu0
      %v1510 = vadd.f32 0.0, %v1509
      %v1511 = vpop.f32.mrf.mxu0
      %1512 = vmatprep.mubr.bf16.mxu0 0
      %1513 = vmatmul.mubr.bf16.gmra.mxu0 %v1443
      %v1514 = vpop.f32.mrf.mxu0
      %v1515 = vadd.f32 0.0, %v1514
      %v1516 = vpop.f32.mrf.mxu0
      %v1517 = vpop.f32.mrf.mxu0
      %v1518 = vpop.f32.mrf.mxu0
      %1519 = vdwg.mxu0
      %v1520 = vadd.f32 %v1345, %v1483
      %v1521 = vadd.f32 %v1346, %v1486
      %v1522 = vadd.f32 %v1347, %v1491
      %v1523 = vadd.f32 %v1348, %v1494
      %v1524 = vadd.f32 %v1349, %v1499
      %v1525 = vadd.f32 %v1350, %v1502
      %v1526 = vadd.f32 %v1351, %v1507
      %v1527 = vadd.f32 %v1352, %v1510
      %v1528 = vadd.f32 %v1353, %v1515
      %v1529 = vld [vmem:[%s291 + $0x4] sm:$0xe]
      %s1530 = scalar_lea.vmem %s4, 16
      %v1531 = vld [vmem:[%s1530] sm:$0x3]
      %v1533 = vunpack.c.l.b16 %v1529
      %v1534 = vpack.c.b16 %v1202, %v1533
      %vm1535 = vcmask 1046528
      %v1536 = vrot.slane %v1534, 1
      %v1537 = vrot.slane %v1212, 1
      %v1538 = vsel %vm1535, %v1536, %v1537
      %v1539 = vrot.slane %v1213, 1
      %v1540 = vsel %vm1535, %v1537, %v1539
      %v1541 = vrot.slane %v1214, 1
      %v1542 = vsel %vm1535, %v1539, %v1541
      %v1543 = vrot.slane %v1215, 1
      %v1544 = vsel %vm1535, %v1541, %v1543
      %v1546 = vsel %vm357, %v1538, 0
      %v1549 = vsel %vm357, %v1540, 0
      %v1552 = vsel %vm357, %v1542, 0
      %v1555 = vsel %vm357, %v1544, 0
      %v1558 = vsel %vm357, %v1543, 0
      %v1561 = vsel %vm373, %v1531, 0
      %1563 = vmatprep.subr.bf16.mxu0 0
      %1564 = vmatpush1.bf16.msra.mxu0 0
      %1565 = vmatprep.subr.bf16.mxu0 0
      %1566 = vmatpush1.bf16.msra.mxu0 0
      %1567 = vmatprep.subr.bf16.mxu0 0
      %1568 = vmatpush1.bf16.msra.mxu0 0
      %1569 = vmatprep.subr.bf16.mxu0 0
      %1570 = vmatpush1.bf16.msra.mxu0 0
      %1571 = vmatprep.subr.bf16.mxu0 0
      %1572 = vmatpush1.bf16.msra.mxu0 0
      %1573 = vmatprep.subr.bf16.mxu0 0
      %1574 = vmatpush1.bf16.msra.mxu0 0
      %1575 = vmatprep.subr.bf16.mxu0 0
      %1576 = vmatpush1.bf16.msra.mxu0 0
      %1577 = vmatprep.subr.bf16.mxu0 0
      %1578 = vmatpush1.bf16.msra.mxu0 %v1561
      %1579 = vmatprep.subr.bf16.mxu0 0
      %1580 = vmatpush2.bf16.msra.mxu0 0
      %1581 = vmatprep.subr.bf16.mxu0 0
      %1582 = vmatpush2.bf16.msra.mxu0 0
      %1583 = vmatprep.subr.bf16.mxu0 0
      %1584 = vmatpush2.bf16.msra.mxu0 0
      %1585 = vmatprep.subr.bf16.mxu0 0
      %1586 = vmatpush2.bf16.msra.mxu0 0
      %1587 = vmatprep.subr.bf16.mxu0 0
      %1588 = vmatpush2.bf16.msra.mxu0 0
      %1589 = vmatprep.subr.bf16.mxu0 0
      %1590 = vmatpush2.bf16.msra.mxu0 0
      %1591 = vmatprep.subr.bf16.mxu0 0
      %1592 = vmatpush2.bf16.msra.mxu0 0
      %1593 = vmatprep.subr.bf16.mxu0 0
      %1594 = vmatpush2.bf16.msra.mxu0 0
      %1595 = vmatprep.mubr.bf16.mxu0 0
      %1596 = vmatmul.mubr.bf16.gmra.mxu0 %v1546
      %v1597 = vpop.f32.mrf.mxu0
      %v1598 = vadd.f32 0.0, %v1597
      %v1599 = vpop.f32.mrf.mxu0
      %v1600 = vpop.f32.mrf.mxu0
      %v1601 = vadd.f32 0.0, %v1600
      %v1602 = vpop.f32.mrf.mxu0
      %1603 = vmatprep.mubr.bf16.mxu0 0
      %1604 = vmatmul.mubr.bf16.gmra.mxu0 %v1549
      %v1605 = vpop.f32.mrf.mxu0
      %v1606 = vadd.f32 0.0, %v1605
      %v1607 = vpop.f32.mrf.mxu0
      %v1608 = vpop.f32.mrf.mxu0
      %v1609 = vadd.f32 0.0, %v1608
      %v1610 = vpop.f32.mrf.mxu0
      %1611 = vmatprep.mubr.bf16.mxu0 0
      %1612 = vmatmul.mubr.bf16.gmra.mxu0 %v1552
      %v1613 = vpop.f32.mrf.mxu0
      %v1614 = vadd.f32 0.0, %v1613
      %v1615 = vpop.f32.mrf.mxu0
      %v1616 = vpop.f32.mrf.mxu0
      %v1617 = vadd.f32 0.0, %v1616
      %v1618 = vpop.f32.mrf.mxu0
      %1619 = vmatprep.mubr.bf16.mxu0 0
      %1620 = vmatmul.mubr.bf16.gmra.mxu0 %v1555
      %v1621 = vpop.f32.mrf.mxu0
      %v1622 = vadd.f32 0.0, %v1621
      %v1623 = vpop.f32.mrf.mxu0
      %v1624 = vpop.f32.mrf.mxu0
      %v1625 = vadd.f32 0.0, %v1624
      %v1626 = vpop.f32.mrf.mxu0
      %1627 = vmatprep.mubr.bf16.mxu0 0
      %1628 = vmatmul.mubr.bf16.gmra.mxu0 %v1558
      %v1629 = vpop.f32.mrf.mxu0
      %v1630 = vadd.f32 0.0, %v1629
      %v1631 = vpop.f32.mrf.mxu0
      %v1632 = vpop.f32.mrf.mxu0
      %v1633 = vpop.f32.mrf.mxu0
      %1634 = vdwg.mxu0
      %v1635 = vadd.f32 %v1520, %v1598
      %v1636 = vadd.f32 %v1521, %v1601
      %v1637 = vadd.f32 %v1522, %v1606
      %v1638 = vadd.f32 %v1523, %v1609
      %v1639 = vadd.f32 %v1524, %v1614
      %v1640 = vadd.f32 %v1525, %v1617
      %v1641 = vadd.f32 %v1526, %v1622
      %v1642 = vadd.f32 %v1527, %v1625
      %v1643 = vadd.f32 %v1528, %v1630
      %v1644 = vld [vmem:[%s5] sm:$0x1]
      %v1646 = vlaneseq
      %v1647 = vshrl.u32 %v1646, 7
      %v1648 = vsub.s32 0, %v1647
      %v1649 = vrot.slane %v1644, %v1648
      %v1651 = vadd.f32 %v1635, %v1649
      %v1652 = vadd.f32 %v1636, %v1649
      %v1653 = vadd.f32 %v1637, %v1649
      %v1654 = vadd.f32 %v1638, %v1649
      %v1655 = vadd.f32 %v1639, %v1649
      %v1656 = vadd.f32 %v1640, %v1649
      %v1657 = vadd.f32 %v1641, %v1649
      %v1658 = vadd.f32 %v1642, %v1649
      %v1659 = vadd.f32 %v1643, %v1649
      %v1660 = vmax.f32 %v1651, 0.0
      %v1661 = vmax.f32 %v1652, 0.0
      %v1662 = vmax.f32 %v1653, 0.0
      %v1663 = vmax.f32 %v1654, 0.0
      %v1664 = vmax.f32 %v1655, 0.0
      %v1665 = vmax.f32 %v1656, 0.0
      %v1666 = vmax.f32 %v1657, 0.0
      %v1667 = vmax.f32 %v1658, 0.0
      %v1668 = vmax.f32 %v1659, 0.0
      %v1669 = vpack.c.bf16 %v1661, %v1660
      %v1670 = vpack.c.bf16 %v1663, %v1662
      %v1671 = vpack.c.bf16 %v1665, %v1664
      %v1672 = vpack.c.bf16 %v1667, %v1666
      %v1673 = vpack.c.bf16 %v1668, %v1668
      %v1679 = vunpack.c.l.b16 %v1669
      %v1680 = vunpack.c.h.b16 %v1669
      %v1681 = vunpack.c.l.b16 %v1670
      %v1682 = vunpack.c.h.b16 %v1670
      %v1683 = vunpack.c.l.b16 %v1671
      %v1684 = vunpack.c.h.b16 %v1671
      %v1685 = vunpack.c.l.b16 %v1672
      %v1686 = vunpack.c.h.b16 %v1672
      %v1687 = vunpack.c.l.b16 %v1673
      %v1688 = vpack.c.b16 %v1679, %v1679
      %v1689 = vpack.c.b16 %v1680, %v1680
      %v1690 = vpack.c.b16 %v1681, %v1681
      %v1691 = vpack.c.b16 %v1682, %v1682
      %v1692 = vpack.c.b16 %v1683, %v1683
      %v1693 = vpack.c.b16 %v1684, %v1684
      %v1694 = vpack.c.b16 %v1685, %v1685
      %v1695 = vpack.c.b16 %v1686, %v1686
      %v1696 = vpack.c.b16 %v1687, %v1687
      %vm1706 = vcmask 257024
      %1707 = vst.msk [vmem:[%s311] sm:$0xf] %vm1706, %v1688
      %1708 = vst.msk [vmem:[%s311 + $0x4] sm:$0xf] %vm1706, %v1689
      %1709 = vst.msk [vmem:[%s311 + $0x8] sm:$0xf] %vm1706, %v1690
      %1710 = vst.msk [vmem:[%s311 + $0xc] sm:$0xf] %vm1706, %v1691
      %1711 = vst.msk [vmem:[%s311 + $0x10] sm:$0xf] %vm1706, %v1692
      %1712 = vst.msk [vmem:[%s311 + $0x14] sm:$0xf] %vm1706, %v1693
      %1713 = vst.msk [vmem:[%s311 + $0x18] sm:$0xf] %vm1706, %v1694
      %1714 = vst.msk [vmem:[%s311 + $0x1c] sm:$0xf] %vm1706, %v1695
      %1715 = vst.msk [vmem:[%s311 + $0x20] sm:$0xf] %vm1706, %v1696
      %p1716 = scmp.lt.s32.totalorder %s17, 1
      %s1717 = scalar_select %p1716, %s17, 1
      %s1718 = smul.addr %s1717, 9
      %s1719 = smul.addr %s1718, 4
      %s1720 = scalar_lea.vmem %s6, %s1719
      // Predicated region
      $region45: #{forward.5} parent=43 // pred_check
        %p1721 = pneg %p181
      $region46: #{forward.5} parent=43 // pred_check_branch
        %1723 = sbr.rel (%p1721) target = $region48
      $region47: #{forward.5} parent=43 // pred_region
        _
      $region48: #{forward.5} parent=43 // pred_fallthru
        _
    $region44: #{forward.5} parent=5 // pred_fallthru
      _
    %p1724 = scmp.le.s32.totalorder 2, %s12
    // Predicated region
    $region49: #{forward.5} parent=5 // pred_check
      %p1725 = pneg %p1724
    $region50: #{forward.5} parent=5 // pred_check_branch
      %1727 = sbr.rel (%p1725) target = $region52
    $region51: #{forward.5} parent=5 // pred_region
      %s1728 = ssub.s32 %s12, 2
      // Predicated region
      $region53: #{forward.5} parent=51 // pred_check
        %p1729 = pneg %p187
      $region54: #{forward.5} parent=51 // pred_check_branch
        %1731 = sbr.rel (%p1729) target = $region56
      $region55: #{forward.5} parent=51 // pred_region
        %p1732 = scmp.lt.s32.totalorder %s18, 1
        %s1733 = scalar_select %p1732, %s18, 1
        %s1734 = smul.addr %s1733, 9
        %s1735 = smul.addr %s1734, 4
        %s1736 = scalar_lea.vmem %s6, %s1735
      $region56: #{forward.5} parent=51 // pred_fallthru
        _
    $region52: #{forward.5} parent=5 // pred_fallthru
      _
  $region6: #{forward.5} parent=0 // loop_footer
    %s16 = sadd.s32 1, %s12
  $region7: #{forward.5} parent=0 // loop_footer_branch
    %11 = sbr.rel target = $region3
  $region8: #{forward.5} parent=0 // loop_exit
    _

// kernel: forward.8
$region0: #{forward.8}
  #allocation0 [shape = 'u32[]', space=smem, size = 0x4, offset = 0x4, fixed_abs, tag = 'smem constant byte address 0x4 - core index']
  #allocation1 [shape = 'u32[144,128]{1,0:T(1,128)}', space=vmem, size = 0x12000, scoped, tag = 'internal scratch']
  %s0 = inlined_call_operand.vmem [shape: bf16[2,24,64], index: 0, kind: input, shape index: {}]
  %s1 = inlined_call_operand.vmem [shape: bf16[9,64,128], index: 1, kind: input, shape index: {}]
  %s2 = inlined_call_operand.hbm [shape: f32[1,128], index: 2, kind: input, shape index: {}]
  %s3 = inlined_call_operand.vmem [shape: bf16[2,8,128], index: 3, kind: output, shape index: {}]
  %s4 = sld [smem:[#allocation0]]
  $region49: #{forward.8} parent=0
    _
  %s6 = ssub.s32 1, %s4
  %s7 = scalar_select 0, %s6, %s4
  $region1: #{forward.8} parent=0
    #allocation2 [shape = 'u8[512]{0}', space=vmem, size = 0x400, scoped, tag = 'input window, operand 2, single buffered']
    #allocation3 [shape = 's32[2]{0}', space=sflag, size = 0x8, scoped, tag = 'scoped memory for forward.8']
    %8 = vsyncpa [#allocation3], 0
    loop: start=0, step=1, limit=4
    $region2: #{forward.8} parent=1 // loop_pre_header
      _
    $region3: #{forward.8} parent=1 // loop_header
      %s10 = sphi 0, %s14
      %p11 = scmp.ge.s32.totalorder %s10, 4
      %s20 = sphi 0, %s22
      %s23 = sphi 0, %s20
      %s24 = sphi 0, %s23
      %s40 = sphi 0, %s24
      %s44 = sphi 0, %s44
      %s46 = sphi 0, %s44
      %s47 = sphi 0, %s46
      %s61 = sphi 0, %s47
      %s65 = sphi 0, %s65
      %s67 = sphi 0, %s65
      %s68 = sphi 0, %s67
      %s82 = sphi 0, %s68
      %s88 = sphi 0, %s90
      %s91 = sphi 0, %s88
      %s92 = sphi 0, %s91
      %s108 = sphi 0, %s92
    $region4: #{forward.8} parent=1 // loop_header_branch
      %13 = sbr.rel (%p11) target = $region8
    $region5: #{forward.8} parent=1 // loop_body
      %s15 = ssub.s32 %s10, 1
      %s16 = ssub.s32 %s10, 2
      %s17 = sadd.s32 %s10, 1
      %s18 = ssub.s32 %s10, %s17
      %p19 = scmp.eq.s32.totalorder %s18, 0
      %s21 = sadd.s32 %s20, 1
      %s22 = scalar_select %p19, %s20, %s21
      %p25 = pneg %p19
      %p26 = scmp.eq.s32.totalorder %s10, 1
      %p27 = por %p25, %p26
      %p28 = scmp.ne.s32.totalorder %s20, %s23
      %p29 = scmp.eq.s32.totalorder %s10, 0
      %p30 = por %p28, %p29
      %p31 = scmp.ne.s32.totalorder %s20, %s23
      %p32 = scmp.eq.s32.totalorder %s15, 1
      %p33 = por %p31, %p32
      %p34 = scmp.ne.s32.totalorder %s23, %s24
      %p35 = scmp.eq.s32.totalorder %s15, 0
      %p36 = por %p34, %p35
      %p37 = scmp.ne.s32.totalorder %s23, %s24
      %p38 = scmp.eq.s32.totalorder %s16, 1
      %p39 = por %p37, %p38
      %p41 = scmp.ne.s32.totalorder %s24, %s40
      %p42 = scmp.eq.s32.totalorder %s16, 0
      %p43 = por %p41, %p42
      %s45 = sadd.s32 %s44, 1
      %p48 = scmp.eq.s32.totalorder %s10, 1
      %p49 = scmp.ne.s32.totalorder %s44, %s46
      %p50 = scmp.eq.s32.totalorder %s10, 0
      %p51 = por %p49, %p50
      %p52 = scmp.ne.s32.totalorder %s44, %s46
      %p53 = scmp.eq.s32.totalorder %s15, 1
      %p54 = por %p52, %p53
      %p55 = scmp.ne.s32.totalorder %s46, %s47
      %p56 = scmp.eq.s32.totalorder %s15, 0
      %p57 = por %p55, %p56
      %p58 = scmp.ne.s32.totalorder %s46, %s47
      %p59 = scmp.eq.s32.totalorder %s16, 1
      %p60 = por %p58, %p59
      %p62 = scmp.ne.s32.totalorder %s47, %s61
      %p63 = scmp.eq.s32.totalorder %s16, 0
      %p64 = por %p62, %p63
      %s66 = sadd.s32 %s65, 1
      %p69 = scmp.eq.s32.totalorder %s10, 1
      %p70 = scmp.ne.s32.totalorder %s65, %s67
      %p71 = scmp.eq.s32.totalorder %s10, 0
      %p72 = por %p70, %p71
      %p73 = scmp.ne.s32.totalorder %s65, %s67
      %p74 = scmp.eq.s32.totalorder %s15, 1
      %p75 = por %p73, %p74
      %p76 = scmp.ne.s32.totalorder %s67, %s68
      %p77 = scmp.eq.s32.totalorder %s15, 0
      %p78 = por %p76, %p77
      %p79 = scmp.ne.s32.totalorder %s67, %s68
      %p80 = scmp.eq.s32.totalorder %s16, 1
      %p81 = por %p79, %p80
      %p83 = scmp.ne.s32.totalorder %s68, %s82
      %p84 = scmp.eq.s32.totalorder %s16, 0
      %p85 = por %p83, %p84
      %s86 = ssub.s32 %s10, %s17
      %p87 = scmp.eq.s32.totalorder %s86, 0
      %s89 = sadd.s32 %s88, 1
      %s90 = scalar_select %p87, %s88, %s89
      %p93 = pneg %p87
      %p94 = scmp.eq.s32.totalorder %s10, 1
      %p95 = por %p93, %p94
      %p96 = scmp.ne.s32.totalorder %s88, %s91
      %p97 = scmp.eq.s32.totalorder %s10, 0
      %p98 = por %p96, %p97
      %p99 = scmp.ne.s32.totalorder %s88, %s91
      %p100 = scmp.eq.s32.totalorder %s15, 1
      %p101 = por %p99, %p100
      %p102 = scmp.ne.s32.totalorder %s91, %s92
      %p103 = scmp.eq.s32.totalorder %s15, 0
      %p104 = por %p102, %p103
      %p105 = scmp.ne.s32.totalorder %s91, %s92
      %p106 = scmp.eq.s32.totalorder %s16, 1
      %p107 = por %p105, %p106
      %p109 = scmp.ne.s32.totalorder %s92, %s108
      %p110 = scmp.eq.s32.totalorder %s16, 0
      %p111 = por %p109, %p110
      %p112 = scmp.le.s32.totalorder 1, %s10
      %p113 = scmp.lt.s32.totalorder %s10, 3
      %p114 = pnand %p112, %p113
      %p115 = pneg %p114
      // Predicated region
      $region9: #{forward.8} parent=5 // pred_check
        _
      $region10: #{forward.8} parent=5 // pred_check_branch
        %117 = sbr.rel (%p114) target = $region12
      $region11: #{forward.8} parent=5 // pred_region
        %s118 = ssub.s32 %s10, 1
        // Predicated region
        $region13: #{forward.8} parent=11 // pred_check
          %p119 = pneg %p57
        $region14: #{forward.8} parent=11 // pred_check_branch
          %121 = sbr.rel (%p119) target = $region16
        $region15: #{forward.8} parent=11 // pred_region
          _
        $region16: #{forward.8} parent=11 // pred_fallthru
          _
        // Predicated region
        $region17: #{forward.8} parent=11 // pred_check
          %p122 = pneg %p78
        $region18: #{forward.8} parent=11 // pred_check_branch
          %124 = sbr.rel (%p122) target = $region20
        $region19: #{forward.8} parent=11 // pred_region
          %s126 = ssub.s32 16, 16
          %127 = vsyncadd [#allocation3], %s126
          %s129 = sshll.u32 [#allocation2], 4
          %s130 = int_to_ptr.vmem [resolvable:$true] %s129
          %132 = dma.hbm_to_vmem [thread:$0]  %s2, 16, %s130, [#allocation3]
        $region20: #{forward.8} parent=11 // pred_fallthru
          _
      $region12: #{forward.8} parent=5 // pred_fallthru
        _
      %p133 = scmp.lt.s32.totalorder %s10, 2
      // Predicated region
      $region21: #{forward.8} parent=5 // pred_check
        %p134 = pneg %p133
      $region22: #{forward.8} parent=5 // pred_check_branch
        %136 = sbr.rel (%p134) target = $region24
      $region23: #{forward.8} parent=5 // pred_region
        // Predicated region
        $region25: #{forward.8} parent=23 // pred_check
          %p137 = pneg %p30
        $region26: #{forward.8} parent=23 // pred_check_branch
          %139 = sbr.rel (%p137) target = $region28
        $region27: #{forward.8} parent=23 // pred_region
          %p140 = scmp.lt.s32.totalorder %s10, 1
          %s141 = scalar_select %p140, %s10, 1
          %s142 = smul.addr %s141, 3
          %s143 = smul.addr %s142, 4
          %s144 = scalar_lea.vmem %s0, %s143
        $region28: #{forward.8} parent=23 // pred_fallthru
          _
      $region24: #{forward.8} parent=5 // pred_fallthru
        _
      %p145 = scmp.le.s32.totalorder 1, %s10
      %p146 = scmp.lt.s32.totalorder %s10, 3
      %p147 = pnand %p145, %p146
      %p148 = pneg %p147
      // Predicated region
      $region29: #{forward.8} parent=5 // pred_check
        _
      $region30: #{forward.8} parent=5 // pred_check_branch
        %150 = sbr.rel (%p147) target = $region32
      $region31: #{forward.8} parent=5 // pred_region
        %s151 = ssub.s32 %s10, 1
        // Predicated region
        $region33: #{forward.8} parent=31 // pred_check
          %p152 = pneg %p78
        $region34: #{forward.8} parent=31 // pred_check_branch
          %154 = sbr.rel (%p152) target = $region36
        $region35: #{forward.8} parent=31 // pred_region
          %155 = dma.done [#allocation3], 16
        $region36: #{forward.8} parent=31 // pred_fallthru
          _
        %p156 = scmp.lt.s32.totalorder %s15, 1
        %s157 = scalar_select %p156, %s15, 1
        %s158 = smul.addr %s157, 3
        %s159 = smul.addr %s158, 4
        %s160 = scalar_lea.vmem %s0, %s159
        %p161 = pneg %p36
        %p162 = pneg %p33
        %p163 = pneg %p57
        %p164 = pneg %p54
        %p165 = pneg %p78
        %p166 = pneg %p75
        %p167 = pneg %p104
        %p168 = pneg %p101
        %p169 = scmp.lt.s32.totalorder %s15, 1
        %s170 = scalar_select %p169, %s15, 1
        %s171 = smul.addr %s170, 4
        %s172 = scalar_lea.vmem %s3, %s171
        %p173 = scmp.lt.s32.totalorder %s15, 1
        %s174 = scalar_select %p173, %s15, 1
        %s175 = smul.addr %s174, 3
        %s176 = smul.addr %s175, 4
        %s177 = scalar_lea.vmem %s0, %s176
        %p178 = scmp.lt.s32.totalorder %s15, 1
        %s179 = scalar_select %p178, %s15, 1
        %s180 = smul.addr %s179, 4
        %s181 = scalar_lea.vmem %s3, %s180
        %v183 = vld [vmem:[%s177] sm:$0xf]
        %v184 = vld [vmem:[%s1] sm:$0xf]
        %v185 = vld [vmem:[%s1 + $0x4] sm:$0xf]
        %v186 = vld [vmem:[%s1 + $0x8] sm:$0xf]
        %v187 = vld [vmem:[%s1 + $0xc] sm:$0xf]
        %v188 = vld [vmem:[%s1 + $0x10] sm:$0xf]
        %v189 = vld [vmem:[%s1 + $0x14] sm:$0xf]
        %v190 = vld [vmem:[%s1 + $0x18] sm:$0xf]
        %v191 = vld [vmem:[%s1 + $0x1c] sm:$0xf]
        %v192 = vld [vmem:[%s177 + $0x4] sm:$0x1]
        %s193 = scalar_lea.vmem %s1, 32
        %v194 = vld [vmem:[%s193] sm:$0xf]
        %v195 = vld [vmem:[%s193 + $0x4] sm:$0xf]
        %v196 = vld [vmem:[%s193 + $0x8] sm:$0xf]
        %v197 = vld [vmem:[%s193 + $0xc] sm:$0xf]
        %v198 = vld [vmem:[%s193 + $0x10] sm:$0xf]
        %v199 = vld [vmem:[%s193 + $0x14] sm:$0xf]
        %v200 = vld [vmem:[%s193 + $0x18] sm:$0xf]
        %v201 = vld [vmem:[%s193 + $0x1c] sm:$0xf]
        %v204 = vunpack.c.l.b16 %v183
        %v205 = vunpack.c.l.b16 %v192
        %v206 = vpack.c.b16 %v205, %v204
        %v208 = vshrl.u32 %v206, 16
        %v210 = vshll.u32 %v206, 16
        %v212 = vrot.slane %v210, 1
        %v213 = vor.u32 %v208, %v212
        %v222 = vunpack.c.l.b16 %v194
        %v223 = vunpack.c.l.b16 %v195
        %v224 = vunpack.c.l.b16 %v196
        %v225 = vunpack.c.l.b16 %v197
        %v226 = vunpack.c.l.b16 %v198
        %v227 = vunpack.c.l.b16 %v199
        %v228 = vunpack.c.l.b16 %v200
        %v229 = vunpack.c.l.b16 %v201
        %v230 = vpack.c.b16 %v223, %v222
        %v231 = vpack.c.b16 %v225, %v224
        %v232 = vpack.c.b16 %v227, %v226
        %v233 = vpack.c.b16 %v229, %v228
        %vm238 = vcmask 523264
        %v240 = vsel %vm238, %v213, 0
        %242 = vmatprep.subr.bf16.mxu0 0
        %243 = vmatpush1.bf16.msra.mxu0 0
        %244 = vmatprep.subr.bf16.mxu0 0
        %245 = vmatpush1.bf16.msra.mxu0 0
        %246 = vmatprep.subr.bf16.mxu0 0
        %247 = vmatpush1.bf16.msra.mxu0 0
        %248 = vmatprep.subr.bf16.mxu0 0
        %249 = vmatpush1.bf16.msra.mxu0 0
        %250 = vmatprep.subr.bf16.mxu0 0
        %251 = vmatpush1.bf16.msra.mxu0 %v233
        %252 = vmatprep.subr.bf16.mxu0 0
        %253 = vmatpush1.bf16.msra.mxu0 %v232
        %254 = vmatprep.subr.bf16.mxu0 0
        %255 = vmatpush1.bf16.msra.mxu0 %v231
        %256 = vmatprep.subr.bf16.mxu0 0
        %257 = vmatpush1.bf16.msra.mxu0 %v230
        %258 = vmatprep.subr.bf16.mxu0 0
        %259 = vmatpush2.bf16.msra.mxu0 0
        %260 = vmatprep.subr.bf16.mxu0 0
        %261 = vmatpush2.bf16.msra.mxu0 0
        %262 = vmatprep.subr.bf16.mxu0 0
        %263 = vmatpush2.bf16.msra.mxu0 0
        %264 = vmatprep.subr.bf16.mxu0 0
        %265 = vmatpush2.bf16.msra.mxu0 0
        %266 = vmatprep.subr.bf16.mxu0 0
        %267 = vmatpush2.bf16.msra.mxu0 0
        %268 = vmatprep.subr.bf16.mxu0 0
        %269 = vmatpush2.bf16.msra.mxu0 0
        %270 = vmatprep.subr.bf16.mxu0 0
        %271 = vmatpush2.bf16.msra.mxu0 0
        %272 = vmatprep.subr.bf16.mxu0 0
        %273 = vmatpush2.bf16.msra.mxu0 0
        %274 = vmatprep.mubr.bf16.mxu0 0
        %275 = vmatmul.mubr.bf16.gmra.mxu0 %v240
        %v276 = vpop.f32.mrf.mxu0
        %v277 = vadd.f32 0.0, %v276
        %v278 = vpop.f32.mrf.mxu0
        %v279 = vpop.f32.mrf.mxu0
        %v280 = vpop.f32.mrf.mxu0
        %281 = vdwg.mxu0
        %v290 = vunpack.c.l.b16 %v184
        %v291 = vunpack.c.l.b16 %v185
        %v292 = vunpack.c.l.b16 %v186
        %v293 = vunpack.c.l.b16 %v187
        %v294 = vunpack.c.l.b16 %v188
        %v295 = vunpack.c.l.b16 %v189
        %v296 = vunpack.c.l.b16 %v190
        %v297 = vunpack.c.l.b16 %v191
        %v298 = vpack.c.b16 %v291, %v290
        %v299 = vpack.c.b16 %v293, %v292
        %v300 = vpack.c.b16 %v295, %v294
        %v301 = vpack.c.b16 %v297, %v296
        %v307 = vsel %vm238, %v183, 0
        %309 = vmatprep.subr.bf16.mxu0 0
        %310 = vmatpush1.bf16.msra.mxu0 0
        %311 = vmatprep.subr.bf16.mxu0 0
        %312 = vmatpush1.bf16.msra.mxu0 0
        %313 = vmatprep.subr.bf16.mxu0 0
        %314 = vmatpush1.bf16.msra.mxu0 0
        %315 = vmatprep.subr.bf16.mxu0 0
        %316 = vmatpush1.bf16.msra.mxu0 0
        %317 = vmatprep.subr.bf16.mxu0 0
        %318 = vmatpush1.bf16.msra.mxu0 %v301
        %319 = vmatprep.subr.bf16.mxu0 0
        %320 = vmatpush1.bf16.msra.mxu0 %v300
        %321 = vmatprep.subr.bf16.mxu0 0
        %322 = vmatpush1.bf16.msra.mxu0 %v299
        %323 = vmatprep.subr.bf16.mxu0 0
        %324 = vmatpush1.bf16.msra.mxu0 %v298
        %325 = vmatprep.subr.bf16.mxu0 0
        %326 = vmatpush2.bf16.msra.mxu0 0
        %327 = vmatprep.subr.bf16.mxu0 0
        %328 = vmatpush2.bf16.msra.mxu0 0
        %329 = vmatprep.subr.bf16.mxu0 0
        %330 = vmatpush2.bf16.msra.mxu0 0
        %331 = vmatprep.subr.bf16.mxu0 0
        %332 = vmatpush2.bf16.msra.mxu0 0
        %333 = vmatprep.subr.bf16.mxu0 0
        %334 = vmatpush2.bf16.msra.mxu0 0
        %335 = vmatprep.subr.bf16.mxu0 0
        %336 = vmatpush2.bf16.msra.mxu0 0
        %337 = vmatprep.subr.bf16.mxu0 0
        %338 = vmatpush2.bf16.msra.mxu0 0
        %339 = vmatprep.subr.bf16.mxu0 0
        %340 = vmatpush2.bf16.msra.mxu0 0
        %341 = vmatprep.mubr.bf16.mxu0 0
        %342 = vmatmul.mubr.bf16.gmra.mxu0 %v307
        %v343 = vpop.f32.mrf.mxu0
        %v344 = vadd.f32 %v277, %v343
        %v345 = vpop.f32.mrf.mxu0
        %v346 = vpop.f32.mrf.mxu0
        %v347 = vpop.f32.mrf.mxu0
        %348 = vdwg.mxu0
        %v349 = vld [vmem:[%s177] sm:$0xe]
        %s350 = scalar_lea.vmem %s1, 64
        %v351 = vld [vmem:[%s350] sm:$0xf]
        %v352 = vld [vmem:[%s350 + $0x4] sm:$0xf]
        %v353 = vld [vmem:[%s350 + $0x8] sm:$0xf]
        %v354 = vld [vmem:[%s350 + $0xc] sm:$0xf]
        %v355 = vld [vmem:[%s350 + $0x10] sm:$0xf]
        %v356 = vld [vmem:[%s350 + $0x14] sm:$0xf]
        %v357 = vld [vmem:[%s350 + $0x18] sm:$0xf]
        %v358 = vld [vmem:[%s350 + $0x1c] sm:$0xf]
        %v360 = vunpack.c.l.b16 %v349
        %v361 = vpack.c.b16 %v205, %v360
        %v362 = vrot.slane %v361, 1
        %v371 = vunpack.c.l.b16 %v351
        %v372 = vunpack.c.l.b16 %v352
        %v373 = vunpack.c.l.b16 %v353
        %v374 = vunpack.c.l.b16 %v354
        %v375 = vunpack.c.l.b16 %v355
        %v376 = vunpack.c.l.b16 %v356
        %v377 = vunpack.c.l.b16 %v357
        %v378 = vunpack.c.l.b16 %v358
        %v379 = vpack.c.b16 %v372, %v371
        %v380 = vpack.c.b16 %v374, %v373
        %v381 = vpack.c.b16 %v376, %v375
        %v382 = vpack.c.b16 %v378, %v377
        %v388 = vsel %vm238, %v362, 0
        %390 = vmatprep.subr.bf16.mxu0 0
        %391 = vmatpush1.bf16.msra.mxu0 0
        %392 = vmatprep.subr.bf16.mxu0 0
        %393 = vmatpush1.bf16.msra.mxu0 0
        %394 = vmatprep.subr.bf16.mxu0 0
        %395 = vmatpush1.bf16.msra.mxu0 0
        %396 = vmatprep.subr.bf16.mxu0 0
        %397 = vmatpush1.bf16.msra.mxu0 0
        %398 = vmatprep.subr.bf16.mxu0 0
        %399 = vmatpush1.bf16.msra.mxu0 %v382
        %400 = vmatprep.subr.bf16.mxu0 0
        %401 = vmatpush1.bf16.msra.mxu0 %v381
        %402 = vmatprep.subr.bf16.mxu0 0
        %403 = vmatpush1.bf16.msra.mxu0 %v380
        %404 = vmatprep.subr.bf16.mxu0 0
        %405 = vmatpush1.bf16.msra.mxu0 %v379
        %406 = vmatprep.subr.bf16.mxu0 0
        %407 = vmatpush2.bf16.msra.mxu0 0
        %408 = vmatprep.subr.bf16.mxu0 0
        %409 = vmatpush2.bf16.msra.mxu0 0
        %410 = vmatprep.subr.bf16.mxu0 0
        %411 = vmatpush2.bf16.msra.mxu0 0
        %412 = vmatprep.subr.bf16.mxu0 0
        %413 = vmatpush2.bf16.msra.mxu0 0
        %414 = vmatprep.subr.bf16.mxu0 0
        %415 = vmatpush2.bf16.msra.mxu0 0
        %416 = vmatprep.subr.bf16.mxu0 0
        %417 = vmatpush2.bf16.msra.mxu0 0
        %418 = vmatprep.subr.bf16.mxu0 0
        %419 = vmatpush2.bf16.msra.mxu0 0
        %420 = vmatprep.subr.bf16.mxu0 0
        %421 = vmatpush2.bf16.msra.mxu0 0
        %422 = vmatprep.mubr.bf16.mxu0 0
        %423 = vmatmul.mubr.bf16.gmra.mxu0 %v388
        %v424 = vpop.f32.mrf.mxu0
        %v425 = vadd.f32 0.0, %v424
        %v426 = vpop.f32.mrf.mxu0
        %v427 = vpop.f32.mrf.mxu0
        %v428 = vpop.f32.mrf.mxu0
        %429 = vdwg.mxu0
        %v430 = vadd.f32 %v344, %v425
        %v431 = vld [vmem:[%s177] sm:$0xc]
        %v432 = vld [vmem:[%s177 + $0x4] sm:$0x3]
        %s433 = scalar_lea.vmem %s1, 96
        %v434 = vld [vmem:[%s433] sm:$0xf]
        %v435 = vld [vmem:[%s433 + $0x4] sm:$0xf]
        %v436 = vld [vmem:[%s433 + $0x8] sm:$0xf]
        %v437 = vld [vmem:[%s433 + $0xc] sm:$0xf]
        %v438 = vld [vmem:[%s433 + $0x10] sm:$0xf]
        %v439 = vld [vmem:[%s433 + $0x14] sm:$0xf]
        %v440 = vld [vmem:[%s433 + $0x18] sm:$0xf]
        %v441 = vld [vmem:[%s433 + $0x1c] sm:$0xf]
        %v444 = vunpack.c.l.b16 %v431
        %v445 = vunpack.c.l.b16 %v432
        %v446 = vpack.c.b16 %v445, %v444
        %v447 = vrot.slane %v446, 2
        %v456 = vunpack.c.l.b16 %v434
        %v457 = vunpack.c.l.b16 %v435
        %v458 = vunpack.c.l.b16 %v436
        %v459 = vunpack.c.l.b16 %v437
        %v460 = vunpack.c.l.b16 %v438
        %v461 = vunpack.c.l.b16 %v439
        %v462 = vunpack.c.l.b16 %v440
        %v463 = vunpack.c.l.b16 %v441
        %v464 = vpack.c.b16 %v457, %v456
        %v465 = vpack.c.b16 %v459, %v458
        %v466 = vpack.c.b16 %v461, %v460
        %v467 = vpack.c.b16 %v463, %v462
        %v473 = vsel %vm238, %v447, 0
        %475 = vmatprep.subr.bf16.mxu0 0
        %476 = vmatpush1.bf16.msra.mxu0 0
        %477 = vmatprep.subr.bf16.mxu0 0
        %478 = vmatpush1.bf16.msra.mxu0 0
        %479 = vmatprep.subr.bf16.mxu0 0
        %480 = vmatpush1.bf16.msra.mxu0 0
        %481 = vmatprep.subr.bf16.mxu0 0
        %482 = vmatpush1.bf16.msra.mxu0 0
        %483 = vmatprep.subr.bf16.mxu0 0
        %484 = vmatpush1.bf16.msra.mxu0 %v467
        %485 = vmatprep.subr.bf16.mxu0 0
        %486 = vmatpush1.bf16.msra.mxu0 %v466
        %487 = vmatprep.subr.bf16.mxu0 0
        %488 = vmatpush1.bf16.msra.mxu0 %v465
        %489 = vmatprep.subr.bf16.mxu0 0
        %490 = vmatpush1.bf16.msra.mxu0 %v464
        %491 = vmatprep.subr.bf16.mxu0 0
        %492 = vmatpush2.bf16.msra.mxu0 0
        %493 = vmatprep.subr.bf16.mxu0 0
        %494 = vmatpush2.bf16.msra.mxu0 0
        %495 = vmatprep.subr.bf16.mxu0 0
        %496 = vmatpush2.bf16.msra.mxu0 0
        %497 = vmatprep.subr.bf16.mxu0 0
        %498 = vmatpush2.bf16.msra.mxu0 0
        %499 = vmatprep.subr.bf16.mxu0 0
        %500 = vmatpush2.bf16.msra.mxu0 0
        %501 = vmatprep.subr.bf16.mxu0 0
        %502 = vmatpush2.bf16.msra.mxu0 0
        %503 = vmatprep.subr.bf16.mxu0 0
        %504 = vmatpush2.bf16.msra.mxu0 0
        %505 = vmatprep.subr.bf16.mxu0 0
        %506 = vmatpush2.bf16.msra.mxu0 0
        %507 = vmatprep.mubr.bf16.mxu0 0
        %508 = vmatmul.mubr.bf16.gmra.mxu0 %v473
        %v509 = vpop.f32.mrf.mxu0
        %v510 = vadd.f32 0.0, %v509
        %v511 = vpop.f32.mrf.mxu0
        %v512 = vpop.f32.mrf.mxu0
        %v513 = vpop.f32.mrf.mxu0
        %514 = vdwg.mxu0
        %v515 = vadd.f32 %v430, %v510
        %v516 = vld [vmem:[%s177 + $0x4] sm:$0x7]
        %s517 = scalar_lea.vmem %s1, 128
        %v518 = vld [vmem:[%s517] sm:$0xf]
        %v519 = vld [vmem:[%s517 + $0x4] sm:$0xf]
        %v520 = vld [vmem:[%s517 + $0x8] sm:$0xf]
        %v521 = vld [vmem:[%s517 + $0xc] sm:$0xf]
        %v522 = vld [vmem:[%s517 + $0x10] sm:$0xf]
        %v523 = vld [vmem:[%s517 + $0x14] sm:$0xf]
        %v524 = vld [vmem:[%s517 + $0x18] sm:$0xf]
        %v525 = vld [vmem:[%s517 + $0x1c] sm:$0xf]
        %v527 = vunpack.c.l.b16 %v516
        %v528 = vpack.c.b16 %v527, %v444
        %v530 = vshrl.u32 %v528, 16
        %v532 = vrot.slane %v530, 2
        %v533 = vshll.u32 %v528, 16
        %v535 = vrot.slane %v533, 3
        %v536 = vor.u32 %v532, %v535
        %v545 = vunpack.c.l.b16 %v518
        %v546 = vunpack.c.l.b16 %v519
        %v547 = vunpack.c.l.b16 %v520
        %v548 = vunpack.c.l.b16 %v521
        %v549 = vunpack.c.l.b16 %v522
        %v550 = vunpack.c.l.b16 %v523
        %v551 = vunpack.c.l.b16 %v524
        %v552 = vunpack.c.l.b16 %v525
        %v553 = vpack.c.b16 %v546, %v545
        %v554 = vpack.c.b16 %v548, %v547
        %v555 = vpack.c.b16 %v550, %v549
        %v556 = vpack.c.b16 %v552, %v551
        %v562 = vsel %vm238, %v536, 0
        %564 = vmatprep.subr.bf16.mxu0 0
        %565 = vmatpush1.bf16.msra.mxu0 0
        %566 = vmatprep.subr.bf16.mxu0 0
        %567 = vmatpush1.bf16.msra.mxu0 0
        %568 = vmatprep.subr.bf16.mxu0 0
        %569 = vmatpush1.bf16.msra.mxu0 0
        %570 = vmatprep.subr.bf16.mxu0 0
        %571 = vmatpush1.bf16.msra.mxu0 0
        %572 = vmatprep.subr.bf16.mxu0 0
        %573 = vmatpush1.bf16.msra.mxu0 %v556
        %574 = vmatprep.subr.bf16.mxu0 0
        %575 = vmatpush1.bf16.msra.mxu0 %v555
        %576 = vmatprep.subr.bf16.mxu0 0
        %577 = vmatpush1.bf16.msra.mxu0 %v554
        %578 = vmatprep.subr.bf16.mxu0 0
        %579 = vmatpush1.bf16.msra.mxu0 %v553
        %580 = vmatprep.subr.bf16.mxu0 0
        %581 = vmatpush2.bf16.msra.mxu0 0
        %582 = vmatprep.subr.bf16.mxu0 0
        %583 = vmatpush2.bf16.msra.mxu0 0
        %584 = vmatprep.subr.bf16.mxu0 0
        %585 = vmatpush2.bf16.msra.mxu0 0
        %586 = vmatprep.subr.bf16.mxu0 0
        %587 = vmatpush2.bf16.msra.mxu0 0
        %588 = vmatprep.subr.bf16.mxu0 0
        %589 = vmatpush2.bf16.msra.mxu0 0
        %590 = vmatprep.subr.bf16.mxu0 0
        %591 = vmatpush2.bf16.msra.mxu0 0
        %592 = vmatprep.subr.bf16.mxu0 0
        %593 = vmatpush2.bf16.msra.mxu0 0
        %594 = vmatprep.subr.bf16.mxu0 0
        %595 = vmatpush2.bf16.msra.mxu0 0
        %596 = vmatprep.mubr.bf16.mxu0 0
        %597 = vmatmul.mubr.bf16.gmra.mxu0 %v562
        %v598 = vpop.f32.mrf.mxu0
        %v599 = vadd.f32 0.0, %v598
        %v600 = vpop.f32.mrf.mxu0
        %v601 = vpop.f32.mrf.mxu0
        %v602 = vpop.f32.mrf.mxu0
        %603 = vdwg.mxu0
        %v604 = vadd.f32 %v515, %v599
        %v605 = vld [vmem:[%s177] sm:$0x8]
        %s606 = scalar_lea.vmem %s1, 160
        %v607 = vld [vmem:[%s606] sm:$0xf]
        %v608 = vld [vmem:[%s606 + $0x4] sm:$0xf]
        %v609 = vld [vmem:[%s606 + $0x8] sm:$0xf]
        %v610 = vld [vmem:[%s606 + $0xc] sm:$0xf]
        %v611 = vld [vmem:[%s606 + $0x10] sm:$0xf]
        %v612 = vld [vmem:[%s606 + $0x14] sm:$0xf]
        %v613 = vld [vmem:[%s606 + $0x18] sm:$0xf]
        %v614 = vld [vmem:[%s606 + $0x1c] sm:$0xf]
        %v616 = vunpack.c.l.b16 %v605
        %v617 = vpack.c.b16 %v527, %v616
        %v618 = vrot.slane %v617, 3
        %v627 = vunpack.c.l.b16 %v607
        %v628 = vunpack.c.l.b16 %v608
        %v629 = vunpack.c.l.b16 %v609
        %v630 = vunpack.c.l.b16 %v610
        %v631 = vunpack.c.l.b16 %v611
        %v632 = vunpack.c.l.b16 %v612
        %v633 = vunpack.c.l.b16 %v613
        %v634 = vunpack.c.l.b16 %v614
        %v635 = vpack.c.b16 %v628, %v627
        %v636 = vpack.c.b16 %v630, %v629
        %v637 = vpack.c.b16 %v632, %v631
        %v638 = vpack.c.b16 %v634, %v633
        %v644 = vsel %vm238, %v618, 0
        %646 = vmatprep.subr.bf16.mxu0 0
        %647 = vmatpush1.bf16.msra.mxu0 0
        %648 = vmatprep.subr.bf16.mxu0 0
        %649 = vmatpush1.bf16.msra.mxu0 0
        %650 = vmatprep.subr.bf16.mxu0 0
        %651 = vmatpush1.bf16.msra.mxu0 0
        %652 = vmatprep.subr.bf16.mxu0 0
        %653 = vmatpush1.bf16.msra.mxu0 0
        %654 = vmatprep.subr.bf16.mxu0 0
        %655 = vmatpush1.bf16.msra.mxu0 %v638
        %656 = vmatprep.subr.bf16.mxu0 0
        %657 = vmatpush1.bf16.msra.mxu0 %v637
        %658 = vmatprep.subr.bf16.mxu0 0
        %659 = vmatpush1.bf16.msra.mxu0 %v636
        %660 = vmatprep.subr.bf16.mxu0 0
        %661 = vmatpush1.bf16.msra.mxu0 %v635
        %662 = vmatprep.subr.bf16.mxu0 0
        %663 = vmatpush2.bf16.msra.mxu0 0
        %664 = vmatprep.subr.bf16.mxu0 0
        %665 = vmatpush2.bf16.msra.mxu0 0
        %666 = vmatprep.subr.bf16.mxu0 0
        %667 = vmatpush2.bf16.msra.mxu0 0
        %668 = vmatprep.subr.bf16.mxu0 0
        %669 = vmatpush2.bf16.msra.mxu0 0
        %670 = vmatprep.subr.bf16.mxu0 0
        %671 = vmatpush2.bf16.msra.mxu0 0
        %672 = vmatprep.subr.bf16.mxu0 0
        %673 = vmatpush2.bf16.msra.mxu0 0
        %674 = vmatprep.subr.bf16.mxu0 0
        %675 = vmatpush2.bf16.msra.mxu0 0
        %676 = vmatprep.subr.bf16.mxu0 0
        %677 = vmatpush2.bf16.msra.mxu0 0
        %678 = vmatprep.mubr.bf16.mxu0 0
        %679 = vmatmul.mubr.bf16.gmra.mxu0 %v644
        %v680 = vpop.f32.mrf.mxu0
        %v681 = vadd.f32 0.0, %v680
        %v682 = vpop.f32.mrf.mxu0
        %v683 = vpop.f32.mrf.mxu0
        %v684 = vpop.f32.mrf.mxu0
        %685 = vdwg.mxu0
        %v686 = vadd.f32 %v604, %v681
        %v687 = vld [vmem:[%s177 + $0x4] sm:$0xf]
        %s688 = scalar_lea.vmem %s1, 192
        %v689 = vld [vmem:[%s688] sm:$0xf]
        %v690 = vld [vmem:[%s688 + $0x4] sm:$0xf]
        %v691 = vld [vmem:[%s688 + $0x8] sm:$0xf]
        %v692 = vld [vmem:[%s688 + $0xc] sm:$0xf]
        %v693 = vld [vmem:[%s688 + $0x10] sm:$0xf]
        %v694 = vld [vmem:[%s688 + $0x14] sm:$0xf]
        %v695 = vld [vmem:[%s688 + $0x18] sm:$0xf]
        %v696 = vld [vmem:[%s688 + $0x1c] sm:$0xf]
        %v705 = vunpack.c.l.b16 %v689
        %v706 = vunpack.c.l.b16 %v690
        %v707 = vunpack.c.l.b16 %v691
        %v708 = vunpack.c.l.b16 %v692
        %v709 = vunpack.c.l.b16 %v693
        %v710 = vunpack.c.l.b16 %v694
        %v711 = vunpack.c.l.b16 %v695
        %v712 = vunpack.c.l.b16 %v696
        %v713 = vpack.c.b16 %v706, %v705
        %v714 = vpack.c.b16 %v708, %v707
        %v715 = vpack.c.b16 %v710, %v709
        %v716 = vpack.c.b16 %v712, %v711
        %v722 = vsel %vm238, %v687, 0
        %724 = vmatprep.subr.bf16.mxu0 0
        %725 = vmatpush1.bf16.msra.mxu0 0
        %726 = vmatprep.subr.bf16.mxu0 0
        %727 = vmatpush1.bf16.msra.mxu0 0
        %728 = vmatprep.subr.bf16.mxu0 0
        %729 = vmatpush1.bf16.msra.mxu0 0
        %730 = vmatprep.subr.bf16.mxu0 0
        %731 = vmatpush1.bf16.msra.mxu0 0
        %732 = vmatprep.subr.bf16.mxu0 0
        %733 = vmatpush1.bf16.msra.mxu0 %v716
        %734 = vmatprep.subr.bf16.mxu0 0
        %735 = vmatpush1.bf16.msra.mxu0 %v715
        %736 = vmatprep.subr.bf16.mxu0 0
        %737 = vmatpush1.bf16.msra.mxu0 %v714
        %738 = vmatprep.subr.bf16.mxu0 0
        %739 = vmatpush1.bf16.msra.mxu0 %v713
        %740 = vmatprep.subr.bf16.mxu0 0
        %741 = vmatpush2.bf16.msra.mxu0 0
        %742 = vmatprep.subr.bf16.mxu0 0
        %743 = vmatpush2.bf16.msra.mxu0 0
        %744 = vmatprep.subr.bf16.mxu0 0
        %745 = vmatpush2.bf16.msra.mxu0 0
        %746 = vmatprep.subr.bf16.mxu0 0
        %747 = vmatpush2.bf16.msra.mxu0 0
        %748 = vmatprep.subr.bf16.mxu0 0
        %749 = vmatpush2.bf16.msra.mxu0 0
        %750 = vmatprep.subr.bf16.mxu0 0
        %751 = vmatpush2.bf16.msra.mxu0 0
        %752 = vmatprep.subr.bf16.mxu0 0
        %753 = vmatpush2.bf16.msra.mxu0 0
        %754 = vmatprep.subr.bf16.mxu0 0
        %755 = vmatpush2.bf16.msra.mxu0 0
        %756 = vmatprep.mubr.bf16.mxu0 0
        %757 = vmatmul.mubr.bf16.gmra.mxu0 %v722
        %v758 = vpop.f32.mrf.mxu0
        %v759 = vadd.f32 0.0, %v758
        %v760 = vpop.f32.mrf.mxu0
        %v761 = vpop.f32.mrf.mxu0
        %v762 = vpop.f32.mrf.mxu0
        %763 = vdwg.mxu0
        %v764 = vadd.f32 %v686, %v759
        %v765 = vld [vmem:[%s177 + $0x4] sm:$0xf]
        %v766 = vld [vmem:[%s177 + $0x8] sm:$0x1]
        %s767 = scalar_lea.vmem %s1, 224
        %v768 = vld [vmem:[%s767] sm:$0xf]
        %v769 = vld [vmem:[%s767 + $0x4] sm:$0xf]
        %v770 = vld [vmem:[%s767 + $0x8] sm:$0xf]
        %v771 = vld [vmem:[%s767 + $0xc] sm:$0xf]
        %v772 = vld [vmem:[%s767 + $0x10] sm:$0xf]
        %v773 = vld [vmem:[%s767 + $0x14] sm:$0xf]
        %v774 = vld [vmem:[%s767 + $0x18] sm:$0xf]
        %v775 = vld [vmem:[%s767 + $0x1c] sm:$0xf]
        %v778 = vunpack.c.l.b16 %v765
        %v779 = vunpack.c.l.b16 %v766
        %v780 = vpack.c.b16 %v779, %v778
        %v782 = vshrl.u32 %v780, 16
        %v784 = vshll.u32 %v780, 16
        %v786 = vrot.slane %v784, 1
        %v787 = vor.u32 %v782, %v786
        %v796 = vunpack.c.l.b16 %v768
        %v797 = vunpack.c.l.b16 %v769
        %v798 = vunpack.c.l.b16 %v770
        %v799 = vunpack.c.l.b16 %v771
        %v800 = vunpack.c.l.b16 %v772
        %v801 = vunpack.c.l.b16 %v773
        %v802 = vunpack.c.l.b16 %v774
        %v803 = vunpack.c.l.b16 %v775
        %v804 = vpack.c.b16 %v797, %v796
        %v805 = vpack.c.b16 %v799, %v798
        %v806 = vpack.c.b16 %v801, %v800
        %v807 = vpack.c.b16 %v803, %v802
        %v813 = vsel %vm238, %v787, 0
        %815 = vmatprep.subr.bf16.mxu0 0
        %816 = vmatpush1.bf16.msra.mxu0 0
        %817 = vmatprep.subr.bf16.mxu0 0
        %818 = vmatpush1.bf16.msra.mxu0 0
        %819 = vmatprep.subr.bf16.mxu0 0
        %820 = vmatpush1.bf16.msra.mxu0 0
        %821 = vmatprep.subr.bf16.mxu0 0
        %822 = vmatpush1.bf16.msra.mxu0 0
        %823 = vmatprep.subr.bf16.mxu0 0
        %824 = vmatpush1.bf16.msra.mxu0 %v807
        %825 = vmatprep.subr.bf16.mxu0 0
        %826 = vmatpush1.bf16.msra.mxu0 %v806
        %827 = vmatprep.subr.bf16.mxu0 0
        %828 = vmatpush1.bf16.msra.mxu0 %v805
        %829 = vmatprep.subr.bf16.mxu0 0
        %830 = vmatpush1.bf16.msra.mxu0 %v804
        %831 = vmatprep.subr.bf16.mxu0 0
        %832 = vmatpush2.bf16.msra.mxu0 0
        %833 = vmatprep.subr.bf16.mxu0 0
        %834 = vmatpush2.bf16.msra.mxu0 0
        %835 = vmatprep.subr.bf16.mxu0 0
        %836 = vmatpush2.bf16.msra.mxu0 0
        %837 = vmatprep.subr.bf16.mxu0 0
        %838 = vmatpush2.bf16.msra.mxu0 0
        %839 = vmatprep.subr.bf16.mxu0 0
        %840 = vmatpush2.bf16.msra.mxu0 0
        %841 = vmatprep.subr.bf16.mxu0 0
        %842 = vmatpush2.bf16.msra.mxu0 0
        %843 = vmatprep.subr.bf16.mxu0 0
        %844 = vmatpush2.bf16.msra.mxu0 0
        %845 = vmatprep.subr.bf16.mxu0 0
        %846 = vmatpush2.bf16.msra.mxu0 0
        %847 = vmatprep.mubr.bf16.mxu0 0
        %848 = vmatmul.mubr.bf16.gmra.mxu0 %v813
        %v849 = vpop.f32.mrf.mxu0
        %v850 = vadd.f32 0.0, %v849
        %v851 = vpop.f32.mrf.mxu0
        %v852 = vpop.f32.mrf.mxu0
        %v853 = vpop.f32.mrf.mxu0
        %854 = vdwg.mxu0
        %v855 = vadd.f32 %v764, %v850
        %v856 = vld [vmem:[%s177 + $0x4] sm:$0xe]
        %s857 = scalar_lea.vmem %s1, 256
        %v858 = vld [vmem:[%s857] sm:$0xf]
        %v859 = vld [vmem:[%s857 + $0x4] sm:$0xf]
        %v860 = vld [vmem:[%s857 + $0x8] sm:$0xf]
        %v861 = vld [vmem:[%s857 + $0xc] sm:$0xf]
        %v862 = vld [vmem:[%s857 + $0x10] sm:$0xf]
        %v863 = vld [vmem:[%s857 + $0x14] sm:$0xf]
        %v864 = vld [vmem:[%s857 + $0x18] sm:$0xf]
        %v865 = vld [vmem:[%s857 + $0x1c] sm:$0xf]
        %v867 = vunpack.c.l.b16 %v856
        %v868 = vpack.c.b16 %v779, %v867
        %v869 = vrot.slane %v868, 1
        %v878 = vunpack.c.l.b16 %v858
        %v879 = vunpack.c.l.b16 %v859
        %v880 = vunpack.c.l.b16 %v860
        %v881 = vunpack.c.l.b16 %v861
        %v882 = vunpack.c.l.b16 %v862
        %v883 = vunpack.c.l.b16 %v863
        %v884 = vunpack.c.l.b16 %v864
        %v885 = vunpack.c.l.b16 %v865
        %v886 = vpack.c.b16 %v879, %v878
        %v887 = vpack.c.b16 %v881, %v880
        %v888 = vpack.c.b16 %v883, %v882
        %v889 = vpack.c.b16 %v885, %v884
        %v895 = vsel %vm238, %v869, 0
        %897 = vmatprep.subr.bf16.mxu0 0
        %898 = vmatpush1.bf16.msra.mxu0 0
        %899 = vmatprep.subr.bf16.mxu0 0
        %900 = vmatpush1.bf16.msra.mxu0 0
        %901 = vmatprep.subr.bf16.mxu0 0
        %902 = vmatpush1.bf16.msra.mxu0 0
        %903 = vmatprep.subr.bf16.mxu0 0
        %904 = vmatpush1.bf16.msra.mxu0 0
        %905 = vmatprep.subr.bf16.mxu0 0
        %906 = vmatpush1.bf16.msra.mxu0 %v889
        %907 = vmatprep.subr.bf16.mxu0 0
        %908 = vmatpush1.bf16.msra.mxu0 %v888
        %909 = vmatprep.subr.bf16.mxu0 0
        %910 = vmatpush1.bf16.msra.mxu0 %v887
        %911 = vmatprep.subr.bf16.mxu0 0
        %912 = vmatpush1.bf16.msra.mxu0 %v886
        %913 = vmatprep.subr.bf16.mxu0 0
        %914 = vmatpush2.bf16.msra.mxu0 0
        %915 = vmatprep.subr.bf16.mxu0 0
        %916 = vmatpush2.bf16.msra.mxu0 0
        %917 = vmatprep.subr.bf16.mxu0 0
        %918 = vmatpush2.bf16.msra.mxu0 0
        %919 = vmatprep.subr.bf16.mxu0 0
        %920 = vmatpush2.bf16.msra.mxu0 0
        %921 = vmatprep.subr.bf16.mxu0 0
        %922 = vmatpush2.bf16.msra.mxu0 0
        %923 = vmatprep.subr.bf16.mxu0 0
        %924 = vmatpush2.bf16.msra.mxu0 0
        %925 = vmatprep.subr.bf16.mxu0 0
        %926 = vmatpush2.bf16.msra.mxu0 0
        %927 = vmatprep.subr.bf16.mxu0 0
        %928 = vmatpush2.bf16.msra.mxu0 0
        %929 = vmatprep.mubr.bf16.mxu0 0
        %930 = vmatmul.mubr.bf16.gmra.mxu0 %v895
        %v931 = vpop.f32.mrf.mxu0
        %v932 = vadd.f32 0.0, %v931
        %v933 = vpop.f32.mrf.mxu0
        %v934 = vpop.f32.mrf.mxu0
        %v935 = vpop.f32.mrf.mxu0
        %936 = vdwg.mxu0
        %v937 = vadd.f32 %v855, %v932
        %v938 = vld [vmem:[#allocation2] sm:$0x1]
        %v940 = vlaneseq
        %v941 = vshrl.u32 %v940, 7
        %v942 = vsub.s32 0, %v941
        %v943 = vrot.slane %v938, %v942
        %v945 = vadd.f32 %v937, %v943
        %v946 = vmax.f32 %v945, 0.0
        %v947 = vpack.c.bf16 %v946, %v946
        %948 = vst [vmem:[%s181] sm:$0xf] %v947
        %p949 = scmp.lt.s32.totalorder %s15, 1
        %s950 = scalar_select %p949, %s15, 1
        %s951 = smul.addr %s950, 4
        %s952 = scalar_lea.vmem %s3, %s951
        // Predicated region
        $region37: #{forward.8} parent=31 // pred_check
          %p953 = pneg %p101
        $region38: #{forward.8} parent=31 // pred_check_branch
          %955 = sbr.rel (%p953) target = $region40
        $region39: #{forward.8} parent=31 // pred_region
          _
        $region40: #{forward.8} parent=31 // pred_fallthru
          _
      $region32: #{forward.8} parent=5 // pred_fallthru
        _
      %p956 = scmp.le.s32.totalorder 2, %s10
      // Predicated region
      $region41: #{forward.8} parent=5 // pred_check
        %p957 = pneg %p956
      $region42: #{forward.8} parent=5 // pred_check_branch
        %959 = sbr.rel (%p957) target = $region44
      $region43: #{forward.8} parent=5 // pred_region
        %s960 = ssub.s32 %s10, 2
        // Predicated region
        $region45: #{forward.8} parent=43 // pred_check
          %p961 = pneg %p107
        $region46: #{forward.8} parent=43 // pred_check_branch
          %963 = sbr.rel (%p961) target = $region48
        $region47: #{forward.8} parent=43 // pred_region
          %p964 = scmp.lt.s32.totalorder %s16, 1
          %s965 = scalar_select %p964, %s16, 1
          %s966 = smul.addr %s965, 4
          %s967 = scalar_lea.vmem %s3, %s966
        $region48: #{forward.8} parent=43 // pred_fallthru
          _
      $region44: #{forward.8} parent=5 // pred_fallthru
        _
    $region6: #{forward.8} parent=1 // loop_footer
      %s14 = sadd.s32 1, %s10
    $region7: #{forward.8} parent=1 // loop_footer_branch
      %9 = sbr.rel target = $region3
    $region8: #{forward.8} parent=1 // loop_exit
      _
    %968 = vsyncpa [#allocation3], 1
    %s969 = scalar_lea.sflag [#allocation3], 1
    %970 = vsyncpa %s969, 1

// kernel: forward.9
$region0: #{forward.9}
  #allocation0 [shape = 'u32[]', space=smem, size = 0x4, offset = 0x4, fixed_abs, tag = 'smem constant byte address 0x4 - core index']
  #allocation1 [shape = 'u32[144,128]{1,0:T(1,128)}', space=vmem, size = 0x12000, scoped, tag = 'internal scratch']
  #allocation2 [shape = 'f32[2,512]{1,0:T(2,128)}', space=vmem, size = 0x1000, scoped, tag = 'scratch operand']
  %s0 = inlined_call_operand.vmem [shape: bf16[2,512], index: 0, kind: input, shape index: {}]
  %s1 = inlined_call_operand.hbm [shape: bf16[512,512], index: 1, kind: input, shape index: {}]
  %s2 = inlined_call_operand.vmem [shape: f32[1,512], index: 2, kind: input, shape index: {}]
  %s3 = inlined_call_operand.vmem [shape: f32[512,512], index: 3, kind: input, shape index: {}]
  %s4 = inlined_call_operand.hbm [shape: f32[1,512], index: 4, kind: input, shape index: {}]
  %s5 = inlined_call_operand.vmem [shape: f32[512,512], index: 5, kind: input, shape index: {}]
  %s6 = inlined_call_operand.hbm [shape: f32[1,512], index: 6, kind: input, shape index: {}]
  %s7 = inlined_call_operand.vmem [shape: f32[512,128], index: 7, kind: input, shape index: {}]
  %s8 = inlined_call_operand.hbm [shape: f32[1,128], index: 8, kind: input, shape index: {}]
  %s9 = inlined_call_operand.hbm [shape: f32[512,128], index: 9, kind: input, shape index: {}]
  %s10 = inlined_call_operand.hbm [shape: f32[1,128], index: 10, kind: input, shape index: {}]
  %s11 = inlined_call_operand.vmem [shape: f32[2,256], index: 11, kind: output, shape index: {}]
  %s12 = sld [smem:[#allocation0]]
  $region86: #{forward.9} parent=0
    _
  %s14 = ssub.s32 1, %s12
  %s15 = scalar_select 0, %s14, %s12
  $region1: #{forward.9} parent=0
    #allocation3 [shape = 'u8[524288]{0}', space=vmem, size = 0x80000, scoped, tag = 'input window, operand 1, single buffered']
    #allocation4 [shape = 's32[1]{0}', space=sflag, size = 0x4, scoped, tag = 'scoped memory for forward.9']
    #allocation5 [shape = 'u8[2048]{0}', space=vmem, size = 0x800, scoped, tag = 'input window, operand 4, single buffered']
    #allocation6 [shape = 's32[1]{0}', space=sflag, size = 0x4, scoped, tag = 'scoped memory for forward.9']
    #allocation7 [shape = 'u8[2048]{0}', space=vmem, size = 0x800, scoped, tag = 'input window, operand 6, single buffered']
    #allocation8 [shape = 'u8[512]{0}', space=vmem, size = 0x400, scoped, tag = 'input window, operand 8, single buffered']
    #allocation9 [shape = 's32[1]{0}', space=sflag, size = 0x4, scoped, tag = 'scoped memory for forward.9']
    #allocation10 [shape = 'u8[262144]{0}', space=vmem, size = 0x40000, scoped, tag = 'input window, operand 9, single buffered']
    #allocation11 [shape = 'u8[512]{0}', space=vmem, size = 0x400, scoped, tag = 'input window, operand 10, single buffered']
    #allocation12 [shape = 's32[1]{0}', space=sflag, size = 0x4, scoped, tag = 'scoped memory for forward.9']
    %16 = vsyncpa [#allocation4], 0
    %17 = vsyncpa [#allocation6], 0
    %18 = vsyncpa [#allocation9], 0
    %19 = vsyncpa [#allocation12], 0
    // Predicated region
    $region2: #{forward.9} parent=1 // pred_check
      _
    $region3: #{forward.9} parent=1 // pred_check_branch
      %21 = sbr.rel (0) target = $region5
    $region4: #{forward.9} parent=1 // pred_region
      _
    $region5: #{forward.9} parent=1 // pred_fallthru
      _
    // Predicated region
    $region6: #{forward.9} parent=1 // pred_check
      _
    $region7: #{forward.9} parent=1 // pred_check_branch
      %23 = sbr.rel (0) target = $region9
    $region8: #{forward.9} parent=1 // pred_region
      %s25 = ssub.s32 16384, 16384
      %26 = vsyncadd [#allocation4], %s25
      %s27 = sshll.u32 [#allocation3], 4
      %s28 = int_to_ptr.vmem [resolvable:$true] %s27
      %33 = dma.hbm_to_vmem [thread:$0]  %s1, 16384, %s28, [#allocation4], 256, 256, 16
    $region9: #{forward.9} parent=1 // pred_fallthru
      _
    // Predicated region
    $region10: #{forward.9} parent=1 // pred_check
      _
    $region11: #{forward.9} parent=1 // pred_check_branch
      %35 = sbr.rel (0) target = $region13
    $region12: #{forward.9} parent=1 // pred_region
      _
    $region13: #{forward.9} parent=1 // pred_fallthru
      _
    // Predicated region
    $region14: #{forward.9} parent=1 // pred_check
      _
    $region15: #{forward.9} parent=1 // pred_check_branch
      %37 = sbr.rel (0) target = $region17
    $region16: #{forward.9} parent=1 // pred_region
      _
    $region17: #{forward.9} parent=1 // pred_fallthru
      _
    // Predicated region
    $region18: #{forward.9} parent=1 // pred_check
      _
    $region19: #{forward.9} parent=1 // pred_check_branch
      %39 = sbr.rel (0) target = $region21
    $region20: #{forward.9} parent=1 // pred_region
      %s41 = ssub.s32 64, 64
      %42 = vsyncadd [#allocation6], %s41
      %s44 = sshll.u32 [#allocation5], 4
      %s45 = int_to_ptr.vmem [resolvable:$true] %s44
      %47 = dma.hbm_to_vmem [thread:$0]  %s4, 64, %s45, [#allocation6]
    $region21: #{forward.9} parent=1 // pred_fallthru
      _
    // Predicated region
    $region22: #{forward.9} parent=1 // pred_check
      _
    $region23: #{forward.9} parent=1 // pred_check_branch
      %49 = sbr.rel (0) target = $region25
    $region24: #{forward.9} parent=1 // pred_region
      _
    $region25: #{forward.9} parent=1 // pred_fallthru
      _
    // Predicated region
    $region26: #{forward.9} parent=1 // pred_check
      _
    $region27: #{forward.9} parent=1 // pred_check_branch
      %51 = sbr.rel (0) target = $region29
    $region28: #{forward.9} parent=1 // pred_region
      %s53 = ssub.s32 64, 64
      %54 = vsyncadd [#allocation6], %s53
      %s56 = sshll.u32 [#allocation7], 4
      %s57 = int_to_ptr.vmem [resolvable:$true] %s56
      %59 = dma.hbm_to_vmem [thread:$0]  %s6, 64, %s57, [#allocation6]
    $region29: #{forward.9} parent=1 // pred_fallthru
      _
    // Predicated region
    $region30: #{forward.9} parent=1 // pred_check
      _
    $region31: #{forward.9} parent=1 // pred_check_branch
      %61 = sbr.rel (0) target = $region33
    $region32: #{forward.9} parent=1 // pred_region
      _
    $region33: #{forward.9} parent=1 // pred_fallthru
      _
    // Predicated region
    $region34: #{forward.9} parent=1 // pred_check
      _
    $region35: #{forward.9} parent=1 // pred_check_branch
      %63 = sbr.rel (0) target = $region37
    $region36: #{forward.9} parent=1 // pred_region
      %s65 = ssub.s32 16, 16
      %66 = vsyncadd [#allocation9], %s65
      %s68 = sshll.u32 [#allocation8], 4
      %s69 = int_to_ptr.vmem [resolvable:$true] %s68
      %71 = dma.hbm_to_vmem [thread:$0]  %s8, 16, %s69, [#allocation9]
    $region37: #{forward.9} parent=1 // pred_fallthru
      _
    // Predicated region
    $region38: #{forward.9} parent=1 // pred_check
      _
    $region39: #{forward.9} parent=1 // pred_check_branch
      %73 = sbr.rel (0) target = $region41
    $region40: #{forward.9} parent=1 // pred_region
      %s75 = ssub.s32 8192, 8192
      %76 = vsyncadd [#allocation9], %s75
      %s77 = sshll.u32 [#allocation10], 4
      %s78 = int_to_ptr.vmem [resolvable:$true] %s77
      %83 = dma.hbm_to_vmem [thread:$0]  %s9, 8192, %s78, [#allocation9], 128, 128, 8
    $region41: #{forward.9} parent=1 // pred_fallthru
      _
    // Predicated region
    $region42: #{forward.9} parent=1 // pred_check
      _
    $region43: #{forward.9} parent=1 // pred_check_branch
      %85 = sbr.rel (0) target = $region45
    $region44: #{forward.9} parent=1 // pred_region
      %s87 = ssub.s32 16, 16
      %88 = vsyncadd [#allocation12], %s87
      %s90 = sshll.u32 [#allocation11], 4
      %s91 = int_to_ptr.vmem [resolvable:$true] %s90
      %93 = dma.hbm_to_vmem [thread:$0]  %s10, 16, %s91, [#allocation12]
    $region45: #{forward.9} parent=1 // pred_fallthru
      _
    // Predicated region
    $region46: #{forward.9} parent=1 // pred_check
      _
    $region47: #{forward.9} parent=1 // pred_check_branch
      %95 = sbr.rel (0) target = $region49
    $region48: #{forward.9} parent=1 // pred_region
      %96 = dma.done [#allocation4], 16384
    $region49: #{forward.9} parent=1 // pred_fallthru
      _
    // Predicated region
    $region50: #{forward.9} parent=1 // pred_check
      _
    $region51: #{forward.9} parent=1 // pred_check_branch
      %98 = sbr.rel (0) target = $region53
    $region52: #{forward.9} parent=1 // pred_region
      %99 = dma.done [#allocation6], 64
    $region53: #{forward.9} parent=1 // pred_fallthru
      _
    // Predicated region
    $region54: #{forward.9} parent=1 // pred_check
      _
    $region55: #{forward.9} parent=1 // pred_check_branch
      %101 = sbr.rel (0) target = $region57
    $region56: #{forward.9} parent=1 // pred_region
      %102 = dma.done [#allocation6], 64
    $region57: #{forward.9} parent=1 // pred_fallthru
      _
    // Predicated region
    $region58: #{forward.9} parent=1 // pred_check
      _
    $region59: #{forward.9} parent=1 // pred_check_branch
      %104 = sbr.rel (0) target = $region61
    $region60: #{forward.9} parent=1 // pred_region
      %105 = dma.done [#allocation9], 16
    $region61: #{forward.9} parent=1 // pred_fallthru
      _
    // Predicated region
    $region62: #{forward.9} parent=1 // pred_check
      _
    $region63: #{forward.9} parent=1 // pred_check_branch
      %107 = sbr.rel (0) target = $region65
    $region64: #{forward.9} parent=1 // pred_region
      %108 = dma.done [#allocation9], 8192
    $region65: #{forward.9} parent=1 // pred_fallthru
      _
    // Predicated region
    $region66: #{forward.9} parent=1 // pred_check
      _
    $region67: #{forward.9} parent=1 // pred_check_branch
      %110 = sbr.rel (0) target = $region69
    $region68: #{forward.9} parent=1 // pred_region
      %111 = dma.done [#allocation12], 16
    $region69: #{forward.9} parent=1 // pred_fallthru
      _
    %p112 = scmp.eq.s32.totalorder 0, 0
    // Predicated region
    $region70: #{forward.9} parent=1 // pred_check
      %p113 = pneg %p112
    $region71: #{forward.9} parent=1 // pred_check_branch
      %115 = sbr.rel (%p113) target = $region73
    $region72: #{forward.9} parent=1 // pred_region
      %116 = vst [vmem:[#allocation2] sm:$0xff] 0.0
    $region73: #{forward.9} parent=1 // pred_fallthru
      _
    %v117 = vld [vmem:[#allocation2] sm:$0xff]
    %v118 = vld [vmem:[%s0] sm:$0xf]
    %v119 = vld [vmem:[#allocation3] sm:$0xff]
    %v120 = vld [vmem:[#allocation3 + $0x8] sm:$0xff]
    %v121 = vld [vmem:[#allocation3 + $0x10] sm:$0xff]
    %v122 = vld [vmem:[#allocation3 + $0x18] sm:$0xff]
    %v123 = vld [vmem:[#allocation3 + $0x20] sm:$0xff]
    %v124 = vld [vmem:[#allocation3 + $0x28] sm:$0xff]
    %v125 = vld [vmem:[#allocation3 + $0x30] sm:$0xff]
    %v126 = vld [vmem:[#allocation3 + $0x38] sm:$0xff]
    %v127 = vld [vmem:[#allocation3 + $0x40] sm:$0xff]
    %v128 = vld [vmem:[#allocation3 + $0x48] sm:$0xff]
    %v129 = vld [vmem:[#allocation3 + $0x50] sm:$0xff]
    %v130 = vld [vmem:[#allocation3 + $0x58] sm:$0xff]
    %v131 = vld [vmem:[#allocation3 + $0x60] sm:$0xff]
    %v132 = vld [vmem:[#allocation3 + $0x68] sm:$0xff]
    %v133 = vld [vmem:[#allocation3 + $0x70] sm:$0xff]
    %v134 = vld [vmem:[#allocation3 + $0x78] sm:$0xff]
    %v135 = vld [vmem:[#allocation3 + $0x80] sm:$0xff]
    %v136 = vld [vmem:[#allocation3 + $0x88] sm:$0xff]
    %v137 = vld [vmem:[#allocation3 + $0x90] sm:$0xff]
    %v138 = vld [vmem:[#allocation3 + $0x98] sm:$0xff]
    %v139 = vld [vmem:[#allocation3 + $0xa0] sm:$0xff]
    %v140 = vld [vmem:[#allocation3 + $0xa8] sm:$0xff]
    %v141 = vld [vmem:[#allocation3 + $0xb0] sm:$0xff]
    %v142 = vld [vmem:[#allocation3 + $0xb8] sm:$0xff]
    %v143 = vld [vmem:[#allocation3 + $0xc0] sm:$0xff]
    %v144 = vld [vmem:[#allocation3 + $0xc8] sm:$0xff]
    %v145 = vld [vmem:[#allocation3 + $0xd0] sm:$0xff]
    %v146 = vld [vmem:[#allocation3 + $0xd8] sm:$0xff]
    %v147 = vld [vmem:[#allocation3 + $0xe0] sm:$0xff]
    %v148 = vld [vmem:[#allocation3 + $0xe8] sm:$0xff]
    %v149 = vld [vmem:[#allocation3 + $0xf0] sm:$0xff]
    %v150 = vld [vmem:[#allocation3 + $0xf8] sm:$0xff]
    %v151 = vld [vmem:[#allocation3 + $0x100] sm:$0xff]
    %v152 = vld [vmem:[#allocation3 + $0x108] sm:$0xff]
    %v153 = vld [vmem:[#allocation3 + $0x110] sm:$0xff]
    %v154 = vld [vmem:[#allocation3 + $0x118] sm:$0xff]
    %v155 = vld [vmem:[#allocation3 + $0x120] sm:$0xff]
    %v156 = vld [vmem:[#allocation3 + $0x128] sm:$0xff]
    %v157 = vld [vmem:[#allocation3 + $0x130] sm:$0xff]
    %v158 = vld [vmem:[#allocation3 + $0x138] sm:$0xff]
    %v159 = vld [vmem:[#allocation3 + $0x140] sm:$0xff]
    %v160 = vld [vmem:[#allocation3 + $0x148] sm:$0xff]
    %v161 = vld [vmem:[#allocation3 + $0x150] sm:$0xff]
    %v162 = vld [vmem:[#allocation3 + $0x158] sm:$0xff]
    %v163 = vld [vmem:[#allocation3 + $0x160] sm:$0xff]
    %v164 = vld [vmem:[#allocation3 + $0x168] sm:$0xff]
    %v165 = vld [vmem:[#allocation3 + $0x170] sm:$0xff]
    %v166 = vld [vmem:[#allocation3 + $0x178] sm:$0xff]
    %v167 = vld [vmem:[#allocation3 + $0x180] sm:$0xff]
    %v168 = vld [vmem:[#allocation3 + $0x188] sm:$0xff]
    %v169 = vld [vmem:[#allocation3 + $0x190] sm:$0xff]
    %v170 = vld [vmem:[#allocation3 + $0x198] sm:$0xff]
    %v171 = vld [vmem:[#allocation3 + $0x1a0] sm:$0xff]
    %v172 = vld [vmem:[#allocation3 + $0x1a8] sm:$0xff]
    %v173 = vld [vmem:[#allocation3 + $0x1b0] sm:$0xff]
    %v174 = vld [vmem:[#allocation3 + $0x1b8] sm:$0xff]
    %v175 = vld [vmem:[#allocation3 + $0x1c0] sm:$0xff]
    %v176 = vld [vmem:[#allocation3 + $0x1c8] sm:$0xff]
    %v177 = vld [vmem:[#allocation3 + $0x1d0] sm:$0xff]
    %v178 = vld [vmem:[#allocation3 + $0x1d8] sm:$0xff]
    %v179 = vld [vmem:[#allocation3 + $0x1e0] sm:$0xff]
    %v180 = vld [vmem:[#allocation3 + $0x1e8] sm:$0xff]
    %v181 = vld [vmem:[#allocation3 + $0x1f0] sm:$0xff]
    %v182 = vld [vmem:[#allocation3 + $0x1f8] sm:$0xff]
    %v183 = vld [vmem:[#allocation3 + $0x200] sm:$0xff]
    %v184 = vld [vmem:[#allocation3 + $0x208] sm:$0xff]
    %v185 = vld [vmem:[#allocation3 + $0x210] sm:$0xff]
    %v186 = vld [vmem:[#allocation3 + $0x218] sm:$0xff]
    %v187 = vld [vmem:[#allocation3 + $0x220] sm:$0xff]
    %v188 = vld [vmem:[#allocation3 + $0x228] sm:$0xff]
    %v189 = vld [vmem:[#allocation3 + $0x230] sm:$0xff]
    %v190 = vld [vmem:[#allocation3 + $0x238] sm:$0xff]
    %v191 = vld [vmem:[#allocation3 + $0x240] sm:$0xff]
    %v192 = vld [vmem:[#allocation3 + $0x248] sm:$0xff]
    %v193 = vld [vmem:[#allocation3 + $0x250] sm:$0xff]
    %v194 = vld [vmem:[#allocation3 + $0x258] sm:$0xff]
    %v195 = vld [vmem:[#allocation3 + $0x260] sm:$0xff]
    %v196 = vld [vmem:[#allocation3 + $0x268] sm:$0xff]
    %v197 = vld [vmem:[#allocation3 + $0x270] sm:$0xff]
    %v198 = vld [vmem:[#allocation3 + $0x278] sm:$0xff]
    %v199 = vld [vmem:[#allocation3 + $0x280] sm:$0xff]
    %v200 = vld [vmem:[#allocation3 + $0x288] sm:$0xff]
    %v201 = vld [vmem:[#allocation3 + $0x290] sm:$0xff]
    %v202 = vld [vmem:[#allocation3 + $0x298] sm:$0xff]
    %v203 = vld [vmem:[#allocation3 + $0x2a0] sm:$0xff]
    %v204 = vld [vmem:[#allocation3 + $0x2a8] sm:$0xff]
    %v205 = vld [vmem:[#allocation3 + $0x2b0] sm:$0xff]
    %v206 = vld [vmem:[#allocation3 + $0x2b8] sm:$0xff]
    %v207 = vld [vmem:[#allocation3 + $0x2c0] sm:$0xff]
    %v208 = vld [vmem:[#allocation3 + $0x2c8] sm:$0xff]
    %v209 = vld [vmem:[#allocation3 + $0x2d0] sm:$0xff]
    %v210 = vld [vmem:[#allocation3 + $0x2d8] sm:$0xff]
    %v211 = vld [vmem:[#allocation3 + $0x2e0] sm:$0xff]
    %v212 = vld [vmem:[#allocation3 + $0x2e8] sm:$0xff]
    %v213 = vld [vmem:[#allocation3 + $0x2f0] sm:$0xff]
    %v214 = vld [vmem:[#allocation3 + $0x2f8] sm:$0xff]
    %v215 = vld [vmem:[#allocation3 + $0x300] sm:$0xff]
    %v216 = vld [vmem:[#allocation3 + $0x308] sm:$0xff]
    %v217 = vld [vmem:[#allocation3 + $0x310] sm:$0xff]
    %v218 = vld [vmem:[#allocation3 + $0x318] sm:$0xff]
    %v219 = vld [vmem:[#allocation3 + $0x320] sm:$0xff]
    %v220 = vld [vmem:[#allocation3 + $0x328] sm:$0xff]
    %v221 = vld [vmem:[#allocation3 + $0x330] sm:$0xff]
    %v222 = vld [vmem:[#allocation3 + $0x338] sm:$0xff]
    %v223 = vld [vmem:[#allocation3 + $0x340] sm:$0xff]
    %v224 = vld [vmem:[#allocation3 + $0x348] sm:$0xff]
    %v225 = vld [vmem:[#allocation3 + $0x350] sm:$0xff]
    %v226 = vld [vmem:[#allocation3 + $0x358] sm:$0xff]
    %v227 = vld [vmem:[#allocation3 + $0x360] sm:$0xff]
    %v228 = vld [vmem:[#allocation3 + $0x368] sm:$0xff]
    %v229 = vld [vmem:[#allocation3 + $0x370] sm:$0xff]
    %v230 = vld [vmem:[#allocation3 + $0x378] sm:$0xff]
    %v231 = vld [vmem:[#allocation3 + $0x380] sm:$0xff]
    %v232 = vld [vmem:[#allocation3 + $0x388] sm:$0xff]
    %v233 = vld [vmem:[#allocation3 + $0x390] sm:$0xff]
    %v234 = vld [vmem:[#allocation3 + $0x398] sm:$0xff]
    %v235 = vld [vmem:[#allocation3 + $0x3a0] sm:$0xff]
    %v236 = vld [vmem:[#allocation3 + $0x3a8] sm:$0xff]
    %v237 = vld [vmem:[#allocation3 + $0x3b0] sm:$0xff]
    %v238 = vld [vmem:[#allocation3 + $0x3b8] sm:$0xff]
    %v239 = vld [vmem:[#allocation3 + $0x3c0] sm:$0xff]
    %v240 = vld [vmem:[#allocation3 + $0x3c8] sm:$0xff]
    %v241 = vld [vmem:[#allocation3 + $0x3d0] sm:$0xff]
    %v242 = vld [vmem:[#allocation3 + $0x3d8] sm:$0xff]
    %v243 = vld [vmem:[#allocation3 + $0x3e0] sm:$0xff]
    %v244 = vld [vmem:[#allocation3 + $0x3e8] sm:$0xff]
    %v245 = vld [vmem:[#allocation3 + $0x3f0] sm:$0xff]
    %v246 = vld [vmem:[#allocation3 + $0x3f8] sm:$0xff]
    %v249 = vunpack.c.l.s4 1966171168
    %v250 = vunpack.c.0.s8 %v249
    %v251 = vlaneseq
    %v252 = vshrl.u32 %v251, 7
    %v253 = vsub.s32 %v250, %v252
    %v254 = vrot.slane %v118, %v253
    %v255 = vcombine.high %v254, %v254
    %v257 = vunpack.c.l.s4 1966171168
    %v258 = vunpack.c.0.s8 %v257
    %v259 = vlaneseq
    %v260 = vshrl.u32 %v259, 7
    %v261 = vsub.s32 %v258, %v260
    %v262 = vrot.slane %v254, %v261
    %v264 = vunpack.c.l.s4 1966171168
    %v265 = vunpack.c.0.s8 %v264
    %v266 = vlaneseq
    %v267 = vshrl.u32 %v266, 7
    %v268 = vsub.s32 %v265, %v267
    %v269 = vrot.slane %v255, %v268
    %v270 = vcombine.high %v262, %v262
    %v271 = vcombine.high %v269, %v269
    %v404 = vunpack.c.l.b16 %v119
    %v405 = vunpack.c.h.b16 %v119
    %v406 = vunpack.c.l.b16 %v120
    %v407 = vunpack.c.h.b16 %v120
    %v408 = vunpack.c.l.b16 %v121
    %v409 = vunpack.c.h.b16 %v121
    %v410 = vunpack.c.l.b16 %v122
    %v411 = vunpack.c.h.b16 %v122
    %v412 = vunpack.c.l.b16 %v123
    %v413 = vunpack.c.h.b16 %v123
    %v414 = vunpack.c.l.b16 %v124
    %v415 = vunpack.c.h.b16 %v124
    %v416 = vunpack.c.l.b16 %v125
    %v417 = vunpack.c.h.b16 %v125
    %v418 = vunpack.c.l.b16 %v126
    %v419 = vunpack.c.h.b16 %v126
    %v420 = vunpack.c.l.b16 %v127
    %v421 = vunpack.c.h.b16 %v127
    %v422 = vunpack.c.l.b16 %v128
    %v423 = vunpack.c.h.b16 %v128
    %v424 = vunpack.c.l.b16 %v129
    %v425 = vunpack.c.h.b16 %v129
    %v426 = vunpack.c.l.b16 %v130
    %v427 = vunpack.c.h.b16 %v130
    %v428 = vunpack.c.l.b16 %v131
    %v429 = vunpack.c.h.b16 %v131
    %v430 = vunpack.c.l.b16 %v132
    %v431 = vunpack.c.h.b16 %v132
    %v432 = vunpack.c.l.b16 %v133
    %v433 = vunpack.c.h.b16 %v133
    %v434 = vunpack.c.l.b16 %v134
    %v435 = vunpack.c.h.b16 %v134
    %v436 = vunpack.c.l.b16 %v135
    %v437 = vunpack.c.h.b16 %v135
    %v438 = vunpack.c.l.b16 %v136
    %v439 = vunpack.c.h.b16 %v136
    %v440 = vunpack.c.l.b16 %v137
    %v441 = vunpack.c.h.b16 %v137
    %v442 = vunpack.c.l.b16 %v138
    %v443 = vunpack.c.h.b16 %v138
    %v444 = vunpack.c.l.b16 %v139
    %v445 = vunpack.c.h.b16 %v139
    %v446 = vunpack.c.l.b16 %v140
    %v447 = vunpack.c.h.b16 %v140
    %v448 = vunpack.c.l.b16 %v141
    %v449 = vunpack.c.h.b16 %v141
    %v450 = vunpack.c.l.b16 %v142
    %v451 = vunpack.c.h.b16 %v142
    %v452 = vunpack.c.l.b16 %v143
    %v453 = vunpack.c.h.b16 %v143
    %v454 = vunpack.c.l.b16 %v144
    %v455 = vunpack.c.h.b16 %v144
    %v456 = vunpack.c.l.b16 %v145
    %v457 = vunpack.c.h.b16 %v145
    %v458 = vunpack.c.l.b16 %v146
    %v459 = vunpack.c.h.b16 %v146
    %v460 = vunpack.c.l.b16 %v147
    %v461 = vunpack.c.h.b16 %v147
    %v462 = vunpack.c.l.b16 %v148
    %v463 = vunpack.c.h.b16 %v148
    %v464 = vunpack.c.l.b16 %v149
    %v465 = vunpack.c.h.b16 %v149
    %v466 = vunpack.c.l.b16 %v150
    %v467 = vunpack.c.h.b16 %v150
    %v468 = vunpack.c.l.b16 %v151
    %v469 = vunpack.c.h.b16 %v151
    %v470 = vunpack.c.l.b16 %v152
    %v471 = vunpack.c.h.b16 %v152
    %v472 = vunpack.c.l.b16 %v153
    %v473 = vunpack.c.h.b16 %v153
    %v474 = vunpack.c.l.b16 %v154
    %v475 = vunpack.c.h.b16 %v154
    %v476 = vunpack.c.l.b16 %v155
    %v477 = vunpack.c.h.b16 %v155
    %v478 = vunpack.c.l.b16 %v156
    %v479 = vunpack.c.h.b16 %v156
    %v480 = vunpack.c.l.b16 %v157
    %v481 = vunpack.c.h.b16 %v157
    %v482 = vunpack.c.l.b16 %v158
    %v483 = vunpack.c.h.b16 %v158
    %v484 = vunpack.c.l.b16 %v159
    %v485 = vunpack.c.h.b16 %v159
    %v486 = vunpack.c.l.b16 %v160
    %v487 = vunpack.c.h.b16 %v160
    %v488 = vunpack.c.l.b16 %v161
    %v489 = vunpack.c.h.b16 %v161
    %v490 = vunpack.c.l.b16 %v162
    %v491 = vunpack.c.h.b16 %v162
    %v492 = vunpack.c.l.b16 %v163
    %v493 = vunpack.c.h.b16 %v163
    %v494 = vunpack.c.l.b16 %v164
    %v495 = vunpack.c.h.b16 %v164
    %v496 = vunpack.c.l.b16 %v165
    %v497 = vunpack.c.h.b16 %v165
    %v498 = vunpack.c.l.b16 %v166
    %v499 = vunpack.c.h.b16 %v166
    %v500 = vunpack.c.l.b16 %v167
    %v501 = vunpack.c.h.b16 %v167
    %v502 = vunpack.c.l.b16 %v168
    %v503 = vunpack.c.h.b16 %v168
    %v504 = vunpack.c.l.b16 %v169
    %v505 = vunpack.c.h.b16 %v169
    %v506 = vunpack.c.l.b16 %v170
    %v507 = vunpack.c.h.b16 %v170
    %v508 = vunpack.c.l.b16 %v171
    %v509 = vunpack.c.h.b16 %v171
    %v510 = vunpack.c.l.b16 %v172
    %v511 = vunpack.c.h.b16 %v172
    %v512 = vunpack.c.l.b16 %v173
    %v513 = vunpack.c.h.b16 %v173
    %v514 = vunpack.c.l.b16 %v174
    %v515 = vunpack.c.h.b16 %v174
    %v516 = vunpack.c.l.b16 %v175
    %v517 = vunpack.c.h.b16 %v175
    %v518 = vunpack.c.l.b16 %v176
    %v519 = vunpack.c.h.b16 %v176
    %v520 = vunpack.c.l.b16 %v177
    %v521 = vunpack.c.h.b16 %v177
    %v522 = vunpack.c.l.b16 %v178
    %v523 = vunpack.c.h.b16 %v178
    %v524 = vunpack.c.l.b16 %v179
    %v525 = vunpack.c.h.b16 %v179
    %v526 = vunpack.c.l.b16 %v180
    %v527 = vunpack.c.h.b16 %v180
    %v528 = vunpack.c.l.b16 %v181
    %v529 = vunpack.c.h.b16 %v181
    %v530 = vunpack.c.l.b16 %v182
    %v531 = vunpack.c.h.b16 %v182
    %v532 = vunpack.c.l.b16 %v183
    %v533 = vunpack.c.h.b16 %v183
    %v534 = vunpack.c.l.b16 %v184
    %v535 = vunpack.c.h.b16 %v184
    %v536 = vunpack.c.l.b16 %v185
    %v537 = vunpack.c.h.b16 %v185
    %v538 = vunpack.c.l.b16 %v186
    %v539 = vunpack.c.h.b16 %v186
    %v540 = vunpack.c.l.b16 %v187
    %v541 = vunpack.c.h.b16 %v187
    %v542 = vunpack.c.l.b16 %v188
    %v543 = vunpack.c.h.b16 %v188
    %v544 = vunpack.c.l.b16 %v189
    %v545 = vunpack.c.h.b16 %v189
    %v546 = vunpack.c.l.b16 %v190
    %v547 = vunpack.c.h.b16 %v190
    %v548 = vunpack.c.l.b16 %v191
    %v549 = vunpack.c.h.b16 %v191
    %v550 = vunpack.c.l.b16 %v192
    %v551 = vunpack.c.h.b16 %v192
    %v552 = vunpack.c.l.b16 %v193
    %v553 = vunpack.c.h.b16 %v193
    %v554 = vunpack.c.l.b16 %v194
    %v555 = vunpack.c.h.b16 %v194
    %v556 = vunpack.c.l.b16 %v195
    %v557 = vunpack.c.h.b16 %v195
    %v558 = vunpack.c.l.b16 %v196
    %v559 = vunpack.c.h.b16 %v196
    %v560 = vunpack.c.l.b16 %v197
    %v561 = vunpack.c.h.b16 %v197
    %v562 = vunpack.c.l.b16 %v198
    %v563 = vunpack.c.h.b16 %v198
    %v564 = vunpack.c.l.b16 %v199
    %v565 = vunpack.c.h.b16 %v199
    %v566 = vunpack.c.l.b16 %v200
    %v567 = vunpack.c.h.b16 %v200
    %v568 = vunpack.c.l.b16 %v201
    %v569 = vunpack.c.h.b16 %v201
    %v570 = vunpack.c.l.b16 %v202
    %v571 = vunpack.c.h.b16 %v202
    %v572 = vunpack.c.l.b16 %v203
    %v573 = vunpack.c.h.b16 %v203
    %v574 = vunpack.c.l.b16 %v204
    %v575 = vunpack.c.h.b16 %v204
    %v576 = vunpack.c.l.b16 %v205
    %v577 = vunpack.c.h.b16 %v205
    %v578 = vunpack.c.l.b16 %v206
    %v579 = vunpack.c.h.b16 %v206
    %v580 = vunpack.c.l.b16 %v207
    %v581 = vunpack.c.h.b16 %v207
    %v582 = vunpack.c.l.b16 %v208
    %v583 = vunpack.c.h.b16 %v208
    %v584 = vunpack.c.l.b16 %v209
    %v585 = vunpack.c.h.b16 %v209
    %v586 = vunpack.c.l.b16 %v210
    %v587 = vunpack.c.h.b16 %v210
    %v588 = vunpack.c.l.b16 %v211
    %v589 = vunpack.c.h.b16 %v211
    %v590 = vunpack.c.l.b16 %v212
    %v591 = vunpack.c.h.b16 %v212
    %v592 = vunpack.c.l.b16 %v213
    %v593 = vunpack.c.h.b16 %v213
    %v594 = vunpack.c.l.b16 %v214
    %v595 = vunpack.c.h.b16 %v214
    %v596 = vunpack.c.l.b16 %v215
    %v597 = vunpack.c.h.b16 %v215
    %v598 = vunpack.c.l.b16 %v216
    %v599 = vunpack.c.h.b16 %v216
    %v600 = vunpack.c.l.b16 %v217
    %v601 = vunpack.c.h.b16 %v217
    %v602 = vunpack.c.l.b16 %v218
    %v603 = vunpack.c.h.b16 %v218
    %v604 = vunpack.c.l.b16 %v219
    %v605 = vunpack.c.h.b16 %v219
    %v606 = vunpack.c.l.b16 %v220
    %v607 = vunpack.c.h.b16 %v220
    %v608 = vunpack.c.l.b16 %v221
    %v609 = vunpack.c.h.b16 %v221
    %v610 = vunpack.c.l.b16 %v222
    %v611 = vunpack.c.h.b16 %v222
    %v612 = vunpack.c.l.b16 %v223
    %v613 = vunpack.c.h.b16 %v223
    %v614 = vunpack.c.l.b16 %v224
    %v615 = vunpack.c.h.b16 %v224
    %v616 = vunpack.c.l.b16 %v225
    %v617 = vunpack.c.h.b16 %v225
    %v618 = vunpack.c.l.b16 %v226
    %v619 = vunpack.c.h.b16 %v226
    %v620 = vunpack.c.l.b16 %v227
    %v621 = vunpack.c.h.b16 %v227
    %v622 = vunpack.c.l.b16 %v228
    %v623 = vunpack.c.h.b16 %v228
    %v624 = vunpack.c.l.b16 %v229
    %v625 = vunpack.c.h.b16 %v229
    %v626 = vunpack.c.l.b16 %v230
    %v627 = vunpack.c.h.b16 %v230
    %v628 = vunpack.c.l.b16 %v231
    %v629 = vunpack.c.h.b16 %v231
    %v630 = vunpack.c.l.b16 %v232
    %v631 = vunpack.c.h.b16 %v232
    %v632 = vunpack.c.l.b16 %v233
    %v633 = vunpack.c.h.b16 %v233
    %v634 = vunpack.c.l.b16 %v234
    %v635 = vunpack.c.h.b16 %v234
    %v636 = vunpack.c.l.b16 %v235
    %v637 = vunpack.c.h.b16 %v235
    %v638 = vunpack.c.l.b16 %v236
    %v639 = vunpack.c.h.b16 %v236
    %v640 = vunpack.c.l.b16 %v237
    %v641 = vunpack.c.h.b16 %v237
    %v642 = vunpack.c.l.b16 %v238
    %v643 = vunpack.c.h.b16 %v238
    %v644 = vunpack.c.l.b16 %v239
    %v645 = vunpack.c.h.b16 %v239
    %v646 = vunpack.c.l.b16 %v240
    %v647 = vunpack.c.h.b16 %v240
    %v648 = vunpack.c.l.b16 %v241
    %v649 = vunpack.c.h.b16 %v241
    %v650 = vunpack.c.l.b16 %v242
    %v651 = vunpack.c.h.b16 %v242
    %v652 = vunpack.c.l.b16 %v243
    %v653 = vunpack.c.h.b16 %v243
    %v654 = vunpack.c.l.b16 %v244
    %v655 = vunpack.c.h.b16 %v244
    %v656 = vunpack.c.l.b16 %v245
    %v657 = vunpack.c.h.b16 %v245
    %v658 = vunpack.c.l.b16 %v246
    %v659 = vunpack.c.h.b16 %v246
    %v660 = vpack.c.b16 %v408, %v404
    %v661 = vpack.c.b16 %v409, %v405
    %v662 = vpack.c.b16 %v410, %v406
    %v663 = vpack.c.b16 %v411, %v407
    %v664 = vpack.c.b16 %v416, %v412
    %v665 = vpack.c.b16 %v417, %v413
    %v666 = vpack.c.b16 %v418, %v414
    %v667 = vpack.c.b16 %v419, %v415
    %v668 = vpack.c.b16 %v424, %v420
    %v669 = vpack.c.b16 %v425, %v421
    %v670 = vpack.c.b16 %v426, %v422
    %v671 = vpack.c.b16 %v427, %v423
    %v672 = vpack.c.b16 %v432, %v428
    %v673 = vpack.c.b16 %v433, %v429
    %v674 = vpack.c.b16 %v434, %v430
    %v675 = vpack.c.b16 %v435, %v431
    %v676 = vpack.c.b16 %v440, %v436
    %v677 = vpack.c.b16 %v441, %v437
    %v678 = vpack.c.b16 %v442, %v438
    %v679 = vpack.c.b16 %v443, %v439
    %v680 = vpack.c.b16 %v448, %v444
    %v681 = vpack.c.b16 %v449, %v445
    %v682 = vpack.c.b16 %v450, %v446
    %v683 = vpack.c.b16 %v451, %v447
    %v684 = vpack.c.b16 %v456, %v452
    %v685 = vpack.c.b16 %v457, %v453
    %v686 = vpack.c.b16 %v458, %v454
    %v687 = vpack.c.b16 %v459, %v455
    %v688 = vpack.c.b16 %v464, %v460
    %v689 = vpack.c.b16 %v465, %v461
    %v690 = vpack.c.b16 %v466, %v462
    %v691 = vpack.c.b16 %v467, %v463
    %v692 = vpack.c.b16 %v472, %v468
    %v693 = vpack.c.b16 %v473, %v469
    %v694 = vpack.c.b16 %v474, %v470
    %v695 = vpack.c.b16 %v475, %v471
    %v696 = vpack.c.b16 %v480, %v476
    %v697 = vpack.c.b16 %v481, %v477
    %v698 = vpack.c.b16 %v482, %v478
    %v699 = vpack.c.b16 %v483, %v479
    %v700 = vpack.c.b16 %v488, %v484
    %v701 = vpack.c.b16 %v489, %v485
    %v702 = vpack.c.b16 %v490, %v486
    %v703 = vpack.c.b16 %v491, %v487
    %v704 = vpack.c.b16 %v496, %v492
    %v705 = vpack.c.b16 %v497, %v493
    %v706 = vpack.c.b16 %v498, %v494
    %v707 = vpack.c.b16 %v499, %v495
    %v708 = vpack.c.b16 %v504, %v500
    %v709 = vpack.c.b16 %v505, %v501
    %v710 = vpack.c.b16 %v506, %v502
    %v711 = vpack.c.b16 %v507, %v503
    %v712 = vpack.c.b16 %v512, %v508
    %v713 = vpack.c.b16 %v513, %v509
    %v714 = vpack.c.b16 %v514, %v510
    %v715 = vpack.c.b16 %v515, %v511
    %v716 = vpack.c.b16 %v520, %v516
    %v717 = vpack.c.b16 %v521, %v517
    %v718 = vpack.c.b16 %v522, %v518
    %v719 = vpack.c.b16 %v523, %v519
    %v720 = vpack.c.b16 %v528, %v524
    %v721 = vpack.c.b16 %v529, %v525
    %v722 = vpack.c.b16 %v530, %v526
    %v723 = vpack.c.b16 %v531, %v527
    %v724 = vpack.c.b16 %v536, %v532
    %v725 = vpack.c.b16 %v537, %v533
    %v726 = vpack.c.b16 %v538, %v534
    %v727 = vpack.c.b16 %v539, %v535
    %v728 = vpack.c.b16 %v544, %v540
    %v729 = vpack.c.b16 %v545, %v541
    %v730 = vpack.c.b16 %v546, %v542
    %v731 = vpack.c.b16 %v547, %v543
    %v732 = vpack.c.b16 %v552, %v548
    %v733 = vpack.c.b16 %v553, %v549
    %v734 = vpack.c.b16 %v554, %v550
    %v735 = vpack.c.b16 %v555, %v551
    %v736 = vpack.c.b16 %v560, %v556
    %v737 = vpack.c.b16 %v561, %v557
    %v738 = vpack.c.b16 %v562, %v558
    %v739 = vpack.c.b16 %v563, %v559
    %v740 = vpack.c.b16 %v568, %v564
    %v741 = vpack.c.b16 %v569, %v565
    %v742 = vpack.c.b16 %v570, %v566
    %v743 = vpack.c.b16 %v571, %v567
    %v744 = vpack.c.b16 %v576, %v572
    %v745 = vpack.c.b16 %v577, %v573
    %v746 = vpack.c.b16 %v578, %v574
    %v747 = vpack.c.b16 %v579, %v575
    %v748 = vpack.c.b16 %v584, %v580
    %v749 = vpack.c.b16 %v585, %v581
    %v750 = vpack.c.b16 %v586, %v582
    %v751 = vpack.c.b16 %v587, %v583
    %v752 = vpack.c.b16 %v592, %v588
    %v753 = vpack.c.b16 %v593, %v589
    %v754 = vpack.c.b16 %v594, %v590
    %v755 = vpack.c.b16 %v595, %v591
    %v756 = vpack.c.b16 %v600, %v596
    %v757 = vpack.c.b16 %v601, %v597
    %v758 = vpack.c.b16 %v602, %v598
    %v759 = vpack.c.b16 %v603, %v599
    %v760 = vpack.c.b16 %v608, %v604
    %v761 = vpack.c.b16 %v609, %v605
    %v762 = vpack.c.b16 %v610, %v606
    %v763 = vpack.c.b16 %v611, %v607
    %v764 = vpack.c.b16 %v616, %v612
    %v765 = vpack.c.b16 %v617, %v613
    %v766 = vpack.c.b16 %v618, %v614
    %v767 = vpack.c.b16 %v619, %v615
    %v768 = vpack.c.b16 %v624, %v620
    %v769 = vpack.c.b16 %v625, %v621
    %v770 = vpack.c.b16 %v626, %v622
    %v771 = vpack.c.b16 %v627, %v623
    %v772 = vpack.c.b16 %v632, %v628
    %v773 = vpack.c.b16 %v633, %v629
    %v774 = vpack.c.b16 %v634, %v630
    %v775 = vpack.c.b16 %v635, %v631
    %v776 = vpack.c.b16 %v640, %v636
    %v777 = vpack.c.b16 %v641, %v637
    %v778 = vpack.c.b16 %v642, %v638
    %v779 = vpack.c.b16 %v643, %v639
    %v780 = vpack.c.b16 %v648, %v644
    %v781 = vpack.c.b16 %v649, %v645
    %v782 = vpack.c.b16 %v650, %v646
    %v783 = vpack.c.b16 %v651, %v647
    %v784 = vpack.c.b16 %v656, %v652
    %v785 = vpack.c.b16 %v657, %v653
    %v786 = vpack.c.b16 %v658, %v654
    %v787 = vpack.c.b16 %v659, %v655
    %916 = vmatprep.subr.bf16.mxu0 %v689
    %917 = vmatpush1.bf16.msra.mxu0 %v688
    %918 = vmatprep.subr.bf16.mxu0 %v685
    %919 = vmatpush1.bf16.msra.mxu0 %v684
    %920 = vmatprep.subr.bf16.mxu0 %v681
    %921 = vmatpush1.bf16.msra.mxu0 %v680
    %922 = vmatprep.subr.bf16.mxu0 %v677
    %923 = vmatpush1.bf16.msra.mxu0 %v676
    %924 = vmatprep.subr.bf16.mxu0 %v673
    %925 = vmatpush1.bf16.msra.mxu0 %v672
    %926 = vmatprep.subr.bf16.mxu0 %v669
    %927 = vmatpush1.bf16.msra.mxu0 %v668
    %928 = vmatprep.subr.bf16.mxu0 %v665
    %929 = vmatpush1.bf16.msra.mxu0 %v664
    %930 = vmatprep.subr.bf16.mxu0 %v661
    %931 = vmatpush1.bf16.msra.mxu0 %v660
    %932 = vmatprep.subr.bf16.mxu0 %v721
    %933 = vmatpush2.bf16.msra.mxu0 %v720
    %934 = vmatprep.subr.bf16.mxu0 %v717
    %935 = vmatpush2.bf16.msra.mxu0 %v716
    %936 = vmatprep.subr.bf16.mxu0 %v713
    %937 = vmatpush2.bf16.msra.mxu0 %v712
    %938 = vmatprep.subr.bf16.mxu0 %v709
    %939 = vmatpush2.bf16.msra.mxu0 %v708
    %940 = vmatprep.subr.bf16.mxu0 %v705
    %941 = vmatpush2.bf16.msra.mxu0 %v704
    %942 = vmatprep.subr.bf16.mxu0 %v701
    %943 = vmatpush2.bf16.msra.mxu0 %v700
    %944 = vmatprep.subr.bf16.mxu0 %v697
    %945 = vmatpush2.bf16.msra.mxu0 %v696
    %946 = vmatprep.subr.bf16.mxu0 %v693
    %947 = vmatpush2.bf16.msra.mxu0 %v692
    %948 = vmatprep.mubr.bf16.mxu0 %v269
    %949 = vmatmul.mubr.bf16.gmra.mxu0 %v262
    %v950 = vpop.f32.mrf.mxu0
    %v951 = vadd.f32 0.0, %v950
    %v952 = vpop.f32.mrf.mxu0
    %v953 = vadd.f32 0.0, %v952
    %v954 = vpop.f32.mrf.mxu0
    %v955 = vpop.f32.mrf.mxu0
    %956 = vdwg.mxu0
    %957 = vmatprep.subr.bf16.mxu0 %v753
    %958 = vmatpush1.bf16.msra.mxu0 %v752
    %959 = vmatprep.subr.bf16.mxu0 %v749
    %960 = vmatpush1.bf16.msra.mxu0 %v748
    %961 = vmatprep.subr.bf16.mxu0 %v745
    %962 = vmatpush1.bf16.msra.mxu0 %v744
    %963 = vmatprep.subr.bf16.mxu0 %v741
    %964 = vmatpush1.bf16.msra.mxu0 %v740
    %965 = vmatprep.subr.bf16.mxu0 %v737
    %966 = vmatpush1.bf16.msra.mxu0 %v736
    %967 = vmatprep.subr.bf16.mxu0 %v733
    %968 = vmatpush1.bf16.msra.mxu0 %v732
    %969 = vmatprep.subr.bf16.mxu0 %v729
    %970 = vmatpush1.bf16.msra.mxu0 %v728
    %971 = vmatprep.subr.bf16.mxu0 %v725
    %972 = vmatpush1.bf16.msra.mxu0 %v724
    %973 = vmatprep.subr.bf16.mxu0 %v785
    %974 = vmatpush2.bf16.msra.mxu0 %v784
    %975 = vmatprep.subr.bf16.mxu0 %v781
    %976 = vmatpush2.bf16.msra.mxu0 %v780
    %977 = vmatprep.subr.bf16.mxu0 %v777
    %978 = vmatpush2.bf16.msra.mxu0 %v776
    %979 = vmatprep.subr.bf16.mxu0 %v773
    %980 = vmatpush2.bf16.msra.mxu0 %v772
    %981 = vmatprep.subr.bf16.mxu0 %v769
    %982 = vmatpush2.bf16.msra.mxu0 %v768
    %983 = vmatprep.subr.bf16.mxu0 %v765
    %984 = vmatpush2.bf16.msra.mxu0 %v764
    %985 = vmatprep.subr.bf16.mxu0 %v761
    %986 = vmatpush2.bf16.msra.mxu0 %v760
    %987 = vmatprep.subr.bf16.mxu0 %v757
    %988 = vmatpush2.bf16.msra.mxu0 %v756
    %989 = vmatprep.mubr.bf16.mxu0 %v271
    %990 = vmatmul.mubr.bf16.gmra.mxu0 %v270
    %v991 = vpop.f32.mrf.mxu0
    %v992 = vadd.f32 %v951, %v991
    %v993 = vpop.f32.mrf.mxu0
    %v994 = vadd.f32 %v953, %v993
    %v995 = vpop.f32.mrf.mxu0
    %v996 = vpop.f32.mrf.mxu0
    %997 = vdwg.mxu0
    %998 = vmatprep.subr.bf16.mxu0 %v691
    %999 = vmatpush1.bf16.msra.mxu0 %v690
    %1000 = vmatprep.subr.bf16.mxu0 %v687
    %1001 = vmatpush1.bf16.msra.mxu0 %v686
    %1002 = vmatprep.subr.bf16.mxu0 %v683
    %1003 = vmatpush1.bf16.msra.mxu0 %v682
    %1004 = vmatprep.subr.bf16.mxu0 %v679
    %1005 = vmatpush1.bf16.msra.mxu0 %v678
    %1006 = vmatprep.subr.bf16.mxu0 %v675
    %1007 = vmatpush1.bf16.msra.mxu0 %v674
    %1008 = vmatprep.subr.bf16.mxu0 %v671
    %1009 = vmatpush1.bf16.msra.mxu0 %v670
    %1010 = vmatprep.subr.bf16.mxu0 %v667
    %1011 = vmatpush1.bf16.msra.mxu0 %v666
    %1012 = vmatprep.subr.bf16.mxu0 %v663
    %1013 = vmatpush1.bf16.msra.mxu0 %v662
    %1014 = vmatprep.subr.bf16.mxu0 %v723
    %1015 = vmatpush2.bf16.msra.mxu0 %v722
    %1016 = vmatprep.subr.bf16.mxu0 %v719
    %1017 = vmatpush2.bf16.msra.mxu0 %v718
    %1018 = vmatprep.subr.bf16.mxu0 %v715
    %1019 = vmatpush2.bf16.msra.mxu0 %v714
    %1020 = vmatprep.subr.bf16.mxu0 %v711
    %1021 = vmatpush2.bf16.msra.mxu0 %v710
    %1022 = vmatprep.subr.bf16.mxu0 %v707
    %1023 = vmatpush2.bf16.msra.mxu0 %v706
    %1024 = vmatprep.subr.bf16.mxu0 %v703
    %1025 = vmatpush2.bf16.msra.mxu0 %v702
    %1026 = vmatprep.subr.bf16.mxu0 %v699
    %1027 = vmatpush2.bf16.msra.mxu0 %v698
    %1028 = vmatprep.subr.bf16.mxu0 %v695
    %1029 = vmatpush2.bf16.msra.mxu0 %v694
    %1030 = vmatprep.mubr.bf16.mxu0 %v269
    %1031 = vmatmul.mubr.bf16.gmra.mxu0 %v262
    %v1032 = vpop.f32.mrf.mxu0
    %v1033 = vadd.f32 0.0, %v1032
    %v1034 = vpop.f32.mrf.mxu0
    %v1035 = vadd.f32 0.0, %v1034
    %v1036 = vpop.f32.mrf.mxu0
    %v1037 = vpop.f32.mrf.mxu0
    %1038 = vdwg.mxu0
    %1039 = vmatprep.subr.bf16.mxu0 %v755
    %1040 = vmatpush1.bf16.msra.mxu0 %v754
    %1041 = vmatprep.subr.bf16.mxu0 %v751
    %1042 = vmatpush1.bf16.msra.mxu0 %v750
    %1043 = vmatprep.subr.bf16.mxu0 %v747
    %1044 = vmatpush1.bf16.msra.mxu0 %v746
    %1045 = vmatprep.subr.bf16.mxu0 %v743
    %1046 = vmatpush1.bf16.msra.mxu0 %v742
    %1047 = vmatprep.subr.bf16.mxu0 %v739
    %1048 = vmatpush1.bf16.msra.mxu0 %v738
    %1049 = vmatprep.subr.bf16.mxu0 %v735
    %1050 = vmatpush1.bf16.msra.mxu0 %v734
    %1051 = vmatprep.subr.bf16.mxu0 %v731
    %1052 = vmatpush1.bf16.msra.mxu0 %v730
    %1053 = vmatprep.subr.bf16.mxu0 %v727
    %1054 = vmatpush1.bf16.msra.mxu0 %v726
    %1055 = vmatprep.subr.bf16.mxu0 %v787
    %1056 = vmatpush2.bf16.msra.mxu0 %v786
    %1057 = vmatprep.subr.bf16.mxu0 %v783
    %1058 = vmatpush2.bf16.msra.mxu0 %v782
    %1059 = vmatprep.subr.bf16.mxu0 %v779
    %1060 = vmatpush2.bf16.msra.mxu0 %v778
    %1061 = vmatprep.subr.bf16.mxu0 %v775
    %1062 = vmatpush2.bf16.msra.mxu0 %v774
    %1063 = vmatprep.subr.bf16.mxu0 %v771
    %1064 = vmatpush2.bf16.msra.mxu0 %v770
    %1065 = vmatprep.subr.bf16.mxu0 %v767
    %1066 = vmatpush2.bf16.msra.mxu0 %v766
    %1067 = vmatprep.subr.bf16.mxu0 %v763
    %1068 = vmatpush2.bf16.msra.mxu0 %v762
    %1069 = vmatprep.subr.bf16.mxu0 %v759
    %1070 = vmatpush2.bf16.msra.mxu0 %v758
    %1071 = vmatprep.mubr.bf16.mxu0 %v271
    %1072 = vmatmul.mubr.bf16.gmra.mxu0 %v270
    %v1073 = vpop.f32.mrf.mxu0
    %v1074 = vadd.f32 %v1033, %v1073
    %v1075 = vpop.f32.mrf.mxu0
    %v1076 = vadd.f32 %v1035, %v1075
    %v1077 = vpop.f32.mrf.mxu0
    %v1078 = vpop.f32.mrf.mxu0
    %1079 = vdwg.mxu0
    %v1084 = vcombine.low %v992, %v994
    %v1085 = vcombine.low %v1074, %v1076
    %v1087 = vunpack.c.l.s4 1983009808
    %v1088 = vunpack.c.0.s8 %v1087
    %v1089 = vlaneseq
    %v1090 = vshrl.u32 %v1089, 7
    %v1091 = vsub.s32 %v1088, %v1090
    %v1092 = vrot.slane %v1084, %v1091
    %v1094 = vunpack.c.l.s4 1983009808
    %v1095 = vunpack.c.0.s8 %v1094
    %v1096 = vlaneseq
    %v1097 = vshrl.u32 %v1096, 7
    %v1098 = vsub.s32 %v1095, %v1097
    %v1099 = vrot.slane %v1085, %v1098
    %v1100 = vcombine.low %v1092, %v1099
    %v1102 = vadd.f32 %v117, %v1100
    %1103 = vst [vmem:[#allocation2] sm:$0xff] %v1102
    // Predicated region
    $region74: #{forward.9} parent=1 // pred_check
      %p1104 = pneg %p112
    $region75: #{forward.9} parent=1 // pred_check_branch
      %1106 = sbr.rel (%p1104) target = $region77
    $region76: #{forward.9} parent=1 // pred_region
      %v1107 = vld [vmem:[#allocation2] sm:$0xff]
      %v1108 = vld [vmem:[%s2] sm:$0xf]
      %v1110 = vlaneseq
      %v1111 = vshrl.u32 %v1110, 7
      %v1112 = vsub.s32 0, %v1111
      %v1113 = vrot.slane %v1108, %v1112
      %v1114 = vlaneseq
      %v1115 = vshrl.u32 %v1114, 7
      %v1116 = vsub.s32 1, %v1115
      %v1117 = vrot.slane %v1108, %v1116
      %v1118 = vlaneseq
      %v1119 = vshrl.u32 %v1118, 7
      %v1120 = vsub.s32 2, %v1119
      %v1121 = vrot.slane %v1108, %v1120
      %v1122 = vlaneseq
      %v1123 = vshrl.u32 %v1122, 7
      %v1124 = vsub.s32 3, %v1123
      %v1125 = vrot.slane %v1108, %v1124
      %v1126 = vcombine.low %v1113, %v1117
      %v1127 = vcombine.low %v1121, %v1125
      %v1129 = vunpack.c.l.s4 1983009808
      %v1130 = vunpack.c.0.s8 %v1129
      %v1131 = vlaneseq
      %v1132 = vshrl.u32 %v1131, 7
      %v1133 = vsub.s32 %v1130, %v1132
      %v1134 = vrot.slane %v1126, %v1133
      %v1136 = vunpack.c.l.s4 1983009808
      %v1137 = vunpack.c.0.s8 %v1136
      %v1138 = vlaneseq
      %v1139 = vshrl.u32 %v1138, 7
      %v1140 = vsub.s32 %v1137, %v1139
      %v1141 = vrot.slane %v1127, %v1140
      %v1142 = vcombine.low %v1134, %v1141
      %v1144 = vadd.f32 %v1107, %v1142
      %v1145 = vmax.f32 %v1144, 0.0
      %v1146 = vld [vmem:[%s3] sm:$0xff]
      %v1147 = vld [vmem:[%s3 + $0x8] sm:$0xff]
      %v1148 = vld [vmem:[%s3 + $0x10] sm:$0xff]
      %v1149 = vld [vmem:[%s3 + $0x18] sm:$0xff]
      %v1150 = vld [vmem:[%s3 + $0x20] sm:$0xff]
      %v1151 = vld [vmem:[%s3 + $0x28] sm:$0xff]
      %v1152 = vld [vmem:[%s3 + $0x30] sm:$0xff]
      %v1153 = vld [vmem:[%s3 + $0x38] sm:$0xff]
      %v1154 = vld [vmem:[%s3 + $0x40] sm:$0xff]
      %v1155 = vld [vmem:[%s3 + $0x48] sm:$0xff]
      %v1156 = vld [vmem:[%s3 + $0x50] sm:$0xff]
      %v1157 = vld [vmem:[%s3 + $0x58] sm:$0xff]
      %v1158 = vld [vmem:[%s3 + $0x60] sm:$0xff]
      %v1159 = vld [vmem:[%s3 + $0x68] sm:$0xff]
      %v1160 = vld [vmem:[%s3 + $0x70] sm:$0xff]
      %v1161 = vld [vmem:[%s3 + $0x78] sm:$0xff]
      %v1162 = vld [vmem:[%s3 + $0x80] sm:$0xff]
      %v1163 = vld [vmem:[%s3 + $0x88] sm:$0xff]
      %v1164 = vld [vmem:[%s3 + $0x90] sm:$0xff]
      %v1165 = vld [vmem:[%s3 + $0x98] sm:$0xff]
      %v1166 = vld [vmem:[%s3 + $0xa0] sm:$0xff]
      %v1167 = vld [vmem:[%s3 + $0xa8] sm:$0xff]
      %v1168 = vld [vmem:[%s3 + $0xb0] sm:$0xff]
      %v1169 = vld [vmem:[%s3 + $0xb8] sm:$0xff]
      %v1170 = vld [vmem:[%s3 + $0xc0] sm:$0xff]
      %v1171 = vld [vmem:[%s3 + $0xc8] sm:$0xff]
      %v1172 = vld [vmem:[%s3 + $0xd0] sm:$0xff]
      %v1173 = vld [vmem:[%s3 + $0xd8] sm:$0xff]
      %v1174 = vld [vmem:[%s3 + $0xe0] sm:$0xff]
      %v1175 = vld [vmem:[%s3 + $0xe8] sm:$0xff]
      %v1176 = vld [vmem:[%s3 + $0xf0] sm:$0xff]
      %v1177 = vld [vmem:[%s3 + $0xf8] sm:$0xff]
      %v1178 = vld [vmem:[%s3 + $0x100] sm:$0xff]
      %v1179 = vld [vmem:[%s3 + $0x108] sm:$0xff]
      %v1180 = vld [vmem:[%s3 + $0x110] sm:$0xff]
      %v1181 = vld [vmem:[%s3 + $0x118] sm:$0xff]
      %v1182 = vld [vmem:[%s3 + $0x120] sm:$0xff]
      %v1183 = vld [vmem:[%s3 + $0x128] sm:$0xff]
      %v1184 = vld [vmem:[%s3 + $0x130] sm:$0xff]
      %v1185 = vld [vmem:[%s3 + $0x138] sm:$0xff]
      %v1186 = vld [vmem:[%s3 + $0x140] sm:$0xff]
      %v1187 = vld [vmem:[%s3 + $0x148] sm:$0xff]
      %v1188 = vld [vmem:[%s3 + $0x150] sm:$0xff]
      %v1189 = vld [vmem:[%s3 + $0x158] sm:$0xff]
      %v1190 = vld [vmem:[%s3 + $0x160] sm:$0xff]
      %v1191 = vld [vmem:[%s3 + $0x168] sm:$0xff]
      %v1192 = vld [vmem:[%s3 + $0x170] sm:$0xff]
      %v1193 = vld [vmem:[%s3 + $0x178] sm:$0xff]
      %v1194 = vld [vmem:[%s3 + $0x180] sm:$0xff]
      %v1195 = vld [vmem:[%s3 + $0x188] sm:$0xff]
      %v1196 = vld [vmem:[%s3 + $0x190] sm:$0xff]
      %v1197 = vld [vmem:[%s3 + $0x198] sm:$0xff]
      %v1198 = vld [vmem:[%s3 + $0x1a0] sm:$0xff]
      %v1199 = vld [vmem:[%s3 + $0x1a8] sm:$0xff]
      %v1200 = vld [vmem:[%s3 + $0x1b0] sm:$0xff]
      %v1201 = vld [vmem:[%s3 + $0x1b8] sm:$0xff]
      %v1202 = vld [vmem:[%s3 + $0x1c0] sm:$0xff]
      %v1203 = vld [vmem:[%s3 + $0x1c8] sm:$0xff]
      %v1204 = vld [vmem:[%s3 + $0x1d0] sm:$0xff]
      %v1205 = vld [vmem:[%s3 + $0x1d8] sm:$0xff]
      %v1206 = vld [vmem:[%s3 + $0x1e0] sm:$0xff]
      %v1207 = vld [vmem:[%s3 + $0x1e8] sm:$0xff]
      %v1208 = vld [vmem:[%s3 + $0x1f0] sm:$0xff]
      %v1209 = vld [vmem:[%s3 + $0x1f8] sm:$0xff]
      %v1210 = vld [vmem:[%s3 + $0x200] sm:$0xff]
      %v1211 = vld [vmem:[%s3 + $0x208] sm:$0xff]
      %v1212 = vld [vmem:[%s3 + $0x210] sm:$0xff]
      %v1213 = vld [vmem:[%s3 + $0x218] sm:$0xff]
      %v1214 = vld [vmem:[%s3 + $0x220] sm:$0xff]
      %v1215 = vld [vmem:[%s3 + $0x228] sm:$0xff]
      %v1216 = vld [vmem:[%s3 + $0x230] sm:$0xff]
      %v1217 = vld [vmem:[%s3 + $0x238] sm:$0xff]
      %v1218 = vld [vmem:[%s3 + $0x240] sm:$0xff]
      %v1219 = vld [vmem:[%s3 + $0x248] sm:$0xff]
      %v1220 = vld [vmem:[%s3 + $0x250] sm:$0xff]
      %v1221 = vld [vmem:[%s3 + $0x258] sm:$0xff]
      %v1222 = vld [vmem:[%s3 + $0x260] sm:$0xff]
      %v1223 = vld [vmem:[%s3 + $0x268] sm:$0xff]
      %v1224 = vld [vmem:[%s3 + $0x270] sm:$0xff]
      %v1225 = vld [vmem:[%s3 + $0x278] sm:$0xff]
      %v1226 = vld [vmem:[%s3 + $0x280] sm:$0xff]
      %v1227 = vld [vmem:[%s3 + $0x288] sm:$0xff]
      %v1228 = vld [vmem:[%s3 + $0x290] sm:$0xff]
      %v1229 = vld [vmem:[%s3 + $0x298] sm:$0xff]
      %v1230 = vld [vmem:[%s3 + $0x2a0] sm:$0xff]
      %v1231 = vld [vmem:[%s3 + $0x2a8] sm:$0xff]
      %v1232 = vld [vmem:[%s3 + $0x2b0] sm:$0xff]
      %v1233 = vld [vmem:[%s3 + $0x2b8] sm:$0xff]
      %v1234 = vld [vmem:[%s3 + $0x2c0] sm:$0xff]
      %v1235 = vld [vmem:[%s3 + $0x2c8] sm:$0xff]
      %v1236 = vld [vmem:[%s3 + $0x2d0] sm:$0xff]
      %v1237 = vld [vmem:[%s3 + $0x2d8] sm:$0xff]
      %v1238 = vld [vmem:[%s3 + $0x2e0] sm:$0xff]
      %v1239 = vld [vmem:[%s3 + $0x2e8] sm:$0xff]
      %v1240 = vld [vmem:[%s3 + $0x2f0] sm:$0xff]
      %v1241 = vld [vmem:[%s3 + $0x2f8] sm:$0xff]
      %v1242 = vld [vmem:[%s3 + $0x300] sm:$0xff]
      %v1243 = vld [vmem:[%s3 + $0x308] sm:$0xff]
      %v1244 = vld [vmem:[%s3 + $0x310] sm:$0xff]
      %v1245 = vld [vmem:[%s3 + $0x318] sm:$0xff]
      %v1246 = vld [vmem:[%s3 + $0x320] sm:$0xff]
      %v1247 = vld [vmem:[%s3 + $0x328] sm:$0xff]
      %v1248 = vld [vmem:[%s3 + $0x330] sm:$0xff]
      %v1249 = vld [vmem:[%s3 + $0x338] sm:$0xff]
      %v1250 = vld [vmem:[%s3 + $0x340] sm:$0xff]
      %v1251 = vld [vmem:[%s3 + $0x348] sm:$0xff]
      %v1252 = vld [vmem:[%s3 + $0x350] sm:$0xff]
      %v1253 = vld [vmem:[%s3 + $0x358] sm:$0xff]
      %v1254 = vld [vmem:[%s3 + $0x360] sm:$0xff]
      %v1255 = vld [vmem:[%s3 + $0x368] sm:$0xff]
      %v1256 = vld [vmem:[%s3 + $0x370] sm:$0xff]
      %v1257 = vld [vmem:[%s3 + $0x378] sm:$0xff]
      %v1258 = vld [vmem:[%s3 + $0x380] sm:$0xff]
      %v1259 = vld [vmem:[%s3 + $0x388] sm:$0xff]
      %v1260 = vld [vmem:[%s3 + $0x390] sm:$0xff]
      %v1261 = vld [vmem:[%s3 + $0x398] sm:$0xff]
      %v1262 = vld [vmem:[%s3 + $0x3a0] sm:$0xff]
      %v1263 = vld [vmem:[%s3 + $0x3a8] sm:$0xff]
      %v1264 = vld [vmem:[%s3 + $0x3b0] sm:$0xff]
      %v1265 = vld [vmem:[%s3 + $0x3b8] sm:$0xff]
      %v1266 = vld [vmem:[%s3 + $0x3c0] sm:$0xff]
      %v1267 = vld [vmem:[%s3 + $0x3c8] sm:$0xff]
      %v1268 = vld [vmem:[%s3 + $0x3d0] sm:$0xff]
      %v1269 = vld [vmem:[%s3 + $0x3d8] sm:$0xff]
      %v1270 = vld [vmem:[%s3 + $0x3e0] sm:$0xff]
      %v1271 = vld [vmem:[%s3 + $0x3e8] sm:$0xff]
      %v1272 = vld [vmem:[%s3 + $0x3f0] sm:$0xff]
      %v1273 = vld [vmem:[%s3 + $0x3f8] sm:$0xff]
      %v1274 = vld [vmem:[%s3 + $0x400] sm:$0xff]
      %v1275 = vld [vmem:[%s3 + $0x408] sm:$0xff]
      %v1276 = vld [vmem:[%s3 + $0x410] sm:$0xff]
      %v1277 = vld [vmem:[%s3 + $0x418] sm:$0xff]
      %v1278 = vld [vmem:[%s3 + $0x420] sm:$0xff]
      %v1279 = vld [vmem:[%s3 + $0x428] sm:$0xff]
      %v1280 = vld [vmem:[%s3 + $0x430] sm:$0xff]
      %v1281 = vld [vmem:[%s3 + $0x438] sm:$0xff]
      %v1282 = vld [vmem:[%s3 + $0x440] sm:$0xff]
      %v1283 = vld [vmem:[%s3 + $0x448] sm:$0xff]
      %v1284 = vld [vmem:[%s3 + $0x450] sm:$0xff]
      %v1285 = vld [vmem:[%s3 + $0x458] sm:$0xff]
      %v1286 = vld [vmem:[%s3 + $0x460] sm:$0xff]
      %v1287 = vld [vmem:[%s3 + $0x468] sm:$0xff]
      %v1288 = vld [vmem:[%s3 + $0x470] sm:$0xff]
      %v1289 = vld [vmem:[%s3 + $0x478] sm:$0xff]
      %v1290 = vld [vmem:[%s3 + $0x480] sm:$0xff]
      %v1291 = vld [vmem:[%s3 + $0x488] sm:$0xff]
      %v1292 = vld [vmem:[%s3 + $0x490] sm:$0xff]
      %v1293 = vld [vmem:[%s3 + $0x498] sm:$0xff]
      %v1294 = vld [vmem:[%s3 + $0x4a0] sm:$0xff]
      %v1295 = vld [vmem:[%s3 + $0x4a8] sm:$0xff]
      %v1296 = vld [vmem:[%s3 + $0x4b0] sm:$0xff]
      %v1297 = vld [vmem:[%s3 + $0x4b8] sm:$0xff]
      %v1298 = vld [vmem:[%s3 + $0x4c0] sm:$0xff]
      %v1299 = vld [vmem:[%s3 + $0x4c8] sm:$0xff]
      %v1300 = vld [vmem:[%s3 + $0x4d0] sm:$0xff]
      %v1301 = vld [vmem:[%s3 + $0x4d8] sm:$0xff]
      %v1302 = vld [vmem:[%s3 + $0x4e0] sm:$0xff]
      %v1303 = vld [vmem:[%s3 + $0x4e8] sm:$0xff]
      %v1304 = vld [vmem:[%s3 + $0x4f0] sm:$0xff]
      %v1305 = vld [vmem:[%s3 + $0x4f8] sm:$0xff]
      %v1306 = vld [vmem:[%s3 + $0x500] sm:$0xff]
      %v1307 = vld [vmem:[%s3 + $0x508] sm:$0xff]
      %v1308 = vld [vmem:[%s3 + $0x510] sm:$0xff]
      %v1309 = vld [vmem:[%s3 + $0x518] sm:$0xff]
      %v1310 = vld [vmem:[%s3 + $0x520] sm:$0xff]
      %v1311 = vld [vmem:[%s3 + $0x528] sm:$0xff]
      %v1312 = vld [vmem:[%s3 + $0x530] sm:$0xff]
      %v1313 = vld [vmem:[%s3 + $0x538] sm:$0xff]
      %v1314 = vld [vmem:[%s3 + $0x540] sm:$0xff]
      %v1315 = vld [vmem:[%s3 + $0x548] sm:$0xff]
      %v1316 = vld [vmem:[%s3 + $0x550] sm:$0xff]
      %v1317 = vld [vmem:[%s3 + $0x558] sm:$0xff]
      %v1318 = vld [vmem:[%s3 + $0x560] sm:$0xff]
      %v1319 = vld [vmem:[%s3 + $0x568] sm:$0xff]
      %v1320 = vld [vmem:[%s3 + $0x570] sm:$0xff]
      %v1321 = vld [vmem:[%s3 + $0x578] sm:$0xff]
      %v1322 = vld [vmem:[%s3 + $0x580] sm:$0xff]
      %v1323 = vld [vmem:[%s3 + $0x588] sm:$0xff]
      %v1324 = vld [vmem:[%s3 + $0x590] sm:$0xff]
      %v1325 = vld [vmem:[%s3 + $0x598] sm:$0xff]
      %v1326 = vld [vmem:[%s3 + $0x5a0] sm:$0xff]
      %v1327 = vld [vmem:[%s3 + $0x5a8] sm:$0xff]
      %v1328 = vld [vmem:[%s3 + $0x5b0] sm:$0xff]
      %v1329 = vld [vmem:[%s3 + $0x5b8] sm:$0xff]
      %v1330 = vld [vmem:[%s3 + $0x5c0] sm:$0xff]
      %v1331 = vld [vmem:[%s3 + $0x5c8] sm:$0xff]
      %v1332 = vld [vmem:[%s3 + $0x5d0] sm:$0xff]
      %v1333 = vld [vmem:[%s3 + $0x5d8] sm:$0xff]
      %v1334 = vld [vmem:[%s3 + $0x5e0] sm:$0xff]
      %v1335 = vld [vmem:[%s3 + $0x5e8] sm:$0xff]
      %v1336 = vld [vmem:[%s3 + $0x5f0] sm:$0xff]
      %v1337 = vld [vmem:[%s3 + $0x5f8] sm:$0xff]
      %v1338 = vld [vmem:[%s3 + $0x600] sm:$0xff]
      %v1339 = vld [vmem:[%s3 + $0x608] sm:$0xff]
      %v1340 = vld [vmem:[%s3 + $0x610] sm:$0xff]
      %v1341 = vld [vmem:[%s3 + $0x618] sm:$0xff]
      %v1342 = vld [vmem:[%s3 + $0x620] sm:$0xff]
      %v1343 = vld [vmem:[%s3 + $0x628] sm:$0xff]
      %v1344 = vld [vmem:[%s3 + $0x630] sm:$0xff]
      %v1345 = vld [vmem:[%s3 + $0x638] sm:$0xff]
      %v1346 = vld [vmem:[%s3 + $0x640] sm:$0xff]
      %v1347 = vld [vmem:[%s3 + $0x648] sm:$0xff]
      %v1348 = vld [vmem:[%s3 + $0x650] sm:$0xff]
      %v1349 = vld [vmem:[%s3 + $0x658] sm:$0xff]
      %v1350 = vld [vmem:[%s3 + $0x660] sm:$0xff]
      %v1351 = vld [vmem:[%s3 + $0x668] sm:$0xff]
      %v1352 = vld [vmem:[%s3 + $0x670] sm:$0xff]
      %v1353 = vld [vmem:[%s3 + $0x678] sm:$0xff]
      %v1354 = vld [vmem:[%s3 + $0x680] sm:$0xff]
      %v1355 = vld [vmem:[%s3 + $0x688] sm:$0xff]
      %v1356 = vld [vmem:[%s3 + $0x690] sm:$0xff]
      %v1357 = vld [vmem:[%s3 + $0x698] sm:$0xff]
      %v1358 = vld [vmem:[%s3 + $0x6a0] sm:$0xff]
      %v1359 = vld [vmem:[%s3 + $0x6a8] sm:$0xff]
      %v1360 = vld [vmem:[%s3 + $0x6b0] sm:$0xff]
      %v1361 = vld [vmem:[%s3 + $0x6b8] sm:$0xff]
      %v1362 = vld [vmem:[%s3 + $0x6c0] sm:$0xff]
      %v1363 = vld [vmem:[%s3 + $0x6c8] sm:$0xff]
      %v1364 = vld [vmem:[%s3 + $0x6d0] sm:$0xff]
      %v1365 = vld [vmem:[%s3 + $0x6d8] sm:$0xff]
      %v1366 = vld [vmem:[%s3 + $0x6e0] sm:$0xff]
      %v1367 = vld [vmem:[%s3 + $0x6e8] sm:$0xff]
      %v1368 = vld [vmem:[%s3 + $0x6f0] sm:$0xff]
      %v1369 = vld [vmem:[%s3 + $0x6f8] sm:$0xff]
      %v1370 = vld [vmem:[%s3 + $0x700] sm:$0xff]
      %v1371 = vld [vmem:[%s3 + $0x708] sm:$0xff]
      %v1372 = vld [vmem:[%s3 + $0x710] sm:$0xff]
      %v1373 = vld [vmem:[%s3 + $0x718] sm:$0xff]
      %v1374 = vld [vmem:[%s3 + $0x720] sm:$0xff]
      %v1375 = vld [vmem:[%s3 + $0x728] sm:$0xff]
      %v1376 = vld [vmem:[%s3 + $0x730] sm:$0xff]
      %v1377 = vld [vmem:[%s3 + $0x738] sm:$0xff]
      %v1378 = vld [vmem:[%s3 + $0x740] sm:$0xff]
      %v1379 = vld [vmem:[%s3 + $0x748] sm:$0xff]
      %v1380 = vld [vmem:[%s3 + $0x750] sm:$0xff]
      %v1381 = vld [vmem:[%s3 + $0x758] sm:$0xff]
      %v1382 = vld [vmem:[%s3 + $0x760] sm:$0xff]
      %v1383 = vld [vmem:[%s3 + $0x768] sm:$0xff]
      %v1384 = vld [vmem:[%s3 + $0x770] sm:$0xff]
      %v1385 = vld [vmem:[%s3 + $0x778] sm:$0xff]
      %v1386 = vld [vmem:[%s3 + $0x780] sm:$0xff]
      %v1387 = vld [vmem:[%s3 + $0x788] sm:$0xff]
      %v1388 = vld [vmem:[%s3 + $0x790] sm:$0xff]
      %v1389 = vld [vmem:[%s3 + $0x798] sm:$0xff]
      %v1390 = vld [vmem:[%s3 + $0x7a0] sm:$0xff]
      %v1391 = vld [vmem:[%s3 + $0x7a8] sm:$0xff]
      %v1392 = vld [vmem:[%s3 + $0x7b0] sm:$0xff]
      %v1393 = vld [vmem:[%s3 + $0x7b8] sm:$0xff]
      %v1394 = vld [vmem:[%s3 + $0x7c0] sm:$0xff]
      %v1395 = vld [vmem:[%s3 + $0x7c8] sm:$0xff]
      %v1396 = vld [vmem:[%s3 + $0x7d0] sm:$0xff]
      %v1397 = vld [vmem:[%s3 + $0x7d8] sm:$0xff]
      %v1398 = vld [vmem:[%s3 + $0x7e0] sm:$0xff]
      %v1399 = vld [vmem:[%s3 + $0x7e8] sm:$0xff]
      %v1400 = vld [vmem:[%s3 + $0x7f0] sm:$0xff]
      %v1401 = vld [vmem:[%s3 + $0x7f8] sm:$0xff]
      %v1402 = vld [vmem:[#allocation5] sm:$0xf]
      %v1404 = vlaneseq
      %v1405 = vshrl.u32 %v1404, 7
      %v1406 = vsub.s32 0, %v1405
      %v1407 = vrot.slane %v1402, %v1406
      %v1408 = vlaneseq
      %v1409 = vshrl.u32 %v1408, 7
      %v1410 = vsub.s32 1, %v1409
      %v1411 = vrot.slane %v1402, %v1410
      %v1412 = vlaneseq
      %v1413 = vshrl.u32 %v1412, 7
      %v1414 = vsub.s32 2, %v1413
      %v1415 = vrot.slane %v1402, %v1414
      %v1416 = vlaneseq
      %v1417 = vshrl.u32 %v1416, 7
      %v1418 = vsub.s32 3, %v1417
      %v1419 = vrot.slane %v1402, %v1418
      %v1425 = vcombine.high %v1145, %v1145
      %v1427 = vunpack.c.l.s4 1983009808
      %v1428 = vunpack.c.0.s8 %v1427
      %v1429 = vlaneseq
      %v1430 = vshrl.u32 %v1429, 7
      %v1431 = vsub.s32 %v1428, %v1430
      %v1432 = vrot.slane %v1145, %v1431
      %v1434 = vunpack.c.l.s4 1983009808
      %v1435 = vunpack.c.0.s8 %v1434
      %v1436 = vlaneseq
      %v1437 = vshrl.u32 %v1436, 7
      %v1438 = vsub.s32 %v1435, %v1437
      %v1439 = vrot.slane %v1425, %v1438
      %v1440 = vcombine.high %v1432, %v1432
      %v1441 = vcombine.high %v1439, %v1439
      %1446 = vmatprep.subr.mxu0 %v1207
      %1447 = vmatpush1.msra.mxu0 %v1206
      %1448 = vmatprep.subr.mxu0 %v1203
      %1449 = vmatpush1.msra.mxu0 %v1202
      %1450 = vmatprep.subr.mxu0 %v1199
      %1451 = vmatpush1.msra.mxu0 %v1198
      %1452 = vmatprep.subr.mxu0 %v1195
      %1453 = vmatpush1.msra.mxu0 %v1194
      %1454 = vmatprep.subr.mxu0 %v1191
      %1455 = vmatpush1.msra.mxu0 %v1190
      %1456 = vmatprep.subr.mxu0 %v1187
      %1457 = vmatpush1.msra.mxu0 %v1186
      %1458 = vmatprep.subr.mxu0 %v1183
      %1459 = vmatpush1.msra.mxu0 %v1182
      %1460 = vmatprep.subr.mxu0 %v1179
      %1461 = vmatpush1.msra.mxu0 %v1178
      %1462 = vmatprep.subr.mxu0 %v1175
      %1463 = vmatpush1.msra.mxu0 %v1174
      %1464 = vmatprep.subr.mxu0 %v1171
      %1465 = vmatpush1.msra.mxu0 %v1170
      %1466 = vmatprep.subr.mxu0 %v1167
      %1467 = vmatpush1.msra.mxu0 %v1166
      %1468 = vmatprep.subr.mxu0 %v1163
      %1469 = vmatpush1.msra.mxu0 %v1162
      %1470 = vmatprep.subr.mxu0 %v1159
      %1471 = vmatpush1.msra.mxu0 %v1158
      %1472 = vmatprep.subr.mxu0 %v1155
      %1473 = vmatpush1.msra.mxu0 %v1154
      %1474 = vmatprep.subr.mxu0 %v1151
      %1475 = vmatpush1.msra.mxu0 %v1150
      %1476 = vmatprep.subr.mxu0 %v1147
      %1477 = vmatpush1.msra.mxu0 %v1146
      %1478 = vmatprep.subr.mxu0 %v1271
      %1479 = vmatpush2.msra.mxu0 %v1270
      %1480 = vmatprep.subr.mxu0 %v1267
      %1481 = vmatpush2.msra.mxu0 %v1266
      %1482 = vmatprep.subr.mxu0 %v1263
      %1483 = vmatpush2.msra.mxu0 %v1262
      %1484 = vmatprep.subr.mxu0 %v1259
      %1485 = vmatpush2.msra.mxu0 %v1258
      %1486 = vmatprep.subr.mxu0 %v1255
      %1487 = vmatpush2.msra.mxu0 %v1254
      %1488 = vmatprep.subr.mxu0 %v1251
      %1489 = vmatpush2.msra.mxu0 %v1250
      %1490 = vmatprep.subr.mxu0 %v1247
      %1491 = vmatpush2.msra.mxu0 %v1246
      %1492 = vmatprep.subr.mxu0 %v1243
      %1493 = vmatpush2.msra.mxu0 %v1242
      %1494 = vmatprep.subr.mxu0 %v1239
      %1495 = vmatpush2.msra.mxu0 %v1238
      %1496 = vmatprep.subr.mxu0 %v1235
      %1497 = vmatpush2.msra.mxu0 %v1234
      %1498 = vmatprep.subr.mxu0 %v1231
      %1499 = vmatpush2.msra.mxu0 %v1230
      %1500 = vmatprep.subr.mxu0 %v1227
      %1501 = vmatpush2.msra.mxu0 %v1226
      %1502 = vmatprep.subr.mxu0 %v1223
      %1503 = vmatpush2.msra.mxu0 %v1222
      %1504 = vmatprep.subr.mxu0 %v1219
      %1505 = vmatpush2.msra.mxu0 %v1218
      %1506 = vmatprep.subr.mxu0 %v1215
      %1507 = vmatpush2.msra.mxu0 %v1214
      %1508 = vmatprep.subr.mxu0 %v1211
      %1509 = vmatpush2.msra.mxu0 %v1210
      %1510 = vmatprep.mubr.f32.mxu0 %v1440
      %1511 = vmatmul.mubr.f32.gmra.mxu0 %v1432
      %v1512 = vpop.f32.mrf.mxu0
      %v1513 = vadd.f32 %v1407, %v1512
      %v1514 = vpop.f32.mrf.mxu0
      %v1515 = vadd.f32 %v1411, %v1514
      %1516 = vdwg.mxu0
      %1517 = vmatprep.subr.mxu0 %v1335
      %1518 = vmatpush1.msra.mxu0 %v1334
      %1519 = vmatprep.subr.mxu0 %v1331
      %1520 = vmatpush1.msra.mxu0 %v1330
      %1521 = vmatprep.subr.mxu0 %v1327
      %1522 = vmatpush1.msra.mxu0 %v1326
      %1523 = vmatprep.subr.mxu0 %v1323
      %1524 = vmatpush1.msra.mxu0 %v1322
      %1525 = vmatprep.subr.mxu0 %v1319
      %1526 = vmatpush1.msra.mxu0 %v1318
      %1527 = vmatprep.subr.mxu0 %v1315
      %1528 = vmatpush1.msra.mxu0 %v1314
      %1529 = vmatprep.subr.mxu0 %v1311
      %1530 = vmatpush1.msra.mxu0 %v1310
      %1531 = vmatprep.subr.mxu0 %v1307
      %1532 = vmatpush1.msra.mxu0 %v1306
      %1533 = vmatprep.subr.mxu0 %v1303
      %1534 = vmatpush1.msra.mxu0 %v1302
      %1535 = vmatprep.subr.mxu0 %v1299
      %1536 = vmatpush1.msra.mxu0 %v1298
      %1537 = vmatprep.subr.mxu0 %v1295
      %1538 = vmatpush1.msra.mxu0 %v1294
      %1539 = vmatprep.subr.mxu0 %v1291
      %1540 = vmatpush1.msra.mxu0 %v1290
      %1541 = vmatprep.subr.mxu0 %v1287
      %1542 = vmatpush1.msra.mxu0 %v1286
      %1543 = vmatprep.subr.mxu0 %v1283
      %1544 = vmatpush1.msra.mxu0 %v1282
      %1545 = vmatprep.subr.mxu0 %v1279
      %1546 = vmatpush1.msra.mxu0 %v1278
      %1547 = vmatprep.subr.mxu0 %v1275
      %1548 = vmatpush1.msra.mxu0 %v1274
      %1549 = vmatprep.subr.mxu0 %v1399
      %1550 = vmatpush2.msra.mxu0 %v1398
      %1551 = vmatprep.subr.mxu0 %v1395
      %1552 = vmatpush2.msra.mxu0 %v1394
      %1553 = vmatprep.subr.mxu0 %v1391
      %1554 = vmatpush2.msra.mxu0 %v1390
      %1555 = vmatprep.subr.mxu0 %v1387
      %1556 = vmatpush2.msra.mxu0 %v1386
      %1557 = vmatprep.subr.mxu0 %v1383
      %1558 = vmatpush2.msra.mxu0 %v1382
      %1559 = vmatprep.subr.mxu0 %v1379
      %1560 = vmatpush2.msra.mxu0 %v1378
      %1561 = vmatprep.subr.mxu0 %v1375
      %1562 = vmatpush2.msra.mxu0 %v1374
      %1563 = vmatprep.subr.mxu0 %v1371
      %1564 = vmatpush2.msra.mxu0 %v1370
      %1565 = vmatprep.subr.mxu0 %v1367
      %1566 = vmatpush2.msra.mxu0 %v1366
      %1567 = vmatprep.subr.mxu0 %v1363
      %1568 = vmatpush2.msra.mxu0 %v1362
      %1569 = vmatprep.subr.mxu0 %v1359
      %1570 = vmatpush2.msra.mxu0 %v1358
      %1571 = vmatprep.subr.mxu0 %v1355
      %1572 = vmatpush2.msra.mxu0 %v1354
      %1573 = vmatprep.subr.mxu0 %v1351
      %1574 = vmatpush2.msra.mxu0 %v1350
      %1575 = vmatprep.subr.mxu0 %v1347
      %1576 = vmatpush2.msra.mxu0 %v1346
      %1577 = vmatprep.subr.mxu0 %v1343
      %1578 = vmatpush2.msra.mxu0 %v1342
      %1579 = vmatprep.subr.mxu0 %v1339
      %1580 = vmatpush2.msra.mxu0 %v1338
      %1581 = vmatprep.mubr.f32.mxu0 %v1441
      %1582 = vmatmul.mubr.f32.gmra.mxu0 %v1439
      %v1583 = vpop.f32.mrf.mxu0
      %v1584 = vadd.f32 %v1513, %v1583
      %v1585 = vpop.f32.mrf.mxu0
      %v1586 = vadd.f32 %v1515, %v1585
      %1587 = vdwg.mxu0
      %1588 = vmatprep.subr.mxu0 %v1209
      %1589 = vmatpush1.msra.mxu0 %v1208
      %1590 = vmatprep.subr.mxu0 %v1205
      %1591 = vmatpush1.msra.mxu0 %v1204
      %1592 = vmatprep.subr.mxu0 %v1201
      %1593 = vmatpush1.msra.mxu0 %v1200
      %1594 = vmatprep.subr.mxu0 %v1197
      %1595 = vmatpush1.msra.mxu0 %v1196
      %1596 = vmatprep.subr.mxu0 %v1193
      %1597 = vmatpush1.msra.mxu0 %v1192
      %1598 = vmatprep.subr.mxu0 %v1189
      %1599 = vmatpush1.msra.mxu0 %v1188
      %1600 = vmatprep.subr.mxu0 %v1185
      %1601 = vmatpush1.msra.mxu0 %v1184
      %1602 = vmatprep.subr.mxu0 %v1181
      %1603 = vmatpush1.msra.mxu0 %v1180
      %1604 = vmatprep.subr.mxu0 %v1177
      %1605 = vmatpush1.msra.mxu0 %v1176
      %1606 = vmatprep.subr.mxu0 %v1173
      %1607 = vmatpush1.msra.mxu0 %v1172
      %1608 = vmatprep.subr.mxu0 %v1169
      %1609 = vmatpush1.msra.mxu0 %v1168
      %1610 = vmatprep.subr.mxu0 %v1165
      %1611 = vmatpush1.msra.mxu0 %v1164
      %1612 = vmatprep.subr.mxu0 %v1161
      %1613 = vmatpush1.msra.mxu0 %v1160
      %1614 = vmatprep.subr.mxu0 %v1157
      %1615 = vmatpush1.msra.mxu0 %v1156
      %1616 = vmatprep.subr.mxu0 %v1153
      %1617 = vmatpush1.msra.mxu0 %v1152
      %1618 = vmatprep.subr.mxu0 %v1149
      %1619 = vmatpush1.msra.mxu0 %v1148
      %1620 = vmatprep.subr.mxu0 %v1273
      %1621 = vmatpush2.msra.mxu0 %v1272
      %1622 = vmatprep.subr.mxu0 %v1269
      %1623 = vmatpush2.msra.mxu0 %v1268
      %1624 = vmatprep.subr.mxu0 %v1265
      %1625 = vmatpush2.msra.mxu0 %v1264
      %1626 = vmatprep.subr.mxu0 %v1261
      %1627 = vmatpush2.msra.mxu0 %v1260
      %1628 = vmatprep.subr.mxu0 %v1257
      %1629 = vmatpush2.msra.mxu0 %v1256
      %1630 = vmatprep.subr.mxu0 %v1253
      %1631 = vmatpush2.msra.mxu0 %v1252
      %1632 = vmatprep.subr.mxu0 %v1249
      %1633 = vmatpush2.msra.mxu0 %v1248
      %1634 = vmatprep.subr.mxu0 %v1245
      %1635 = vmatpush2.msra.mxu0 %v1244
      %1636 = vmatprep.subr.mxu0 %v1241
      %1637 = vmatpush2.msra.mxu0 %v1240
      %1638 = vmatprep.subr.mxu0 %v1237
      %1639 = vmatpush2.msra.mxu0 %v1236
      %1640 = vmatprep.subr.mxu0 %v1233
      %1641 = vmatpush2.msra.mxu0 %v1232
      %1642 = vmatprep.subr.mxu0 %v1229
      %1643 = vmatpush2.msra.mxu0 %v1228
      %1644 = vmatprep.subr.mxu0 %v1225
      %1645 = vmatpush2.msra.mxu0 %v1224
      %1646 = vmatprep.subr.mxu0 %v1221
      %1647 = vmatpush2.msra.mxu0 %v1220
      %1648 = vmatprep.subr.mxu0 %v1217
      %1649 = vmatpush2.msra.mxu0 %v1216
      %1650 = vmatprep.subr.mxu0 %v1213
      %1651 = vmatpush2.msra.mxu0 %v1212
      %1652 = vmatprep.mubr.f32.mxu0 %v1440
      %1653 = vmatmul.mubr.f32.gmra.mxu0 %v1432
      %v1654 = vpop.f32.mrf.mxu0
      %v1655 = vadd.f32 %v1415, %v1654
      %v1656 = vpop.f32.mrf.mxu0
      %v1657 = vadd.f32 %v1419, %v1656
      %1658 = vdwg.mxu0
      %1659 = vmatprep.subr.mxu0 %v1337
      %1660 = vmatpush1.msra.mxu0 %v1336
      %1661 = vmatprep.subr.mxu0 %v1333
      %1662 = vmatpush1.msra.mxu0 %v1332
      %1663 = vmatprep.subr.mxu0 %v1329
      %1664 = vmatpush1.msra.mxu0 %v1328
      %1665 = vmatprep.subr.mxu0 %v1325
      %1666 = vmatpush1.msra.mxu0 %v1324
      %1667 = vmatprep.subr.mxu0 %v1321
      %1668 = vmatpush1.msra.mxu0 %v1320
      %1669 = vmatprep.subr.mxu0 %v1317
      %1670 = vmatpush1.msra.mxu0 %v1316
      %1671 = vmatprep.subr.mxu0 %v1313
      %1672 = vmatpush1.msra.mxu0 %v1312
      %1673 = vmatprep.subr.mxu0 %v1309
      %1674 = vmatpush1.msra.mxu0 %v1308
      %1675 = vmatprep.subr.mxu0 %v1305
      %1676 = vmatpush1.msra.mxu0 %v1304
      %1677 = vmatprep.subr.mxu0 %v1301
      %1678 = vmatpush1.msra.mxu0 %v1300
      %1679 = vmatprep.subr.mxu0 %v1297
      %1680 = vmatpush1.msra.mxu0 %v1296
      %1681 = vmatprep.subr.mxu0 %v1293
      %1682 = vmatpush1.msra.mxu0 %v1292
      %1683 = vmatprep.subr.mxu0 %v1289
      %1684 = vmatpush1.msra.mxu0 %v1288
      %1685 = vmatprep.subr.mxu0 %v1285
      %1686 = vmatpush1.msra.mxu0 %v1284
      %1687 = vmatprep.subr.mxu0 %v1281
      %1688 = vmatpush1.msra.mxu0 %v1280
      %1689 = vmatprep.subr.mxu0 %v1277
      %1690 = vmatpush1.msra.mxu0 %v1276
      %1691 = vmatprep.subr.mxu0 %v1401
      %1692 = vmatpush2.msra.mxu0 %v1400
      %1693 = vmatprep.subr.mxu0 %v1397
      %1694 = vmatpush2.msra.mxu0 %v1396
      %1695 = vmatprep.subr.mxu0 %v1393
      %1696 = vmatpush2.msra.mxu0 %v1392
      %1697 = vmatprep.subr.mxu0 %v1389
      %1698 = vmatpush2.msra.mxu0 %v1388
      %1699 = vmatprep.subr.mxu0 %v1385
      %1700 = vmatpush2.msra.mxu0 %v1384
      %1701 = vmatprep.subr.mxu0 %v1381
      %1702 = vmatpush2.msra.mxu0 %v1380
      %1703 = vmatprep.subr.mxu0 %v1377
      %1704 = vmatpush2.msra.mxu0 %v1376
      %1705 = vmatprep.subr.mxu0 %v1373
      %1706 = vmatpush2.msra.mxu0 %v1372
      %1707 = vmatprep.subr.mxu0 %v1369
      %1708 = vmatpush2.msra.mxu0 %v1368
      %1709 = vmatprep.subr.mxu0 %v1365
      %1710 = vmatpush2.msra.mxu0 %v1364
      %1711 = vmatprep.subr.mxu0 %v1361
      %1712 = vmatpush2.msra.mxu0 %v1360
      %1713 = vmatprep.subr.mxu0 %v1357
      %1714 = vmatpush2.msra.mxu0 %v1356
      %1715 = vmatprep.subr.mxu0 %v1353
      %1716 = vmatpush2.msra.mxu0 %v1352
      %1717 = vmatprep.subr.mxu0 %v1349
      %1718 = vmatpush2.msra.mxu0 %v1348
      %1719 = vmatprep.subr.mxu0 %v1345
      %1720 = vmatpush2.msra.mxu0 %v1344
      %1721 = vmatprep.subr.mxu0 %v1341
      %1722 = vmatpush2.msra.mxu0 %v1340
      %1723 = vmatprep.mubr.f32.mxu0 %v1441
      %1724 = vmatmul.mubr.f32.gmra.mxu0 %v1439
      %v1725 = vpop.f32.mrf.mxu0
      %v1726 = vadd.f32 %v1655, %v1725
      %v1727 = vpop.f32.mrf.mxu0
      %v1728 = vadd.f32 %v1657, %v1727
      %1729 = vdwg.mxu0
      %v1730 = vmax.f32 %v1584, 0.0
      %v1731 = vmax.f32 %v1586, 0.0
      %v1732 = vmax.f32 %v1726, 0.0
      %v1733 = vmax.f32 %v1728, 0.0
      %v1734 = vld [vmem:[%s5] sm:$0xff]
      %v1735 = vld [vmem:[%s5 + $0x8] sm:$0xff]
      %v1736 = vld [vmem:[%s5 + $0x10] sm:$0xff]
      %v1737 = vld [vmem:[%s5 + $0x18] sm:$0xff]
      %v1738 = vld [vmem:[%s5 + $0x20] sm:$0xff]
      %v1739 = vld [vmem:[%s5 + $0x28] sm:$0xff]
      %v1740 = vld [vmem:[%s5 + $0x30] sm:$0xff]
      %v1741 = vld [vmem:[%s5 + $0x38] sm:$0xff]
      %v1742 = vld [vmem:[%s5 + $0x40] sm:$0xff]
      %v1743 = vld [vmem:[%s5 + $0x48] sm:$0xff]
      %v1744 = vld [vmem:[%s5 + $0x50] sm:$0xff]
      %v1745 = vld [vmem:[%s5 + $0x58] sm:$0xff]
      %v1746 = vld [vmem:[%s5 + $0x60] sm:$0xff]
      %v1747 = vld [vmem:[%s5 + $0x68] sm:$0xff]
      %v1748 = vld [vmem:[%s5 + $0x70] sm:$0xff]
      %v1749 = vld [vmem:[%s5 + $0x78] sm:$0xff]
      %v1750 = vld [vmem:[%s5 + $0x80] sm:$0xff]
      %v1751 = vld [vmem:[%s5 + $0x88] sm:$0xff]
      %v1752 = vld [vmem:[%s5 + $0x90] sm:$0xff]
      %v1753 = vld [vmem:[%s5 + $0x98] sm:$0xff]
      %v1754 = vld [vmem:[%s5 + $0xa0] sm:$0xff]
      %v1755 = vld [vmem:[%s5 + $0xa8] sm:$0xff]
      %v1756 = vld [vmem:[%s5 + $0xb0] sm:$0xff]
      %v1757 = vld [vmem:[%s5 + $0xb8] sm:$0xff]
      %v1758 = vld [vmem:[%s5 + $0xc0] sm:$0xff]
      %v1759 = vld [vmem:[%s5 + $0xc8] sm:$0xff]
      %v1760 = vld [vmem:[%s5 + $0xd0] sm:$0xff]
      %v1761 = vld [vmem:[%s5 + $0xd8] sm:$0xff]
      %v1762 = vld [vmem:[%s5 + $0xe0] sm:$0xff]
      %v1763 = vld [vmem:[%s5 + $0xe8] sm:$0xff]
      %v1764 = vld [vmem:[%s5 + $0xf0] sm:$0xff]
      %v1765 = vld [vmem:[%s5 + $0xf8] sm:$0xff]
      %v1766 = vld [vmem:[%s5 + $0x100] sm:$0xff]
      %v1767 = vld [vmem:[%s5 + $0x108] sm:$0xff]
      %v1768 = vld [vmem:[%s5 + $0x110] sm:$0xff]
      %v1769 = vld [vmem:[%s5 + $0x118] sm:$0xff]
      %v1770 = vld [vmem:[%s5 + $0x120] sm:$0xff]
      %v1771 = vld [vmem:[%s5 + $0x128] sm:$0xff]
      %v1772 = vld [vmem:[%s5 + $0x130] sm:$0xff]
      %v1773 = vld [vmem:[%s5 + $0x138] sm:$0xff]
      %v1774 = vld [vmem:[%s5 + $0x140] sm:$0xff]
      %v1775 = vld [vmem:[%s5 + $0x148] sm:$0xff]
      %v1776 = vld [vmem:[%s5 + $0x150] sm:$0xff]
      %v1777 = vld [vmem:[%s5 + $0x158] sm:$0xff]
      %v1778 = vld [vmem:[%s5 + $0x160] sm:$0xff]
      %v1779 = vld [vmem:[%s5 + $0x168] sm:$0xff]
      %v1780 = vld [vmem:[%s5 + $0x170] sm:$0xff]
      %v1781 = vld [vmem:[%s5 + $0x178] sm:$0xff]
      %v1782 = vld [vmem:[%s5 + $0x180] sm:$0xff]
      %v1783 = vld [vmem:[%s5 + $0x188] sm:$0xff]
      %v1784 = vld [vmem:[%s5 + $0x190] sm:$0xff]
      %v1785 = vld [vmem:[%s5 + $0x198] sm:$0xff]
      %v1786 = vld [vmem:[%s5 + $0x1a0] sm:$0xff]
      %v1787 = vld [vmem:[%s5 + $0x1a8] sm:$0xff]
      %v1788 = vld [vmem:[%s5 + $0x1b0] sm:$0xff]
      %v1789 = vld [vmem:[%s5 + $0x1b8] sm:$0xff]
      %v1790 = vld [vmem:[%s5 + $0x1c0] sm:$0xff]
      %v1791 = vld [vmem:[%s5 + $0x1c8] sm:$0xff]
      %v1792 = vld [vmem:[%s5 + $0x1d0] sm:$0xff]
      %v1793 = vld [vmem:[%s5 + $0x1d8] sm:$0xff]
      %v1794 = vld [vmem:[%s5 + $0x1e0] sm:$0xff]
      %v1795 = vld [vmem:[%s5 + $0x1e8] sm:$0xff]
      %v1796 = vld [vmem:[%s5 + $0x1f0] sm:$0xff]
      %v1797 = vld [vmem:[%s5 + $0x1f8] sm:$0xff]
      %v1798 = vld [vmem:[%s5 + $0x200] sm:$0xff]
      %v1799 = vld [vmem:[%s5 + $0x208] sm:$0xff]
      %v1800 = vld [vmem:[%s5 + $0x210] sm:$0xff]
      %v1801 = vld [vmem:[%s5 + $0x218] sm:$0xff]
      %v1802 = vld [vmem:[%s5 + $0x220] sm:$0xff]
      %v1803 = vld [vmem:[%s5 + $0x228] sm:$0xff]
      %v1804 = vld [vmem:[%s5 + $0x230] sm:$0xff]
      %v1805 = vld [vmem:[%s5 + $0x238] sm:$0xff]
      %v1806 = vld [vmem:[%s5 + $0x240] sm:$0xff]
      %v1807 = vld [vmem:[%s5 + $0x248] sm:$0xff]
      %v1808 = vld [vmem:[%s5 + $0x250] sm:$0xff]
      %v1809 = vld [vmem:[%s5 + $0x258] sm:$0xff]
      %v1810 = vld [vmem:[%s5 + $0x260] sm:$0xff]
      %v1811 = vld [vmem:[%s5 + $0x268] sm:$0xff]
      %v1812 = vld [vmem:[%s5 + $0x270] sm:$0xff]
      %v1813 = vld [vmem:[%s5 + $0x278] sm:$0xff]
      %v1814 = vld [vmem:[%s5 + $0x280] sm:$0xff]
      %v1815 = vld [vmem:[%s5 + $0x288] sm:$0xff]
      %v1816 = vld [vmem:[%s5 + $0x290] sm:$0xff]
      %v1817 = vld [vmem:[%s5 + $0x298] sm:$0xff]
      %v1818 = vld [vmem:[%s5 + $0x2a0] sm:$0xff]
      %v1819 = vld [vmem:[%s5 + $0x2a8] sm:$0xff]
      %v1820 = vld [vmem:[%s5 + $0x2b0] sm:$0xff]
      %v1821 = vld [vmem:[%s5 + $0x2b8] sm:$0xff]
      %v1822 = vld [vmem:[%s5 + $0x2c0] sm:$0xff]
      %v1823 = vld [vmem:[%s5 + $0x2c8] sm:$0xff]
      %v1824 = vld [vmem:[%s5 + $0x2d0] sm:$0xff]
      %v1825 = vld [vmem:[%s5 + $0x2d8] sm:$0xff]
      %v1826 = vld [vmem:[%s5 + $0x2e0] sm:$0xff]
      %v1827 = vld [vmem:[%s5 + $0x2e8] sm:$0xff]
      %v1828 = vld [vmem:[%s5 + $0x2f0] sm:$0xff]
      %v1829 = vld [vmem:[%s5 + $0x2f8] sm:$0xff]
      %v1830 = vld [vmem:[%s5 + $0x300] sm:$0xff]
      %v1831 = vld [vmem:[%s5 + $0x308] sm:$0xff]
      %v1832 = vld [vmem:[%s5 + $0x310] sm:$0xff]
      %v1833 = vld [vmem:[%s5 + $0x318] sm:$0xff]
      %v1834 = vld [vmem:[%s5 + $0x320] sm:$0xff]
      %v1835 = vld [vmem:[%s5 + $0x328] sm:$0xff]
      %v1836 = vld [vmem:[%s5 + $0x330] sm:$0xff]
      %v1837 = vld [vmem:[%s5 + $0x338] sm:$0xff]
      %v1838 = vld [vmem:[%s5 + $0x340] sm:$0xff]
      %v1839 = vld [vmem:[%s5 + $0x348] sm:$0xff]
      %v1840 = vld [vmem:[%s5 + $0x350] sm:$0xff]
      %v1841 = vld [vmem:[%s5 + $0x358] sm:$0xff]
      %v1842 = vld [vmem:[%s5 + $0x360] sm:$0xff]
      %v1843 = vld [vmem:[%s5 + $0x368] sm:$0xff]
      %v1844 = vld [vmem:[%s5 + $0x370] sm:$0xff]
      %v1845 = vld [vmem:[%s5 + $0x378] sm:$0xff]
      %v1846 = vld [vmem:[%s5 + $0x380] sm:$0xff]
      %v1847 = vld [vmem:[%s5 + $0x388] sm:$0xff]
      %v1848 = vld [vmem:[%s5 + $0x390] sm:$0xff]
      %v1849 = vld [vmem:[%s5 + $0x398] sm:$0xff]
      %v1850 = vld [vmem:[%s5 + $0x3a0] sm:$0xff]
      %v1851 = vld [vmem:[%s5 + $0x3a8] sm:$0xff]
      %v1852 = vld [vmem:[%s5 + $0x3b0] sm:$0xff]
      %v1853 = vld [vmem:[%s5 + $0x3b8] sm:$0xff]
      %v1854 = vld [vmem:[%s5 + $0x3c0] sm:$0xff]
      %v1855 = vld [vmem:[%s5 + $0x3c8] sm:$0xff]
      %v1856 = vld [vmem:[%s5 + $0x3d0] sm:$0xff]
      %v1857 = vld [vmem:[%s5 + $0x3d8] sm:$0xff]
      %v1858 = vld [vmem:[%s5 + $0x3e0] sm:$0xff]
      %v1859 = vld [vmem:[%s5 + $0x3e8] sm:$0xff]
      %v1860 = vld [vmem:[%s5 + $0x3f0] sm:$0xff]
      %v1861 = vld [vmem:[%s5 + $0x3f8] sm:$0xff]
      %v1862 = vld [vmem:[%s5 + $0x400] sm:$0xff]
      %v1863 = vld [vmem:[%s5 + $0x408] sm:$0xff]
      %v1864 = vld [vmem:[%s5 + $0x410] sm:$0xff]
      %v1865 = vld [vmem:[%s5 + $0x418] sm:$0xff]
      %v1866 = vld [vmem:[%s5 + $0x420] sm:$0xff]
      %v1867 = vld [vmem:[%s5 + $0x428] sm:$0xff]
      %v1868 = vld [vmem:[%s5 + $0x430] sm:$0xff]
      %v1869 = vld [vmem:[%s5 + $0x438] sm:$0xff]
      %v1870 = vld [vmem:[%s5 + $0x440] sm:$0xff]
      %v1871 = vld [vmem:[%s5 + $0x448] sm:$0xff]
      %v1872 = vld [vmem:[%s5 + $0x450] sm:$0xff]
      %v1873 = vld [vmem:[%s5 + $0x458] sm:$0xff]
      %v1874 = vld [vmem:[%s5 + $0x460] sm:$0xff]
      %v1875 = vld [vmem:[%s5 + $0x468] sm:$0xff]
      %v1876 = vld [vmem:[%s5 + $0x470] sm:$0xff]
      %v1877 = vld [vmem:[%s5 + $0x478] sm:$0xff]
      %v1878 = vld [vmem:[%s5 + $0x480] sm:$0xff]
      %v1879 = vld [vmem:[%s5 + $0x488] sm:$0xff]
      %v1880 = vld [vmem:[%s5 + $0x490] sm:$0xff]
      %v1881 = vld [vmem:[%s5 + $0x498] sm:$0xff]
      %v1882 = vld [vmem:[%s5 + $0x4a0] sm:$0xff]
      %v1883 = vld [vmem:[%s5 + $0x4a8] sm:$0xff]
      %v1884 = vld [vmem:[%s5 + $0x4b0] sm:$0xff]
      %v1885 = vld [vmem:[%s5 + $0x4b8] sm:$0xff]
      %v1886 = vld [vmem:[%s5 + $0x4c0] sm:$0xff]
      %v1887 = vld [vmem:[%s5 + $0x4c8] sm:$0xff]
      %v1888 = vld [vmem:[%s5 + $0x4d0] sm:$0xff]
      %v1889 = vld [vmem:[%s5 + $0x4d8] sm:$0xff]
      %v1890 = vld [vmem:[%s5 + $0x4e0] sm:$0xff]
      %v1891 = vld [vmem:[%s5 + $0x4e8] sm:$0xff]
      %v1892 = vld [vmem:[%s5 + $0x4f0] sm:$0xff]
      %v1893 = vld [vmem:[%s5 + $0x4f8] sm:$0xff]
      %v1894 = vld [vmem:[%s5 + $0x500] sm:$0xff]
      %v1895 = vld [vmem:[%s5 + $0x508] sm:$0xff]
      %v1896 = vld [vmem:[%s5 + $0x510] sm:$0xff]
      %v1897 = vld [vmem:[%s5 + $0x518] sm:$0xff]
      %v1898 = vld [vmem:[%s5 + $0x520] sm:$0xff]
      %v1899 = vld [vmem:[%s5 + $0x528] sm:$0xff]
      %v1900 = vld [vmem:[%s5 + $0x530] sm:$0xff]
      %v1901 = vld [vmem:[%s5 + $0x538] sm:$0xff]
      %v1902 = vld [vmem:[%s5 + $0x540] sm:$0xff]
      %v1903 = vld [vmem:[%s5 + $0x548] sm:$0xff]
      %v1904 = vld [vmem:[%s5 + $0x550] sm:$0xff]
      %v1905 = vld [vmem:[%s5 + $0x558] sm:$0xff]
      %v1906 = vld [vmem:[%s5 + $0x560] sm:$0xff]
      %v1907 = vld [vmem:[%s5 + $0x568] sm:$0xff]
      %v1908 = vld [vmem:[%s5 + $0x570] sm:$0xff]
      %v1909 = vld [vmem:[%s5 + $0x578] sm:$0xff]
      %v1910 = vld [vmem:[%s5 + $0x580] sm:$0xff]
      %v1911 = vld [vmem:[%s5 + $0x588] sm:$0xff]
      %v1912 = vld [vmem:[%s5 + $0x590] sm:$0xff]
      %v1913 = vld [vmem:[%s5 + $0x598] sm:$0xff]
      %v1914 = vld [vmem:[%s5 + $0x5a0] sm:$0xff]
      %v1915 = vld [vmem:[%s5 + $0x5a8] sm:$0xff]
      %v1916 = vld [vmem:[%s5 + $0x5b0] sm:$0xff]
      %v1917 = vld [vmem:[%s5 + $0x5b8] sm:$0xff]
      %v1918 = vld [vmem:[%s5 + $0x5c0] sm:$0xff]
      %v1919 = vld [vmem:[%s5 + $0x5c8] sm:$0xff]
      %v1920 = vld [vmem:[%s5 + $0x5d0] sm:$0xff]
      %v1921 = vld [vmem:[%s5 + $0x5d8] sm:$0xff]
      %v1922 = vld [vmem:[%s5 + $0x5e0] sm:$0xff]
      %v1923 = vld [vmem:[%s5 + $0x5e8] sm:$0xff]
      %v1924 = vld [vmem:[%s5 + $0x5f0] sm:$0xff]
      %v1925 = vld [vmem:[%s5 + $0x5f8] sm:$0xff]
      %v1926 = vld [vmem:[%s5 + $0x600] sm:$0xff]
      %v1927 = vld [vmem:[%s5 + $0x608] sm:$0xff]
      %v1928 = vld [vmem:[%s5 + $0x610] sm:$0xff]
      %v1929 = vld [vmem:[%s5 + $0x618] sm:$0xff]
      %v1930 = vld [vmem:[%s5 + $0x620] sm:$0xff]
      %v1931 = vld [vmem:[%s5 + $0x628] sm:$0xff]
      %v1932 = vld [vmem:[%s5 + $0x630] sm:$0xff]
      %v1933 = vld [vmem:[%s5 + $0x638] sm:$0xff]
      %v1934 = vld [vmem:[%s5 + $0x640] sm:$0xff]
      %v1935 = vld [vmem:[%s5 + $0x648] sm:$0xff]
      %v1936 = vld [vmem:[%s5 + $0x650] sm:$0xff]
      %v1937 = vld [vmem:[%s5 + $0x658] sm:$0xff]
      %v1938 = vld [vmem:[%s5 + $0x660] sm:$0xff]
      %v1939 = vld [vmem:[%s5 + $0x668] sm:$0xff]
      %v1940 = vld [vmem:[%s5 + $0x670] sm:$0xff]
      %v1941 = vld [vmem:[%s5 + $0x678] sm:$0xff]
      %v1942 = vld [vmem:[%s5 + $0x680] sm:$0xff]
      %v1943 = vld [vmem:[%s5 + $0x688] sm:$0xff]
      %v1944 = vld [vmem:[%s5 + $0x690] sm:$0xff]
      %v1945 = vld [vmem:[%s5 + $0x698] sm:$0xff]
      %v1946 = vld [vmem:[%s5 + $0x6a0] sm:$0xff]
      %v1947 = vld [vmem:[%s5 + $0x6a8] sm:$0xff]
      %v1948 = vld [vmem:[%s5 + $0x6b0] sm:$0xff]
      %v1949 = vld [vmem:[%s5 + $0x6b8] sm:$0xff]
      %v1950 = vld [vmem:[%s5 + $0x6c0] sm:$0xff]
      %v1951 = vld [vmem:[%s5 + $0x6c8] sm:$0xff]
      %v1952 = vld [vmem:[%s5 + $0x6d0] sm:$0xff]
      %v1953 = vld [vmem:[%s5 + $0x6d8] sm:$0xff]
      %v1954 = vld [vmem:[%s5 + $0x6e0] sm:$0xff]
      %v1955 = vld [vmem:[%s5 + $0x6e8] sm:$0xff]
      %v1956 = vld [vmem:[%s5 + $0x6f0] sm:$0xff]
      %v1957 = vld [vmem:[%s5 + $0x6f8] sm:$0xff]
      %v1958 = vld [vmem:[%s5 + $0x700] sm:$0xff]
      %v1959 = vld [vmem:[%s5 + $0x708] sm:$0xff]
      %v1960 = vld [vmem:[%s5 + $0x710] sm:$0xff]
      %v1961 = vld [vmem:[%s5 + $0x718] sm:$0xff]
      %v1962 = vld [vmem:[%s5 + $0x720] sm:$0xff]
      %v1963 = vld [vmem:[%s5 + $0x728] sm:$0xff]
      %v1964 = vld [vmem:[%s5 + $0x730] sm:$0xff]
      %v1965 = vld [vmem:[%s5 + $0x738] sm:$0xff]
      %v1966 = vld [vmem:[%s5 + $0x740] sm:$0xff]
      %v1967 = vld [vmem:[%s5 + $0x748] sm:$0xff]
      %v1968 = vld [vmem:[%s5 + $0x750] sm:$0xff]
      %v1969 = vld [vmem:[%s5 + $0x758] sm:$0xff]
      %v1970 = vld [vmem:[%s5 + $0x760] sm:$0xff]
      %v1971 = vld [vmem:[%s5 + $0x768] sm:$0xff]
      %v1972 = vld [vmem:[%s5 + $0x770] sm:$0xff]
      %v1973 = vld [vmem:[%s5 + $0x778] sm:$0xff]
      %v1974 = vld [vmem:[%s5 + $0x780] sm:$0xff]
      %v1975 = vld [vmem:[%s5 + $0x788] sm:$0xff]
      %v1976 = vld [vmem:[%s5 + $0x790] sm:$0xff]
      %v1977 = vld [vmem:[%s5 + $0x798] sm:$0xff]
      %v1978 = vld [vmem:[%s5 + $0x7a0] sm:$0xff]
      %v1979 = vld [vmem:[%s5 + $0x7a8] sm:$0xff]
      %v1980 = vld [vmem:[%s5 + $0x7b0] sm:$0xff]
      %v1981 = vld [vmem:[%s5 + $0x7b8] sm:$0xff]
      %v1982 = vld [vmem:[%s5 + $0x7c0] sm:$0xff]
      %v1983 = vld [vmem:[%s5 + $0x7c8] sm:$0xff]
      %v1984 = vld [vmem:[%s5 + $0x7d0] sm:$0xff]
      %v1985 = vld [vmem:[%s5 + $0x7d8] sm:$0xff]
      %v1986 = vld [vmem:[%s5 + $0x7e0] sm:$0xff]
      %v1987 = vld [vmem:[%s5 + $0x7e8] sm:$0xff]
      %v1988 = vld [vmem:[%s5 + $0x7f0] sm:$0xff]
      %v1989 = vld [vmem:[%s5 + $0x7f8] sm:$0xff]
      %v1990 = vld [vmem:[#allocation7] sm:$0xf]
      %v1992 = vlaneseq
      %v1993 = vshrl.u32 %v1992, 7
      %v1994 = vsub.s32 0, %v1993
      %v1995 = vrot.slane %v1990, %v1994
      %v1996 = vlaneseq
      %v1997 = vshrl.u32 %v1996, 7
      %v1998 = vsub.s32 1, %v1997
      %v1999 = vrot.slane %v1990, %v1998
      %v2000 = vlaneseq
      %v2001 = vshrl.u32 %v2000, 7
      %v2002 = vsub.s32 2, %v2001
      %v2003 = vrot.slane %v1990, %v2002
      %v2004 = vlaneseq
      %v2005 = vshrl.u32 %v2004, 7
      %v2006 = vsub.s32 3, %v2005
      %v2007 = vrot.slane %v1990, %v2006
      %2012 = vmatprep.subr.mxu0 %v1795
      %2013 = vmatpush1.msra.mxu0 %v1794
      %2014 = vmatprep.subr.mxu0 %v1791
      %2015 = vmatpush1.msra.mxu0 %v1790
      %2016 = vmatprep.subr.mxu0 %v1787
      %2017 = vmatpush1.msra.mxu0 %v1786
      %2018 = vmatprep.subr.mxu0 %v1783
      %2019 = vmatpush1.msra.mxu0 %v1782
      %2020 = vmatprep.subr.mxu0 %v1779
      %2021 = vmatpush1.msra.mxu0 %v1778
      %2022 = vmatprep.subr.mxu0 %v1775
      %2023 = vmatpush1.msra.mxu0 %v1774
      %2024 = vmatprep.subr.mxu0 %v1771
      %2025 = vmatpush1.msra.mxu0 %v1770
      %2026 = vmatprep.subr.mxu0 %v1767
      %2027 = vmatpush1.msra.mxu0 %v1766
      %2028 = vmatprep.subr.mxu0 %v1763
      %2029 = vmatpush1.msra.mxu0 %v1762
      %2030 = vmatprep.subr.mxu0 %v1759
      %2031 = vmatpush1.msra.mxu0 %v1758
      %2032 = vmatprep.subr.mxu0 %v1755
      %2033 = vmatpush1.msra.mxu0 %v1754
      %2034 = vmatprep.subr.mxu0 %v1751
      %2035 = vmatpush1.msra.mxu0 %v1750
      %2036 = vmatprep.subr.mxu0 %v1747
      %2037 = vmatpush1.msra.mxu0 %v1746
      %2038 = vmatprep.subr.mxu0 %v1743
      %2039 = vmatpush1.msra.mxu0 %v1742
      %2040 = vmatprep.subr.mxu0 %v1739
      %2041 = vmatpush1.msra.mxu0 %v1738
      %2042 = vmatprep.subr.mxu0 %v1735
      %2043 = vmatpush1.msra.mxu0 %v1734
      %2044 = vmatprep.subr.mxu0 %v1859
      %2045 = vmatpush2.msra.mxu0 %v1858
      %2046 = vmatprep.subr.mxu0 %v1855
      %2047 = vmatpush2.msra.mxu0 %v1854
      %2048 = vmatprep.subr.mxu0 %v1851
      %2049 = vmatpush2.msra.mxu0 %v1850
      %2050 = vmatprep.subr.mxu0 %v1847
      %2051 = vmatpush2.msra.mxu0 %v1846
      %2052 = vmatprep.subr.mxu0 %v1843
      %2053 = vmatpush2.msra.mxu0 %v1842
      %2054 = vmatprep.subr.mxu0 %v1839
      %2055 = vmatpush2.msra.mxu0 %v1838
      %2056 = vmatprep.subr.mxu0 %v1835
      %2057 = vmatpush2.msra.mxu0 %v1834
      %2058 = vmatprep.subr.mxu0 %v1831
      %2059 = vmatpush2.msra.mxu0 %v1830
      %2060 = vmatprep.subr.mxu0 %v1827
      %2061 = vmatpush2.msra.mxu0 %v1826
      %2062 = vmatprep.subr.mxu0 %v1823
      %2063 = vmatpush2.msra.mxu0 %v1822
      %2064 = vmatprep.subr.mxu0 %v1819
      %2065 = vmatpush2.msra.mxu0 %v1818
      %2066 = vmatprep.subr.mxu0 %v1815
      %2067 = vmatpush2.msra.mxu0 %v1814
      %2068 = vmatprep.subr.mxu0 %v1811
      %2069 = vmatpush2.msra.mxu0 %v1810
      %2070 = vmatprep.subr.mxu0 %v1807
      %2071 = vmatpush2.msra.mxu0 %v1806
      %2072 = vmatprep.subr.mxu0 %v1803
      %2073 = vmatpush2.msra.mxu0 %v1802
      %2074 = vmatprep.subr.mxu0 %v1799
      %2075 = vmatpush2.msra.mxu0 %v1798
      %2076 = vmatprep.mubr.f32.mxu0 %v1440
      %2077 = vmatmul.mubr.f32.gmra.mxu0 %v1432
      %v2078 = vpop.f32.mrf.mxu0
      %v2079 = vadd.f32 %v1995, %v2078
      %v2080 = vpop.f32.mrf.mxu0
      %v2081 = vadd.f32 %v1999, %v2080
      %2082 = vdwg.mxu0
      %2083 = vmatprep.subr.mxu0 %v1923
      %2084 = vmatpush1.msra.mxu0 %v1922
      %2085 = vmatprep.subr.mxu0 %v1919
      %2086 = vmatpush1.msra.mxu0 %v1918
      %2087 = vmatprep.subr.mxu0 %v1915
      %2088 = vmatpush1.msra.mxu0 %v1914
      %2089 = vmatprep.subr.mxu0 %v1911
      %2090 = vmatpush1.msra.mxu0 %v1910
      %2091 = vmatprep.subr.mxu0 %v1907
      %2092 = vmatpush1.msra.mxu0 %v1906
      %2093 = vmatprep.subr.mxu0 %v1903
      %2094 = vmatpush1.msra.mxu0 %v1902
      %2095 = vmatprep.subr.mxu0 %v1899
      %2096 = vmatpush1.msra.mxu0 %v1898
      %2097 = vmatprep.subr.mxu0 %v1895
      %2098 = vmatpush1.msra.mxu0 %v1894
      %2099 = vmatprep.subr.mxu0 %v1891
      %2100 = vmatpush1.msra.mxu0 %v1890
      %2101 = vmatprep.subr.mxu0 %v1887
      %2102 = vmatpush1.msra.mxu0 %v1886
      %2103 = vmatprep.subr.mxu0 %v1883
      %2104 = vmatpush1.msra.mxu0 %v1882
      %2105 = vmatprep.subr.mxu0 %v1879
      %2106 = vmatpush1.msra.mxu0 %v1878
      %2107 = vmatprep.subr.mxu0 %v1875
      %2108 = vmatpush1.msra.mxu0 %v1874
      %2109 = vmatprep.subr.mxu0 %v1871
      %2110 = vmatpush1.msra.mxu0 %v1870
      %2111 = vmatprep.subr.mxu0 %v1867
      %2112 = vmatpush1.msra.mxu0 %v1866
      %2113 = vmatprep.subr.mxu0 %v1863
      %2114 = vmatpush1.msra.mxu0 %v1862
      %2115 = vmatprep.subr.mxu0 %v1987
      %2116 = vmatpush2.msra.mxu0 %v1986
      %2117 = vmatprep.subr.mxu0 %v1983
      %2118 = vmatpush2.msra.mxu0 %v1982
      %2119 = vmatprep.subr.mxu0 %v1979
      %2120 = vmatpush2.msra.mxu0 %v1978
      %2121 = vmatprep.subr.mxu0 %v1975
      %2122 = vmatpush2.msra.mxu0 %v1974
      %2123 = vmatprep.subr.mxu0 %v1971
      %2124 = vmatpush2.msra.mxu0 %v1970
      %2125 = vmatprep.subr.mxu0 %v1967
      %2126 = vmatpush2.msra.mxu0 %v1966
      %2127 = vmatprep.subr.mxu0 %v1963
      %2128 = vmatpush2.msra.mxu0 %v1962
      %2129 = vmatprep.subr.mxu0 %v1959
      %2130 = vmatpush2.msra.mxu0 %v1958
      %2131 = vmatprep.subr.mxu0 %v1955
      %2132 = vmatpush2.msra.mxu0 %v1954
      %2133 = vmatprep.subr.mxu0 %v1951
      %2134 = vmatpush2.msra.mxu0 %v1950
      %2135 = vmatprep.subr.mxu0 %v1947
      %2136 = vmatpush2.msra.mxu0 %v1946
      %2137 = vmatprep.subr.mxu0 %v1943
      %2138 = vmatpush2.msra.mxu0 %v1942
      %2139 = vmatprep.subr.mxu0 %v1939
      %2140 = vmatpush2.msra.mxu0 %v1938
      %2141 = vmatprep.subr.mxu0 %v1935
      %2142 = vmatpush2.msra.mxu0 %v1934
      %2143 = vmatprep.subr.mxu0 %v1931
      %2144 = vmatpush2.msra.mxu0 %v1930
      %2145 = vmatprep.subr.mxu0 %v1927
      %2146 = vmatpush2.msra.mxu0 %v1926
      %2147 = vmatprep.mubr.f32.mxu0 %v1441
      %2148 = vmatmul.mubr.f32.gmra.mxu0 %v1439
      %v2149 = vpop.f32.mrf.mxu0
      %v2150 = vadd.f32 %v2079, %v2149
      %v2151 = vpop.f32.mrf.mxu0
      %v2152 = vadd.f32 %v2081, %v2151
      %2153 = vdwg.mxu0
      %2154 = vmatprep.subr.mxu0 %v1797
      %2155 = vmatpush1.msra.mxu0 %v1796
      %2156 = vmatprep.subr.mxu0 %v1793
      %2157 = vmatpush1.msra.mxu0 %v1792
      %2158 = vmatprep.subr.mxu0 %v1789
      %2159 = vmatpush1.msra.mxu0 %v1788
      %2160 = vmatprep.subr.mxu0 %v1785
      %2161 = vmatpush1.msra.mxu0 %v1784
      %2162 = vmatprep.subr.mxu0 %v1781
      %2163 = vmatpush1.msra.mxu0 %v1780
      %2164 = vmatprep.subr.mxu0 %v1777
      %2165 = vmatpush1.msra.mxu0 %v1776
      %2166 = vmatprep.subr.mxu0 %v1773
      %2167 = vmatpush1.msra.mxu0 %v1772
      %2168 = vmatprep.subr.mxu0 %v1769
      %2169 = vmatpush1.msra.mxu0 %v1768
      %2170 = vmatprep.subr.mxu0 %v1765
      %2171 = vmatpush1.msra.mxu0 %v1764
      %2172 = vmatprep.subr.mxu0 %v1761
      %2173 = vmatpush1.msra.mxu0 %v1760
      %2174 = vmatprep.subr.mxu0 %v1757
      %2175 = vmatpush1.msra.mxu0 %v1756
      %2176 = vmatprep.subr.mxu0 %v1753
      %2177 = vmatpush1.msra.mxu0 %v1752
      %2178 = vmatprep.subr.mxu0 %v1749
      %2179 = vmatpush1.msra.mxu0 %v1748
      %2180 = vmatprep.subr.mxu0 %v1745
      %2181 = vmatpush1.msra.mxu0 %v1744
      %2182 = vmatprep.subr.mxu0 %v1741
      %2183 = vmatpush1.msra.mxu0 %v1740
      %2184 = vmatprep.subr.mxu0 %v1737
      %2185 = vmatpush1.msra.mxu0 %v1736
      %2186 = vmatprep.subr.mxu0 %v1861
      %2187 = vmatpush2.msra.mxu0 %v1860
      %2188 = vmatprep.subr.mxu0 %v1857
      %2189 = vmatpush2.msra.mxu0 %v1856
      %2190 = vmatprep.subr.mxu0 %v1853
      %2191 = vmatpush2.msra.mxu0 %v1852
      %2192 = vmatprep.subr.mxu0 %v1849
      %2193 = vmatpush2.msra.mxu0 %v1848
      %2194 = vmatprep.subr.mxu0 %v1845
      %2195 = vmatpush2.msra.mxu0 %v1844
      %2196 = vmatprep.subr.mxu0 %v1841
      %2197 = vmatpush2.msra.mxu0 %v1840
      %2198 = vmatprep.subr.mxu0 %v1837
      %2199 = vmatpush2.msra.mxu0 %v1836
      %2200 = vmatprep.subr.mxu0 %v1833
      %2201 = vmatpush2.msra.mxu0 %v1832
      %2202 = vmatprep.subr.mxu0 %v1829
      %2203 = vmatpush2.msra.mxu0 %v1828
      %2204 = vmatprep.subr.mxu0 %v1825
      %2205 = vmatpush2.msra.mxu0 %v1824
      %2206 = vmatprep.subr.mxu0 %v1821
      %2207 = vmatpush2.msra.mxu0 %v1820
      %2208 = vmatprep.subr.mxu0 %v1817
      %2209 = vmatpush2.msra.mxu0 %v1816
      %2210 = vmatprep.subr.mxu0 %v1813
      %2211 = vmatpush2.msra.mxu0 %v1812
      %2212 = vmatprep.subr.mxu0 %v1809
      %2213 = vmatpush2.msra.mxu0 %v1808
      %2214 = vmatprep.subr.mxu0 %v1805
      %2215 = vmatpush2.msra.mxu0 %v1804
      %2216 = vmatprep.subr.mxu0 %v1801
      %2217 = vmatpush2.msra.mxu0 %v1800
      %2218 = vmatprep.mubr.f32.mxu0 %v1440
      %2219 = vmatmul.mubr.f32.gmra.mxu0 %v1432
      %v2220 = vpop.f32.mrf.mxu0
      %v2221 = vadd.f32 %v2003, %v2220
      %v2222 = vpop.f32.mrf.mxu0
      %v2223 = vadd.f32 %v2007, %v2222
      %2224 = vdwg.mxu0
      %2225 = vmatprep.subr.mxu0 %v1925
      %2226 = vmatpush1.msra.mxu0 %v1924
      %2227 = vmatprep.subr.mxu0 %v1921
      %2228 = vmatpush1.msra.mxu0 %v1920
      %2229 = vmatprep.subr.mxu0 %v1917
      %2230 = vmatpush1.msra.mxu0 %v1916
      %2231 = vmatprep.subr.mxu0 %v1913
      %2232 = vmatpush1.msra.mxu0 %v1912
      %2233 = vmatprep.subr.mxu0 %v1909
      %2234 = vmatpush1.msra.mxu0 %v1908
      %2235 = vmatprep.subr.mxu0 %v1905
      %2236 = vmatpush1.msra.mxu0 %v1904
      %2237 = vmatprep.subr.mxu0 %v1901
      %2238 = vmatpush1.msra.mxu0 %v1900
      %2239 = vmatprep.subr.mxu0 %v1897
      %2240 = vmatpush1.msra.mxu0 %v1896
      %2241 = vmatprep.subr.mxu0 %v1893
      %2242 = vmatpush1.msra.mxu0 %v1892
      %2243 = vmatprep.subr.mxu0 %v1889
      %2244 = vmatpush1.msra.mxu0 %v1888
      %2245 = vmatprep.subr.mxu0 %v1885
      %2246 = vmatpush1.msra.mxu0 %v1884
      %2247 = vmatprep.subr.mxu0 %v1881
      %2248 = vmatpush1.msra.mxu0 %v1880
      %2249 = vmatprep.subr.mxu0 %v1877
      %2250 = vmatpush1.msra.mxu0 %v1876
      %2251 = vmatprep.subr.mxu0 %v1873
      %2252 = vmatpush1.msra.mxu0 %v1872
      %2253 = vmatprep.subr.mxu0 %v1869
      %2254 = vmatpush1.msra.mxu0 %v1868
      %2255 = vmatprep.subr.mxu0 %v1865
      %2256 = vmatpush1.msra.mxu0 %v1864
      %2257 = vmatprep.subr.mxu0 %v1989
      %2258 = vmatpush2.msra.mxu0 %v1988
      %2259 = vmatprep.subr.mxu0 %v1985
      %2260 = vmatpush2.msra.mxu0 %v1984
      %2261 = vmatprep.subr.mxu0 %v1981
      %2262 = vmatpush2.msra.mxu0 %v1980
      %2263 = vmatprep.subr.mxu0 %v1977
      %2264 = vmatpush2.msra.mxu0 %v1976
      %2265 = vmatprep.subr.mxu0 %v1973
      %2266 = vmatpush2.msra.mxu0 %v1972
      %2267 = vmatprep.subr.mxu0 %v1969
      %2268 = vmatpush2.msra.mxu0 %v1968
      %2269 = vmatprep.subr.mxu0 %v1965
      %2270 = vmatpush2.msra.mxu0 %v1964
      %2271 = vmatprep.subr.mxu0 %v1961
      %2272 = vmatpush2.msra.mxu0 %v1960
      %2273 = vmatprep.subr.mxu0 %v1957
      %2274 = vmatpush2.msra.mxu0 %v1956
      %2275 = vmatprep.subr.mxu0 %v1953
      %2276 = vmatpush2.msra.mxu0 %v1952
      %2277 = vmatprep.subr.mxu0 %v1949
      %2278 = vmatpush2.msra.mxu0 %v1948
      %2279 = vmatprep.subr.mxu0 %v1945
      %2280 = vmatpush2.msra.mxu0 %v1944
      %2281 = vmatprep.subr.mxu0 %v1941
      %2282 = vmatpush2.msra.mxu0 %v1940
      %2283 = vmatprep.subr.mxu0 %v1937
      %2284 = vmatpush2.msra.mxu0 %v1936
      %2285 = vmatprep.subr.mxu0 %v1933
      %2286 = vmatpush2.msra.mxu0 %v1932
      %2287 = vmatprep.subr.mxu0 %v1929
      %2288 = vmatpush2.msra.mxu0 %v1928
      %2289 = vmatprep.mubr.f32.mxu0 %v1441
      %2290 = vmatmul.mubr.f32.gmra.mxu0 %v1439
      %v2291 = vpop.f32.mrf.mxu0
      %v2292 = vadd.f32 %v2221, %v2291
      %v2293 = vpop.f32.mrf.mxu0
      %v2294 = vadd.f32 %v2223, %v2293
      %2295 = vdwg.mxu0
      %v2296 = vmax.f32 %v2150, 0.0
      %v2297 = vmax.f32 %v2152, 0.0
      %v2298 = vmax.f32 %v2292, 0.0
      %v2299 = vmax.f32 %v2294, 0.0
      %v2300 = vld [vmem:[%s7] sm:$0xff]
      %v2301 = vld [vmem:[%s7 + $0x8] sm:$0xff]
      %v2302 = vld [vmem:[%s7 + $0x10] sm:$0xff]
      %v2303 = vld [vmem:[%s7 + $0x18] sm:$0xff]
      %v2304 = vld [vmem:[%s7 + $0x20] sm:$0xff]
      %v2305 = vld [vmem:[%s7 + $0x28] sm:$0xff]
      %v2306 = vld [vmem:[%s7 + $0x30] sm:$0xff]
      %v2307 = vld [vmem:[%s7 + $0x38] sm:$0xff]
      %v2308 = vld [vmem:[%s7 + $0x40] sm:$0xff]
      %v2309 = vld [vmem:[%s7 + $0x48] sm:$0xff]
      %v2310 = vld [vmem:[%s7 + $0x50] sm:$0xff]
      %v2311 = vld [vmem:[%s7 + $0x58] sm:$0xff]
      %v2312 = vld [vmem:[%s7 + $0x60] sm:$0xff]
      %v2313 = vld [vmem:[%s7 + $0x68] sm:$0xff]
      %v2314 = vld [vmem:[%s7 + $0x70] sm:$0xff]
      %v2315 = vld [vmem:[%s7 + $0x78] sm:$0xff]
      %v2316 = vld [vmem:[%s7 + $0x80] sm:$0xff]
      %v2317 = vld [vmem:[%s7 + $0x88] sm:$0xff]
      %v2318 = vld [vmem:[%s7 + $0x90] sm:$0xff]
      %v2319 = vld [vmem:[%s7 + $0x98] sm:$0xff]
      %v2320 = vld [vmem:[%s7 + $0xa0] sm:$0xff]
      %v2321 = vld [vmem:[%s7 + $0xa8] sm:$0xff]
      %v2322 = vld [vmem:[%s7 + $0xb0] sm:$0xff]
      %v2323 = vld [vmem:[%s7 + $0xb8] sm:$0xff]
      %v2324 = vld [vmem:[%s7 + $0xc0] sm:$0xff]
      %v2325 = vld [vmem:[%s7 + $0xc8] sm:$0xff]
      %v2326 = vld [vmem:[%s7 + $0xd0] sm:$0xff]
      %v2327 = vld [vmem:[%s7 + $0xd8] sm:$0xff]
      %v2328 = vld [vmem:[%s7 + $0xe0] sm:$0xff]
      %v2329 = vld [vmem:[%s7 + $0xe8] sm:$0xff]
      %v2330 = vld [vmem:[%s7 + $0xf0] sm:$0xff]
      %v2331 = vld [vmem:[%s7 + $0xf8] sm:$0xff]
      %v2332 = vld [vmem:[%s7 + $0x100] sm:$0xff]
      %v2333 = vld [vmem:[%s7 + $0x108] sm:$0xff]
      %v2334 = vld [vmem:[%s7 + $0x110] sm:$0xff]
      %v2335 = vld [vmem:[%s7 + $0x118] sm:$0xff]
      %v2336 = vld [vmem:[%s7 + $0x120] sm:$0xff]
      %v2337 = vld [vmem:[%s7 + $0x128] sm:$0xff]
      %v2338 = vld [vmem:[%s7 + $0x130] sm:$0xff]
      %v2339 = vld [vmem:[%s7 + $0x138] sm:$0xff]
      %v2340 = vld [vmem:[%s7 + $0x140] sm:$0xff]
      %v2341 = vld [vmem:[%s7 + $0x148] sm:$0xff]
      %v2342 = vld [vmem:[%s7 + $0x150] sm:$0xff]
      %v2343 = vld [vmem:[%s7 + $0x158] sm:$0xff]
      %v2344 = vld [vmem:[%s7 + $0x160] sm:$0xff]
      %v2345 = vld [vmem:[%s7 + $0x168] sm:$0xff]
      %v2346 = vld [vmem:[%s7 + $0x170] sm:$0xff]
      %v2347 = vld [vmem:[%s7 + $0x178] sm:$0xff]
      %v2348 = vld [vmem:[%s7 + $0x180] sm:$0xff]
      %v2349 = vld [vmem:[%s7 + $0x188] sm:$0xff]
      %v2350 = vld [vmem:[%s7 + $0x190] sm:$0xff]
      %v2351 = vld [vmem:[%s7 + $0x198] sm:$0xff]
      %v2352 = vld [vmem:[%s7 + $0x1a0] sm:$0xff]
      %v2353 = vld [vmem:[%s7 + $0x1a8] sm:$0xff]
      %v2354 = vld [vmem:[%s7 + $0x1b0] sm:$0xff]
      %v2355 = vld [vmem:[%s7 + $0x1b8] sm:$0xff]
      %v2356 = vld [vmem:[%s7 + $0x1c0] sm:$0xff]
      %v2357 = vld [vmem:[%s7 + $0x1c8] sm:$0xff]
      %v2358 = vld [vmem:[%s7 + $0x1d0] sm:$0xff]
      %v2359 = vld [vmem:[%s7 + $0x1d8] sm:$0xff]
      %v2360 = vld [vmem:[%s7 + $0x1e0] sm:$0xff]
      %v2361 = vld [vmem:[%s7 + $0x1e8] sm:$0xff]
      %v2362 = vld [vmem:[%s7 + $0x1f0] sm:$0xff]
      %v2363 = vld [vmem:[%s7 + $0x1f8] sm:$0xff]
      %v2364 = vld [vmem:[#allocation8] sm:$0x1]
      %v2366 = vlaneseq
      %v2367 = vshrl.u32 %v2366, 7
      %v2368 = vsub.s32 0, %v2367
      %v2369 = vrot.slane %v2364, %v2368
      %2371 = vmatprep.subr.mxu0 0.0
      %2372 = vmatpush1.msra.mxu0 %v2315
      %2373 = vmatprep.subr.mxu0 0.0
      %2374 = vmatpush1.msra.mxu0 %v2314
      %2375 = vmatprep.subr.mxu0 0.0
      %2376 = vmatpush1.msra.mxu0 %v2313
      %2377 = vmatprep.subr.mxu0 0.0
      %2378 = vmatpush1.msra.mxu0 %v2312
      %2379 = vmatprep.subr.mxu0 0.0
      %2380 = vmatpush1.msra.mxu0 %v2311
      %2381 = vmatprep.subr.mxu0 0.0
      %2382 = vmatpush1.msra.mxu0 %v2310
      %2383 = vmatprep.subr.mxu0 0.0
      %2384 = vmatpush1.msra.mxu0 %v2309
      %2385 = vmatprep.subr.mxu0 0.0
      %2386 = vmatpush1.msra.mxu0 %v2308
      %2387 = vmatprep.subr.mxu0 0.0
      %2388 = vmatpush1.msra.mxu0 %v2307
      %2389 = vmatprep.subr.mxu0 0.0
      %2390 = vmatpush1.msra.mxu0 %v2306
      %2391 = vmatprep.subr.mxu0 0.0
      %2392 = vmatpush1.msra.mxu0 %v2305
      %2393 = vmatprep.subr.mxu0 0.0
      %2394 = vmatpush1.msra.mxu0 %v2304
      %2395 = vmatprep.subr.mxu0 0.0
      %2396 = vmatpush1.msra.mxu0 %v2303
      %2397 = vmatprep.subr.mxu0 0.0
      %2398 = vmatpush1.msra.mxu0 %v2302
      %2399 = vmatprep.subr.mxu0 0.0
      %2400 = vmatpush1.msra.mxu0 %v2301
      %2401 = vmatprep.subr.mxu0 0.0
      %2402 = vmatpush1.msra.mxu0 %v2300
      %2403 = vmatprep.subr.mxu0 0.0
      %2404 = vmatpush2.msra.mxu0 %v2331
      %2405 = vmatprep.subr.mxu0 0.0
      %2406 = vmatpush2.msra.mxu0 %v2330
      %2407 = vmatprep.subr.mxu0 0.0
      %2408 = vmatpush2.msra.mxu0 %v2329
      %2409 = vmatprep.subr.mxu0 0.0
      %2410 = vmatpush2.msra.mxu0 %v2328
      %2411 = vmatprep.subr.mxu0 0.0
      %2412 = vmatpush2.msra.mxu0 %v2327
      %2413 = vmatprep.subr.mxu0 0.0
      %2414 = vmatpush2.msra.mxu0 %v2326
      %2415 = vmatprep.subr.mxu0 0.0
      %2416 = vmatpush2.msra.mxu0 %v2325
      %2417 = vmatprep.subr.mxu0 0.0
      %2418 = vmatpush2.msra.mxu0 %v2324
      %2419 = vmatprep.subr.mxu0 0.0
      %2420 = vmatpush2.msra.mxu0 %v2323
      %2421 = vmatprep.subr.mxu0 0.0
      %2422 = vmatpush2.msra.mxu0 %v2322
      %2423 = vmatprep.subr.mxu0 0.0
      %2424 = vmatpush2.msra.mxu0 %v2321
      %2425 = vmatprep.subr.mxu0 0.0
      %2426 = vmatpush2.msra.mxu0 %v2320
      %2427 = vmatprep.subr.mxu0 0.0
      %2428 = vmatpush2.msra.mxu0 %v2319
      %2429 = vmatprep.subr.mxu0 0.0
      %2430 = vmatpush2.msra.mxu0 %v2318
      %2431 = vmatprep.subr.mxu0 0.0
      %2432 = vmatpush2.msra.mxu0 %v2317
      %2433 = vmatprep.subr.mxu0 0.0
      %2434 = vmatpush2.msra.mxu0 %v2316
      %2435 = vmatprep.mubr.f32.mxu0 %v1731
      %2436 = vmatmul.mubr.f32.gmra.mxu0 %v1730
      %v2437 = vpop.f32.mrf.mxu0
      %v2438 = vadd.f32 %v2369, %v2437
      %v2439 = vpop.f32.mrf.mxu0
      %2440 = vdwg.mxu0
      %2441 = vmatprep.subr.mxu0 0.0
      %2442 = vmatpush1.msra.mxu0 %v2347
      %2443 = vmatprep.subr.mxu0 0.0
      %2444 = vmatpush1.msra.mxu0 %v2346
      %2445 = vmatprep.subr.mxu0 0.0
      %2446 = vmatpush1.msra.mxu0 %v2345
      %2447 = vmatprep.subr.mxu0 0.0
      %2448 = vmatpush1.msra.mxu0 %v2344
      %2449 = vmatprep.subr.mxu0 0.0
      %2450 = vmatpush1.msra.mxu0 %v2343
      %2451 = vmatprep.subr.mxu0 0.0
      %2452 = vmatpush1.msra.mxu0 %v2342
      %2453 = vmatprep.subr.mxu0 0.0
      %2454 = vmatpush1.msra.mxu0 %v2341
      %2455 = vmatprep.subr.mxu0 0.0
      %2456 = vmatpush1.msra.mxu0 %v2340
      %2457 = vmatprep.subr.mxu0 0.0
      %2458 = vmatpush1.msra.mxu0 %v2339
      %2459 = vmatprep.subr.mxu0 0.0
      %2460 = vmatpush1.msra.mxu0 %v2338
      %2461 = vmatprep.subr.mxu0 0.0
      %2462 = vmatpush1.msra.mxu0 %v2337
      %2463 = vmatprep.subr.mxu0 0.0
      %2464 = vmatpush1.msra.mxu0 %v2336
      %2465 = vmatprep.subr.mxu0 0.0
      %2466 = vmatpush1.msra.mxu0 %v2335
      %2467 = vmatprep.subr.mxu0 0.0
      %2468 = vmatpush1.msra.mxu0 %v2334
      %2469 = vmatprep.subr.mxu0 0.0
      %2470 = vmatpush1.msra.mxu0 %v2333
      %2471 = vmatprep.subr.mxu0 0.0
      %2472 = vmatpush1.msra.mxu0 %v2332
      %2473 = vmatprep.subr.mxu0 0.0
      %2474 = vmatpush2.msra.mxu0 %v2363
      %2475 = vmatprep.subr.mxu0 0.0
      %2476 = vmatpush2.msra.mxu0 %v2362
      %2477 = vmatprep.subr.mxu0 0.0
      %2478 = vmatpush2.msra.mxu0 %v2361
      %2479 = vmatprep.subr.mxu0 0.0
      %2480 = vmatpush2.msra.mxu0 %v2360
      %2481 = vmatprep.subr.mxu0 0.0
      %2482 = vmatpush2.msra.mxu0 %v2359
      %2483 = vmatprep.subr.mxu0 0.0
      %2484 = vmatpush2.msra.mxu0 %v2358
      %2485 = vmatprep.subr.mxu0 0.0
      %2486 = vmatpush2.msra.mxu0 %v2357
      %2487 = vmatprep.subr.mxu0 0.0
      %2488 = vmatpush2.msra.mxu0 %v2356
      %2489 = vmatprep.subr.mxu0 0.0
      %2490 = vmatpush2.msra.mxu0 %v2355
      %2491 = vmatprep.subr.mxu0 0.0
      %2492 = vmatpush2.msra.mxu0 %v2354
      %2493 = vmatprep.subr.mxu0 0.0
      %2494 = vmatpush2.msra.mxu0 %v2353
      %2495 = vmatprep.subr.mxu0 0.0
      %2496 = vmatpush2.msra.mxu0 %v2352
      %2497 = vmatprep.subr.mxu0 0.0
      %2498 = vmatpush2.msra.mxu0 %v2351
      %2499 = vmatprep.subr.mxu0 0.0
      %2500 = vmatpush2.msra.mxu0 %v2350
      %2501 = vmatprep.subr.mxu0 0.0
      %2502 = vmatpush2.msra.mxu0 %v2349
      %2503 = vmatprep.subr.mxu0 0.0
      %2504 = vmatpush2.msra.mxu0 %v2348
      %2505 = vmatprep.mubr.f32.mxu0 %v1733
      %2506 = vmatmul.mubr.f32.gmra.mxu0 %v1732
      %v2507 = vpop.f32.mrf.mxu0
      %v2508 = vadd.f32 %v2438, %v2507
      %v2509 = vpop.f32.mrf.mxu0
      %2510 = vdwg.mxu0
      %v2511 = vld [vmem:[#allocation10] sm:$0xff]
      %v2512 = vld [vmem:[#allocation10 + $0x8] sm:$0xff]
      %v2513 = vld [vmem:[#allocation10 + $0x10] sm:$0xff]
      %v2514 = vld [vmem:[#allocation10 + $0x18] sm:$0xff]
      %v2515 = vld [vmem:[#allocation10 + $0x20] sm:$0xff]
      %v2516 = vld [vmem:[#allocation10 + $0x28] sm:$0xff]
      %v2517 = vld [vmem:[#allocation10 + $0x30] sm:$0xff]
      %v2518 = vld [vmem:[#allocation10 + $0x38] sm:$0xff]
      %v2519 = vld [vmem:[#allocation10 + $0x40] sm:$0xff]
      %v2520 = vld [vmem:[#allocation10 + $0x48] sm:$0xff]
      %v2521 = vld [vmem:[#allocation10 + $0x50] sm:$0xff]
      %v2522 = vld [vmem:[#allocation10 + $0x58] sm:$0xff]
      %v2523 = vld [vmem:[#allocation10 + $0x60] sm:$0xff]
      %v2524 = vld [vmem:[#allocation10 + $0x68] sm:$0xff]
      %v2525 = vld [vmem:[#allocation10 + $0x70] sm:$0xff]
      %v2526 = vld [vmem:[#allocation10 + $0x78] sm:$0xff]
      %v2527 = vld [vmem:[#allocation10 + $0x80] sm:$0xff]
      %v2528 = vld [vmem:[#allocation10 + $0x88] sm:$0xff]
      %v2529 = vld [vmem:[#allocation10 + $0x90] sm:$0xff]
      %v2530 = vld [vmem:[#allocation10 + $0x98] sm:$0xff]
      %v2531 = vld [vmem:[#allocation10 + $0xa0] sm:$0xff]
      %v2532 = vld [vmem:[#allocation10 + $0xa8] sm:$0xff]
      %v2533 = vld [vmem:[#allocation10 + $0xb0] sm:$0xff]
      %v2534 = vld [vmem:[#allocation10 + $0xb8] sm:$0xff]
      %v2535 = vld [vmem:[#allocation10 + $0xc0] sm:$0xff]
      %v2536 = vld [vmem:[#allocation10 + $0xc8] sm:$0xff]
      %v2537 = vld [vmem:[#allocation10 + $0xd0] sm:$0xff]
      %v2538 = vld [vmem:[#allocation10 + $0xd8] sm:$0xff]
      %v2539 = vld [vmem:[#allocation10 + $0xe0] sm:$0xff]
      %v2540 = vld [vmem:[#allocation10 + $0xe8] sm:$0xff]
      %v2541 = vld [vmem:[#allocation10 + $0xf0] sm:$0xff]
      %v2542 = vld [vmem:[#allocation10 + $0xf8] sm:$0xff]
      %v2543 = vld [vmem:[#allocation10 + $0x100] sm:$0xff]
      %v2544 = vld [vmem:[#allocation10 + $0x108] sm:$0xff]
      %v2545 = vld [vmem:[#allocation10 + $0x110] sm:$0xff]
      %v2546 = vld [vmem:[#allocation10 + $0x118] sm:$0xff]
      %v2547 = vld [vmem:[#allocation10 + $0x120] sm:$0xff]
      %v2548 = vld [vmem:[#allocation10 + $0x128] sm:$0xff]
      %v2549 = vld [vmem:[#allocation10 + $0x130] sm:$0xff]
      %v2550 = vld [vmem:[#allocation10 + $0x138] sm:$0xff]
      %v2551 = vld [vmem:[#allocation10 + $0x140] sm:$0xff]
      %v2552 = vld [vmem:[#allocation10 + $0x148] sm:$0xff]
      %v2553 = vld [vmem:[#allocation10 + $0x150] sm:$0xff]
      %v2554 = vld [vmem:[#allocation10 + $0x158] sm:$0xff]
      %v2555 = vld [vmem:[#allocation10 + $0x160] sm:$0xff]
      %v2556 = vld [vmem:[#allocation10 + $0x168] sm:$0xff]
      %v2557 = vld [vmem:[#allocation10 + $0x170] sm:$0xff]
      %v2558 = vld [vmem:[#allocation10 + $0x178] sm:$0xff]
      %v2559 = vld [vmem:[#allocation10 + $0x180] sm:$0xff]
      %v2560 = vld [vmem:[#allocation10 + $0x188] sm:$0xff]
      %v2561 = vld [vmem:[#allocation10 + $0x190] sm:$0xff]
      %v2562 = vld [vmem:[#allocation10 + $0x198] sm:$0xff]
      %v2563 = vld [vmem:[#allocation10 + $0x1a0] sm:$0xff]
      %v2564 = vld [vmem:[#allocation10 + $0x1a8] sm:$0xff]
      %v2565 = vld [vmem:[#allocation10 + $0x1b0] sm:$0xff]
      %v2566 = vld [vmem:[#allocation10 + $0x1b8] sm:$0xff]
      %v2567 = vld [vmem:[#allocation10 + $0x1c0] sm:$0xff]
      %v2568 = vld [vmem:[#allocation10 + $0x1c8] sm:$0xff]
      %v2569 = vld [vmem:[#allocation10 + $0x1d0] sm:$0xff]
      %v2570 = vld [vmem:[#allocation10 + $0x1d8] sm:$0xff]
      %v2571 = vld [vmem:[#allocation10 + $0x1e0] sm:$0xff]
      %v2572 = vld [vmem:[#allocation10 + $0x1e8] sm:$0xff]
      %v2573 = vld [vmem:[#allocation10 + $0x1f0] sm:$0xff]
      %v2574 = vld [vmem:[#allocation10 + $0x1f8] sm:$0xff]
      %v2575 = vld [vmem:[#allocation11] sm:$0x1]
      %v2577 = vlaneseq
      %v2578 = vshrl.u32 %v2577, 7
      %v2579 = vsub.s32 0, %v2578
      %v2580 = vrot.slane %v2575, %v2579
      %2582 = vmatprep.subr.mxu0 0.0
      %2583 = vmatpush1.msra.mxu0 %v2526
      %2584 = vmatprep.subr.mxu0 0.0
      %2585 = vmatpush1.msra.mxu0 %v2525
      %2586 = vmatprep.subr.mxu0 0.0
      %2587 = vmatpush1.msra.mxu0 %v2524
      %2588 = vmatprep.subr.mxu0 0.0
      %2589 = vmatpush1.msra.mxu0 %v2523
      %2590 = vmatprep.subr.mxu0 0.0
      %2591 = vmatpush1.msra.mxu0 %v2522
      %2592 = vmatprep.subr.mxu0 0.0
      %2593 = vmatpush1.msra.mxu0 %v2521
      %2594 = vmatprep.subr.mxu0 0.0
      %2595 = vmatpush1.msra.mxu0 %v2520
      %2596 = vmatprep.subr.mxu0 0.0
      %2597 = vmatpush1.msra.mxu0 %v2519
      %2598 = vmatprep.subr.mxu0 0.0
      %2599 = vmatpush1.msra.mxu0 %v2518
      %2600 = vmatprep.subr.mxu0 0.0
      %2601 = vmatpush1.msra.mxu0 %v2517
      %2602 = vmatprep.subr.mxu0 0.0
      %2603 = vmatpush1.msra.mxu0 %v2516
      %2604 = vmatprep.subr.mxu0 0.0
      %2605 = vmatpush1.msra.mxu0 %v2515
      %2606 = vmatprep.subr.mxu0 0.0
      %2607 = vmatpush1.msra.mxu0 %v2514
      %2608 = vmatprep.subr.mxu0 0.0
      %2609 = vmatpush1.msra.mxu0 %v2513
      %2610 = vmatprep.subr.mxu0 0.0
      %2611 = vmatpush1.msra.mxu0 %v2512
      %2612 = vmatprep.subr.mxu0 0.0
      %2613 = vmatpush1.msra.mxu0 %v2511
      %2614 = vmatprep.subr.mxu0 0.0
      %2615 = vmatpush2.msra.mxu0 %v2542
      %2616 = vmatprep.subr.mxu0 0.0
      %2617 = vmatpush2.msra.mxu0 %v2541
      %2618 = vmatprep.subr.mxu0 0.0
      %2619 = vmatpush2.msra.mxu0 %v2540
      %2620 = vmatprep.subr.mxu0 0.0
      %2621 = vmatpush2.msra.mxu0 %v2539
      %2622 = vmatprep.subr.mxu0 0.0
      %2623 = vmatpush2.msra.mxu0 %v2538
      %2624 = vmatprep.subr.mxu0 0.0
      %2625 = vmatpush2.msra.mxu0 %v2537
      %2626 = vmatprep.subr.mxu0 0.0
      %2627 = vmatpush2.msra.mxu0 %v2536
      %2628 = vmatprep.subr.mxu0 0.0
      %2629 = vmatpush2.msra.mxu0 %v2535
      %2630 = vmatprep.subr.mxu0 0.0
      %2631 = vmatpush2.msra.mxu0 %v2534
      %2632 = vmatprep.subr.mxu0 0.0
      %2633 = vmatpush2.msra.mxu0 %v2533
      %2634 = vmatprep.subr.mxu0 0.0
      %2635 = vmatpush2.msra.mxu0 %v2532
      %2636 = vmatprep.subr.mxu0 0.0
      %2637 = vmatpush2.msra.mxu0 %v2531
      %2638 = vmatprep.subr.mxu0 0.0
      %2639 = vmatpush2.msra.mxu0 %v2530
      %2640 = vmatprep.subr.mxu0 0.0
      %2641 = vmatpush2.msra.mxu0 %v2529
      %2642 = vmatprep.subr.mxu0 0.0
      %2643 = vmatpush2.msra.mxu0 %v2528
      %2644 = vmatprep.subr.mxu0 0.0
      %2645 = vmatpush2.msra.mxu0 %v2527
      %2646 = vmatprep.mubr.f32.mxu0 %v2297
      %2647 = vmatmul.mubr.f32.gmra.mxu0 %v2296
      %v2648 = vpop.f32.mrf.mxu0
      %v2649 = vadd.f32 %v2580, %v2648
      %v2650 = vpop.f32.mrf.mxu0
      %2651 = vdwg.mxu0
      %2652 = vmatprep.subr.mxu0 0.0
      %2653 = vmatpush1.msra.mxu0 %v2558
      %2654 = vmatprep.subr.mxu0 0.0
      %2655 = vmatpush1.msra.mxu0 %v2557
      %2656 = vmatprep.subr.mxu0 0.0
      %2657 = vmatpush1.msra.mxu0 %v2556
      %2658 = vmatprep.subr.mxu0 0.0
      %2659 = vmatpush1.msra.mxu0 %v2555
      %2660 = vmatprep.subr.mxu0 0.0
      %2661 = vmatpush1.msra.mxu0 %v2554
      %2662 = vmatprep.subr.mxu0 0.0
      %2663 = vmatpush1.msra.mxu0 %v2553
      %2664 = vmatprep.subr.mxu0 0.0
      %2665 = vmatpush1.msra.mxu0 %v2552
      %2666 = vmatprep.subr.mxu0 0.0
      %2667 = vmatpush1.msra.mxu0 %v2551
      %2668 = vmatprep.subr.mxu0 0.0
      %2669 = vmatpush1.msra.mxu0 %v2550
      %2670 = vmatprep.subr.mxu0 0.0
      %2671 = vmatpush1.msra.mxu0 %v2549
      %2672 = vmatprep.subr.mxu0 0.0
      %2673 = vmatpush1.msra.mxu0 %v2548
      %2674 = vmatprep.subr.mxu0 0.0
      %2675 = vmatpush1.msra.mxu0 %v2547
      %2676 = vmatprep.subr.mxu0 0.0
      %2677 = vmatpush1.msra.mxu0 %v2546
      %2678 = vmatprep.subr.mxu0 0.0
      %2679 = vmatpush1.msra.mxu0 %v2545
      %2680 = vmatprep.subr.mxu0 0.0
      %2681 = vmatpush1.msra.mxu0 %v2544
      %2682 = vmatprep.subr.mxu0 0.0
      %2683 = vmatpush1.msra.mxu0 %v2543
      %2684 = vmatprep.subr.mxu0 0.0
      %2685 = vmatpush2.msra.mxu0 %v2574
      %2686 = vmatprep.subr.mxu0 0.0
      %2687 = vmatpush2.msra.mxu0 %v2573
      %2688 = vmatprep.subr.mxu0 0.0
      %2689 = vmatpush2.msra.mxu0 %v2572
      %2690 = vmatprep.subr.mxu0 0.0
      %2691 = vmatpush2.msra.mxu0 %v2571
      %2692 = vmatprep.subr.mxu0 0.0
      %2693 = vmatpush2.msra.mxu0 %v2570
      %2694 = vmatprep.subr.mxu0 0.0
      %2695 = vmatpush2.msra.mxu0 %v2569
      %2696 = vmatprep.subr.mxu0 0.0
      %2697 = vmatpush2.msra.mxu0 %v2568
      %2698 = vmatprep.subr.mxu0 0.0
      %2699 = vmatpush2.msra.mxu0 %v2567
      %2700 = vmatprep.subr.mxu0 0.0
      %2701 = vmatpush2.msra.mxu0 %v2566
      %2702 = vmatprep.subr.mxu0 0.0
      %2703 = vmatpush2.msra.mxu0 %v2565
      %2704 = vmatprep.subr.mxu0 0.0
      %2705 = vmatpush2.msra.mxu0 %v2564
      %2706 = vmatprep.subr.mxu0 0.0
      %2707 = vmatpush2.msra.mxu0 %v2563
      %2708 = vmatprep.subr.mxu0 0.0
      %2709 = vmatpush2.msra.mxu0 %v2562
      %2710 = vmatprep.subr.mxu0 0.0
      %2711 = vmatpush2.msra.mxu0 %v2561
      %2712 = vmatprep.subr.mxu0 0.0
      %2713 = vmatpush2.msra.mxu0 %v2560
      %2714 = vmatprep.subr.mxu0 0.0
      %2715 = vmatpush2.msra.mxu0 %v2559
      %2716 = vmatprep.mubr.f32.mxu0 %v2299
      %2717 = vmatmul.mubr.f32.gmra.mxu0 %v2298
      %v2718 = vpop.f32.mrf.mxu0
      %v2719 = vadd.f32 %v2649, %v2718
      %v2720 = vpop.f32.mrf.mxu0
      %2721 = vdwg.mxu0
      %v2724 = vcombine.low %v2508, %v2719
      %v2726 = vunpack.c.l.s4 1983009808
      %v2727 = vunpack.c.0.s8 %v2726
      %v2728 = vlaneseq
      %v2729 = vshrl.u32 %v2728, 7
      %v2730 = vsub.s32 %v2727, %v2729
      %v2731 = vrot.slane %v2724, %v2730
      %2733 = vst [vmem:[%s11] sm:$0xf] %v2731
    $region77: #{forward.9} parent=1 // pred_fallthru
      _
    // Predicated region
    $region78: #{forward.9} parent=1 // pred_check
      _
    $region79: #{forward.9} parent=1 // pred_check_branch
      %2735 = sbr.rel (0) target = $region81
    $region80: #{forward.9} parent=1 // pred_region
      _
    $region81: #{forward.9} parent=1 // pred_fallthru
      _
    // Predicated region
    $region82: #{forward.9} parent=1 // pred_check
      _
    $region83: #{forward.9} parent=1 // pred_check_branch
      %2737 = sbr.rel (0) target = $region85
    $region84: #{forward.9} parent=1 // pred_region
      _
    $region85: #{forward.9} parent=1 // pred_fallthru
      _
    %2738 = vsyncpa [#allocation4], 1
    %2739 = vsyncpa [#allocation6], 1
    %2740 = vsyncpa [#allocation9], 1
    %2741 = vsyncpa [#allocation12], 1

</llo_original>
